<compile_context>
chip_gen: v6e
topology: v6e:2x2x1
jax: 0.10.0
libtpu: 0.0.40
codegen_flags: <defaults>
</compile_context>

<pallas_src>
import functools

import jax
import jax.numpy as jnp
from jax.experimental import pallas as pl
from jax.experimental.pallas import tpu as pltpu


def _rpe_mha_kernel(q_ref, k_ref, v_ref, e_ref,
                    wqkv_ref, bqkv_ref, wp_ref, bp_ref, wvp_ref, bvp_ref,
                    hidden_ref, attn_ref, pos_ref,
                    *, num_heads, head_dim, tile_n, mxu_dtype):
    """One (batch, query-tile) grid step.

    q_ref:    (1, TN, C)            k_ref / v_ref: (1, M, C)
    e_ref:    (1, TN, M, C)         relative positional embedding tile
    wqkv_ref: (3, C, C)             pre-transposed so  y = x @ w + b
    bqkv_ref: (3, 1, C)
    wp_ref:   (H, c, C)             per-head rows of proj_p.weight
    bp_ref:   (H, 1, c)
    wvp_ref:  (H, c, C)             per-head rows of proj_vp.weight
    bvp_ref:  (H, 1, c)
    hidden_ref / pos_ref: (1, TN, C)    attn_ref: (1, H, TN, M)
    """
    H, c, TN = num_heads, head_dim, tile_n
    C = H * c
    M = k_ref.shape[1]
    f32 = jnp.float32
    scale = 1.0 / float(c) ** 0.5

    cast = lambda x: x.astype(mxu_dtype)

    xq = q_ref[0]                      # (TN, C)
    xk = k_ref[0]                      # (M, C)
    xv = v_ref[0]                      # (M, C)
    e3 = cast(e_ref[0])                # (TN, M, C)

    # ---- q/k/v projections (MXU, f32 accumulate) ----------------------------
    q = jnp.dot(cast(xq), cast(wqkv_ref[0]), preferred_element_type=f32) + bqkv_ref[0]
    k = jnp.dot(cast(xk), cast(wqkv_ref[1]), preferred_element_type=f32) + bqkv_ref[1]
    v = jnp.dot(cast(xv), cast(wqkv_ref[2]), preferred_element_type=f32) + bqkv_ref[2]

    q_hm = jnp.transpose(q.reshape(TN, H, c), (1, 0, 2))    # (H, TN, c)
    k_hm = jnp.transpose(k.reshape(M, H, c), (1, 0, 2))     # (H, M, c)
    v_hm = jnp.transpose(v.reshape(M, H, c), (1, 0, 2))     # (H, M, c)

    # ---- attention scores ----------------------------------------------------
    se = jnp.einsum('hnc,hmc->hnm', cast(q_hm), cast(k_hm),
                    preferred_element_type=f32)              # (H, TN, M)
    # proj_p folded past the q.p einsum:  u[h,n,:] = q_h[n,:] @ Wp_h
    u = jnp.einsum('hnc,hcd->hnd', cast(q_hm), cast(wp_ref[...]),
                   preferred_element_type=f32)               # (H, TN, C)
    sp = jnp.einsum('hnd,nmd->hnm', cast(u), e3,
                    preferred_element_type=f32)              # (H, TN, M)
    sp_bias = jnp.einsum('hnc,hoc->hno', q_hm, bp_ref[...],
                         preferred_element_type=f32)         # (H, TN, 1)

    s = (se + sp + sp_bias) * scale                          # (H, TN, M), f32

    # ---- softmax + diagonal-masked softmax (shared exp) ----------------------
    m_row = jnp.max(s, axis=-1, keepdims=True)
    e_s = jnp.exp(s - m_row)
    denom = jnp.sum(e_s, axis=-1, keepdims=True)
    attn = e_s * pl.reciprocal(denom, approx=True)           # (H, TN, M)

    n0 = pl.program_id(1) * TN                               # global query offset
    row = jax.lax.broadcasted_iota(jnp.int32, (TN, M), 0) + n0
    col = jax.lax.broadcasted_iota(jnp.int32, (TN, M), 1)
    diag = (row == col)[None, :, :]                          # (1, TN, M)

    e_off = jnp.where(diag, 0.0, e_s)
    denom_m = jnp.sum(e_off, axis=-1, keepdims=True)
    attn_m = e_off * pl.reciprocal(denom_m, approx=True)     # (H, TN, M)

    # ---- outputs -------------------------------------------------------------
    hid = jnp.einsum('hnm,hmc->hnc', cast(attn), cast(v_hm),
                     preferred_element_type=f32)             # (H, TN, c)
    # proj_vp folded past the weighted sum:
    #   t[h,n,:] = sum_m attn_m[h,n,m] * embed[n,m,:]
    t = jnp.einsum('hnm,nmd->hnd', cast(attn_m), e3,
                   preferred_element_type=f32)               # (H, TN, C)
    pos = jnp.einsum('hnd,hcd->hnc', cast(t), cast(wvp_ref[...]),
                     preferred_element_type=f32) + bvp_ref[...]   # (H, TN, c)

    attn_ref[0] = attn.astype(attn_ref.dtype)
    hidden_ref[0] = jnp.transpose(hid, (1, 0, 2)).reshape(TN, C).astype(hidden_ref.dtype)
    pos_ref[0] = jnp.transpose(pos, (1, 0, 2)).reshape(TN, C).astype(pos_ref.dtype)


def _vmem_limit_bytes():
    """~3/4 of physical VMEM (capped at 96 MiB), or None if not queryable."""
    try:
        cap = int(pltpu.get_tpu_info().vmem_capacity_bytes)
        return min((cap * 3) // 4, 96 * 1024 * 1024)
    except Exception:
        return None


def _choose_tile_n(n, m, c_model, itemsize, vmem_budget):
    """Largest query tile that divides N, is a multiple of 8 (or == N), and keeps
    the double-buffered embed tile within ~half of the VMEM budget."""
    if n <= 8:
        return n
    row_bytes = max(1, m * c_model * itemsize)        # one query row of embed_qk
    cap = int(vmem_budget // (4 * row_bytes))         # 2 buffers, ~50% of budget
    cap = max(8, min(cap, 512, n))
    tn = (cap // 8) * 8
    while tn >= 8:
        if n % tn == 0:
            return tn
        tn -= 8
    # TODO(synk): pad N (and M) to multiples of 8/128 in the wrapper for ragged shapes
    # instead of falling back to a full-N tile.
    return n


def rpe_multi_head_attention(input_q, input_k, input_v, embed_qk, params, num_heads,
                             *, tile_n=None, use_bf16_matmul=False):
    """Pallas forward of RPEMultiHeadAttention.

    params = (wq, bq, wk, bk, wv, bv, wp, bp, wvp, bvp), weights in the PyTorch
    nn.Linear convention (out_features, in_features).
    Returns (hidden_states (B,N,C), attention_scores (B,H,N,M), pos_states (B,N,C)).
    """
    B, N, C = input_q.shape
    M = input_k.shape[1]
    assert C % num_heads == 0
    H = num_heads
    c = C // H
    f32 = jnp.float32
    in_dtype = jnp.bfloat16 if use_bf16_matmul else jnp.float32
    mxu_dtype = in_dtype

    # TODO(synk): key_weights / key_masks / attention_factors (default None in the
    # PyTorch module) and non-identity dropout are not implemented.

    wq, bq, wk, bk, wv, bv, wp, bp, wvp, bvp = params
    w_qkv = jnp.stack([wq.T, wk.T, wv.T]).astype(in_dtype)        # (3, C, C): y = x @ w
    b_qkv = jnp.stack([bq, bk, bv]).astype(f32)[:, None, :]       # (3, 1, C)
    wp_r = wp.astype(in_dtype).reshape(H, c, C)                   # per-head rows of Wp
    bp_r = bp.astype(f32).reshape(H, 1, c)
    wvp_r = wvp.astype(in_dtype).reshape(H, c, C)
    bvp_r = bvp.astype(f32).reshape(H, 1, c)

    vmem_limit = _vmem_limit_bytes()
    if tile_n is None:
        budget = vmem_limit if vmem_limit is not None else 64 * 1024 * 1024
        tile_n = _choose_tile_n(N, M, C, jnp.dtype(in_dtype).itemsize, budget)
    assert N % tile_n == 0
    n_tiles = N // tile_n

    kernel = functools.partial(
        _rpe_mha_kernel, num_heads=H, head_dim=c, tile_n=tile_n, mxu_dtype=mxu_dtype)

    out_shapes = (
        jax.ShapeDtypeStruct((B, N, C), f32),             # hidden_states
        jax.ShapeDtypeStruct((B, H, N, M), f32),          # attention_scores
        jax.ShapeDtypeStruct((B, N, C), f32),             # pos_states
    )

    grid_spec = pltpu.PrefetchScalarGridSpec(
        num_scalar_prefetch=0,
        grid=(B, n_tiles),
        in_specs=[
            pl.BlockSpec((1, tile_n, C), lambda b, n: (b, n, 0)),        # input_q
            pl.BlockSpec((1, M, C), lambda b, n: (b, 0, 0)),             # input_k
            pl.BlockSpec((1, M, C), lambda b, n: (b, 0, 0)),             # input_v
            pl.BlockSpec((1, tile_n, M, C), lambda b, n: (b, n, 0, 0)),  # embed_qk tile
            pl.BlockSpec((3, C, C), lambda b, n: (0, 0, 0)),             # Wq/Wk/Wv^T
            pl.BlockSpec((3, 1, C), lambda b, n: (0, 0, 0)),             # bq/bk/bv
            pl.BlockSpec((H, c, C), lambda b, n: (0, 0, 0)),             # Wp per head
            pl.BlockSpec((H, 1, c), lambda b, n: (0, 0, 0)),             # bp per head
            pl.BlockSpec((H, c, C), lambda b, n: (0, 0, 0)),             # Wvp per head
            pl.BlockSpec((H, 1, c), lambda b, n: (0, 0, 0)),             # bvp per head
        ],
        out_specs=[
            pl.BlockSpec((1, tile_n, C), lambda b, n: (b, n, 0)),
            pl.BlockSpec((1, H, tile_n, M), lambda b, n: (b, 0, n, 0)),
            pl.BlockSpec((1, tile_n, C), lambda b, n: (b, n, 0)),
        ],
    )

    cp_kwargs = dict(dimension_semantics=("parallel", "parallel"))
    if vmem_limit is not None:
        cp_kwargs["vmem_limit_bytes"] = vmem_limit

    return pl.pallas_call(
        kernel,
        out_shape=out_shapes,
        grid_spec=grid_spec,
        compiler_params=pltpu.CompilerParams(**cp_kwargs),
    )(input_q.astype(in_dtype), input_k.astype(in_dtype), input_v.astype(in_dtype),
      embed_qk.astype(in_dtype), w_qkv, b_qkv, wp_r, bp_r, wvp_r, bvp_r)


def _reference_forward(input_q, input_k, input_v, embed_qk, params, num_heads):
    """Plain-JAX port of the PyTorch forward (dropout=None -> identity)."""
    wq, bq, wk, bk, wv, bv, wp, bp, wvp, bvp = params
    B, N, C = input_q.shape
    M = input_k.shape[1]
    H = num_heads
    c = C // H
    q = (input_q @ wq.T + bq).reshape(B, N, H, c).transpose(0, 2, 1, 3)
    k = (input_k @ wk.T + bk).reshape(B, M, H, c).transpose(0, 2, 1, 3)
    v = (input_v @ wv.T + bv).reshape(B, M, H, c).transpose(0, 2, 1, 3)
    p = (embed_qk @ wp.T + bp).reshape(B, N, M, H, c).transpose(0, 3, 1, 2, 4)
    vp = (embed_qk @ wvp.T + bvp).reshape(B, N, M, H, c).transpose(0, 3, 1, 2, 4)
    sp = jnp.einsum('bhnc,bhnmc->bhnm', q, p)
    se = jnp.einsum('bhnc,bhmc->bhnm', q, k)
    s = (se + sp) / (c ** 0.5)
    attn = jax.nn.softmax(s, axis=-1)
    diag = jnp.eye(N, M, dtype=bool)
    attn_masked = jax.nn.softmax(jnp.where(diag, -jnp.inf, s), axis=-1)
    hidden = jnp.einsum('bhnm,bhmc->bhnc', attn, v).transpose(0, 2, 1, 3).reshape(B, N, C)
    pos = jnp.sum(attn_masked[..., None] * vp, axis=-2).transpose(0, 2, 1, 3).reshape(B, N, C)
    return hidden, attn, pos


if __name__ == "__main__":
    B, N, M, C, H = 2, 8, 8, 32, 4   # d_model=32, num_heads=4

    key = jax.random.PRNGKey(0)
    ks = jax.random.split(key, 14)

    input_q = jax.random.normal(ks[0], (B, N, C), jnp.float32)
    input_k = jax.random.normal(ks[1], (B, M, C), jnp.float32)
    input_v = jax.random.normal(ks[2], (B, M, C), jnp.float32)
    embed_qk = jax.random.normal(ks[3], (B, N, M, C), jnp.float32)

    bound = 1.0 / (C ** 0.5)   # PyTorch nn.Linear default init range

    def make_linear(kw, kb):
        w = jax.random.uniform(kw, (C, C), jnp.float32, -bound, bound)  # (out, in)
        b = jax.random.uniform(kb, (C,), jnp.float32, -bound, bound)
        return w, b

    wq, bq = make_linear(ks[4], ks[5])
    wk, bk = make_linear(ks[6], ks[7])
    wv, bv = make_linear(ks[8], ks[9])
    wp, bp = make_linear(ks[10], ks[11])
    wvp, bvp = make_linear(ks[12], ks[13])
    params = (wq, bq, wk, bk, wv, bv, wp, bp, wvp, bvp)

    # Default f32 MXU path here so the strict tolerance check holds on every chip;
    # pass use_bf16_matmul=True on v6e/v7x for ~2x MXU throughput and half the e DMA.
    hidden, attn, pos = rpe_multi_head_attention(
        input_q, input_k, input_v, embed_qk, params, num_heads=H)
    jax.block_until_ready((hidden, attn, pos))

    hidden_ref, attn_ref, pos_ref = _reference_forward(
        input_q, input_k, input_v, embed_qk, params, num_heads=H)

    assert hidden.shape == (B, N, C) and attn.shape == (B, H, N, M) and pos.shape == (B, N, C)
    assert bool(jnp.all(jnp.isfinite(hidden))) and bool(jnp.all(jnp.isfinite(pos)))
    assert jnp.allclose(hidden, hidden_ref, rtol=2e-2, atol=2e-2)
    assert jnp.allclose(attn, attn_ref, rtol=2e-2, atol=2e-2)
    assert jnp.allclose(pos, pos_ref, rtol=2e-2, atol=2e-2)

    print("KERNEL_OK")
</pallas_src>

<mosaic_0001>
module attributes {stable_mosaic.version = 11 : i64} {
  func.func @_rpe_mha_kernel(%arg0: i32, %arg1: i32, %arg2: memref<1x8x32xf32, #tpu.memory_space<vmem>>, %arg3: memref<1x8x32xf32, #tpu.memory_space<vmem>>, %arg4: memref<1x8x32xf32, #tpu.memory_space<vmem>>, %arg5: memref<1x8x8x32xf32, #tpu.memory_space<vmem>>, %arg6: memref<3x32x32xf32, #tpu.memory_space<vmem>>, %arg7: memref<3x1x32xf32, #tpu.memory_space<vmem>>, %arg8: memref<4x8x32xf32, #tpu.memory_space<vmem>>, %arg9: memref<4x1x8xf32, #tpu.memory_space<vmem>>, %arg10: memref<4x8x32xf32, #tpu.memory_space<vmem>>, %arg11: memref<4x1x8xf32, #tpu.memory_space<vmem>>, %arg12: memref<1x8x32xf32, #tpu.memory_space<vmem>>, %arg13: memref<1x4x8x8xf32, #tpu.memory_space<vmem>>, %arg14: memref<1x8x32xf32, #tpu.memory_space<vmem>>) attributes {dimension_semantics = [#tpu.dimension_semantics<parallel>, #tpu.dimension_semantics<parallel>], iteration_bounds = array<i64: 2, 1>, scalar_prefetch = 0 : i64, scratch_operands = 0 : i64, tpu.core_type = #tpu.core_type<tc>, window_params = [{transform_indices = @transform_0, window_bounds = array<i64: 1, 8, 32>}, {transform_indices = @transform_1, window_bounds = array<i64: 1, 8, 32>}, {transform_indices = @transform_2, window_bounds = array<i64: 1, 8, 32>}, {transform_indices = @transform_3, window_bounds = array<i64: 1, 8, 8, 32>}, {pipeline_mode = #tpu.pipeline_mode<synchronous>, transform_indices = @transform_4, window_bounds = array<i64: 3, 32, 32>}, {pipeline_mode = #tpu.pipeline_mode<synchronous>, transform_indices = @transform_5, window_bounds = array<i64: 3, 1, 32>}, {pipeline_mode = #tpu.pipeline_mode<synchronous>, transform_indices = @transform_6, window_bounds = array<i64: 4, 8, 32>}, {pipeline_mode = #tpu.pipeline_mode<synchronous>, transform_indices = @transform_7, window_bounds = array<i64: 4, 1, 8>}, {pipeline_mode = #tpu.pipeline_mode<synchronous>, transform_indices = @transform_8, window_bounds = array<i64: 4, 8, 32>}, {pipeline_mode = #tpu.pipeline_mode<synchronous>, transform_indices = @transform_9, window_bounds = array<i64: 4, 1, 8>}, {transform_indices = @transform_10, window_bounds = array<i64: 1, 8, 32>}, {transform_indices = @transform_11, window_bounds = array<i64: 1, 4, 8, 8>}, {transform_indices = @transform_12, window_bounds = array<i64: 1, 8, 32>}]} {
    %c0 = arith.constant 0 : index
    %c0_0 = arith.constant 0 : index
    %c0_1 = arith.constant 0 : index
    %0 = vector.load %arg2[%c0, %c0_0, %c0_1] : memref<1x8x32xf32, #tpu.memory_space<vmem>>, vector<1x8x32xf32>
    %1 = vector.shape_cast %0 : vector<1x8x32xf32> to vector<8x32xf32>
    %c0_2 = arith.constant 0 : index
    %c0_3 = arith.constant 0 : index
    %c0_4 = arith.constant 0 : index
    %2 = vector.load %arg3[%c0_2, %c0_3, %c0_4] : memref<1x8x32xf32, #tpu.memory_space<vmem>>, vector<1x8x32xf32>
    %3 = vector.shape_cast %2 : vector<1x8x32xf32> to vector<8x32xf32>
    %c0_5 = arith.constant 0 : index
    %c0_6 = arith.constant 0 : index
    %c0_7 = arith.constant 0 : index
    %4 = vector.load %arg4[%c0_5, %c0_6, %c0_7] : memref<1x8x32xf32, #tpu.memory_space<vmem>>, vector<1x8x32xf32>
    %5 = vector.shape_cast %4 : vector<1x8x32xf32> to vector<8x32xf32>
    %c0_8 = arith.constant 0 : index
    %c0_9 = arith.constant 0 : index
    %c0_10 = arith.constant 0 : index
    %c0_11 = arith.constant 0 : index
    %6 = vector.load %arg5[%c0_8, %c0_9, %c0_10, %c0_11] : memref<1x8x8x32xf32, #tpu.memory_space<vmem>>, vector<1x8x8x32xf32>
    %7 = vector.shape_cast %6 : vector<1x8x8x32xf32> to vector<8x8x32xf32>
    %c0_12 = arith.constant 0 : index
    %c0_13 = arith.constant 0 : index
    %c0_14 = arith.constant 0 : index
    %8 = vector.load %arg6[%c0_12, %c0_13, %c0_14] : memref<3x32x32xf32, #tpu.memory_space<vmem>>, vector<1x32x32xf32>
    %9 = vector.shape_cast %8 : vector<1x32x32xf32> to vector<32x32xf32>
    %cst = arith.constant dense<0.000000e+00> : vector<8x32xf32>
    %10 = tpu.matmul %1, %9, %cst {dimension_numbers = #tpu.dot_dimension_numbers<[1], [0], [0], [1], [0, 0, 1, 1], [], []>} : vector<8x32xf32>, vector<32x32xf32>, vector<8x32xf32> -> vector<8x32xf32>
    %c0_15 = arith.constant 0 : index
    %c0_16 = arith.constant 0 : index
    %c0_17 = arith.constant 0 : index
    %11 = vector.load %arg7[%c0_15, %c0_16, %c0_17] : memref<3x1x32xf32, #tpu.memory_space<vmem>>, vector<1x1x32xf32>
    %12 = vector.shape_cast %11 : vector<1x1x32xf32> to vector<1x32xf32>
    %13 = vector.broadcast %12 : vector<1x32xf32> to vector<8x32xf32>
    %14 = arith.addf %10, %13 : vector<8x32xf32>
    %c1 = arith.constant 1 : index
    %c0_18 = arith.constant 0 : index
    %c0_19 = arith.constant 0 : index
    %15 = vector.load %arg6[%c1, %c0_18, %c0_19] : memref<3x32x32xf32, #tpu.memory_space<vmem>>, vector<1x32x32xf32>
    %16 = vector.shape_cast %15 : vector<1x32x32xf32> to vector<32x32xf32>
    %cst_20 = arith.constant dense<0.000000e+00> : vector<8x32xf32>
    %17 = tpu.matmul %3, %16, %cst_20 {dimension_numbers = #tpu.dot_dimension_numbers<[1], [0], [0], [1], [0, 0, 1, 1], [], []>} : vector<8x32xf32>, vector<32x32xf32>, vector<8x32xf32> -> vector<8x32xf32>
    %c1_21 = arith.constant 1 : index
    %c0_22 = arith.constant 0 : index
    %c0_23 = arith.constant 0 : index
    %18 = vector.load %arg7[%c1_21, %c0_22, %c0_23] : memref<3x1x32xf32, #tpu.memory_space<vmem>>, vector<1x1x32xf32>
    %19 = vector.shape_cast %18 : vector<1x1x32xf32> to vector<1x32xf32>
    %20 = vector.broadcast %19 : vector<1x32xf32> to vector<8x32xf32>
    %21 = arith.addf %17, %20 : vector<8x32xf32>
    %c2 = arith.constant 2 : index
    %c0_24 = arith.constant 0 : index
    %c0_25 = arith.constant 0 : index
    %22 = vector.load %arg6[%c2, %c0_24, %c0_25] : memref<3x32x32xf32, #tpu.memory_space<vmem>>, vector<1x32x32xf32>
    %23 = vector.shape_cast %22 : vector<1x32x32xf32> to vector<32x32xf32>
    %cst_26 = arith.constant dense<0.000000e+00> : vector<8x32xf32>
    %24 = tpu.matmul %5, %23, %cst_26 {dimension_numbers = #tpu.dot_dimension_numbers<[1], [0], [0], [1], [0, 0, 1, 1], [], []>} : vector<8x32xf32>, vector<32x32xf32>, vector<8x32xf32> -> vector<8x32xf32>
    %c2_27 = arith.constant 2 : index
    %c0_28 = arith.constant 0 : index
    %c0_29 = arith.constant 0 : index
    %25 = vector.load %arg7[%c2_27, %c0_28, %c0_29] : memref<3x1x32xf32, #tpu.memory_space<vmem>>, vector<1x1x32xf32>
    %26 = vector.shape_cast %25 : vector<1x1x32xf32> to vector<1x32xf32>
    %27 = vector.broadcast %26 : vector<1x32xf32> to vector<8x32xf32>
    %28 = arith.addf %24, %27 : vector<8x32xf32>
    %29 = vector.shape_cast %14 : vector<8x32xf32> to vector<8x4x8xf32>
    %30 = tpu.transpose %29, [1, 0, 2] : vector<8x4x8xf32> -> vector<4x8x8xf32>
    %31 = vector.shape_cast %21 : vector<8x32xf32> to vector<8x4x8xf32>
    %32 = tpu.transpose %31, [1, 0, 2] : vector<8x4x8xf32> -> vector<4x8x8xf32>
    %33 = vector.shape_cast %28 : vector<8x32xf32> to vector<8x4x8xf32>
    %34 = tpu.transpose %33, [1, 0, 2] : vector<8x4x8xf32> -> vector<4x8x8xf32>
    "tpu.trace_start"() <{level = 10 : i32, message = "hnc,hmc->hnm"}> : () -> ()
    %cst_30 = arith.constant dense<0.000000e+00> : vector<4x8x8xf32>
    %35 = tpu.matmul %30, %32, %cst_30 {dimension_numbers = #tpu.dot_dimension_numbers<[2], [2], [1], [1], [0, 0, 0, 1, 1, 1], [0], [0]>} : vector<4x8x8xf32>, vector<4x8x8xf32>, vector<4x8x8xf32> -> vector<4x8x8xf32>
    "tpu.trace_stop"() : () -> ()
    %c0_31 = arith.constant 0 : index
    %c0_32 = arith.constant 0 : index
    %c0_33 = arith.constant 0 : index
    %36 = vector.load %arg8[%c0_31, %c0_32, %c0_33] : memref<4x8x32xf32, #tpu.memory_space<vmem>>, vector<4x8x32xf32>
    "tpu.trace_start"() <{level = 10 : i32, message = "hnc,hcd->hnd"}> : () -> ()
    %cst_34 = arith.constant dense<0.000000e+00> : vector<4x8x32xf32>
    %37 = tpu.matmul %30, %36, %cst_34 {dimension_numbers = #tpu.dot_dimension_numbers<[2], [1], [1], [2], [0, 0, 0, 1, 1, 2], [0], [0]>} : vector<4x8x8xf32>, vector<4x8x32xf32>, vector<4x8x32xf32> -> vector<4x8x32xf32>
    "tpu.trace_stop"() : () -> ()
    "tpu.trace_start"() <{level = 10 : i32, message = "hnd,nmd->hnm"}> : () -> ()
    %cst_35 = arith.constant dense<0.000000e+00> : vector<8x8x4xf32>
    %38 = tpu.matmul %7, %37, %cst_35 {dimension_numbers = #tpu.dot_dimension_numbers<[2], [2], [1], [0], [0, 0, 0, 1, 1, 0], [0], [1]>} : vector<8x8x32xf32>, vector<4x8x32xf32>, vector<8x8x4xf32> -> vector<8x8x4xf32>
    %39 = tpu.transpose %38, [2, 0, 1] : vector<8x8x4xf32> -> vector<4x8x8xf32>
    "tpu.trace_stop"() : () -> ()
    %c0_36 = arith.constant 0 : index
    %c0_37 = arith.constant 0 : index
    %c0_38 = arith.constant 0 : index
    %40 = vector.load %arg9[%c0_36, %c0_37, %c0_38] : memref<4x1x8xf32, #tpu.memory_space<vmem>>, vector<4x1x8xf32>
    "tpu.trace_start"() <{level = 10 : i32, message = "hnc,hoc->hno"}> : () -> ()
    %cst_39 = arith.constant dense<0.000000e+00> : vector<4x8x1xf32>
    %41 = tpu.matmul %30, %40, %cst_39 {dimension_numbers = #tpu.dot_dimension_numbers<[2], [2], [1], [1], [0, 0, 0, 1, 1, 1], [0], [0]>} : vector<4x8x8xf32>, vector<4x1x8xf32>, vector<4x8x1xf32> -> vector<4x8x1xf32>
    "tpu.trace_stop"() : () -> ()
    %42 = arith.addf %35, %39 : vector<4x8x8xf32>
    %43 = vector.broadcast %41 : vector<4x8x1xf32> to vector<4x8x8xf32>
    %44 = arith.addf %42, %43 : vector<4x8x8xf32>
    %cst_40 = arith.constant 0.353553385 : f32
    %45 = vector.broadcast %cst_40 : f32 to vector<4x8x8xf32>
    %46 = arith.mulf %44, %45 : vector<4x8x8xf32>
    %cst_41 = arith.constant dense<0xFF800000> : vector<4x8xf32>
    %47 = vector.multi_reduction <maximumf>, %46, %cst_41 [2] : vector<4x8x8xf32> to vector<4x8xf32>
    %48 = vector.shape_cast %47 : vector<4x8xf32> to vector<4x8x1xf32>
    %49 = vector.broadcast %48 : vector<4x8x1xf32> to vector<4x8x8xf32>
    %50 = arith.subf %46, %49 : vector<4x8x8xf32>
    %51 = math.exp %50 : vector<4x8x8xf32>
    %cst_42 = arith.constant dense<0.000000e+00> : vector<4x8xf32>
    %52 = vector.multi_reduction <add>, %51, %cst_42 [2] : vector<4x8x8xf32> to vector<4x8xf32>
    %53 = vector.shape_cast %52 : vector<4x8xf32> to vector<4x8x1xf32>
    %54 = tpu.reciprocal %53 {approx = true} : vector<4x8x1xf32> -> vector<4x8x1xf32>
    %55 = vector.broadcast %54 : vector<4x8x1xf32> to vector<4x8x8xf32>
    %56 = arith.mulf %51, %55 : vector<4x8x8xf32>
    %c8_i32 = arith.constant 8 : i32
    %57 = arith.muli %arg1, %c8_i32 : i32
    %58 = tpu.iota {dimensions = array<i32: 0>} : vector<8x8xi32>
    %59 = vector.broadcast %57 : i32 to vector<8x8xi32>
    %60 = arith.addi %58, %59 : vector<8x8xi32>
    %61 = tpu.iota {dimensions = array<i32: 1>} : vector<8x8xi32>
    %62 = arith.cmpi eq, %60, %61 : vector<8x8xi32>
    %63 = vector.shape_cast %62 : vector<8x8xi1> to vector<1x8x8xi1>
    %cst_43 = arith.constant 0.000000e+00 : f32
    %64 = vector.shape_cast %63 : vector<1x8x8xi1> to vector<1x8x8xi1>
    %65 = vector.broadcast %64 : vector<1x8x8xi1> to vector<4x8x8xi1>
    %66 = vector.broadcast %cst_43 : f32 to vector<4x8x8xf32>
    %67 = arith.select %65, %66, %51 : vector<4x8x8xi1>, vector<4x8x8xf32>
    %cst_44 = arith.constant dense<0.000000e+00> : vector<4x8xf32>
    %68 = vector.multi_reduction <add>, %67, %cst_44 [2] : vector<4x8x8xf32> to vector<4x8xf32>
    %69 = vector.shape_cast %68 : vector<4x8xf32> to vector<4x8x1xf32>
    %70 = tpu.reciprocal %69 {approx = true} : vector<4x8x1xf32> -> vector<4x8x1xf32>
    %71 = vector.broadcast %70 : vector<4x8x1xf32> to vector<4x8x8xf32>
    %72 = arith.mulf %67, %71 : vector<4x8x8xf32>
    "tpu.trace_start"() <{level = 10 : i32, message = "hnm,hmc->hnc"}> : () -> ()
    %cst_45 = arith.constant dense<0.000000e+00> : vector<4x8x8xf32>
    %73 = tpu.matmul %56, %34, %cst_45 {dimension_numbers = #tpu.dot_dimension_numbers<[2], [1], [1], [2], [0, 0, 0, 1, 1, 2], [0], [0]>} : vector<4x8x8xf32>, vector<4x8x8xf32>, vector<4x8x8xf32> -> vector<4x8x8xf32>
    "tpu.trace_stop"() : () -> ()
    "tpu.trace_start"() <{level = 10 : i32, message = "hnm,nmd->hnd"}> : () -> ()
    %cst_46 = arith.constant dense<0.000000e+00> : vector<8x32x4xf32>
    %74 = tpu.matmul %7, %72, %cst_46 {dimension_numbers = #tpu.dot_dimension_numbers<[1], [2], [2], [0], [0, 0, 0, 2, 1, 0], [0], [1]>} : vector<8x8x32xf32>, vector<4x8x8xf32>, vector<8x32x4xf32> -> vector<8x32x4xf32>
    %75 = tpu.transpose %74, [2, 0, 1] : vector<8x32x4xf32> -> vector<4x8x32xf32>
    "tpu.trace_stop"() : () -> ()
    %c0_47 = arith.constant 0 : index
    %c0_48 = arith.constant 0 : index
    %c0_49 = arith.constant 0 : index
    %76 = vector.load %arg10[%c0_47, %c0_48, %c0_49] : memref<4x8x32xf32, #tpu.memory_space<vmem>>, vector<4x8x32xf32>
    "tpu.trace_start"() <{level = 10 : i32, message = "hnd,hcd->hnc"}> : () -> ()
    %cst_50 = arith.constant dense<0.000000e+00> : vector<4x8x8xf32>
    %77 = tpu.matmul %75, %76, %cst_50 {dimension_numbers = #tpu.dot_dimension_numbers<[2], [2], [1], [1], [0, 0, 0, 1, 1, 1], [0], [0]>} : vector<4x8x32xf32>, vector<4x8x32xf32>, vector<4x8x8xf32> -> vector<4x8x8xf32>
    "tpu.trace_stop"() : () -> ()
    %c0_51 = arith.constant 0 : index
    %c0_52 = arith.constant 0 : index
    %c0_53 = arith.constant 0 : index
    %78 = vector.load %arg11[%c0_51, %c0_52, %c0_53] : memref<4x1x8xf32, #tpu.memory_space<vmem>>, vector<4x1x8xf32>
    %79 = vector.broadcast %78 : vector<4x1x8xf32> to vector<4x8x8xf32>
    %80 = arith.addf %77, %79 : vector<4x8x8xf32>
    %c0_54 = arith.constant 0 : index
    %c0_55 = arith.constant 0 : index
    %c0_56 = arith.constant 0 : index
    %c0_57 = arith.constant 0 : index
    %81 = vector.load %arg13[%c0_54, %c0_55, %c0_56, %c0_57] : memref<1x4x8x8xf32, #tpu.memory_space<vmem>>, vector<1x4x8x8xf32>
    %82 = vector.shape_cast %81 : vector<1x4x8x8xf32> to vector<4x8x8xf32>
    %83 = vector.shape_cast %56 : vector<4x8x8xf32> to vector<1x4x8x8xf32>
    tpu.vector_store %arg13[%c0_54, %c0_55, %c0_56, %c0_57], %83 {strides = array<i32>} : memref<1x4x8x8xf32, #tpu.memory_space<vmem>>, vector<1x4x8x8xf32>,
    %84 = tpu.transpose %73, [1, 0, 2] : vector<4x8x8xf32> -> vector<8x4x8xf32>
    %85 = vector.shape_cast %84 : vector<8x4x8xf32> to vector<8x32xf32>
    %c0_58 = arith.constant 0 : index
    %c0_59 = arith.constant 0 : index
    %c0_60 = arith.constant 0 : index
    %86 = vector.load %arg12[%c0_58, %c0_59, %c0_60] : memref<1x8x32xf32, #tpu.memory_space<vmem>>, vector<1x8x32xf32>
    %87 = vector.shape_cast %86 : vector<1x8x32xf32> to vector<8x32xf32>
    %88 = vector.shape_cast %85 : vector<8x32xf32> to vector<1x8x32xf32>
    tpu.vector_store %arg12[%c0_58, %c0_59, %c0_60], %88 {strides = array<i32>} : memref<1x8x32xf32, #tpu.memory_space<vmem>>, vector<1x8x32xf32>,
    %89 = tpu.transpose %80, [1, 0, 2] : vector<4x8x8xf32> -> vector<8x4x8xf32>
    %90 = vector.shape_cast %89 : vector<8x4x8xf32> to vector<8x32xf32>
    %c0_61 = arith.constant 0 : index
    %c0_62 = arith.constant 0 : index
    %c0_63 = arith.constant 0 : index
    %91 = vector.load %arg14[%c0_61, %c0_62, %c0_63] : memref<1x8x32xf32, #tpu.memory_space<vmem>>, vector<1x8x32xf32>
    %92 = vector.shape_cast %91 : vector<1x8x32xf32> to vector<8x32xf32>
    %93 = vector.shape_cast %90 : vector<8x32xf32> to vector<1x8x32xf32>
    tpu.vector_store %arg14[%c0_61, %c0_62, %c0_63], %93 {strides = array<i32>} : memref<1x8x32xf32, #tpu.memory_space<vmem>>, vector<1x8x32xf32>,
    return
  }
  func.func @transform_0(%arg0: i32, %arg1: i32) -> (i32, i32, i32) {
    %c0_i32 = arith.constant 0 : i32
    %c0_i32_0 = arith.constant 0 : i32
    return %arg0, %arg1, %c0_i32 : i32, i32, i32
  }
  func.func @transform_1(%arg0: i32, %arg1: i32) -> (i32, i32, i32) {
    %c0_i32 = arith.constant 0 : i32
    %c0_i32_0 = arith.constant 0 : i32
    %c0_i32_1 = arith.constant 0 : i32
    return %arg0, %c0_i32, %c0_i32_0 : i32, i32, i32
  }
  func.func @transform_2(%arg0: i32, %arg1: i32) -> (i32, i32, i32) {
    %c0_i32 = arith.constant 0 : i32
    %c0_i32_0 = arith.constant 0 : i32
    %c0_i32_1 = arith.constant 0 : i32
    return %arg0, %c0_i32, %c0_i32_0 : i32, i32, i32
  }
  func.func @transform_3(%arg0: i32, %arg1: i32) -> (i32, i32, i32, i32) {
    %c0_i32 = arith.constant 0 : i32
    %c0_i32_0 = arith.constant 0 : i32
    %c0_i32_1 = arith.constant 0 : i32
    return %arg0, %arg1, %c0_i32, %c0_i32_0 : i32, i32, i32, i32
  }
  func.func @transform_4(%arg0: i32, %arg1: i32) -> (i32, i32, i32) {
    %c0_i32 = arith.constant 0 : i32
    %c0_i32_0 = arith.constant 0 : i32
    %c0_i32_1 = arith.constant 0 : i32
    %c0_i32_2 = arith.constant 0 : i32
    return %c0_i32, %c0_i32_0, %c0_i32_1 : i32, i32, i32
  }
  func.func @transform_5(%arg0: i32, %arg1: i32) -> (i32, i32, i32) {
    %c0_i32 = arith.constant 0 : i32
    %c0_i32_0 = arith.constant 0 : i32
    %c0_i32_1 = arith.constant 0 : i32
    %c0_i32_2 = arith.constant 0 : i32
    return %c0_i32, %c0_i32_0, %c0_i32_1 : i32, i32, i32
  }
  func.func @transform_6(%arg0: i32, %arg1: i32) -> (i32, i32, i32) {
    %c0_i32 = arith.constant 0 : i32
    %c0_i32_0 = arith.constant 0 : i32
    %c0_i32_1 = arith.constant 0 : i32
    %c0_i32_2 = arith.constant 0 : i32
    return %c0_i32, %c0_i32_0, %c0_i32_1 : i32, i32, i32
  }
  func.func @transform_7(%arg0: i32, %arg1: i32) -> (i32, i32, i32) {
    %c0_i32 = arith.constant 0 : i32
    %c0_i32_0 = arith.constant 0 : i32
    %c0_i32_1 = arith.constant 0 : i32
    %c0_i32_2 = arith.constant 0 : i32
    return %c0_i32, %c0_i32_0, %c0_i32_1 : i32, i32, i32
  }
  func.func @transform_8(%arg0: i32, %arg1: i32) -> (i32, i32, i32) {
    %c0_i32 = arith.constant 0 : i32
    %c0_i32_0 = arith.constant 0 : i32
    %c0_i32_1 = arith.constant 0 : i32
    %c0_i32_2 = arith.constant 0 : i32
    return %c0_i32, %c0_i32_0, %c0_i32_1 : i32, i32, i32
  }
  func.func @transform_9(%arg0: i32, %arg1: i32) -> (i32, i32, i32) {
    %c0_i32 = arith.constant 0 : i32
    %c0_i32_0 = arith.constant 0 : i32
    %c0_i32_1 = arith.constant 0 : i32
    %c0_i32_2 = arith.constant 0 : i32
    return %c0_i32, %c0_i32_0, %c0_i32_1 : i32, i32, i32
  }
  func.func @transform_10(%arg0: i32, %arg1: i32) -> (i32, i32, i32) {
    %c0_i32 = arith.constant 0 : i32
    %c0_i32_0 = arith.constant 0 : i32
    return %arg0, %arg1, %c0_i32 : i32, i32, i32
  }
  func.func @transform_11(%arg0: i32, %arg1: i32) -> (i32, i32, i32, i32) {
    %c0_i32 = arith.constant 0 : i32
    %c0_i32_0 = arith.constant 0 : i32
    %c0_i32_1 = arith.constant 0 : i32
    return %arg0, %c0_i32, %arg1, %c0_i32_0 : i32, i32, i32, i32
  }
  func.func @transform_12(%arg0: i32, %arg1: i32) -> (i32, i32, i32) {
    %c0_i32 = arith.constant 0 : i32
    %c0_i32_0 = arith.constant 0 : i32
    return %arg0, %arg1, %c0_i32 : i32, i32, i32
  }
}

</mosaic_0001>

<llo_original>
// kernel: tpu_custom_call.1
$region0: #{tpu_custom_call.1}
  #allocation0 [shape = 'u32[]', space=smem, size = 0x4, offset = 0x4, fixed_abs, tag = 'smem constant byte address 0x4 - core index']
  #allocation1 [shape = 'u32[144,128]{1,0:T(1,128)}', space=vmem, size = 0x12000, scoped, tag = 'internal scratch']
  %s0 = inlined_call_operand.hbm [shape: f32[2,8,32], index: 0, kind: input, shape index: {}]
  %s1 = inlined_call_operand.hbm [shape: f32[2,8,32], index: 1, kind: input, shape index: {}]
  %s2 = inlined_call_operand.hbm [shape: f32[2,8,32], index: 2, kind: input, shape index: {}]
  %s3 = inlined_call_operand.hbm [shape: f32[2,8,8,32], index: 3, kind: input, shape index: {}]
  %s4 = inlined_call_operand.hbm [shape: f32[3,32,32], index: 4, kind: input, shape index: {}]
  %s5 = inlined_call_operand.hbm [shape: f32[3,1,32], index: 5, kind: input, shape index: {}]
  %s6 = inlined_call_operand.hbm [shape: f32[4,8,32], index: 6, kind: input, shape index: {}]
  %s7 = inlined_call_operand.vmem [shape: f32[4,1,8], index: 7, kind: input, shape index: {}]
  %s8 = inlined_call_operand.hbm [shape: f32[4,8,32], index: 8, kind: input, shape index: {}]
  %s9 = inlined_call_operand.vmem [shape: f32[4,1,8], index: 9, kind: input, shape index: {}]
  %s10 = inlined_call_operand.hbm [shape: f32[2,8,32], index: 10, kind: output, shape index: {0}]
  %s11 = inlined_call_operand.hbm [shape: f32[2,4,8,8], index: 11, kind: output, shape index: {1}]
  %s12 = inlined_call_operand.hbm [shape: f32[2,8,32], index: 12, kind: output, shape index: {2}]
  %13 = xla_tuple %s10, %s11, %s12
  %s14 = sld [smem:[#allocation0]]
  $region121: #{tpu_custom_call.1} parent=0
    _
  %s16 = ssub.s32 1, %s14
  %s17 = scalar_select 0, %s16, %s14
  $region1: #{tpu_custom_call.1} parent=0
    #allocation2 [shape = 'u8[8192]{0}', space=vmem, size = 0x2000, scoped, tag = 'input window, operand 0']
    #allocation3 [shape = 's32[2]{0}', space=sflag, size = 0x8, scoped, tag = 'scoped memory for tpu_custom_call.1']
    #allocation4 [shape = 's32[2]{0}', space=sflag, size = 0x8, scoped, tag = 'scoped memory for tpu_custom_call.1']
    #allocation5 [shape = 'u8[8192]{0}', space=vmem, size = 0x2000, scoped, tag = 'input window, operand 1']
    #allocation6 [shape = 's32[2]{0}', space=sflag, size = 0x8, scoped, tag = 'scoped memory for tpu_custom_call.1']
    #allocation7 [shape = 'u8[8192]{0}', space=vmem, size = 0x2000, scoped, tag = 'input window, operand 2']
    #allocation8 [shape = 'u8[65536]{0}', space=vmem, size = 0x10000, scoped, tag = 'input window, operand 3']
    #allocation9 [shape = 's32[2]{0}', space=sflag, size = 0x8, scoped, tag = 'scoped memory for tpu_custom_call.1']
    #allocation10 [shape = 'u8[49152]{0}', space=vmem, size = 0xc000, scoped, tag = 'input window, operand 4, single buffered']
    #allocation11 [shape = 'u8[1536]{0}', space=vmem, size = 0x800, scoped, tag = 'input window, operand 5, single buffered']
    #allocation12 [shape = 's32[1]{0}', space=sflag, size = 0x4, scoped, tag = 'scoped memory for tpu_custom_call.1']
    #allocation13 [shape = 'u8[16384]{0}', space=vmem, size = 0x4000, scoped, tag = 'input window, operand 6, single buffered']
    #allocation14 [shape = 'u8[16384]{0}', space=vmem, size = 0x4000, scoped, tag = 'input window, operand 8, single buffered']
    #allocation15 [shape = 's32[1]{0}', space=sflag, size = 0x4, scoped, tag = 'scoped memory for tpu_custom_call.1']
    #allocation16 [shape = 'u8[8192]{0}', space=vmem, size = 0x2000, scoped, tag = 'output window, operand 0']
    #allocation17 [shape = 'u8[32768]{0}', space=vmem, size = 0x8000, scoped, tag = 'output window, operand 1']
    #allocation18 [shape = 's32[2]{0}', space=sflag, size = 0x8, scoped, tag = 'scoped memory for tpu_custom_call.1']
    #allocation19 [shape = 'u8[8192]{0}', space=vmem, size = 0x2000, scoped, tag = 'output window, operand 2']
    %18 = vsyncpa [#allocation3], 0
    %s19 = scalar_lea.sflag [#allocation3], 1
    %20 = vsyncpa %s19, 0
    %21 = vsyncpa [#allocation6], 0
    %s22 = scalar_lea.sflag [#allocation6], 1
    %23 = vsyncpa %s22, 0
    %24 = vsyncpa [#allocation9], 0
    %s25 = scalar_lea.sflag [#allocation9], 1
    %26 = vsyncpa %s25, 0
    %27 = vsyncpa [#allocation12], 0
    %28 = vsyncpa [#allocation15], 0
    %29 = vsyncpa [#allocation4], 0
    %s30 = scalar_lea.sflag [#allocation4], 1
    %31 = vsyncpa %s30, 0
    %32 = vsyncpa [#allocation18], 0
    %s33 = scalar_lea.sflag [#allocation18], 1
    %34 = vsyncpa %s33, 0
    loop: start=0, step=1, limit=4
    $region2: #{tpu_custom_call.1} parent=1 // loop_pre_header
      _
    $region3: #{tpu_custom_call.1} parent=1 // loop_header
      %s36 = sphi 0, %s40
      %p37 = scmp.ge.s32.totalorder %s36, 4
      %s43 = sphi 0, %s55
      %s44 = sphi 0, %s51
      %s45 = sphi 0, %s43
      %s46 = sphi 0, %s44
      %s47 = sphi 0, %s45
      %s48 = sphi 0, %s46
      %s60 = sphi 0, %s62
      %s63 = sphi 0, %s60
      %s64 = sphi 0, %s63
      %s80 = sphi 0, %s64
      %s86 = sphi 0, %s88
      %s89 = sphi 0, %s86
      %s90 = sphi 0, %s89
      %s106 = sphi 0, %s90
      %s112 = sphi 0, %s114
      %s115 = sphi 0, %s112
      %s116 = sphi 0, %s115
      %s132 = sphi 0, %s116
      %s140 = sphi 0, %s142
      %s143 = sphi 0, %s140
      %s144 = sphi 0, %s143
      %s160 = sphi 0, %s144
      %s164 = sphi 0, %s164
      %s166 = sphi 0, %s164
      %s167 = sphi 0, %s166
      %s181 = sphi 0, %s167
      %s185 = sphi 0, %s185
      %s187 = sphi 0, %s185
      %s188 = sphi 0, %s187
      %s202 = sphi 0, %s188
      %s206 = sphi 0, %s206
      %s208 = sphi 0, %s206
      %s209 = sphi 0, %s208
      %s223 = sphi 0, %s209
      %s227 = sphi 0, %s227
      %s229 = sphi 0, %s227
      %s230 = sphi 0, %s229
      %s244 = sphi 0, %s230
      %s248 = sphi 0, %s248
      %s250 = sphi 0, %s248
      %s251 = sphi 0, %s250
      %s265 = sphi 0, %s251
      %s269 = sphi 0, %s269
      %s271 = sphi 0, %s269
      %s272 = sphi 0, %s271
      %s286 = sphi 0, %s272
      %s294 = sphi 0, %s296
      %s297 = sphi 0, %s294
      %s298 = sphi 0, %s297
      %s314 = sphi 0, %s298
      %s322 = sphi 0, %s324
      %s325 = sphi 0, %s322
      %s326 = sphi 0, %s325
      %s342 = sphi 0, %s326
      %s350 = sphi 0, %s352
      %s353 = sphi 0, %s350
      %s354 = sphi 0, %s353
      %s370 = sphi 0, %s354
    $region4: #{tpu_custom_call.1} parent=1 // loop_header_branch
      %39 = sbr.rel (%p37) target = $region8
    $region5: #{tpu_custom_call.1} parent=1 // loop_body
      %s41 = ssub.s32 %s36, 1
      %s42 = ssub.s32 %s36, 2
      %s49 = sadd.s32 1, %s44
      %p50 = scmp.ge.s32.totalorder %s49, 1
      %s51 = scalar_select %p50, 0, %s49
      %s52 = sadd.s32 1, %s43
      %s53 = scalar_select %p50, %s52, %s43
      %p54 = scmp.ge.s32.totalorder %s53, 2
      %s55 = scalar_select %p54, 0, %s53
      %s56 = ssub.s32 %s43, %s55
      %s57 = ssub.s32 %s44, %s51
      %s58 = sor.u32 %s56, %s57
      %p59 = scmp.eq.s32.totalorder %s58, 0
      %s61 = sadd.s32 %s60, 1
      %s62 = scalar_select %p59, %s60, %s61
      %p65 = pneg %p59
      %p66 = scmp.eq.s32.totalorder %s36, 1
      %p67 = por %p65, %p66
      %p68 = scmp.ne.s32.totalorder %s60, %s63
      %p69 = scmp.eq.s32.totalorder %s36, 0
      %p70 = por %p68, %p69
      %p71 = scmp.ne.s32.totalorder %s60, %s63
      %p72 = scmp.eq.s32.totalorder %s41, 1
      %p73 = por %p71, %p72
      %p74 = scmp.ne.s32.totalorder %s63, %s64
      %p75 = scmp.eq.s32.totalorder %s41, 0
      %p76 = por %p74, %p75
      %p77 = scmp.ne.s32.totalorder %s63, %s64
      %p78 = scmp.eq.s32.totalorder %s42, 1
      %p79 = por %p77, %p78
      %p81 = scmp.ne.s32.totalorder %s64, %s80
      %p82 = scmp.eq.s32.totalorder %s42, 0
      %p83 = por %p81, %p82
      %s84 = ssub.s32 %s43, %s55
      %p85 = scmp.eq.s32.totalorder %s84, 0
      %s87 = sadd.s32 %s86, 1
      %s88 = scalar_select %p85, %s86, %s87
      %p91 = pneg %p85
      %p92 = scmp.eq.s32.totalorder %s36, 1
      %p93 = por %p91, %p92
      %p94 = scmp.ne.s32.totalorder %s86, %s89
      %p95 = scmp.eq.s32.totalorder %s36, 0
      %p96 = por %p94, %p95
      %p97 = scmp.ne.s32.totalorder %s86, %s89
      %p98 = scmp.eq.s32.totalorder %s41, 1
      %p99 = por %p97, %p98
      %p100 = scmp.ne.s32.totalorder %s89, %s90
      %p101 = scmp.eq.s32.totalorder %s41, 0
      %p102 = por %p100, %p101
      %p103 = scmp.ne.s32.totalorder %s89, %s90
      %p104 = scmp.eq.s32.totalorder %s42, 1
      %p105 = por %p103, %p104
      %p107 = scmp.ne.s32.totalorder %s90, %s106
      %p108 = scmp.eq.s32.totalorder %s42, 0
      %p109 = por %p107, %p108
      %s110 = ssub.s32 %s43, %s55
      %p111 = scmp.eq.s32.totalorder %s110, 0
      %s113 = sadd.s32 %s112, 1
      %s114 = scalar_select %p111, %s112, %s113
      %p117 = pneg %p111
      %p118 = scmp.eq.s32.totalorder %s36, 1
      %p119 = por %p117, %p118
      %p120 = scmp.ne.s32.totalorder %s112, %s115
      %p121 = scmp.eq.s32.totalorder %s36, 0
      %p122 = por %p120, %p121
      %p123 = scmp.ne.s32.totalorder %s112, %s115
      %p124 = scmp.eq.s32.totalorder %s41, 1
      %p125 = por %p123, %p124
      %p126 = scmp.ne.s32.totalorder %s115, %s116
      %p127 = scmp.eq.s32.totalorder %s41, 0
      %p128 = por %p126, %p127
      %p129 = scmp.ne.s32.totalorder %s115, %s116
      %p130 = scmp.eq.s32.totalorder %s42, 1
      %p131 = por %p129, %p130
      %p133 = scmp.ne.s32.totalorder %s116, %s132
      %p134 = scmp.eq.s32.totalorder %s42, 0
      %p135 = por %p133, %p134
      %s136 = ssub.s32 %s43, %s55
      %s137 = ssub.s32 %s44, %s51
      %s138 = sor.u32 %s136, %s137
      %p139 = scmp.eq.s32.totalorder %s138, 0
      %s141 = sadd.s32 %s140, 1
      %s142 = scalar_select %p139, %s140, %s141
      %p145 = pneg %p139
      %p146 = scmp.eq.s32.totalorder %s36, 1
      %p147 = por %p145, %p146
      %p148 = scmp.ne.s32.totalorder %s140, %s143
      %p149 = scmp.eq.s32.totalorder %s36, 0
      %p150 = por %p148, %p149
      %p151 = scmp.ne.s32.totalorder %s140, %s143
      %p152 = scmp.eq.s32.totalorder %s41, 1
      %p153 = por %p151, %p152
      %p154 = scmp.ne.s32.totalorder %s143, %s144
      %p155 = scmp.eq.s32.totalorder %s41, 0
      %p156 = por %p154, %p155
      %p157 = scmp.ne.s32.totalorder %s143, %s144
      %p158 = scmp.eq.s32.totalorder %s42, 1
      %p159 = por %p157, %p158
      %p161 = scmp.ne.s32.totalorder %s144, %s160
      %p162 = scmp.eq.s32.totalorder %s42, 0
      %p163 = por %p161, %p162
      %s165 = sadd.s32 %s164, 1
      %p168 = scmp.eq.s32.totalorder %s36, 1
      %p169 = scmp.ne.s32.totalorder %s164, %s166
      %p170 = scmp.eq.s32.totalorder %s36, 0
      %p171 = por %p169, %p170
      %p172 = scmp.ne.s32.totalorder %s164, %s166
      %p173 = scmp.eq.s32.totalorder %s41, 1
      %p174 = por %p172, %p173
      %p175 = scmp.ne.s32.totalorder %s166, %s167
      %p176 = scmp.eq.s32.totalorder %s41, 0
      %p177 = por %p175, %p176
      %p178 = scmp.ne.s32.totalorder %s166, %s167
      %p179 = scmp.eq.s32.totalorder %s42, 1
      %p180 = por %p178, %p179
      %p182 = scmp.ne.s32.totalorder %s167, %s181
      %p183 = scmp.eq.s32.totalorder %s42, 0
      %p184 = por %p182, %p183
      %s186 = sadd.s32 %s185, 1
      %p189 = scmp.eq.s32.totalorder %s36, 1
      %p190 = scmp.ne.s32.totalorder %s185, %s187
      %p191 = scmp.eq.s32.totalorder %s36, 0
      %p192 = por %p190, %p191
      %p193 = scmp.ne.s32.totalorder %s185, %s187
      %p194 = scmp.eq.s32.totalorder %s41, 1
      %p195 = por %p193, %p194
      %p196 = scmp.ne.s32.totalorder %s187, %s188
      %p197 = scmp.eq.s32.totalorder %s41, 0
      %p198 = por %p196, %p197
      %p199 = scmp.ne.s32.totalorder %s187, %s188
      %p200 = scmp.eq.s32.totalorder %s42, 1
      %p201 = por %p199, %p200
      %p203 = scmp.ne.s32.totalorder %s188, %s202
      %p204 = scmp.eq.s32.totalorder %s42, 0
      %p205 = por %p203, %p204
      %s207 = sadd.s32 %s206, 1
      %p210 = scmp.eq.s32.totalorder %s36, 1
      %p211 = scmp.ne.s32.totalorder %s206, %s208
      %p212 = scmp.eq.s32.totalorder %s36, 0
      %p213 = por %p211, %p212
      %p214 = scmp.ne.s32.totalorder %s206, %s208
      %p215 = scmp.eq.s32.totalorder %s41, 1
      %p216 = por %p214, %p215
      %p217 = scmp.ne.s32.totalorder %s208, %s209
      %p218 = scmp.eq.s32.totalorder %s41, 0
      %p219 = por %p217, %p218
      %p220 = scmp.ne.s32.totalorder %s208, %s209
      %p221 = scmp.eq.s32.totalorder %s42, 1
      %p222 = por %p220, %p221
      %p224 = scmp.ne.s32.totalorder %s209, %s223
      %p225 = scmp.eq.s32.totalorder %s42, 0
      %p226 = por %p224, %p225
      %s228 = sadd.s32 %s227, 1
      %p231 = scmp.eq.s32.totalorder %s36, 1
      %p232 = scmp.ne.s32.totalorder %s227, %s229
      %p233 = scmp.eq.s32.totalorder %s36, 0
      %p234 = por %p232, %p233
      %p235 = scmp.ne.s32.totalorder %s227, %s229
      %p236 = scmp.eq.s32.totalorder %s41, 1
      %p237 = por %p235, %p236
      %p238 = scmp.ne.s32.totalorder %s229, %s230
      %p239 = scmp.eq.s32.totalorder %s41, 0
      %p240 = por %p238, %p239
      %p241 = scmp.ne.s32.totalorder %s229, %s230
      %p242 = scmp.eq.s32.totalorder %s42, 1
      %p243 = por %p241, %p242
      %p245 = scmp.ne.s32.totalorder %s230, %s244
      %p246 = scmp.eq.s32.totalorder %s42, 0
      %p247 = por %p245, %p246
      %s249 = sadd.s32 %s248, 1
      %p252 = scmp.eq.s32.totalorder %s36, 1
      %p253 = scmp.ne.s32.totalorder %s248, %s250
      %p254 = scmp.eq.s32.totalorder %s36, 0
      %p255 = por %p253, %p254
      %p256 = scmp.ne.s32.totalorder %s248, %s250
      %p257 = scmp.eq.s32.totalorder %s41, 1
      %p258 = por %p256, %p257
      %p259 = scmp.ne.s32.totalorder %s250, %s251
      %p260 = scmp.eq.s32.totalorder %s41, 0
      %p261 = por %p259, %p260
      %p262 = scmp.ne.s32.totalorder %s250, %s251
      %p263 = scmp.eq.s32.totalorder %s42, 1
      %p264 = por %p262, %p263
      %p266 = scmp.ne.s32.totalorder %s251, %s265
      %p267 = scmp.eq.s32.totalorder %s42, 0
      %p268 = por %p266, %p267
      %s270 = sadd.s32 %s269, 1
      %p273 = scmp.eq.s32.totalorder %s36, 1
      %p274 = scmp.ne.s32.totalorder %s269, %s271
      %p275 = scmp.eq.s32.totalorder %s36, 0
      %p276 = por %p274, %p275
      %p277 = scmp.ne.s32.totalorder %s269, %s271
      %p278 = scmp.eq.s32.totalorder %s41, 1
      %p279 = por %p277, %p278
      %p280 = scmp.ne.s32.totalorder %s271, %s272
      %p281 = scmp.eq.s32.totalorder %s41, 0
      %p282 = por %p280, %p281
      %p283 = scmp.ne.s32.totalorder %s271, %s272
      %p284 = scmp.eq.s32.totalorder %s42, 1
      %p285 = por %p283, %p284
      %p287 = scmp.ne.s32.totalorder %s272, %s286
      %p288 = scmp.eq.s32.totalorder %s42, 0
      %p289 = por %p287, %p288
      %s290 = ssub.s32 %s43, %s55
      %s291 = ssub.s32 %s44, %s51
      %s292 = sor.u32 %s290, %s291
      %p293 = scmp.eq.s32.totalorder %s292, 0
      %s295 = sadd.s32 %s294, 1
      %s296 = scalar_select %p293, %s294, %s295
      %p299 = pneg %p293
      %p300 = scmp.eq.s32.totalorder %s36, 1
      %p301 = por %p299, %p300
      %p302 = scmp.ne.s32.totalorder %s294, %s297
      %p303 = scmp.eq.s32.totalorder %s36, 0
      %p304 = por %p302, %p303
      %p305 = scmp.ne.s32.totalorder %s294, %s297
      %p306 = scmp.eq.s32.totalorder %s41, 1
      %p307 = por %p305, %p306
      %p308 = scmp.ne.s32.totalorder %s297, %s298
      %p309 = scmp.eq.s32.totalorder %s41, 0
      %p310 = por %p308, %p309
      %p311 = scmp.ne.s32.totalorder %s297, %s298
      %p312 = scmp.eq.s32.totalorder %s42, 1
      %p313 = por %p311, %p312
      %p315 = scmp.ne.s32.totalorder %s298, %s314
      %p316 = scmp.eq.s32.totalorder %s42, 0
      %p317 = por %p315, %p316
      %s318 = ssub.s32 %s43, %s55
      %s319 = ssub.s32 %s44, %s51
      %s320 = sor.u32 %s318, %s319
      %p321 = scmp.eq.s32.totalorder %s320, 0
      %s323 = sadd.s32 %s322, 1
      %s324 = scalar_select %p321, %s322, %s323
      %p327 = pneg %p321
      %p328 = scmp.eq.s32.totalorder %s36, 1
      %p329 = por %p327, %p328
      %p330 = scmp.ne.s32.totalorder %s322, %s325
      %p331 = scmp.eq.s32.totalorder %s36, 0
      %p332 = por %p330, %p331
      %p333 = scmp.ne.s32.totalorder %s322, %s325
      %p334 = scmp.eq.s32.totalorder %s41, 1
      %p335 = por %p333, %p334
      %p336 = scmp.ne.s32.totalorder %s325, %s326
      %p337 = scmp.eq.s32.totalorder %s41, 0
      %p338 = por %p336, %p337
      %p339 = scmp.ne.s32.totalorder %s325, %s326
      %p340 = scmp.eq.s32.totalorder %s42, 1
      %p341 = por %p339, %p340
      %p343 = scmp.ne.s32.totalorder %s326, %s342
      %p344 = scmp.eq.s32.totalorder %s42, 0
      %p345 = por %p343, %p344
      %s346 = ssub.s32 %s43, %s55
      %s347 = ssub.s32 %s44, %s51
      %s348 = sor.u32 %s346, %s347
      %p349 = scmp.eq.s32.totalorder %s348, 0
      %s351 = sadd.s32 %s350, 1
      %s352 = scalar_select %p349, %s350, %s351
      %p355 = pneg %p349
      %p356 = scmp.eq.s32.totalorder %s36, 1
      %p357 = por %p355, %p356
      %p358 = scmp.ne.s32.totalorder %s350, %s353
      %p359 = scmp.eq.s32.totalorder %s36, 0
      %p360 = por %p358, %p359
      %p361 = scmp.ne.s32.totalorder %s350, %s353
      %p362 = scmp.eq.s32.totalorder %s41, 1
      %p363 = por %p361, %p362
      %p364 = scmp.ne.s32.totalorder %s353, %s354
      %p365 = scmp.eq.s32.totalorder %s41, 0
      %p366 = por %p364, %p365
      %p367 = scmp.ne.s32.totalorder %s353, %s354
      %p368 = scmp.eq.s32.totalorder %s42, 1
      %p369 = por %p367, %p368
      %p371 = scmp.ne.s32.totalorder %s354, %s370
      %p372 = scmp.eq.s32.totalorder %s42, 0
      %p373 = por %p371, %p372
      %p374 = scmp.le.s32.totalorder 1, %s36
      %p375 = scmp.lt.s32.totalorder %s36, 3
      %p376 = pnand %p374, %p375
      %p377 = pneg %p376
      // Predicated region
      $region9: #{tpu_custom_call.1} parent=5 // pred_check
        _
      $region10: #{tpu_custom_call.1} parent=5 // pred_check_branch
        %379 = sbr.rel (%p376) target = $region12
      $region11: #{tpu_custom_call.1} parent=5 // pred_region
        %s380 = ssub.s32 %s36, 1
        // Predicated region
        $region13: #{tpu_custom_call.1} parent=11 // pred_check
          %p381 = pneg %p177
        $region14: #{tpu_custom_call.1} parent=11 // pred_check_branch
          %383 = sbr.rel (%p381) target = $region16
        $region15: #{tpu_custom_call.1} parent=11 // pred_region
          %s385 = ssub.s32 1536, 1536
          %386 = vsyncadd [#allocation9], %s385
          %s387 = sshll.u32 [#allocation10], 4
          %s388 = int_to_ptr.vmem [resolvable:$true] %s387
          %393 = dma.hbm_to_vmem [thread:$0]  %s4, 1536, %s388, [#allocation9], 128, 128, 8
        $region16: #{tpu_custom_call.1} parent=11 // pred_fallthru
          _
        // Predicated region
        $region17: #{tpu_custom_call.1} parent=11 // pred_check
          %p394 = pneg %p198
        $region18: #{tpu_custom_call.1} parent=11 // pred_check_branch
          %396 = sbr.rel (%p394) target = $region20
        $region19: #{tpu_custom_call.1} parent=11 // pred_region
          %s398 = ssub.s32 48, 48
          %399 = vsyncadd [#allocation12], %s398
          %s400 = sshll.u32 [#allocation11], 4
          %s401 = int_to_ptr.vmem [resolvable:$true] %s400
          %406 = dma.hbm_to_vmem [thread:$0]  %s5, 48, %s401, [#allocation12], 16, 16, 1
        $region20: #{tpu_custom_call.1} parent=11 // pred_fallthru
          _
        // Predicated region
        $region21: #{tpu_custom_call.1} parent=11 // pred_check
          %p407 = pneg %p219
        $region22: #{tpu_custom_call.1} parent=11 // pred_check_branch
          %409 = sbr.rel (%p407) target = $region24
        $region23: #{tpu_custom_call.1} parent=11 // pred_region
          %s411 = ssub.s32 512, 512
          %412 = vsyncadd [#allocation12], %s411
          %s413 = sshll.u32 [#allocation13], 4
          %s414 = int_to_ptr.vmem [resolvable:$true] %s413
          %419 = dma.hbm_to_vmem [thread:$0]  %s6, 512, %s414, [#allocation12], 128, 128, 8
        $region24: #{tpu_custom_call.1} parent=11 // pred_fallthru
          _
        // Predicated region
        $region25: #{tpu_custom_call.1} parent=11 // pred_check
          %p420 = pneg %p240
        $region26: #{tpu_custom_call.1} parent=11 // pred_check_branch
          %422 = sbr.rel (%p420) target = $region28
        $region27: #{tpu_custom_call.1} parent=11 // pred_region
          _
        $region28: #{tpu_custom_call.1} parent=11 // pred_fallthru
          _
        // Predicated region
        $region29: #{tpu_custom_call.1} parent=11 // pred_check
          %p423 = pneg %p261
        $region30: #{tpu_custom_call.1} parent=11 // pred_check_branch
          %425 = sbr.rel (%p423) target = $region32
        $region31: #{tpu_custom_call.1} parent=11 // pred_region
          %s427 = ssub.s32 512, 512
          %428 = vsyncadd [#allocation15], %s427
          %s429 = sshll.u32 [#allocation14], 4
          %s430 = int_to_ptr.vmem [resolvable:$true] %s429
          %435 = dma.hbm_to_vmem [thread:$0]  %s8, 512, %s430, [#allocation15], 128, 128, 8
        $region32: #{tpu_custom_call.1} parent=11 // pred_fallthru
          _
        // Predicated region
        $region33: #{tpu_custom_call.1} parent=11 // pred_check
          %p436 = pneg %p282
        $region34: #{tpu_custom_call.1} parent=11 // pred_check_branch
          %438 = sbr.rel (%p436) target = $region36
        $region35: #{tpu_custom_call.1} parent=11 // pred_region
          _
        $region36: #{tpu_custom_call.1} parent=11 // pred_fallthru
          _
      $region12: #{tpu_custom_call.1} parent=5 // pred_fallthru
        _
      %p439 = scmp.lt.s32.totalorder %s36, 2
      // Predicated region
      $region37: #{tpu_custom_call.1} parent=5 // pred_check
        %p440 = pneg %p439
      $region38: #{tpu_custom_call.1} parent=5 // pred_check_branch
        %442 = sbr.rel (%p440) target = $region40
      $region39: #{tpu_custom_call.1} parent=5 // pred_region
        // Predicated region
        $region41: #{tpu_custom_call.1} parent=39 // pred_check
          %p443 = pneg %p70
        $region42: #{tpu_custom_call.1} parent=39 // pred_check_branch
          %445 = sbr.rel (%p443) target = $region44
        $region43: #{tpu_custom_call.1} parent=39 // pred_region
          %s446 = sand.u32 %s60, 1
          %s447 = scalar_lea.sflag [#allocation3], %s446
          %s448 = sand.u32 %s60, 1
          %s449 = smul.addr %s448, 8
          %s450 = scalar_lea.vmem [#allocation2], %s449
          %s452 = ssub.s32 128, 128
          %453 = vsyncadd %s447, %s452
          %s454 = sadd.s32 %s44, %s43
          %s455 = smul.addr %s454, 128
          %s456 = scalar_lea.hbm %s0, %s455
          %s458 = sshll.u32 %s450, 4
          %s459 = int_to_ptr.vmem [resolvable:$true] %s458
          %461 = dma.hbm_to_vmem [thread:$0]  %s456, 128, %s459, %s447
        $region44: #{tpu_custom_call.1} parent=39 // pred_fallthru
          _
        // Predicated region
        $region45: #{tpu_custom_call.1} parent=39 // pred_check
          %p462 = pneg %p96
        $region46: #{tpu_custom_call.1} parent=39 // pred_check_branch
          %464 = sbr.rel (%p462) target = $region48
        $region47: #{tpu_custom_call.1} parent=39 // pred_region
          %s465 = sand.u32 %s36, 1
          %s466 = scalar_lea.sflag [#allocation6], %s465
          %s467 = sand.u32 %s86, 1
          %s468 = smul.addr %s467, 8
          %s469 = scalar_lea.vmem [#allocation5], %s468
          %s471 = ssub.s32 128, 128
          %472 = vsyncadd %s466, %s471
          %s473 = smul.addr %s43, 128
          %s474 = scalar_lea.hbm %s1, %s473
          %s476 = sshll.u32 %s469, 4
          %s477 = int_to_ptr.vmem [resolvable:$true] %s476
          %479 = dma.hbm_to_vmem [thread:$0]  %s474, 128, %s477, %s466
        $region48: #{tpu_custom_call.1} parent=39 // pred_fallthru
          _
        // Predicated region
        $region49: #{tpu_custom_call.1} parent=39 // pred_check
          %p480 = pneg %p122
        $region50: #{tpu_custom_call.1} parent=39 // pred_check_branch
          %482 = sbr.rel (%p480) target = $region52
        $region51: #{tpu_custom_call.1} parent=39 // pred_region
          %s483 = sand.u32 %s36, 1
          %s484 = scalar_lea.sflag [#allocation6], %s483
          %s485 = sand.u32 %s112, 1
          %s486 = smul.addr %s485, 8
          %s487 = scalar_lea.vmem [#allocation7], %s486
          %s489 = ssub.s32 128, 128
          %490 = vsyncadd %s484, %s489
          %s491 = smul.addr %s43, 128
          %s492 = scalar_lea.hbm %s2, %s491
          %s494 = sshll.u32 %s487, 4
          %s495 = int_to_ptr.vmem [resolvable:$true] %s494
          %497 = dma.hbm_to_vmem [thread:$0]  %s492, 128, %s495, %s484
        $region52: #{tpu_custom_call.1} parent=39 // pred_fallthru
          _
        // Predicated region
        $region53: #{tpu_custom_call.1} parent=39 // pred_check
          %p498 = pneg %p150
        $region54: #{tpu_custom_call.1} parent=39 // pred_check_branch
          %500 = sbr.rel (%p498) target = $region56
        $region55: #{tpu_custom_call.1} parent=39 // pred_region
          %s501 = sand.u32 %s36, 1
          %s502 = scalar_lea.sflag [#allocation9], %s501
          %s503 = sand.u32 %s140, 1
          %s504 = smul.addr %s503, 64
          %s505 = scalar_lea.vmem [#allocation8], %s504
          %s506 = smul.u32 8, %s44
          %s508 = ssub.s32 1024, 1024
          %509 = vsyncadd %s502, %s508
          %s510 = smul.addr %s43, 8
          %s511 = sadd.s32 %s506, %s510
          %s512 = smul.addr %s511, 128
          %s513 = scalar_lea.hbm %s3, %s512
          %s514 = sshll.u32 %s505, 4
          %s515 = int_to_ptr.vmem [resolvable:$true] %s514
          %520 = dma.hbm_to_vmem [thread:$0]  %s513, 1024, %s515, %s502, 128, 128, 8
        $region56: #{tpu_custom_call.1} parent=39 // pred_fallthru
          _
      $region40: #{tpu_custom_call.1} parent=5 // pred_fallthru
        _
      %p521 = scmp.le.s32.totalorder 1, %s36
      %p522 = scmp.lt.s32.totalorder %s36, 3
      %p523 = pnand %p521, %p522
      %p524 = pneg %p523
      // Predicated region
      $region57: #{tpu_custom_call.1} parent=5 // pred_check
        _
      $region58: #{tpu_custom_call.1} parent=5 // pred_check_branch
        %526 = sbr.rel (%p523) target = $region60
      $region59: #{tpu_custom_call.1} parent=5 // pred_region
        %s527 = ssub.s32 %s36, 1
        %s528 = sand.u32 %s63, 1
        %s529 = scalar_lea.sflag [#allocation3], %s528
        %s530 = sand.u32 %s63, 1
        %s531 = smul.addr %s530, 8
        %s532 = scalar_lea.vmem [#allocation2], %s531
        // Predicated region
        $region61: #{tpu_custom_call.1} parent=59 // pred_check
          %p533 = pneg %p76
        $region62: #{tpu_custom_call.1} parent=59 // pred_check_branch
          %535 = sbr.rel (%p533) target = $region64
        $region63: #{tpu_custom_call.1} parent=59 // pred_region
          %536 = dma.done %s529, 128
        $region64: #{tpu_custom_call.1} parent=59 // pred_fallthru
          _
        %s537 = sand.u32 %s41, 1
        %s538 = scalar_lea.sflag [#allocation6], %s537
        %s539 = sand.u32 %s89, 1
        %s540 = smul.addr %s539, 8
        %s541 = scalar_lea.vmem [#allocation5], %s540
        // Predicated region
        $region65: #{tpu_custom_call.1} parent=59 // pred_check
          %p542 = pneg %p102
        $region66: #{tpu_custom_call.1} parent=59 // pred_check_branch
          %544 = sbr.rel (%p542) target = $region68
        $region67: #{tpu_custom_call.1} parent=59 // pred_region
          %545 = dma.done %s538, 128
        $region68: #{tpu_custom_call.1} parent=59 // pred_fallthru
          _
        %s546 = sand.u32 %s41, 1
        %s547 = scalar_lea.sflag [#allocation6], %s546
        %s548 = sand.u32 %s115, 1
        %s549 = smul.addr %s548, 8
        %s550 = scalar_lea.vmem [#allocation7], %s549
        // Predicated region
        $region69: #{tpu_custom_call.1} parent=59 // pred_check
          %p551 = pneg %p128
        $region70: #{tpu_custom_call.1} parent=59 // pred_check_branch
          %553 = sbr.rel (%p551) target = $region72
        $region71: #{tpu_custom_call.1} parent=59 // pred_region
          %554 = dma.done %s547, 128
        $region72: #{tpu_custom_call.1} parent=59 // pred_fallthru
          _
        %s555 = sand.u32 %s41, 1
        %s556 = scalar_lea.sflag [#allocation9], %s555
        %s557 = sand.u32 %s143, 1
        %s558 = smul.addr %s557, 64
        %s559 = scalar_lea.vmem [#allocation8], %s558
        // Predicated region
        $region73: #{tpu_custom_call.1} parent=59 // pred_check
          %p560 = pneg %p156
        $region74: #{tpu_custom_call.1} parent=59 // pred_check_branch
          %562 = sbr.rel (%p560) target = $region76
        $region75: #{tpu_custom_call.1} parent=59 // pred_region
          %563 = dma.done %s556, 1024
        $region76: #{tpu_custom_call.1} parent=59 // pred_fallthru
          _
        // Predicated region
        $region77: #{tpu_custom_call.1} parent=59 // pred_check
          %p564 = pneg %p177
        $region78: #{tpu_custom_call.1} parent=59 // pred_check_branch
          %566 = sbr.rel (%p564) target = $region80
        $region79: #{tpu_custom_call.1} parent=59 // pred_region
          %567 = dma.done [#allocation9], 1536
        $region80: #{tpu_custom_call.1} parent=59 // pred_fallthru
          _
        // Predicated region
        $region81: #{tpu_custom_call.1} parent=59 // pred_check
          %p568 = pneg %p198
        $region82: #{tpu_custom_call.1} parent=59 // pred_check_branch
          %570 = sbr.rel (%p568) target = $region84
        $region83: #{tpu_custom_call.1} parent=59 // pred_region
          %571 = dma.done [#allocation12], 48
        $region84: #{tpu_custom_call.1} parent=59 // pred_fallthru
          _
        // Predicated region
        $region85: #{tpu_custom_call.1} parent=59 // pred_check
          %p572 = pneg %p219
        $region86: #{tpu_custom_call.1} parent=59 // pred_check_branch
          %574 = sbr.rel (%p572) target = $region88
        $region87: #{tpu_custom_call.1} parent=59 // pred_region
          %575 = dma.done [#allocation12], 512
        $region88: #{tpu_custom_call.1} parent=59 // pred_fallthru
          _
        // Predicated region
        $region89: #{tpu_custom_call.1} parent=59 // pred_check
          %p576 = pneg %p261
        $region90: #{tpu_custom_call.1} parent=59 // pred_check_branch
          %578 = sbr.rel (%p576) target = $region92
        $region91: #{tpu_custom_call.1} parent=59 // pred_region
          %579 = dma.done [#allocation15], 512
        $region92: #{tpu_custom_call.1} parent=59 // pred_fallthru
          _
        %s580 = sand.u32 %s63, 1
        %s581 = scalar_lea.sflag [#allocation3], %s580
        %s582 = sand.u32 %s63, 1
        %s583 = smul.addr %s582, 8
        %s584 = scalar_lea.vmem [#allocation2], %s583
        %p585 = pneg %p76
        %p586 = pneg %p73
        %s587 = sand.u32 %s41, 1
        %s588 = scalar_lea.sflag [#allocation6], %s587
        %s589 = sand.u32 %s89, 1
        %s590 = smul.addr %s589, 8
        %s591 = scalar_lea.vmem [#allocation5], %s590
        %p592 = pneg %p102
        %p593 = pneg %p99
        %s594 = sand.u32 %s41, 1
        %s595 = scalar_lea.sflag [#allocation6], %s594
        %s596 = sand.u32 %s115, 1
        %s597 = smul.addr %s596, 8
        %s598 = scalar_lea.vmem [#allocation7], %s597
        %p599 = pneg %p128
        %p600 = pneg %p125
        %s601 = sand.u32 %s41, 1
        %s602 = scalar_lea.sflag [#allocation9], %s601
        %s603 = sand.u32 %s143, 1
        %s604 = smul.addr %s603, 64
        %s605 = scalar_lea.vmem [#allocation8], %s604
        %p606 = pneg %p156
        %p607 = pneg %p153
        %p608 = pneg %p177
        %p609 = pneg %p174
        %p610 = pneg %p198
        %p611 = pneg %p195
        %p612 = pneg %p219
        %p613 = pneg %p216
        %p614 = pneg %p240
        %p615 = pneg %p237
        %p616 = pneg %p261
        %p617 = pneg %p258
        %p618 = pneg %p282
        %p619 = pneg %p279
        %p620 = pneg %p310
        %p621 = pneg %p307
        %s622 = sand.u32 %s297, 1
        %s623 = scalar_lea.sflag [#allocation4], %s622
        %s624 = sand.u32 %s297, 1
        %s625 = smul.addr %s624, 8
        %s626 = scalar_lea.vmem [#allocation16], %s625
        %p627 = pneg %p338
        %p628 = pneg %p335
        %s629 = sand.u32 %s41, 1
        %s630 = scalar_lea.sflag [#allocation18], %s629
        %s631 = sand.u32 %s325, 1
        %s632 = smul.addr %s631, 32
        %s633 = scalar_lea.vmem [#allocation17], %s632
        %p634 = pneg %p366
        %p635 = pneg %p363
        %s636 = sand.u32 %s41, 1
        %s637 = scalar_lea.sflag [#allocation18], %s636
        %s638 = sand.u32 %s353, 1
        %s639 = smul.addr %s638, 8
        %s640 = scalar_lea.vmem [#allocation19], %s639
        %s641 = smul.u32 8, %s46
        %v642 = vld [vmem:[%s532] sm:$0xff]
        %v643 = vld [vmem:[%s541] sm:$0xff]
        %v644 = vld [vmem:[%s550] sm:$0xff]
        %v645 = vld [vmem:[%s559] sm:$0xff]
        %v646 = vld [vmem:[%s559 + $0x8] sm:$0xff]
        %v647 = vld [vmem:[%s559 + $0x10] sm:$0xff]
        %v648 = vld [vmem:[%s559 + $0x18] sm:$0xff]
        %v649 = vld [vmem:[%s559 + $0x20] sm:$0xff]
        %v650 = vld [vmem:[%s559 + $0x28] sm:$0xff]
        %v651 = vld [vmem:[%s559 + $0x30] sm:$0xff]
        %v652 = vld [vmem:[%s559 + $0x38] sm:$0xff]
        %v653 = vld [vmem:[#allocation10] sm:$0xff]
        %v654 = vld [vmem:[#allocation10 + $0x8] sm:$0xff]
        %v655 = vld [vmem:[#allocation10 + $0x10] sm:$0xff]
        %v656 = vld [vmem:[#allocation10 + $0x18] sm:$0xff]
        %v657 = vld [vmem:[#allocation11] sm:$0x1]
        %v659 = vlaneseq
        %v660 = vshrl.u32 %v659, 7
        %v661 = vsub.s32 0, %v660
        %v662 = vrot.slane %v657, %v661
        %vm664 = vcmask 261120
        %v666 = vsel %vm664, %v642, 0
        %668 = vmatprep.subr.mxu0 0.0
        %669 = vmatpush1.msra.mxu0 0.0
        %670 = vmatprep.subr.mxu0 0.0
        %671 = vmatpush1.msra.mxu0 0.0
        %672 = vmatprep.subr.mxu0 0.0
        %673 = vmatpush1.msra.mxu0 0.0
        %674 = vmatprep.subr.mxu0 0.0
        %675 = vmatpush1.msra.mxu0 0.0
        %676 = vmatprep.subr.mxu0 0.0
        %677 = vmatpush1.msra.mxu0 0.0
        %678 = vmatprep.subr.mxu0 0.0
        %679 = vmatpush1.msra.mxu0 0.0
        %680 = vmatprep.subr.mxu0 0.0
        %681 = vmatpush1.msra.mxu0 0.0
        %682 = vmatprep.subr.mxu0 0.0
        %683 = vmatpush1.msra.mxu0 0.0
        %684 = vmatprep.subr.mxu0 0.0
        %685 = vmatpush1.msra.mxu0 0.0
        %686 = vmatprep.subr.mxu0 0.0
        %687 = vmatpush1.msra.mxu0 0.0
        %688 = vmatprep.subr.mxu0 0.0
        %689 = vmatpush1.msra.mxu0 0.0
        %690 = vmatprep.subr.mxu0 0.0
        %691 = vmatpush1.msra.mxu0 0.0
        %692 = vmatprep.subr.mxu0 0.0
        %693 = vmatpush1.msra.mxu0 %v656
        %694 = vmatprep.subr.mxu0 0.0
        %695 = vmatpush1.msra.mxu0 %v655
        %696 = vmatprep.subr.mxu0 0.0
        %697 = vmatpush1.msra.mxu0 %v654
        %698 = vmatprep.subr.mxu0 0.0
        %699 = vmatpush1.msra.mxu0 %v653
        %700 = vmatprep.subr.mxu0 0.0
        %701 = vmatpush2.msra.mxu0 0.0
        %702 = vmatprep.subr.mxu0 0.0
        %703 = vmatpush2.msra.mxu0 0.0
        %704 = vmatprep.subr.mxu0 0.0
        %705 = vmatpush2.msra.mxu0 0.0
        %706 = vmatprep.subr.mxu0 0.0
        %707 = vmatpush2.msra.mxu0 0.0
        %708 = vmatprep.subr.mxu0 0.0
        %709 = vmatpush2.msra.mxu0 0.0
        %710 = vmatprep.subr.mxu0 0.0
        %711 = vmatpush2.msra.mxu0 0.0
        %712 = vmatprep.subr.mxu0 0.0
        %713 = vmatpush2.msra.mxu0 0.0
        %714 = vmatprep.subr.mxu0 0.0
        %715 = vmatpush2.msra.mxu0 0.0
        %716 = vmatprep.subr.mxu0 0.0
        %717 = vmatpush2.msra.mxu0 0.0
        %718 = vmatprep.subr.mxu0 0.0
        %719 = vmatpush2.msra.mxu0 0.0
        %720 = vmatprep.subr.mxu0 0.0
        %721 = vmatpush2.msra.mxu0 0.0
        %722 = vmatprep.subr.mxu0 0.0
        %723 = vmatpush2.msra.mxu0 0.0
        %724 = vmatprep.subr.mxu0 0.0
        %725 = vmatpush2.msra.mxu0 0.0
        %726 = vmatprep.subr.mxu0 0.0
        %727 = vmatpush2.msra.mxu0 0.0
        %728 = vmatprep.subr.mxu0 0.0
        %729 = vmatpush2.msra.mxu0 0.0
        %730 = vmatprep.subr.mxu0 0.0
        %731 = vmatpush2.msra.mxu0 0.0
        %732 = vmatprep.mubr.f32.mxu0 0.0
        %733 = vmatmul.mubr.f32.gmra.mxu0 %v666
        %v734 = vpop.f32.mrf.mxu0
        %v735 = vadd.f32 %v662, %v734
        %v736 = vpop.f32.mrf.mxu0
        %737 = vdwg.mxu0
        %s738 = scalar_lea.vmem [#allocation10], 32
        %v739 = vld [vmem:[%s738] sm:$0xff]
        %v740 = vld [vmem:[%s738 + $0x8] sm:$0xff]
        %v741 = vld [vmem:[%s738 + $0x10] sm:$0xff]
        %v742 = vld [vmem:[%s738 + $0x18] sm:$0xff]
        %s743 = scalar_lea.vmem [#allocation11], 1
        %v744 = vld [vmem:[%s743] sm:$0x1]
        %v746 = vlaneseq
        %v747 = vshrl.u32 %v746, 7
        %v748 = vsub.s32 0, %v747
        %v749 = vrot.slane %v744, %v748
        %v752 = vsel %vm664, %v643, 0
        %754 = vmatprep.subr.mxu0 0.0
        %755 = vmatpush1.msra.mxu0 0.0
        %756 = vmatprep.subr.mxu0 0.0
        %757 = vmatpush1.msra.mxu0 0.0
        %758 = vmatprep.subr.mxu0 0.0
        %759 = vmatpush1.msra.mxu0 0.0
        %760 = vmatprep.subr.mxu0 0.0
        %761 = vmatpush1.msra.mxu0 0.0
        %762 = vmatprep.subr.mxu0 0.0
        %763 = vmatpush1.msra.mxu0 0.0
        %764 = vmatprep.subr.mxu0 0.0
        %765 = vmatpush1.msra.mxu0 0.0
        %766 = vmatprep.subr.mxu0 0.0
        %767 = vmatpush1.msra.mxu0 0.0
        %768 = vmatprep.subr.mxu0 0.0
        %769 = vmatpush1.msra.mxu0 0.0
        %770 = vmatprep.subr.mxu0 0.0
        %771 = vmatpush1.msra.mxu0 0.0
        %772 = vmatprep.subr.mxu0 0.0
        %773 = vmatpush1.msra.mxu0 0.0
        %774 = vmatprep.subr.mxu0 0.0
        %775 = vmatpush1.msra.mxu0 0.0
        %776 = vmatprep.subr.mxu0 0.0
        %777 = vmatpush1.msra.mxu0 0.0
        %778 = vmatprep.subr.mxu0 0.0
        %779 = vmatpush1.msra.mxu0 %v742
        %780 = vmatprep.subr.mxu0 0.0
        %781 = vmatpush1.msra.mxu0 %v741
        %782 = vmatprep.subr.mxu0 0.0
        %783 = vmatpush1.msra.mxu0 %v740
        %784 = vmatprep.subr.mxu0 0.0
        %785 = vmatpush1.msra.mxu0 %v739
        %786 = vmatprep.subr.mxu0 0.0
        %787 = vmatpush2.msra.mxu0 0.0
        %788 = vmatprep.subr.mxu0 0.0
        %789 = vmatpush2.msra.mxu0 0.0
        %790 = vmatprep.subr.mxu0 0.0
        %791 = vmatpush2.msra.mxu0 0.0
        %792 = vmatprep.subr.mxu0 0.0
        %793 = vmatpush2.msra.mxu0 0.0
        %794 = vmatprep.subr.mxu0 0.0
        %795 = vmatpush2.msra.mxu0 0.0
        %796 = vmatprep.subr.mxu0 0.0
        %797 = vmatpush2.msra.mxu0 0.0
        %798 = vmatprep.subr.mxu0 0.0
        %799 = vmatpush2.msra.mxu0 0.0
        %800 = vmatprep.subr.mxu0 0.0
        %801 = vmatpush2.msra.mxu0 0.0
        %802 = vmatprep.subr.mxu0 0.0
        %803 = vmatpush2.msra.mxu0 0.0
        %804 = vmatprep.subr.mxu0 0.0
        %805 = vmatpush2.msra.mxu0 0.0
        %806 = vmatprep.subr.mxu0 0.0
        %807 = vmatpush2.msra.mxu0 0.0
        %808 = vmatprep.subr.mxu0 0.0
        %809 = vmatpush2.msra.mxu0 0.0
        %810 = vmatprep.subr.mxu0 0.0
        %811 = vmatpush2.msra.mxu0 0.0
        %812 = vmatprep.subr.mxu0 0.0
        %813 = vmatpush2.msra.mxu0 0.0
        %814 = vmatprep.subr.mxu0 0.0
        %815 = vmatpush2.msra.mxu0 0.0
        %816 = vmatprep.subr.mxu0 0.0
        %817 = vmatpush2.msra.mxu0 0.0
        %818 = vmatprep.mubr.f32.mxu0 0.0
        %819 = vmatmul.mubr.f32.gmra.mxu0 %v752
        %v820 = vpop.f32.mrf.mxu0
        %v821 = vadd.f32 %v749, %v820
        %v822 = vpop.f32.mrf.mxu0
        %823 = vdwg.mxu0
        %s824 = scalar_lea.vmem [#allocation10], 64
        %v825 = vld [vmem:[%s824] sm:$0xff]
        %v826 = vld [vmem:[%s824 + $0x8] sm:$0xff]
        %v827 = vld [vmem:[%s824 + $0x10] sm:$0xff]
        %v828 = vld [vmem:[%s824 + $0x18] sm:$0xff]
        %s829 = scalar_lea.vmem [#allocation11], 2
        %v830 = vld [vmem:[%s829] sm:$0x1]
        %v832 = vlaneseq
        %v833 = vshrl.u32 %v832, 7
        %v834 = vsub.s32 0, %v833
        %v835 = vrot.slane %v830, %v834
        %v838 = vsel %vm664, %v644, 0
        %840 = vmatprep.subr.mxu0 0.0
        %841 = vmatpush1.msra.mxu0 0.0
        %842 = vmatprep.subr.mxu0 0.0
        %843 = vmatpush1.msra.mxu0 0.0
        %844 = vmatprep.subr.mxu0 0.0
        %845 = vmatpush1.msra.mxu0 0.0
        %846 = vmatprep.subr.mxu0 0.0
        %847 = vmatpush1.msra.mxu0 0.0
        %848 = vmatprep.subr.mxu0 0.0
        %849 = vmatpush1.msra.mxu0 0.0
        %850 = vmatprep.subr.mxu0 0.0
        %851 = vmatpush1.msra.mxu0 0.0
        %852 = vmatprep.subr.mxu0 0.0
        %853 = vmatpush1.msra.mxu0 0.0
        %854 = vmatprep.subr.mxu0 0.0
        %855 = vmatpush1.msra.mxu0 0.0
        %856 = vmatprep.subr.mxu0 0.0
        %857 = vmatpush1.msra.mxu0 0.0
        %858 = vmatprep.subr.mxu0 0.0
        %859 = vmatpush1.msra.mxu0 0.0
        %860 = vmatprep.subr.mxu0 0.0
        %861 = vmatpush1.msra.mxu0 0.0
        %862 = vmatprep.subr.mxu0 0.0
        %863 = vmatpush1.msra.mxu0 0.0
        %864 = vmatprep.subr.mxu0 0.0
        %865 = vmatpush1.msra.mxu0 %v828
        %866 = vmatprep.subr.mxu0 0.0
        %867 = vmatpush1.msra.mxu0 %v827
        %868 = vmatprep.subr.mxu0 0.0
        %869 = vmatpush1.msra.mxu0 %v826
        %870 = vmatprep.subr.mxu0 0.0
        %871 = vmatpush1.msra.mxu0 %v825
        %872 = vmatprep.subr.mxu0 0.0
        %873 = vmatpush2.msra.mxu0 0.0
        %874 = vmatprep.subr.mxu0 0.0
        %875 = vmatpush2.msra.mxu0 0.0
        %876 = vmatprep.subr.mxu0 0.0
        %877 = vmatpush2.msra.mxu0 0.0
        %878 = vmatprep.subr.mxu0 0.0
        %879 = vmatpush2.msra.mxu0 0.0
        %880 = vmatprep.subr.mxu0 0.0
        %881 = vmatpush2.msra.mxu0 0.0
        %882 = vmatprep.subr.mxu0 0.0
        %883 = vmatpush2.msra.mxu0 0.0
        %884 = vmatprep.subr.mxu0 0.0
        %885 = vmatpush2.msra.mxu0 0.0
        %886 = vmatprep.subr.mxu0 0.0
        %887 = vmatpush2.msra.mxu0 0.0
        %888 = vmatprep.subr.mxu0 0.0
        %889 = vmatpush2.msra.mxu0 0.0
        %890 = vmatprep.subr.mxu0 0.0
        %891 = vmatpush2.msra.mxu0 0.0
        %892 = vmatprep.subr.mxu0 0.0
        %893 = vmatpush2.msra.mxu0 0.0
        %894 = vmatprep.subr.mxu0 0.0
        %895 = vmatpush2.msra.mxu0 0.0
        %896 = vmatprep.subr.mxu0 0.0
        %897 = vmatpush2.msra.mxu0 0.0
        %898 = vmatprep.subr.mxu0 0.0
        %899 = vmatpush2.msra.mxu0 0.0
        %900 = vmatprep.subr.mxu0 0.0
        %901 = vmatpush2.msra.mxu0 0.0
        %902 = vmatprep.subr.mxu0 0.0
        %903 = vmatpush2.msra.mxu0 0.0
        %904 = vmatprep.mubr.f32.mxu0 0.0
        %905 = vmatmul.mubr.f32.gmra.mxu0 %v838
        %v906 = vpop.f32.mrf.mxu0
        %v907 = vadd.f32 %v835, %v906
        %v908 = vpop.f32.mrf.mxu0
        %909 = vdwg.mxu0
        %911 = vrot.lane.b32.xlu0 %v735, 120
        %v912 = vpop.permute.xlu0 %911
        %914 = vrot.lane.b32.xlu0 %v735, 112
        %v915 = vpop.permute.xlu0 %914
        %917 = vrot.lane.b32.xlu0 %v735, 104
        %v918 = vpop.permute.xlu0 %917
        %v920 = vcombine.low %v735, %v915
        %v921 = vcombine.high %v735, %v915
        %v923 = vunpack.c.l.s4 1983009808
        %v924 = vunpack.c.0.s8 %v923
        %v925 = vlaneseq
        %v926 = vshrl.u32 %v925, 7
        %v927 = vsub.s32 %v924, %v926
        %v928 = vrot.slane %v920, %v927
        %v930 = vunpack.c.l.s4 1983009808
        %v931 = vunpack.c.0.s8 %v930
        %v932 = vlaneseq
        %v933 = vshrl.u32 %v932, 7
        %v934 = vsub.s32 %v931, %v933
        %v935 = vrot.slane %v921, %v934
        %v936 = vcombine.low %v912, %v918
        %v937 = vcombine.high %v912, %v918
        %v939 = vunpack.c.l.s4 1983009808
        %v940 = vunpack.c.0.s8 %v939
        %v941 = vlaneseq
        %v942 = vshrl.u32 %v941, 7
        %v943 = vsub.s32 %v940, %v942
        %v944 = vrot.slane %v936, %v943
        %v946 = vunpack.c.l.s4 1983009808
        %v947 = vunpack.c.0.s8 %v946
        %v948 = vlaneseq
        %v949 = vshrl.u32 %v948, 7
        %v950 = vsub.s32 %v947, %v949
        %v951 = vrot.slane %v937, %v950
        %v952 = vcombine.low %v928, %v944
        %v953 = vcombine.high %v928, %v944
        %v955 = vunpack.c.l.s4 1934713408
        %v956 = vunpack.c.0.s8 %v955
        %v957 = vlaneseq
        %v958 = vshrl.u32 %v957, 7
        %v959 = vsub.s32 %v956, %v958
        %v960 = vrot.slane %v952, %v959
        %v962 = vunpack.c.l.s4 1934713408
        %v963 = vunpack.c.0.s8 %v962
        %v964 = vlaneseq
        %v965 = vshrl.u32 %v964, 7
        %v966 = vsub.s32 %v963, %v965
        %v967 = vrot.slane %v953, %v966
        %v968 = vcombine.low %v935, %v951
        %v969 = vcombine.high %v935, %v951
        %v971 = vunpack.c.l.s4 1934713408
        %v972 = vunpack.c.0.s8 %v971
        %v973 = vlaneseq
        %v974 = vshrl.u32 %v973, 7
        %v975 = vsub.s32 %v972, %v974
        %v976 = vrot.slane %v968, %v975
        %v978 = vunpack.c.l.s4 1934713408
        %v979 = vunpack.c.0.s8 %v978
        %v980 = vlaneseq
        %v981 = vshrl.u32 %v980, 7
        %v982 = vsub.s32 %v979, %v981
        %v983 = vrot.slane %v969, %v982
        %v984 = vcombine.high %v960, 0.0
        %v985 = vcombine.high %v967, 0.0
        %v986 = vcombine.high %v976, 0.0
        %v987 = vcombine.high %v983, 0.0
        %v988 = vcombine.low %v960, %v967
        %v990 = vunpack.c.l.s4 1983009808
        %v991 = vunpack.c.0.s8 %v990
        %v992 = vlaneseq
        %v993 = vshrl.u32 %v992, 7
        %v994 = vsub.s32 %v991, %v993
        %v995 = vrot.slane %v988, %v994
        %v996 = vcombine.low %v984, %v985
        %v998 = vunpack.c.l.s4 1983009808
        %v999 = vunpack.c.0.s8 %v998
        %v1000 = vlaneseq
        %v1001 = vshrl.u32 %v1000, 7
        %v1002 = vsub.s32 %v999, %v1001
        %v1003 = vrot.slane %v996, %v1002
        %v1004 = vcombine.low %v976, %v983
        %v1006 = vunpack.c.l.s4 1983009808
        %v1007 = vunpack.c.0.s8 %v1006
        %v1008 = vlaneseq
        %v1009 = vshrl.u32 %v1008, 7
        %v1010 = vsub.s32 %v1007, %v1009
        %v1011 = vrot.slane %v1004, %v1010
        %v1012 = vcombine.low %v986, %v987
        %v1014 = vunpack.c.l.s4 1983009808
        %v1015 = vunpack.c.0.s8 %v1014
        %v1016 = vlaneseq
        %v1017 = vshrl.u32 %v1016, 7
        %v1018 = vsub.s32 %v1015, %v1017
        %v1019 = vrot.slane %v1012, %v1018
        %v1020 = vcombine.low %v995, %v1003
        %v1021 = vcombine.high %v995, %v1003
        %v1023 = vunpack.c.l.s4 1934713408
        %v1024 = vunpack.c.0.s8 %v1023
        %v1025 = vlaneseq
        %v1026 = vshrl.u32 %v1025, 7
        %v1027 = vsub.s32 %v1024, %v1026
        %v1028 = vrot.slane %v1020, %v1027
        %v1030 = vunpack.c.l.s4 1934713408
        %v1031 = vunpack.c.0.s8 %v1030
        %v1032 = vlaneseq
        %v1033 = vshrl.u32 %v1032, 7
        %v1034 = vsub.s32 %v1031, %v1033
        %v1035 = vrot.slane %v1021, %v1034
        %v1036 = vcombine.low %v1011, %v1019
        %v1037 = vcombine.high %v1011, %v1019
        %v1039 = vunpack.c.l.s4 1934713408
        %v1040 = vunpack.c.0.s8 %v1039
        %v1041 = vlaneseq
        %v1042 = vshrl.u32 %v1041, 7
        %v1043 = vsub.s32 %v1040, %v1042
        %v1044 = vrot.slane %v1036, %v1043
        %v1046 = vunpack.c.l.s4 1934713408
        %v1047 = vunpack.c.0.s8 %v1046
        %v1048 = vlaneseq
        %v1049 = vshrl.u32 %v1048, 7
        %v1050 = vsub.s32 %v1047, %v1049
        %v1051 = vrot.slane %v1037, %v1050
        %v1052 = vcombine.low %v1028, %v1044
        %v1053 = vcombine.high %v1028, %v1044
        %v1054 = vcombine.low %v1035, %v1051
        %v1055 = vcombine.high %v1035, %v1051
        %1057 = vrot.lane.b32.xlu0 %v821, 120
        %v1058 = vpop.permute.xlu0 %1057
        %1060 = vrot.lane.b32.xlu0 %v821, 112
        %v1061 = vpop.permute.xlu0 %1060
        %1063 = vrot.lane.b32.xlu0 %v821, 104
        %v1064 = vpop.permute.xlu0 %1063
        %v1066 = vcombine.low %v821, %v1061
        %v1067 = vcombine.high %v821, %v1061
        %v1069 = vunpack.c.l.s4 1983009808
        %v1070 = vunpack.c.0.s8 %v1069
        %v1071 = vlaneseq
        %v1072 = vshrl.u32 %v1071, 7
        %v1073 = vsub.s32 %v1070, %v1072
        %v1074 = vrot.slane %v1066, %v1073
        %v1076 = vunpack.c.l.s4 1983009808
        %v1077 = vunpack.c.0.s8 %v1076
        %v1078 = vlaneseq
        %v1079 = vshrl.u32 %v1078, 7
        %v1080 = vsub.s32 %v1077, %v1079
        %v1081 = vrot.slane %v1067, %v1080
        %v1082 = vcombine.low %v1058, %v1064
        %v1083 = vcombine.high %v1058, %v1064
        %v1085 = vunpack.c.l.s4 1983009808
        %v1086 = vunpack.c.0.s8 %v1085
        %v1087 = vlaneseq
        %v1088 = vshrl.u32 %v1087, 7
        %v1089 = vsub.s32 %v1086, %v1088
        %v1090 = vrot.slane %v1082, %v1089
        %v1092 = vunpack.c.l.s4 1983009808
        %v1093 = vunpack.c.0.s8 %v1092
        %v1094 = vlaneseq
        %v1095 = vshrl.u32 %v1094, 7
        %v1096 = vsub.s32 %v1093, %v1095
        %v1097 = vrot.slane %v1083, %v1096
        %v1098 = vcombine.low %v1074, %v1090
        %v1099 = vcombine.high %v1074, %v1090
        %v1101 = vunpack.c.l.s4 1934713408
        %v1102 = vunpack.c.0.s8 %v1101
        %v1103 = vlaneseq
        %v1104 = vshrl.u32 %v1103, 7
        %v1105 = vsub.s32 %v1102, %v1104
        %v1106 = vrot.slane %v1098, %v1105
        %v1108 = vunpack.c.l.s4 1934713408
        %v1109 = vunpack.c.0.s8 %v1108
        %v1110 = vlaneseq
        %v1111 = vshrl.u32 %v1110, 7
        %v1112 = vsub.s32 %v1109, %v1111
        %v1113 = vrot.slane %v1099, %v1112
        %v1114 = vcombine.low %v1081, %v1097
        %v1115 = vcombine.high %v1081, %v1097
        %v1117 = vunpack.c.l.s4 1934713408
        %v1118 = vunpack.c.0.s8 %v1117
        %v1119 = vlaneseq
        %v1120 = vshrl.u32 %v1119, 7
        %v1121 = vsub.s32 %v1118, %v1120
        %v1122 = vrot.slane %v1114, %v1121
        %v1124 = vunpack.c.l.s4 1934713408
        %v1125 = vunpack.c.0.s8 %v1124
        %v1126 = vlaneseq
        %v1127 = vshrl.u32 %v1126, 7
        %v1128 = vsub.s32 %v1125, %v1127
        %v1129 = vrot.slane %v1115, %v1128
        %v1130 = vcombine.high %v1106, 0.0
        %v1131 = vcombine.high %v1113, 0.0
        %v1132 = vcombine.high %v1122, 0.0
        %v1133 = vcombine.high %v1129, 0.0
        %v1134 = vcombine.low %v1106, %v1113
        %v1136 = vunpack.c.l.s4 1983009808
        %v1137 = vunpack.c.0.s8 %v1136
        %v1138 = vlaneseq
        %v1139 = vshrl.u32 %v1138, 7
        %v1140 = vsub.s32 %v1137, %v1139
        %v1141 = vrot.slane %v1134, %v1140
        %v1142 = vcombine.low %v1130, %v1131
        %v1144 = vunpack.c.l.s4 1983009808
        %v1145 = vunpack.c.0.s8 %v1144
        %v1146 = vlaneseq
        %v1147 = vshrl.u32 %v1146, 7
        %v1148 = vsub.s32 %v1145, %v1147
        %v1149 = vrot.slane %v1142, %v1148
        %v1150 = vcombine.low %v1122, %v1129
        %v1152 = vunpack.c.l.s4 1983009808
        %v1153 = vunpack.c.0.s8 %v1152
        %v1154 = vlaneseq
        %v1155 = vshrl.u32 %v1154, 7
        %v1156 = vsub.s32 %v1153, %v1155
        %v1157 = vrot.slane %v1150, %v1156
        %v1158 = vcombine.low %v1132, %v1133
        %v1160 = vunpack.c.l.s4 1983009808
        %v1161 = vunpack.c.0.s8 %v1160
        %v1162 = vlaneseq
        %v1163 = vshrl.u32 %v1162, 7
        %v1164 = vsub.s32 %v1161, %v1163
        %v1165 = vrot.slane %v1158, %v1164
        %v1166 = vcombine.low %v1141, %v1149
        %v1167 = vcombine.high %v1141, %v1149
        %v1169 = vunpack.c.l.s4 1934713408
        %v1170 = vunpack.c.0.s8 %v1169
        %v1171 = vlaneseq
        %v1172 = vshrl.u32 %v1171, 7
        %v1173 = vsub.s32 %v1170, %v1172
        %v1174 = vrot.slane %v1166, %v1173
        %v1176 = vunpack.c.l.s4 1934713408
        %v1177 = vunpack.c.0.s8 %v1176
        %v1178 = vlaneseq
        %v1179 = vshrl.u32 %v1178, 7
        %v1180 = vsub.s32 %v1177, %v1179
        %v1181 = vrot.slane %v1167, %v1180
        %v1182 = vcombine.low %v1157, %v1165
        %v1183 = vcombine.high %v1157, %v1165
        %v1185 = vunpack.c.l.s4 1934713408
        %v1186 = vunpack.c.0.s8 %v1185
        %v1187 = vlaneseq
        %v1188 = vshrl.u32 %v1187, 7
        %v1189 = vsub.s32 %v1186, %v1188
        %v1190 = vrot.slane %v1182, %v1189
        %v1192 = vunpack.c.l.s4 1934713408
        %v1193 = vunpack.c.0.s8 %v1192
        %v1194 = vlaneseq
        %v1195 = vshrl.u32 %v1194, 7
        %v1196 = vsub.s32 %v1193, %v1195
        %v1197 = vrot.slane %v1183, %v1196
        %v1198 = vcombine.low %v1174, %v1190
        %v1199 = vcombine.high %v1174, %v1190
        %v1200 = vcombine.low %v1181, %v1197
        %v1201 = vcombine.high %v1181, %v1197
        %1203 = vrot.lane.b32.xlu0 %v907, 120
        %v1204 = vpop.permute.xlu0 %1203
        %1206 = vrot.lane.b32.xlu0 %v907, 112
        %v1207 = vpop.permute.xlu0 %1206
        %1209 = vrot.lane.b32.xlu0 %v907, 104
        %v1210 = vpop.permute.xlu0 %1209
        %v1212 = vcombine.low %v907, %v1207
        %v1213 = vcombine.high %v907, %v1207
        %v1215 = vunpack.c.l.s4 1983009808
        %v1216 = vunpack.c.0.s8 %v1215
        %v1217 = vlaneseq
        %v1218 = vshrl.u32 %v1217, 7
        %v1219 = vsub.s32 %v1216, %v1218
        %v1220 = vrot.slane %v1212, %v1219
        %v1222 = vunpack.c.l.s4 1983009808
        %v1223 = vunpack.c.0.s8 %v1222
        %v1224 = vlaneseq
        %v1225 = vshrl.u32 %v1224, 7
        %v1226 = vsub.s32 %v1223, %v1225
        %v1227 = vrot.slane %v1213, %v1226
        %v1228 = vcombine.low %v1204, %v1210
        %v1229 = vcombine.high %v1204, %v1210
        %v1231 = vunpack.c.l.s4 1983009808
        %v1232 = vunpack.c.0.s8 %v1231
        %v1233 = vlaneseq
        %v1234 = vshrl.u32 %v1233, 7
        %v1235 = vsub.s32 %v1232, %v1234
        %v1236 = vrot.slane %v1228, %v1235
        %v1238 = vunpack.c.l.s4 1983009808
        %v1239 = vunpack.c.0.s8 %v1238
        %v1240 = vlaneseq
        %v1241 = vshrl.u32 %v1240, 7
        %v1242 = vsub.s32 %v1239, %v1241
        %v1243 = vrot.slane %v1229, %v1242
        %v1244 = vcombine.low %v1220, %v1236
        %v1245 = vcombine.high %v1220, %v1236
        %v1247 = vunpack.c.l.s4 1934713408
        %v1248 = vunpack.c.0.s8 %v1247
        %v1249 = vlaneseq
        %v1250 = vshrl.u32 %v1249, 7
        %v1251 = vsub.s32 %v1248, %v1250
        %v1252 = vrot.slane %v1244, %v1251
        %v1254 = vunpack.c.l.s4 1934713408
        %v1255 = vunpack.c.0.s8 %v1254
        %v1256 = vlaneseq
        %v1257 = vshrl.u32 %v1256, 7
        %v1258 = vsub.s32 %v1255, %v1257
        %v1259 = vrot.slane %v1245, %v1258
        %v1260 = vcombine.low %v1227, %v1243
        %v1261 = vcombine.high %v1227, %v1243
        %v1263 = vunpack.c.l.s4 1934713408
        %v1264 = vunpack.c.0.s8 %v1263
        %v1265 = vlaneseq
        %v1266 = vshrl.u32 %v1265, 7
        %v1267 = vsub.s32 %v1264, %v1266
        %v1268 = vrot.slane %v1260, %v1267
        %v1270 = vunpack.c.l.s4 1934713408
        %v1271 = vunpack.c.0.s8 %v1270
        %v1272 = vlaneseq
        %v1273 = vshrl.u32 %v1272, 7
        %v1274 = vsub.s32 %v1271, %v1273
        %v1275 = vrot.slane %v1261, %v1274
        %v1276 = vcombine.high %v1252, 0.0
        %v1277 = vcombine.high %v1259, 0.0
        %v1278 = vcombine.high %v1268, 0.0
        %v1279 = vcombine.high %v1275, 0.0
        %v1280 = vcombine.low %v1252, %v1259
        %v1282 = vunpack.c.l.s4 1983009808
        %v1283 = vunpack.c.0.s8 %v1282
        %v1284 = vlaneseq
        %v1285 = vshrl.u32 %v1284, 7
        %v1286 = vsub.s32 %v1283, %v1285
        %v1287 = vrot.slane %v1280, %v1286
        %v1288 = vcombine.low %v1276, %v1277
        %v1290 = vunpack.c.l.s4 1983009808
        %v1291 = vunpack.c.0.s8 %v1290
        %v1292 = vlaneseq
        %v1293 = vshrl.u32 %v1292, 7
        %v1294 = vsub.s32 %v1291, %v1293
        %v1295 = vrot.slane %v1288, %v1294
        %v1296 = vcombine.low %v1268, %v1275
        %v1298 = vunpack.c.l.s4 1983009808
        %v1299 = vunpack.c.0.s8 %v1298
        %v1300 = vlaneseq
        %v1301 = vshrl.u32 %v1300, 7
        %v1302 = vsub.s32 %v1299, %v1301
        %v1303 = vrot.slane %v1296, %v1302
        %v1304 = vcombine.low %v1278, %v1279
        %v1306 = vunpack.c.l.s4 1983009808
        %v1307 = vunpack.c.0.s8 %v1306
        %v1308 = vlaneseq
        %v1309 = vshrl.u32 %v1308, 7
        %v1310 = vsub.s32 %v1307, %v1309
        %v1311 = vrot.slane %v1304, %v1310
        %v1312 = vcombine.low %v1287, %v1295
        %v1313 = vcombine.high %v1287, %v1295
        %v1315 = vunpack.c.l.s4 1934713408
        %v1316 = vunpack.c.0.s8 %v1315
        %v1317 = vlaneseq
        %v1318 = vshrl.u32 %v1317, 7
        %v1319 = vsub.s32 %v1316, %v1318
        %v1320 = vrot.slane %v1312, %v1319
        %v1322 = vunpack.c.l.s4 1934713408
        %v1323 = vunpack.c.0.s8 %v1322
        %v1324 = vlaneseq
        %v1325 = vshrl.u32 %v1324, 7
        %v1326 = vsub.s32 %v1323, %v1325
        %v1327 = vrot.slane %v1313, %v1326
        %v1328 = vcombine.low %v1303, %v1311
        %v1329 = vcombine.high %v1303, %v1311
        %v1331 = vunpack.c.l.s4 1934713408
        %v1332 = vunpack.c.0.s8 %v1331
        %v1333 = vlaneseq
        %v1334 = vshrl.u32 %v1333, 7
        %v1335 = vsub.s32 %v1332, %v1334
        %v1336 = vrot.slane %v1328, %v1335
        %v1338 = vunpack.c.l.s4 1934713408
        %v1339 = vunpack.c.0.s8 %v1338
        %v1340 = vlaneseq
        %v1341 = vshrl.u32 %v1340, 7
        %v1342 = vsub.s32 %v1339, %v1341
        %v1343 = vrot.slane %v1329, %v1342
        %v1344 = vcombine.low %v1320, %v1336
        %v1345 = vcombine.high %v1320, %v1336
        %v1346 = vcombine.low %v1327, %v1343
        %v1347 = vcombine.high %v1327, %v1343
        %v1348 = vld [vmem:[#allocation13] sm:$0xff]
        %v1349 = vld [vmem:[#allocation13 + $0x8] sm:$0xff]
        %v1350 = vld [vmem:[#allocation13 + $0x10] sm:$0xff]
        %v1351 = vld [vmem:[#allocation13 + $0x18] sm:$0xff]
        %vm1352 = vcmask 64512
        %v1354 = vsel %vm1352, %v1052, 0
        %1356 = vmatprep.subr.mxu0 0.0
        %1357 = vmatpush1.msra.mxu0 0.0
        %1358 = vmatprep.subr.mxu0 0.0
        %1359 = vmatpush1.msra.mxu0 0.0
        %1360 = vmatprep.subr.mxu0 0.0
        %1361 = vmatpush1.msra.mxu0 0.0
        %1362 = vmatprep.subr.mxu0 0.0
        %1363 = vmatpush1.msra.mxu0 0.0
        %1364 = vmatprep.subr.mxu0 0.0
        %1365 = vmatpush1.msra.mxu0 0.0
        %1366 = vmatprep.subr.mxu0 0.0
        %1367 = vmatpush1.msra.mxu0 0.0
        %1368 = vmatprep.subr.mxu0 0.0
        %1369 = vmatpush1.msra.mxu0 0.0
        %1370 = vmatprep.subr.mxu0 0.0
        %1371 = vmatpush1.msra.mxu0 0.0
        %1372 = vmatprep.subr.mxu0 0.0
        %1373 = vmatpush1.msra.mxu0 0.0
        %1374 = vmatprep.subr.mxu0 0.0
        %1375 = vmatpush1.msra.mxu0 0.0
        %1376 = vmatprep.subr.mxu0 0.0
        %1377 = vmatpush1.msra.mxu0 0.0
        %1378 = vmatprep.subr.mxu0 0.0
        %1379 = vmatpush1.msra.mxu0 0.0
        %1380 = vmatprep.subr.mxu0 0.0
        %1381 = vmatpush1.msra.mxu0 0.0
        %1382 = vmatprep.subr.mxu0 0.0
        %1383 = vmatpush1.msra.mxu0 0.0
        %1384 = vmatprep.subr.mxu0 0.0
        %1385 = vmatpush1.msra.mxu0 0.0
        %1386 = vmatprep.subr.mxu0 0.0
        %1387 = vmatpush1.msra.mxu0 %v1348
        %1388 = vmatprep.subr.mxu0 0.0
        %1389 = vmatpush2.msra.mxu0 0.0
        %1390 = vmatprep.subr.mxu0 0.0
        %1391 = vmatpush2.msra.mxu0 0.0
        %1392 = vmatprep.subr.mxu0 0.0
        %1393 = vmatpush2.msra.mxu0 0.0
        %1394 = vmatprep.subr.mxu0 0.0
        %1395 = vmatpush2.msra.mxu0 0.0
        %1396 = vmatprep.subr.mxu0 0.0
        %1397 = vmatpush2.msra.mxu0 0.0
        %1398 = vmatprep.subr.mxu0 0.0
        %1399 = vmatpush2.msra.mxu0 0.0
        %1400 = vmatprep.subr.mxu0 0.0
        %1401 = vmatpush2.msra.mxu0 0.0
        %1402 = vmatprep.subr.mxu0 0.0
        %1403 = vmatpush2.msra.mxu0 0.0
        %1404 = vmatprep.subr.mxu0 0.0
        %1405 = vmatpush2.msra.mxu0 0.0
        %1406 = vmatprep.subr.mxu0 0.0
        %1407 = vmatpush2.msra.mxu0 0.0
        %1408 = vmatprep.subr.mxu0 0.0
        %1409 = vmatpush2.msra.mxu0 0.0
        %1410 = vmatprep.subr.mxu0 0.0
        %1411 = vmatpush2.msra.mxu0 0.0
        %1412 = vmatprep.subr.mxu0 0.0
        %1413 = vmatpush2.msra.mxu0 0.0
        %1414 = vmatprep.subr.mxu0 0.0
        %1415 = vmatpush2.msra.mxu0 0.0
        %1416 = vmatprep.subr.mxu0 0.0
        %1417 = vmatpush2.msra.mxu0 0.0
        %1418 = vmatprep.subr.mxu0 0.0
        %1419 = vmatpush2.msra.mxu0 0.0
        %1420 = vmatprep.mubr.f32.mxu0 0.0
        %1421 = vmatmul.mubr.f32.gmra.mxu0 %v1354
        %v1422 = vpop.f32.mrf.mxu0
        %v1423 = vadd.f32 0.0, %v1422
        %v1424 = vpop.f32.mrf.mxu0
        %1425 = vdwg.mxu0
        %v1427 = vsel %vm1352, %v1053, 0
        %1429 = vmatprep.subr.mxu0 0.0
        %1430 = vmatpush1.msra.mxu0 0.0
        %1431 = vmatprep.subr.mxu0 0.0
        %1432 = vmatpush1.msra.mxu0 0.0
        %1433 = vmatprep.subr.mxu0 0.0
        %1434 = vmatpush1.msra.mxu0 0.0
        %1435 = vmatprep.subr.mxu0 0.0
        %1436 = vmatpush1.msra.mxu0 0.0
        %1437 = vmatprep.subr.mxu0 0.0
        %1438 = vmatpush1.msra.mxu0 0.0
        %1439 = vmatprep.subr.mxu0 0.0
        %1440 = vmatpush1.msra.mxu0 0.0
        %1441 = vmatprep.subr.mxu0 0.0
        %1442 = vmatpush1.msra.mxu0 0.0
        %1443 = vmatprep.subr.mxu0 0.0
        %1444 = vmatpush1.msra.mxu0 0.0
        %1445 = vmatprep.subr.mxu0 0.0
        %1446 = vmatpush1.msra.mxu0 0.0
        %1447 = vmatprep.subr.mxu0 0.0
        %1448 = vmatpush1.msra.mxu0 0.0
        %1449 = vmatprep.subr.mxu0 0.0
        %1450 = vmatpush1.msra.mxu0 0.0
        %1451 = vmatprep.subr.mxu0 0.0
        %1452 = vmatpush1.msra.mxu0 0.0
        %1453 = vmatprep.subr.mxu0 0.0
        %1454 = vmatpush1.msra.mxu0 0.0
        %1455 = vmatprep.subr.mxu0 0.0
        %1456 = vmatpush1.msra.mxu0 0.0
        %1457 = vmatprep.subr.mxu0 0.0
        %1458 = vmatpush1.msra.mxu0 0.0
        %1459 = vmatprep.subr.mxu0 0.0
        %1460 = vmatpush1.msra.mxu0 %v1349
        %1461 = vmatprep.subr.mxu0 0.0
        %1462 = vmatpush2.msra.mxu0 0.0
        %1463 = vmatprep.subr.mxu0 0.0
        %1464 = vmatpush2.msra.mxu0 0.0
        %1465 = vmatprep.subr.mxu0 0.0
        %1466 = vmatpush2.msra.mxu0 0.0
        %1467 = vmatprep.subr.mxu0 0.0
        %1468 = vmatpush2.msra.mxu0 0.0
        %1469 = vmatprep.subr.mxu0 0.0
        %1470 = vmatpush2.msra.mxu0 0.0
        %1471 = vmatprep.subr.mxu0 0.0
        %1472 = vmatpush2.msra.mxu0 0.0
        %1473 = vmatprep.subr.mxu0 0.0
        %1474 = vmatpush2.msra.mxu0 0.0
        %1475 = vmatprep.subr.mxu0 0.0
        %1476 = vmatpush2.msra.mxu0 0.0
        %1477 = vmatprep.subr.mxu0 0.0
        %1478 = vmatpush2.msra.mxu0 0.0
        %1479 = vmatprep.subr.mxu0 0.0
        %1480 = vmatpush2.msra.mxu0 0.0
        %1481 = vmatprep.subr.mxu0 0.0
        %1482 = vmatpush2.msra.mxu0 0.0
        %1483 = vmatprep.subr.mxu0 0.0
        %1484 = vmatpush2.msra.mxu0 0.0
        %1485 = vmatprep.subr.mxu0 0.0
        %1486 = vmatpush2.msra.mxu0 0.0
        %1487 = vmatprep.subr.mxu0 0.0
        %1488 = vmatpush2.msra.mxu0 0.0
        %1489 = vmatprep.subr.mxu0 0.0
        %1490 = vmatpush2.msra.mxu0 0.0
        %1491 = vmatprep.subr.mxu0 0.0
        %1492 = vmatpush2.msra.mxu0 0.0
        %1493 = vmatprep.mubr.f32.mxu0 0.0
        %1494 = vmatmul.mubr.f32.gmra.mxu0 %v1427
        %v1495 = vpop.f32.mrf.mxu0
        %v1496 = vadd.f32 0.0, %v1495
        %v1497 = vpop.f32.mrf.mxu0
        %1498 = vdwg.mxu0
        %v1500 = vsel %vm1352, %v1054, 0
        %1502 = vmatprep.subr.mxu0 0.0
        %1503 = vmatpush1.msra.mxu0 0.0
        %1504 = vmatprep.subr.mxu0 0.0
        %1505 = vmatpush1.msra.mxu0 0.0
        %1506 = vmatprep.subr.mxu0 0.0
        %1507 = vmatpush1.msra.mxu0 0.0
        %1508 = vmatprep.subr.mxu0 0.0
        %1509 = vmatpush1.msra.mxu0 0.0
        %1510 = vmatprep.subr.mxu0 0.0
        %1511 = vmatpush1.msra.mxu0 0.0
        %1512 = vmatprep.subr.mxu0 0.0
        %1513 = vmatpush1.msra.mxu0 0.0
        %1514 = vmatprep.subr.mxu0 0.0
        %1515 = vmatpush1.msra.mxu0 0.0
        %1516 = vmatprep.subr.mxu0 0.0
        %1517 = vmatpush1.msra.mxu0 0.0
        %1518 = vmatprep.subr.mxu0 0.0
        %1519 = vmatpush1.msra.mxu0 0.0
        %1520 = vmatprep.subr.mxu0 0.0
        %1521 = vmatpush1.msra.mxu0 0.0
        %1522 = vmatprep.subr.mxu0 0.0
        %1523 = vmatpush1.msra.mxu0 0.0
        %1524 = vmatprep.subr.mxu0 0.0
        %1525 = vmatpush1.msra.mxu0 0.0
        %1526 = vmatprep.subr.mxu0 0.0
        %1527 = vmatpush1.msra.mxu0 0.0
        %1528 = vmatprep.subr.mxu0 0.0
        %1529 = vmatpush1.msra.mxu0 0.0
        %1530 = vmatprep.subr.mxu0 0.0
        %1531 = vmatpush1.msra.mxu0 0.0
        %1532 = vmatprep.subr.mxu0 0.0
        %1533 = vmatpush1.msra.mxu0 %v1350
        %1534 = vmatprep.subr.mxu0 0.0
        %1535 = vmatpush2.msra.mxu0 0.0
        %1536 = vmatprep.subr.mxu0 0.0
        %1537 = vmatpush2.msra.mxu0 0.0
        %1538 = vmatprep.subr.mxu0 0.0
        %1539 = vmatpush2.msra.mxu0 0.0
        %1540 = vmatprep.subr.mxu0 0.0
        %1541 = vmatpush2.msra.mxu0 0.0
        %1542 = vmatprep.subr.mxu0 0.0
        %1543 = vmatpush2.msra.mxu0 0.0
        %1544 = vmatprep.subr.mxu0 0.0
        %1545 = vmatpush2.msra.mxu0 0.0
        %1546 = vmatprep.subr.mxu0 0.0
        %1547 = vmatpush2.msra.mxu0 0.0
        %1548 = vmatprep.subr.mxu0 0.0
        %1549 = vmatpush2.msra.mxu0 0.0
        %1550 = vmatprep.subr.mxu0 0.0
        %1551 = vmatpush2.msra.mxu0 0.0
        %1552 = vmatprep.subr.mxu0 0.0
        %1553 = vmatpush2.msra.mxu0 0.0
        %1554 = vmatprep.subr.mxu0 0.0
        %1555 = vmatpush2.msra.mxu0 0.0
        %1556 = vmatprep.subr.mxu0 0.0
        %1557 = vmatpush2.msra.mxu0 0.0
        %1558 = vmatprep.subr.mxu0 0.0
        %1559 = vmatpush2.msra.mxu0 0.0
        %1560 = vmatprep.subr.mxu0 0.0
        %1561 = vmatpush2.msra.mxu0 0.0
        %1562 = vmatprep.subr.mxu0 0.0
        %1563 = vmatpush2.msra.mxu0 0.0
        %1564 = vmatprep.subr.mxu0 0.0
        %1565 = vmatpush2.msra.mxu0 0.0
        %1566 = vmatprep.mubr.f32.mxu0 0.0
        %1567 = vmatmul.mubr.f32.gmra.mxu0 %v1500
        %v1568 = vpop.f32.mrf.mxu0
        %v1569 = vadd.f32 0.0, %v1568
        %v1570 = vpop.f32.mrf.mxu0
        %1571 = vdwg.mxu0
        %v1573 = vsel %vm1352, %v1055, 0
        %1575 = vmatprep.subr.mxu0 0.0
        %1576 = vmatpush1.msra.mxu0 0.0
        %1577 = vmatprep.subr.mxu0 0.0
        %1578 = vmatpush1.msra.mxu0 0.0
        %1579 = vmatprep.subr.mxu0 0.0
        %1580 = vmatpush1.msra.mxu0 0.0
        %1581 = vmatprep.subr.mxu0 0.0
        %1582 = vmatpush1.msra.mxu0 0.0
        %1583 = vmatprep.subr.mxu0 0.0
        %1584 = vmatpush1.msra.mxu0 0.0
        %1585 = vmatprep.subr.mxu0 0.0
        %1586 = vmatpush1.msra.mxu0 0.0
        %1587 = vmatprep.subr.mxu0 0.0
        %1588 = vmatpush1.msra.mxu0 0.0
        %1589 = vmatprep.subr.mxu0 0.0
        %1590 = vmatpush1.msra.mxu0 0.0
        %1591 = vmatprep.subr.mxu0 0.0
        %1592 = vmatpush1.msra.mxu0 0.0
        %1593 = vmatprep.subr.mxu0 0.0
        %1594 = vmatpush1.msra.mxu0 0.0
        %1595 = vmatprep.subr.mxu0 0.0
        %1596 = vmatpush1.msra.mxu0 0.0
        %1597 = vmatprep.subr.mxu0 0.0
        %1598 = vmatpush1.msra.mxu0 0.0
        %1599 = vmatprep.subr.mxu0 0.0
        %1600 = vmatpush1.msra.mxu0 0.0
        %1601 = vmatprep.subr.mxu0 0.0
        %1602 = vmatpush1.msra.mxu0 0.0
        %1603 = vmatprep.subr.mxu0 0.0
        %1604 = vmatpush1.msra.mxu0 0.0
        %1605 = vmatprep.subr.mxu0 0.0
        %1606 = vmatpush1.msra.mxu0 %v1351
        %1607 = vmatprep.subr.mxu0 0.0
        %1608 = vmatpush2.msra.mxu0 0.0
        %1609 = vmatprep.subr.mxu0 0.0
        %1610 = vmatpush2.msra.mxu0 0.0
        %1611 = vmatprep.subr.mxu0 0.0
        %1612 = vmatpush2.msra.mxu0 0.0
        %1613 = vmatprep.subr.mxu0 0.0
        %1614 = vmatpush2.msra.mxu0 0.0
        %1615 = vmatprep.subr.mxu0 0.0
        %1616 = vmatpush2.msra.mxu0 0.0
        %1617 = vmatprep.subr.mxu0 0.0
        %1618 = vmatpush2.msra.mxu0 0.0
        %1619 = vmatprep.subr.mxu0 0.0
        %1620 = vmatpush2.msra.mxu0 0.0
        %1621 = vmatprep.subr.mxu0 0.0
        %1622 = vmatpush2.msra.mxu0 0.0
        %1623 = vmatprep.subr.mxu0 0.0
        %1624 = vmatpush2.msra.mxu0 0.0
        %1625 = vmatprep.subr.mxu0 0.0
        %1626 = vmatpush2.msra.mxu0 0.0
        %1627 = vmatprep.subr.mxu0 0.0
        %1628 = vmatpush2.msra.mxu0 0.0
        %1629 = vmatprep.subr.mxu0 0.0
        %1630 = vmatpush2.msra.mxu0 0.0
        %1631 = vmatprep.subr.mxu0 0.0
        %1632 = vmatpush2.msra.mxu0 0.0
        %1633 = vmatprep.subr.mxu0 0.0
        %1634 = vmatpush2.msra.mxu0 0.0
        %1635 = vmatprep.subr.mxu0 0.0
        %1636 = vmatpush2.msra.mxu0 0.0
        %1637 = vmatprep.subr.mxu0 0.0
        %1638 = vmatpush2.msra.mxu0 0.0
        %1639 = vmatprep.mubr.f32.mxu0 0.0
        %1640 = vmatmul.mubr.f32.gmra.mxu0 %v1573
        %v1641 = vpop.f32.mrf.mxu0
        %v1642 = vadd.f32 0.0, %v1641
        %v1643 = vpop.f32.mrf.mxu0
        %1644 = vdwg.mxu0
        %1645 = vxpose.xlu0.b32.start [1/16] %v1423, 128
        %1646 = vxpose.xlu0.b32.cont [2/16] 0.0, 128
        %1647 = vxpose.xlu0.b32.cont [3/16] 0.0, 128
        %1648 = vxpose.xlu0.b32.cont [4/16] 0.0, 128
        %1649 = vxpose.xlu0.b32.cont [5/16] 0.0, 128
        %1650 = vxpose.xlu0.b32.cont [6/16] 0.0, 128
        %1651 = vxpose.xlu0.b32.cont [7/16] 0.0, 128
        %1652 = vxpose.xlu0.b32.cont [8/16] 0.0, 128
        %1653 = vxpose.xlu0.b32.cont [9/16] 0.0, 128
        %1654 = vxpose.xlu0.b32.cont [10/16] 0.0, 128
        %1655 = vxpose.xlu0.b32.cont [11/16] 0.0, 128
        %1656 = vxpose.xlu0.b32.cont [12/16] 0.0, 128
        %1657 = vxpose.xlu0.b32.cont [13/16] 0.0, 128
        %1658 = vxpose.xlu0.b32.cont [14/16] 0.0, 128
        %1659 = vxpose.xlu0.b32.cont [15/16] 0.0, 128
        %1660 = vxpose.xlu0.b32.end [16/16] 0.0, 128
        %v1661 = vpop.trf.xlu0
        %v1662 = vpop.trf.xlu0
        %v1663 = vpop.trf.xlu0
        %v1664 = vpop.trf.xlu0
        %v1665 = vpop.trf.xlu0
        %v1666 = vpop.trf.xlu0
        %v1667 = vpop.trf.xlu0
        %v1668 = vpop.trf.xlu0
        %v1669 = vpop.trf.xlu0
        %v1670 = vpop.trf.xlu0
        %v1671 = vpop.trf.xlu0
        %v1672 = vpop.trf.xlu0
        %v1673 = vpop.trf.xlu0
        %v1674 = vpop.trf.xlu0
        %v1675 = vpop.trf.xlu0
        %v1676 = vpop.trf.xlu0
        %1677 = vxpose.xlu0.b32.start [1/16] %v1496, 128
        %1678 = vxpose.xlu0.b32.cont [2/16] 0.0, 128
        %1679 = vxpose.xlu0.b32.cont [3/16] 0.0, 128
        %1680 = vxpose.xlu0.b32.cont [4/16] 0.0, 128
        %1681 = vxpose.xlu0.b32.cont [5/16] 0.0, 128
        %1682 = vxpose.xlu0.b32.cont [6/16] 0.0, 128
        %1683 = vxpose.xlu0.b32.cont [7/16] 0.0, 128
        %1684 = vxpose.xlu0.b32.cont [8/16] 0.0, 128
        %1685 = vxpose.xlu0.b32.cont [9/16] 0.0, 128
        %1686 = vxpose.xlu0.b32.cont [10/16] 0.0, 128
        %1687 = vxpose.xlu0.b32.cont [11/16] 0.0, 128
        %1688 = vxpose.xlu0.b32.cont [12/16] 0.0, 128
        %1689 = vxpose.xlu0.b32.cont [13/16] 0.0, 128
        %1690 = vxpose.xlu0.b32.cont [14/16] 0.0, 128
        %1691 = vxpose.xlu0.b32.cont [15/16] 0.0, 128
        %1692 = vxpose.xlu0.b32.end [16/16] 0.0, 128
        %v1693 = vpop.trf.xlu0
        %v1694 = vpop.trf.xlu0
        %v1695 = vpop.trf.xlu0
        %v1696 = vpop.trf.xlu0
        %v1697 = vpop.trf.xlu0
        %v1698 = vpop.trf.xlu0
        %v1699 = vpop.trf.xlu0
        %v1700 = vpop.trf.xlu0
        %v1701 = vpop.trf.xlu0
        %v1702 = vpop.trf.xlu0
        %v1703 = vpop.trf.xlu0
        %v1704 = vpop.trf.xlu0
        %v1705 = vpop.trf.xlu0
        %v1706 = vpop.trf.xlu0
        %v1707 = vpop.trf.xlu0
        %v1708 = vpop.trf.xlu0
        %1709 = vxpose.xlu0.b32.start [1/16] %v1569, 128
        %1710 = vxpose.xlu0.b32.cont [2/16] 0.0, 128
        %1711 = vxpose.xlu0.b32.cont [3/16] 0.0, 128
        %1712 = vxpose.xlu0.b32.cont [4/16] 0.0, 128
        %1713 = vxpose.xlu0.b32.cont [5/16] 0.0, 128
        %1714 = vxpose.xlu0.b32.cont [6/16] 0.0, 128
        %1715 = vxpose.xlu0.b32.cont [7/16] 0.0, 128
        %1716 = vxpose.xlu0.b32.cont [8/16] 0.0, 128
        %1717 = vxpose.xlu0.b32.cont [9/16] 0.0, 128
        %1718 = vxpose.xlu0.b32.cont [10/16] 0.0, 128
        %1719 = vxpose.xlu0.b32.cont [11/16] 0.0, 128
        %1720 = vxpose.xlu0.b32.cont [12/16] 0.0, 128
        %1721 = vxpose.xlu0.b32.cont [13/16] 0.0, 128
        %1722 = vxpose.xlu0.b32.cont [14/16] 0.0, 128
        %1723 = vxpose.xlu0.b32.cont [15/16] 0.0, 128
        %1724 = vxpose.xlu0.b32.end [16/16] 0.0, 128
        %v1725 = vpop.trf.xlu0
        %v1726 = vpop.trf.xlu0
        %v1727 = vpop.trf.xlu0
        %v1728 = vpop.trf.xlu0
        %v1729 = vpop.trf.xlu0
        %v1730 = vpop.trf.xlu0
        %v1731 = vpop.trf.xlu0
        %v1732 = vpop.trf.xlu0
        %v1733 = vpop.trf.xlu0
        %v1734 = vpop.trf.xlu0
        %v1735 = vpop.trf.xlu0
        %v1736 = vpop.trf.xlu0
        %v1737 = vpop.trf.xlu0
        %v1738 = vpop.trf.xlu0
        %v1739 = vpop.trf.xlu0
        %v1740 = vpop.trf.xlu0
        %1741 = vxpose.xlu0.b32.start [1/16] %v1642, 128
        %1742 = vxpose.xlu0.b32.cont [2/16] 0.0, 128
        %1743 = vxpose.xlu0.b32.cont [3/16] 0.0, 128
        %1744 = vxpose.xlu0.b32.cont [4/16] 0.0, 128
        %1745 = vxpose.xlu0.b32.cont [5/16] 0.0, 128
        %1746 = vxpose.xlu0.b32.cont [6/16] 0.0, 128
        %1747 = vxpose.xlu0.b32.cont [7/16] 0.0, 128
        %1748 = vxpose.xlu0.b32.cont [8/16] 0.0, 128
        %1749 = vxpose.xlu0.b32.cont [9/16] 0.0, 128
        %1750 = vxpose.xlu0.b32.cont [10/16] 0.0, 128
        %1751 = vxpose.xlu0.b32.cont [11/16] 0.0, 128
        %1752 = vxpose.xlu0.b32.cont [12/16] 0.0, 128
        %1753 = vxpose.xlu0.b32.cont [13/16] 0.0, 128
        %1754 = vxpose.xlu0.b32.cont [14/16] 0.0, 128
        %1755 = vxpose.xlu0.b32.cont [15/16] 0.0, 128
        %1756 = vxpose.xlu0.b32.end [16/16] 0.0, 128
        %v1757 = vpop.trf.xlu0
        %v1758 = vpop.trf.xlu0
        %v1759 = vpop.trf.xlu0
        %v1760 = vpop.trf.xlu0
        %v1761 = vpop.trf.xlu0
        %v1762 = vpop.trf.xlu0
        %v1763 = vpop.trf.xlu0
        %v1764 = vpop.trf.xlu0
        %v1765 = vpop.trf.xlu0
        %v1766 = vpop.trf.xlu0
        %v1767 = vpop.trf.xlu0
        %v1768 = vpop.trf.xlu0
        %v1769 = vpop.trf.xlu0
        %v1770 = vpop.trf.xlu0
        %v1771 = vpop.trf.xlu0
        %v1772 = vpop.trf.xlu0
        %v1773 = vcombine.low %v1661, %v1725
        %v1774 = vcombine.high %v1661, %v1725
        %v1776 = vunpack.c.l.s4 1983009808
        %v1777 = vunpack.c.0.s8 %v1776
        %v1778 = vlaneseq
        %v1779 = vshrl.u32 %v1778, 7
        %v1780 = vsub.s32 %v1777, %v1779
        %v1781 = vrot.slane %v1773, %v1780
        %v1783 = vunpack.c.l.s4 1983009808
        %v1784 = vunpack.c.0.s8 %v1783
        %v1785 = vlaneseq
        %v1786 = vshrl.u32 %v1785, 7
        %v1787 = vsub.s32 %v1784, %v1786
        %v1788 = vrot.slane %v1774, %v1787
        %v1789 = vcombine.low %v1693, %v1757
        %v1790 = vcombine.high %v1693, %v1757
        %v1792 = vunpack.c.l.s4 1983009808
        %v1793 = vunpack.c.0.s8 %v1792
        %v1794 = vlaneseq
        %v1795 = vshrl.u32 %v1794, 7
        %v1796 = vsub.s32 %v1793, %v1795
        %v1797 = vrot.slane %v1789, %v1796
        %v1799 = vunpack.c.l.s4 1983009808
        %v1800 = vunpack.c.0.s8 %v1799
        %v1801 = vlaneseq
        %v1802 = vshrl.u32 %v1801, 7
        %v1803 = vsub.s32 %v1800, %v1802
        %v1804 = vrot.slane %v1790, %v1803
        %v1805 = vcombine.low %v1781, %v1797
        %v1806 = vcombine.high %v1781, %v1797
        %v1808 = vunpack.c.l.s4 1934713408
        %v1809 = vunpack.c.0.s8 %v1808
        %v1810 = vlaneseq
        %v1811 = vshrl.u32 %v1810, 7
        %v1812 = vsub.s32 %v1809, %v1811
        %v1813 = vrot.slane %v1805, %v1812
        %v1815 = vunpack.c.l.s4 1934713408
        %v1816 = vunpack.c.0.s8 %v1815
        %v1817 = vlaneseq
        %v1818 = vshrl.u32 %v1817, 7
        %v1819 = vsub.s32 %v1816, %v1818
        %v1820 = vrot.slane %v1806, %v1819
        %v1821 = vcombine.low %v1788, %v1804
        %v1822 = vcombine.high %v1788, %v1804
        %v1824 = vunpack.c.l.s4 1934713408
        %v1825 = vunpack.c.0.s8 %v1824
        %v1826 = vlaneseq
        %v1827 = vshrl.u32 %v1826, 7
        %v1828 = vsub.s32 %v1825, %v1827
        %v1829 = vrot.slane %v1821, %v1828
        %v1831 = vunpack.c.l.s4 1934713408
        %v1832 = vunpack.c.0.s8 %v1831
        %v1833 = vlaneseq
        %v1834 = vshrl.u32 %v1833, 7
        %v1835 = vsub.s32 %v1832, %v1834
        %v1836 = vrot.slane %v1822, %v1835
        %v1837 = vcombine.high %v1813, 0.0
        %v1838 = vcombine.high %v1820, 0.0
        %v1839 = vcombine.high %v1829, 0.0
        %v1840 = vcombine.high %v1836, 0.0
        %v1841 = vcombine.low %v1662, %v1726
        %v1842 = vcombine.high %v1662, %v1726
        %v1844 = vunpack.c.l.s4 1983009808
        %v1845 = vunpack.c.0.s8 %v1844
        %v1846 = vlaneseq
        %v1847 = vshrl.u32 %v1846, 7
        %v1848 = vsub.s32 %v1845, %v1847
        %v1849 = vrot.slane %v1841, %v1848
        %v1851 = vunpack.c.l.s4 1983009808
        %v1852 = vunpack.c.0.s8 %v1851
        %v1853 = vlaneseq
        %v1854 = vshrl.u32 %v1853, 7
        %v1855 = vsub.s32 %v1852, %v1854
        %v1856 = vrot.slane %v1842, %v1855
        %v1857 = vcombine.low %v1694, %v1758
        %v1858 = vcombine.high %v1694, %v1758
        %v1860 = vunpack.c.l.s4 1983009808
        %v1861 = vunpack.c.0.s8 %v1860
        %v1862 = vlaneseq
        %v1863 = vshrl.u32 %v1862, 7
        %v1864 = vsub.s32 %v1861, %v1863
        %v1865 = vrot.slane %v1857, %v1864
        %v1867 = vunpack.c.l.s4 1983009808
        %v1868 = vunpack.c.0.s8 %v1867
        %v1869 = vlaneseq
        %v1870 = vshrl.u32 %v1869, 7
        %v1871 = vsub.s32 %v1868, %v1870
        %v1872 = vrot.slane %v1858, %v1871
        %v1873 = vcombine.low %v1849, %v1865
        %v1874 = vcombine.high %v1849, %v1865
        %v1876 = vunpack.c.l.s4 1934713408
        %v1877 = vunpack.c.0.s8 %v1876
        %v1878 = vlaneseq
        %v1879 = vshrl.u32 %v1878, 7
        %v1880 = vsub.s32 %v1877, %v1879
        %v1881 = vrot.slane %v1873, %v1880
        %v1883 = vunpack.c.l.s4 1934713408
        %v1884 = vunpack.c.0.s8 %v1883
        %v1885 = vlaneseq
        %v1886 = vshrl.u32 %v1885, 7
        %v1887 = vsub.s32 %v1884, %v1886
        %v1888 = vrot.slane %v1874, %v1887
        %v1889 = vcombine.low %v1856, %v1872
        %v1890 = vcombine.high %v1856, %v1872
        %v1892 = vunpack.c.l.s4 1934713408
        %v1893 = vunpack.c.0.s8 %v1892
        %v1894 = vlaneseq
        %v1895 = vshrl.u32 %v1894, 7
        %v1896 = vsub.s32 %v1893, %v1895
        %v1897 = vrot.slane %v1889, %v1896
        %v1899 = vunpack.c.l.s4 1934713408
        %v1900 = vunpack.c.0.s8 %v1899
        %v1901 = vlaneseq
        %v1902 = vshrl.u32 %v1901, 7
        %v1903 = vsub.s32 %v1900, %v1902
        %v1904 = vrot.slane %v1890, %v1903
        %v1905 = vcombine.high %v1881, 0.0
        %v1906 = vcombine.high %v1888, 0.0
        %v1907 = vcombine.high %v1897, 0.0
        %v1908 = vcombine.high %v1904, 0.0
        %v1909 = vcombine.low %v1663, %v1727
        %v1910 = vcombine.high %v1663, %v1727
        %v1912 = vunpack.c.l.s4 1983009808
        %v1913 = vunpack.c.0.s8 %v1912
        %v1914 = vlaneseq
        %v1915 = vshrl.u32 %v1914, 7
        %v1916 = vsub.s32 %v1913, %v1915
        %v1917 = vrot.slane %v1909, %v1916
        %v1919 = vunpack.c.l.s4 1983009808
        %v1920 = vunpack.c.0.s8 %v1919
        %v1921 = vlaneseq
        %v1922 = vshrl.u32 %v1921, 7
        %v1923 = vsub.s32 %v1920, %v1922
        %v1924 = vrot.slane %v1910, %v1923
        %v1925 = vcombine.low %v1695, %v1759
        %v1926 = vcombine.high %v1695, %v1759
        %v1928 = vunpack.c.l.s4 1983009808
        %v1929 = vunpack.c.0.s8 %v1928
        %v1930 = vlaneseq
        %v1931 = vshrl.u32 %v1930, 7
        %v1932 = vsub.s32 %v1929, %v1931
        %v1933 = vrot.slane %v1925, %v1932
        %v1935 = vunpack.c.l.s4 1983009808
        %v1936 = vunpack.c.0.s8 %v1935
        %v1937 = vlaneseq
        %v1938 = vshrl.u32 %v1937, 7
        %v1939 = vsub.s32 %v1936, %v1938
        %v1940 = vrot.slane %v1926, %v1939
        %v1941 = vcombine.low %v1917, %v1933
        %v1942 = vcombine.high %v1917, %v1933
        %v1944 = vunpack.c.l.s4 1934713408
        %v1945 = vunpack.c.0.s8 %v1944
        %v1946 = vlaneseq
        %v1947 = vshrl.u32 %v1946, 7
        %v1948 = vsub.s32 %v1945, %v1947
        %v1949 = vrot.slane %v1941, %v1948
        %v1951 = vunpack.c.l.s4 1934713408
        %v1952 = vunpack.c.0.s8 %v1951
        %v1953 = vlaneseq
        %v1954 = vshrl.u32 %v1953, 7
        %v1955 = vsub.s32 %v1952, %v1954
        %v1956 = vrot.slane %v1942, %v1955
        %v1957 = vcombine.low %v1924, %v1940
        %v1958 = vcombine.high %v1924, %v1940
        %v1960 = vunpack.c.l.s4 1934713408
        %v1961 = vunpack.c.0.s8 %v1960
        %v1962 = vlaneseq
        %v1963 = vshrl.u32 %v1962, 7
        %v1964 = vsub.s32 %v1961, %v1963
        %v1965 = vrot.slane %v1957, %v1964
        %v1967 = vunpack.c.l.s4 1934713408
        %v1968 = vunpack.c.0.s8 %v1967
        %v1969 = vlaneseq
        %v1970 = vshrl.u32 %v1969, 7
        %v1971 = vsub.s32 %v1968, %v1970
        %v1972 = vrot.slane %v1958, %v1971
        %v1973 = vcombine.high %v1949, 0.0
        %v1974 = vcombine.high %v1956, 0.0
        %v1975 = vcombine.high %v1965, 0.0
        %v1976 = vcombine.high %v1972, 0.0
        %v1977 = vcombine.low %v1664, %v1728
        %v1978 = vcombine.high %v1664, %v1728
        %v1980 = vunpack.c.l.s4 1983009808
        %v1981 = vunpack.c.0.s8 %v1980
        %v1982 = vlaneseq
        %v1983 = vshrl.u32 %v1982, 7
        %v1984 = vsub.s32 %v1981, %v1983
        %v1985 = vrot.slane %v1977, %v1984
        %v1987 = vunpack.c.l.s4 1983009808
        %v1988 = vunpack.c.0.s8 %v1987
        %v1989 = vlaneseq
        %v1990 = vshrl.u32 %v1989, 7
        %v1991 = vsub.s32 %v1988, %v1990
        %v1992 = vrot.slane %v1978, %v1991
        %v1993 = vcombine.low %v1696, %v1760
        %v1994 = vcombine.high %v1696, %v1760
        %v1996 = vunpack.c.l.s4 1983009808
        %v1997 = vunpack.c.0.s8 %v1996
        %v1998 = vlaneseq
        %v1999 = vshrl.u32 %v1998, 7
        %v2000 = vsub.s32 %v1997, %v1999
        %v2001 = vrot.slane %v1993, %v2000
        %v2003 = vunpack.c.l.s4 1983009808
        %v2004 = vunpack.c.0.s8 %v2003
        %v2005 = vlaneseq
        %v2006 = vshrl.u32 %v2005, 7
        %v2007 = vsub.s32 %v2004, %v2006
        %v2008 = vrot.slane %v1994, %v2007
        %v2009 = vcombine.low %v1985, %v2001
        %v2010 = vcombine.high %v1985, %v2001
        %v2012 = vunpack.c.l.s4 1934713408
        %v2013 = vunpack.c.0.s8 %v2012
        %v2014 = vlaneseq
        %v2015 = vshrl.u32 %v2014, 7
        %v2016 = vsub.s32 %v2013, %v2015
        %v2017 = vrot.slane %v2009, %v2016
        %v2019 = vunpack.c.l.s4 1934713408
        %v2020 = vunpack.c.0.s8 %v2019
        %v2021 = vlaneseq
        %v2022 = vshrl.u32 %v2021, 7
        %v2023 = vsub.s32 %v2020, %v2022
        %v2024 = vrot.slane %v2010, %v2023
        %v2025 = vcombine.low %v1992, %v2008
        %v2026 = vcombine.high %v1992, %v2008
        %v2028 = vunpack.c.l.s4 1934713408
        %v2029 = vunpack.c.0.s8 %v2028
        %v2030 = vlaneseq
        %v2031 = vshrl.u32 %v2030, 7
        %v2032 = vsub.s32 %v2029, %v2031
        %v2033 = vrot.slane %v2025, %v2032
        %v2035 = vunpack.c.l.s4 1934713408
        %v2036 = vunpack.c.0.s8 %v2035
        %v2037 = vlaneseq
        %v2038 = vshrl.u32 %v2037, 7
        %v2039 = vsub.s32 %v2036, %v2038
        %v2040 = vrot.slane %v2026, %v2039
        %v2041 = vcombine.high %v2017, 0.0
        %v2042 = vcombine.high %v2024, 0.0
        %v2043 = vcombine.high %v2033, 0.0
        %v2044 = vcombine.high %v2040, 0.0
        %2045 = vxpose.xlu0.b32.start [1/16] %v1813, 128
        %2046 = vxpose.xlu0.b32.cont [2/16] 0.0, 128
        %2047 = vxpose.xlu0.b32.cont [3/16] 0.0, 128
        %2048 = vxpose.xlu0.b32.cont [4/16] 0.0, 128
        %2049 = vxpose.xlu0.b32.cont [5/16] 0.0, 128
        %2050 = vxpose.xlu0.b32.cont [6/16] 0.0, 128
        %2051 = vxpose.xlu0.b32.cont [7/16] 0.0, 128
        %2052 = vxpose.xlu0.b32.cont [8/16] 0.0, 128
        %2053 = vxpose.xlu0.b32.cont [9/16] 0.0, 128
        %2054 = vxpose.xlu0.b32.cont [10/16] 0.0, 128
        %2055 = vxpose.xlu0.b32.cont [11/16] 0.0, 128
        %2056 = vxpose.xlu0.b32.cont [12/16] 0.0, 128
        %2057 = vxpose.xlu0.b32.cont [13/16] 0.0, 128
        %2058 = vxpose.xlu0.b32.cont [14/16] 0.0, 128
        %2059 = vxpose.xlu0.b32.cont [15/16] 0.0, 128
        %2060 = vxpose.xlu0.b32.end [16/16] 0.0, 128
        %v2061 = vpop.trf.xlu0
        %v2062 = vpop.trf.xlu0
        %v2063 = vpop.trf.xlu0
        %v2064 = vpop.trf.xlu0
        %v2065 = vpop.trf.xlu0
        %v2066 = vpop.trf.xlu0
        %v2067 = vpop.trf.xlu0
        %v2068 = vpop.trf.xlu0
        %v2069 = vpop.trf.xlu0
        %v2070 = vpop.trf.xlu0
        %v2071 = vpop.trf.xlu0
        %v2072 = vpop.trf.xlu0
        %v2073 = vpop.trf.xlu0
        %v2074 = vpop.trf.xlu0
        %v2075 = vpop.trf.xlu0
        %v2076 = vpop.trf.xlu0
        %2077 = vxpose.xlu0.b32.start [1/16] %v1837, 128
        %2078 = vxpose.xlu0.b32.cont [2/16] 0.0, 128
        %2079 = vxpose.xlu0.b32.cont [3/16] 0.0, 128
        %2080 = vxpose.xlu0.b32.cont [4/16] 0.0, 128
        %2081 = vxpose.xlu0.b32.cont [5/16] 0.0, 128
        %2082 = vxpose.xlu0.b32.cont [6/16] 0.0, 128
        %2083 = vxpose.xlu0.b32.cont [7/16] 0.0, 128
        %2084 = vxpose.xlu0.b32.cont [8/16] 0.0, 128
        %2085 = vxpose.xlu0.b32.cont [9/16] 0.0, 128
        %2086 = vxpose.xlu0.b32.cont [10/16] 0.0, 128
        %2087 = vxpose.xlu0.b32.cont [11/16] 0.0, 128
        %2088 = vxpose.xlu0.b32.cont [12/16] 0.0, 128
        %2089 = vxpose.xlu0.b32.cont [13/16] 0.0, 128
        %2090 = vxpose.xlu0.b32.cont [14/16] 0.0, 128
        %2091 = vxpose.xlu0.b32.cont [15/16] 0.0, 128
        %2092 = vxpose.xlu0.b32.end [16/16] 0.0, 128
        %v2093 = vpop.trf.xlu0
        %v2094 = vpop.trf.xlu0
        %v2095 = vpop.trf.xlu0
        %v2096 = vpop.trf.xlu0
        %v2097 = vpop.trf.xlu0
        %v2098 = vpop.trf.xlu0
        %v2099 = vpop.trf.xlu0
        %v2100 = vpop.trf.xlu0
        %v2101 = vpop.trf.xlu0
        %v2102 = vpop.trf.xlu0
        %v2103 = vpop.trf.xlu0
        %v2104 = vpop.trf.xlu0
        %v2105 = vpop.trf.xlu0
        %v2106 = vpop.trf.xlu0
        %v2107 = vpop.trf.xlu0
        %v2108 = vpop.trf.xlu0
        %2109 = vxpose.xlu0.b32.start [1/16] %v1820, 128
        %2110 = vxpose.xlu0.b32.cont [2/16] 0.0, 128
        %2111 = vxpose.xlu0.b32.cont [3/16] 0.0, 128
        %2112 = vxpose.xlu0.b32.cont [4/16] 0.0, 128
        %2113 = vxpose.xlu0.b32.cont [5/16] 0.0, 128
        %2114 = vxpose.xlu0.b32.cont [6/16] 0.0, 128
        %2115 = vxpose.xlu0.b32.cont [7/16] 0.0, 128
        %2116 = vxpose.xlu0.b32.cont [8/16] 0.0, 128
        %2117 = vxpose.xlu0.b32.cont [9/16] 0.0, 128
        %2118 = vxpose.xlu0.b32.cont [10/16] 0.0, 128
        %2119 = vxpose.xlu0.b32.cont [11/16] 0.0, 128
        %2120 = vxpose.xlu0.b32.cont [12/16] 0.0, 128
        %2121 = vxpose.xlu0.b32.cont [13/16] 0.0, 128
        %2122 = vxpose.xlu0.b32.cont [14/16] 0.0, 128
        %2123 = vxpose.xlu0.b32.cont [15/16] 0.0, 128
        %2124 = vxpose.xlu0.b32.end [16/16] 0.0, 128
        %v2125 = vpop.trf.xlu0
        %v2126 = vpop.trf.xlu0
        %v2127 = vpop.trf.xlu0
        %v2128 = vpop.trf.xlu0
        %v2129 = vpop.trf.xlu0
        %v2130 = vpop.trf.xlu0
        %v2131 = vpop.trf.xlu0
        %v2132 = vpop.trf.xlu0
        %v2133 = vpop.trf.xlu0
        %v2134 = vpop.trf.xlu0
        %v2135 = vpop.trf.xlu0
        %v2136 = vpop.trf.xlu0
        %v2137 = vpop.trf.xlu0
        %v2138 = vpop.trf.xlu0
        %v2139 = vpop.trf.xlu0
        %v2140 = vpop.trf.xlu0
        %2141 = vxpose.xlu0.b32.start [1/16] %v1838, 128
        %2142 = vxpose.xlu0.b32.cont [2/16] 0.0, 128
        %2143 = vxpose.xlu0.b32.cont [3/16] 0.0, 128
        %2144 = vxpose.xlu0.b32.cont [4/16] 0.0, 128
        %2145 = vxpose.xlu0.b32.cont [5/16] 0.0, 128
        %2146 = vxpose.xlu0.b32.cont [6/16] 0.0, 128
        %2147 = vxpose.xlu0.b32.cont [7/16] 0.0, 128
        %2148 = vxpose.xlu0.b32.cont [8/16] 0.0, 128
        %2149 = vxpose.xlu0.b32.cont [9/16] 0.0, 128
        %2150 = vxpose.xlu0.b32.cont [10/16] 0.0, 128
        %2151 = vxpose.xlu0.b32.cont [11/16] 0.0, 128
        %2152 = vxpose.xlu0.b32.cont [12/16] 0.0, 128
        %2153 = vxpose.xlu0.b32.cont [13/16] 0.0, 128
        %2154 = vxpose.xlu0.b32.cont [14/16] 0.0, 128
        %2155 = vxpose.xlu0.b32.cont [15/16] 0.0, 128
        %2156 = vxpose.xlu0.b32.end [16/16] 0.0, 128
        %v2157 = vpop.trf.xlu0
        %v2158 = vpop.trf.xlu0
        %v2159 = vpop.trf.xlu0
        %v2160 = vpop.trf.xlu0
        %v2161 = vpop.trf.xlu0
        %v2162 = vpop.trf.xlu0
        %v2163 = vpop.trf.xlu0
        %v2164 = vpop.trf.xlu0
        %v2165 = vpop.trf.xlu0
        %v2166 = vpop.trf.xlu0
        %v2167 = vpop.trf.xlu0
        %v2168 = vpop.trf.xlu0
        %v2169 = vpop.trf.xlu0
        %v2170 = vpop.trf.xlu0
        %v2171 = vpop.trf.xlu0
        %v2172 = vpop.trf.xlu0
        %2173 = vxpose.xlu0.b32.start [1/16] %v1829, 128
        %2174 = vxpose.xlu0.b32.cont [2/16] 0.0, 128
        %2175 = vxpose.xlu0.b32.cont [3/16] 0.0, 128
        %2176 = vxpose.xlu0.b32.cont [4/16] 0.0, 128
        %2177 = vxpose.xlu0.b32.cont [5/16] 0.0, 128
        %2178 = vxpose.xlu0.b32.cont [6/16] 0.0, 128
        %2179 = vxpose.xlu0.b32.cont [7/16] 0.0, 128
        %2180 = vxpose.xlu0.b32.cont [8/16] 0.0, 128
        %2181 = vxpose.xlu0.b32.cont [9/16] 0.0, 128
        %2182 = vxpose.xlu0.b32.cont [10/16] 0.0, 128
        %2183 = vxpose.xlu0.b32.cont [11/16] 0.0, 128
        %2184 = vxpose.xlu0.b32.cont [12/16] 0.0, 128
        %2185 = vxpose.xlu0.b32.cont [13/16] 0.0, 128
        %2186 = vxpose.xlu0.b32.cont [14/16] 0.0, 128
        %2187 = vxpose.xlu0.b32.cont [15/16] 0.0, 128
        %2188 = vxpose.xlu0.b32.end [16/16] 0.0, 128
        %v2189 = vpop.trf.xlu0
        %v2190 = vpop.trf.xlu0
        %v2191 = vpop.trf.xlu0
        %v2192 = vpop.trf.xlu0
        %v2193 = vpop.trf.xlu0
        %v2194 = vpop.trf.xlu0
        %v2195 = vpop.trf.xlu0
        %v2196 = vpop.trf.xlu0
        %v2197 = vpop.trf.xlu0
        %v2198 = vpop.trf.xlu0
        %v2199 = vpop.trf.xlu0
        %v2200 = vpop.trf.xlu0
        %v2201 = vpop.trf.xlu0
        %v2202 = vpop.trf.xlu0
        %v2203 = vpop.trf.xlu0
        %v2204 = vpop.trf.xlu0
        %2205 = vxpose.xlu0.b32.start [1/16] %v1839, 128
        %2206 = vxpose.xlu0.b32.cont [2/16] 0.0, 128
        %2207 = vxpose.xlu0.b32.cont [3/16] 0.0, 128
        %2208 = vxpose.xlu0.b32.cont [4/16] 0.0, 128
        %2209 = vxpose.xlu0.b32.cont [5/16] 0.0, 128
        %2210 = vxpose.xlu0.b32.cont [6/16] 0.0, 128
        %2211 = vxpose.xlu0.b32.cont [7/16] 0.0, 128
        %2212 = vxpose.xlu0.b32.cont [8/16] 0.0, 128
        %2213 = vxpose.xlu0.b32.cont [9/16] 0.0, 128
        %2214 = vxpose.xlu0.b32.cont [10/16] 0.0, 128
        %2215 = vxpose.xlu0.b32.cont [11/16] 0.0, 128
        %2216 = vxpose.xlu0.b32.cont [12/16] 0.0, 128
        %2217 = vxpose.xlu0.b32.cont [13/16] 0.0, 128
        %2218 = vxpose.xlu0.b32.cont [14/16] 0.0, 128
        %2219 = vxpose.xlu0.b32.cont [15/16] 0.0, 128
        %2220 = vxpose.xlu0.b32.end [16/16] 0.0, 128
        %v2221 = vpop.trf.xlu0
        %v2222 = vpop.trf.xlu0
        %v2223 = vpop.trf.xlu0
        %v2224 = vpop.trf.xlu0
        %v2225 = vpop.trf.xlu0
        %v2226 = vpop.trf.xlu0
        %v2227 = vpop.trf.xlu0
        %v2228 = vpop.trf.xlu0
        %v2229 = vpop.trf.xlu0
        %v2230 = vpop.trf.xlu0
        %v2231 = vpop.trf.xlu0
        %v2232 = vpop.trf.xlu0
        %v2233 = vpop.trf.xlu0
        %v2234 = vpop.trf.xlu0
        %v2235 = vpop.trf.xlu0
        %v2236 = vpop.trf.xlu0
        %2237 = vxpose.xlu0.b32.start [1/16] %v1836, 128
        %2238 = vxpose.xlu0.b32.cont [2/16] 0.0, 128
        %2239 = vxpose.xlu0.b32.cont [3/16] 0.0, 128
        %2240 = vxpose.xlu0.b32.cont [4/16] 0.0, 128
        %2241 = vxpose.xlu0.b32.cont [5/16] 0.0, 128
        %2242 = vxpose.xlu0.b32.cont [6/16] 0.0, 128
        %2243 = vxpose.xlu0.b32.cont [7/16] 0.0, 128
        %2244 = vxpose.xlu0.b32.cont [8/16] 0.0, 128
        %2245 = vxpose.xlu0.b32.cont [9/16] 0.0, 128
        %2246 = vxpose.xlu0.b32.cont [10/16] 0.0, 128
        %2247 = vxpose.xlu0.b32.cont [11/16] 0.0, 128
        %2248 = vxpose.xlu0.b32.cont [12/16] 0.0, 128
        %2249 = vxpose.xlu0.b32.cont [13/16] 0.0, 128
        %2250 = vxpose.xlu0.b32.cont [14/16] 0.0, 128
        %2251 = vxpose.xlu0.b32.cont [15/16] 0.0, 128
        %2252 = vxpose.xlu0.b32.end [16/16] 0.0, 128
        %v2253 = vpop.trf.xlu0
        %v2254 = vpop.trf.xlu0
        %v2255 = vpop.trf.xlu0
        %v2256 = vpop.trf.xlu0
        %v2257 = vpop.trf.xlu0
        %v2258 = vpop.trf.xlu0
        %v2259 = vpop.trf.xlu0
        %v2260 = vpop.trf.xlu0
        %v2261 = vpop.trf.xlu0
        %v2262 = vpop.trf.xlu0
        %v2263 = vpop.trf.xlu0
        %v2264 = vpop.trf.xlu0
        %v2265 = vpop.trf.xlu0
        %v2266 = vpop.trf.xlu0
        %v2267 = vpop.trf.xlu0
        %v2268 = vpop.trf.xlu0
        %2269 = vxpose.xlu0.b32.start [1/16] %v1840, 128
        %2270 = vxpose.xlu0.b32.cont [2/16] 0.0, 128
        %2271 = vxpose.xlu0.b32.cont [3/16] 0.0, 128
        %2272 = vxpose.xlu0.b32.cont [4/16] 0.0, 128
        %2273 = vxpose.xlu0.b32.cont [5/16] 0.0, 128
        %2274 = vxpose.xlu0.b32.cont [6/16] 0.0, 128
        %2275 = vxpose.xlu0.b32.cont [7/16] 0.0, 128
        %2276 = vxpose.xlu0.b32.cont [8/16] 0.0, 128
        %2277 = vxpose.xlu0.b32.cont [9/16] 0.0, 128
        %2278 = vxpose.xlu0.b32.cont [10/16] 0.0, 128
        %2279 = vxpose.xlu0.b32.cont [11/16] 0.0, 128
        %2280 = vxpose.xlu0.b32.cont [12/16] 0.0, 128
        %2281 = vxpose.xlu0.b32.cont [13/16] 0.0, 128
        %2282 = vxpose.xlu0.b32.cont [14/16] 0.0, 128
        %2283 = vxpose.xlu0.b32.cont [15/16] 0.0, 128
        %2284 = vxpose.xlu0.b32.end [16/16] 0.0, 128
        %v2285 = vpop.trf.xlu0
        %v2286 = vpop.trf.xlu0
        %v2287 = vpop.trf.xlu0
        %v2288 = vpop.trf.xlu0
        %v2289 = vpop.trf.xlu0
        %v2290 = vpop.trf.xlu0
        %v2291 = vpop.trf.xlu0
        %v2292 = vpop.trf.xlu0
        %v2293 = vpop.trf.xlu0
        %v2294 = vpop.trf.xlu0
        %v2295 = vpop.trf.xlu0
        %v2296 = vpop.trf.xlu0
        %v2297 = vpop.trf.xlu0
        %v2298 = vpop.trf.xlu0
        %v2299 = vpop.trf.xlu0
        %v2300 = vpop.trf.xlu0
        %2301 = vxpose.xlu0.b32.start [1/16] %v1881, 128
        %2302 = vxpose.xlu0.b32.cont [2/16] 0.0, 128
        %2303 = vxpose.xlu0.b32.cont [3/16] 0.0, 128
        %2304 = vxpose.xlu0.b32.cont [4/16] 0.0, 128
        %2305 = vxpose.xlu0.b32.cont [5/16] 0.0, 128
        %2306 = vxpose.xlu0.b32.cont [6/16] 0.0, 128
        %2307 = vxpose.xlu0.b32.cont [7/16] 0.0, 128
        %2308 = vxpose.xlu0.b32.cont [8/16] 0.0, 128
        %2309 = vxpose.xlu0.b32.cont [9/16] 0.0, 128
        %2310 = vxpose.xlu0.b32.cont [10/16] 0.0, 128
        %2311 = vxpose.xlu0.b32.cont [11/16] 0.0, 128
        %2312 = vxpose.xlu0.b32.cont [12/16] 0.0, 128
        %2313 = vxpose.xlu0.b32.cont [13/16] 0.0, 128
        %2314 = vxpose.xlu0.b32.cont [14/16] 0.0, 128
        %2315 = vxpose.xlu0.b32.cont [15/16] 0.0, 128
        %2316 = vxpose.xlu0.b32.end [16/16] 0.0, 128
        %v2317 = vpop.trf.xlu0
        %v2318 = vpop.trf.xlu0
        %v2319 = vpop.trf.xlu0
        %v2320 = vpop.trf.xlu0
        %v2321 = vpop.trf.xlu0
        %v2322 = vpop.trf.xlu0
        %v2323 = vpop.trf.xlu0
        %v2324 = vpop.trf.xlu0
        %v2325 = vpop.trf.xlu0
        %v2326 = vpop.trf.xlu0
        %v2327 = vpop.trf.xlu0
        %v2328 = vpop.trf.xlu0
        %v2329 = vpop.trf.xlu0
        %v2330 = vpop.trf.xlu0
        %v2331 = vpop.trf.xlu0
        %v2332 = vpop.trf.xlu0
        %2333 = vxpose.xlu0.b32.start [1/16] %v1905, 128
        %2334 = vxpose.xlu0.b32.cont [2/16] 0.0, 128
        %2335 = vxpose.xlu0.b32.cont [3/16] 0.0, 128
        %2336 = vxpose.xlu0.b32.cont [4/16] 0.0, 128
        %2337 = vxpose.xlu0.b32.cont [5/16] 0.0, 128
        %2338 = vxpose.xlu0.b32.cont [6/16] 0.0, 128
        %2339 = vxpose.xlu0.b32.cont [7/16] 0.0, 128
        %2340 = vxpose.xlu0.b32.cont [8/16] 0.0, 128
        %2341 = vxpose.xlu0.b32.cont [9/16] 0.0, 128
        %2342 = vxpose.xlu0.b32.cont [10/16] 0.0, 128
        %2343 = vxpose.xlu0.b32.cont [11/16] 0.0, 128
        %2344 = vxpose.xlu0.b32.cont [12/16] 0.0, 128
        %2345 = vxpose.xlu0.b32.cont [13/16] 0.0, 128
        %2346 = vxpose.xlu0.b32.cont [14/16] 0.0, 128
        %2347 = vxpose.xlu0.b32.cont [15/16] 0.0, 128
        %2348 = vxpose.xlu0.b32.end [16/16] 0.0, 128
        %v2349 = vpop.trf.xlu0
        %v2350 = vpop.trf.xlu0
        %v2351 = vpop.trf.xlu0
        %v2352 = vpop.trf.xlu0
        %v2353 = vpop.trf.xlu0
        %v2354 = vpop.trf.xlu0
        %v2355 = vpop.trf.xlu0
        %v2356 = vpop.trf.xlu0
        %v2357 = vpop.trf.xlu0
        %v2358 = vpop.trf.xlu0
        %v2359 = vpop.trf.xlu0
        %v2360 = vpop.trf.xlu0
        %v2361 = vpop.trf.xlu0
        %v2362 = vpop.trf.xlu0
        %v2363 = vpop.trf.xlu0
        %v2364 = vpop.trf.xlu0
        %2365 = vxpose.xlu0.b32.start [1/16] %v1888, 128
        %2366 = vxpose.xlu0.b32.cont [2/16] 0.0, 128
        %2367 = vxpose.xlu0.b32.cont [3/16] 0.0, 128
        %2368 = vxpose.xlu0.b32.cont [4/16] 0.0, 128
        %2369 = vxpose.xlu0.b32.cont [5/16] 0.0, 128
        %2370 = vxpose.xlu0.b32.cont [6/16] 0.0, 128
        %2371 = vxpose.xlu0.b32.cont [7/16] 0.0, 128
        %2372 = vxpose.xlu0.b32.cont [8/16] 0.0, 128
        %2373 = vxpose.xlu0.b32.cont [9/16] 0.0, 128
        %2374 = vxpose.xlu0.b32.cont [10/16] 0.0, 128
        %2375 = vxpose.xlu0.b32.cont [11/16] 0.0, 128
        %2376 = vxpose.xlu0.b32.cont [12/16] 0.0, 128
        %2377 = vxpose.xlu0.b32.cont [13/16] 0.0, 128
        %2378 = vxpose.xlu0.b32.cont [14/16] 0.0, 128
        %2379 = vxpose.xlu0.b32.cont [15/16] 0.0, 128
        %2380 = vxpose.xlu0.b32.end [16/16] 0.0, 128
        %v2381 = vpop.trf.xlu0
        %v2382 = vpop.trf.xlu0
        %v2383 = vpop.trf.xlu0
        %v2384 = vpop.trf.xlu0
        %v2385 = vpop.trf.xlu0
        %v2386 = vpop.trf.xlu0
        %v2387 = vpop.trf.xlu0
        %v2388 = vpop.trf.xlu0
        %v2389 = vpop.trf.xlu0
        %v2390 = vpop.trf.xlu0
        %v2391 = vpop.trf.xlu0
        %v2392 = vpop.trf.xlu0
        %v2393 = vpop.trf.xlu0
        %v2394 = vpop.trf.xlu0
        %v2395 = vpop.trf.xlu0
        %v2396 = vpop.trf.xlu0
        %2397 = vxpose.xlu0.b32.start [1/16] %v1906, 128
        %2398 = vxpose.xlu0.b32.cont [2/16] 0.0, 128
        %2399 = vxpose.xlu0.b32.cont [3/16] 0.0, 128
        %2400 = vxpose.xlu0.b32.cont [4/16] 0.0, 128
        %2401 = vxpose.xlu0.b32.cont [5/16] 0.0, 128
        %2402 = vxpose.xlu0.b32.cont [6/16] 0.0, 128
        %2403 = vxpose.xlu0.b32.cont [7/16] 0.0, 128
        %2404 = vxpose.xlu0.b32.cont [8/16] 0.0, 128
        %2405 = vxpose.xlu0.b32.cont [9/16] 0.0, 128
        %2406 = vxpose.xlu0.b32.cont [10/16] 0.0, 128
        %2407 = vxpose.xlu0.b32.cont [11/16] 0.0, 128
        %2408 = vxpose.xlu0.b32.cont [12/16] 0.0, 128
        %2409 = vxpose.xlu0.b32.cont [13/16] 0.0, 128
        %2410 = vxpose.xlu0.b32.cont [14/16] 0.0, 128
        %2411 = vxpose.xlu0.b32.cont [15/16] 0.0, 128
        %2412 = vxpose.xlu0.b32.end [16/16] 0.0, 128
        %v2413 = vpop.trf.xlu0
        %v2414 = vpop.trf.xlu0
        %v2415 = vpop.trf.xlu0
        %v2416 = vpop.trf.xlu0
        %v2417 = vpop.trf.xlu0
        %v2418 = vpop.trf.xlu0
        %v2419 = vpop.trf.xlu0
        %v2420 = vpop.trf.xlu0
        %v2421 = vpop.trf.xlu0
        %v2422 = vpop.trf.xlu0
        %v2423 = vpop.trf.xlu0
        %v2424 = vpop.trf.xlu0
        %v2425 = vpop.trf.xlu0
        %v2426 = vpop.trf.xlu0
        %v2427 = vpop.trf.xlu0
        %v2428 = vpop.trf.xlu0
        %2429 = vxpose.xlu0.b32.start [1/16] %v1897, 128
        %2430 = vxpose.xlu0.b32.cont [2/16] 0.0, 128
        %2431 = vxpose.xlu0.b32.cont [3/16] 0.0, 128
        %2432 = vxpose.xlu0.b32.cont [4/16] 0.0, 128
        %2433 = vxpose.xlu0.b32.cont [5/16] 0.0, 128
        %2434 = vxpose.xlu0.b32.cont [6/16] 0.0, 128
        %2435 = vxpose.xlu0.b32.cont [7/16] 0.0, 128
        %2436 = vxpose.xlu0.b32.cont [8/16] 0.0, 128
        %2437 = vxpose.xlu0.b32.cont [9/16] 0.0, 128
        %2438 = vxpose.xlu0.b32.cont [10/16] 0.0, 128
        %2439 = vxpose.xlu0.b32.cont [11/16] 0.0, 128
        %2440 = vxpose.xlu0.b32.cont [12/16] 0.0, 128
        %2441 = vxpose.xlu0.b32.cont [13/16] 0.0, 128
        %2442 = vxpose.xlu0.b32.cont [14/16] 0.0, 128
        %2443 = vxpose.xlu0.b32.cont [15/16] 0.0, 128
        %2444 = vxpose.xlu0.b32.end [16/16] 0.0, 128
        %v2445 = vpop.trf.xlu0
        %v2446 = vpop.trf.xlu0
        %v2447 = vpop.trf.xlu0
        %v2448 = vpop.trf.xlu0
        %v2449 = vpop.trf.xlu0
        %v2450 = vpop.trf.xlu0
        %v2451 = vpop.trf.xlu0
        %v2452 = vpop.trf.xlu0
        %v2453 = vpop.trf.xlu0
        %v2454 = vpop.trf.xlu0
        %v2455 = vpop.trf.xlu0
        %v2456 = vpop.trf.xlu0
        %v2457 = vpop.trf.xlu0
        %v2458 = vpop.trf.xlu0
        %v2459 = vpop.trf.xlu0
        %v2460 = vpop.trf.xlu0
        %2461 = vxpose.xlu0.b32.start [1/16] %v1907, 128
        %2462 = vxpose.xlu0.b32.cont [2/16] 0.0, 128
        %2463 = vxpose.xlu0.b32.cont [3/16] 0.0, 128
        %2464 = vxpose.xlu0.b32.cont [4/16] 0.0, 128
        %2465 = vxpose.xlu0.b32.cont [5/16] 0.0, 128
        %2466 = vxpose.xlu0.b32.cont [6/16] 0.0, 128
        %2467 = vxpose.xlu0.b32.cont [7/16] 0.0, 128
        %2468 = vxpose.xlu0.b32.cont [8/16] 0.0, 128
        %2469 = vxpose.xlu0.b32.cont [9/16] 0.0, 128
        %2470 = vxpose.xlu0.b32.cont [10/16] 0.0, 128
        %2471 = vxpose.xlu0.b32.cont [11/16] 0.0, 128
        %2472 = vxpose.xlu0.b32.cont [12/16] 0.0, 128
        %2473 = vxpose.xlu0.b32.cont [13/16] 0.0, 128
        %2474 = vxpose.xlu0.b32.cont [14/16] 0.0, 128
        %2475 = vxpose.xlu0.b32.cont [15/16] 0.0, 128
        %2476 = vxpose.xlu0.b32.end [16/16] 0.0, 128
        %v2477 = vpop.trf.xlu0
        %v2478 = vpop.trf.xlu0
        %v2479 = vpop.trf.xlu0
        %v2480 = vpop.trf.xlu0
        %v2481 = vpop.trf.xlu0
        %v2482 = vpop.trf.xlu0
        %v2483 = vpop.trf.xlu0
        %v2484 = vpop.trf.xlu0
        %v2485 = vpop.trf.xlu0
        %v2486 = vpop.trf.xlu0
        %v2487 = vpop.trf.xlu0
        %v2488 = vpop.trf.xlu0
        %v2489 = vpop.trf.xlu0
        %v2490 = vpop.trf.xlu0
        %v2491 = vpop.trf.xlu0
        %v2492 = vpop.trf.xlu0
        %2493 = vxpose.xlu0.b32.start [1/16] %v1904, 128
        %2494 = vxpose.xlu0.b32.cont [2/16] 0.0, 128
        %2495 = vxpose.xlu0.b32.cont [3/16] 0.0, 128
        %2496 = vxpose.xlu0.b32.cont [4/16] 0.0, 128
        %2497 = vxpose.xlu0.b32.cont [5/16] 0.0, 128
        %2498 = vxpose.xlu0.b32.cont [6/16] 0.0, 128
        %2499 = vxpose.xlu0.b32.cont [7/16] 0.0, 128
        %2500 = vxpose.xlu0.b32.cont [8/16] 0.0, 128
        %2501 = vxpose.xlu0.b32.cont [9/16] 0.0, 128
        %2502 = vxpose.xlu0.b32.cont [10/16] 0.0, 128
        %2503 = vxpose.xlu0.b32.cont [11/16] 0.0, 128
        %2504 = vxpose.xlu0.b32.cont [12/16] 0.0, 128
        %2505 = vxpose.xlu0.b32.cont [13/16] 0.0, 128
        %2506 = vxpose.xlu0.b32.cont [14/16] 0.0, 128
        %2507 = vxpose.xlu0.b32.cont [15/16] 0.0, 128
        %2508 = vxpose.xlu0.b32.end [16/16] 0.0, 128
        %v2509 = vpop.trf.xlu0
        %v2510 = vpop.trf.xlu0
        %v2511 = vpop.trf.xlu0
        %v2512 = vpop.trf.xlu0
        %v2513 = vpop.trf.xlu0
        %v2514 = vpop.trf.xlu0
        %v2515 = vpop.trf.xlu0
        %v2516 = vpop.trf.xlu0
        %v2517 = vpop.trf.xlu0
        %v2518 = vpop.trf.xlu0
        %v2519 = vpop.trf.xlu0
        %v2520 = vpop.trf.xlu0
        %v2521 = vpop.trf.xlu0
        %v2522 = vpop.trf.xlu0
        %v2523 = vpop.trf.xlu0
        %v2524 = vpop.trf.xlu0
        %2525 = vxpose.xlu0.b32.start [1/16] %v1908, 128
        %2526 = vxpose.xlu0.b32.cont [2/16] 0.0, 128
        %2527 = vxpose.xlu0.b32.cont [3/16] 0.0, 128
        %2528 = vxpose.xlu0.b32.cont [4/16] 0.0, 128
        %2529 = vxpose.xlu0.b32.cont [5/16] 0.0, 128
        %2530 = vxpose.xlu0.b32.cont [6/16] 0.0, 128
        %2531 = vxpose.xlu0.b32.cont [7/16] 0.0, 128
        %2532 = vxpose.xlu0.b32.cont [8/16] 0.0, 128
        %2533 = vxpose.xlu0.b32.cont [9/16] 0.0, 128
        %2534 = vxpose.xlu0.b32.cont [10/16] 0.0, 128
        %2535 = vxpose.xlu0.b32.cont [11/16] 0.0, 128
        %2536 = vxpose.xlu0.b32.cont [12/16] 0.0, 128
        %2537 = vxpose.xlu0.b32.cont [13/16] 0.0, 128
        %2538 = vxpose.xlu0.b32.cont [14/16] 0.0, 128
        %2539 = vxpose.xlu0.b32.cont [15/16] 0.0, 128
        %2540 = vxpose.xlu0.b32.end [16/16] 0.0, 128
        %v2541 = vpop.trf.xlu0
        %v2542 = vpop.trf.xlu0
        %v2543 = vpop.trf.xlu0
        %v2544 = vpop.trf.xlu0
        %v2545 = vpop.trf.xlu0
        %v2546 = vpop.trf.xlu0
        %v2547 = vpop.trf.xlu0
        %v2548 = vpop.trf.xlu0
        %v2549 = vpop.trf.xlu0
        %v2550 = vpop.trf.xlu0
        %v2551 = vpop.trf.xlu0
        %v2552 = vpop.trf.xlu0
        %v2553 = vpop.trf.xlu0
        %v2554 = vpop.trf.xlu0
        %v2555 = vpop.trf.xlu0
        %v2556 = vpop.trf.xlu0
        %2557 = vxpose.xlu0.b32.start [1/16] %v1949, 128
        %2558 = vxpose.xlu0.b32.cont [2/16] 0.0, 128
        %2559 = vxpose.xlu0.b32.cont [3/16] 0.0, 128
        %2560 = vxpose.xlu0.b32.cont [4/16] 0.0, 128
        %2561 = vxpose.xlu0.b32.cont [5/16] 0.0, 128
        %2562 = vxpose.xlu0.b32.cont [6/16] 0.0, 128
        %2563 = vxpose.xlu0.b32.cont [7/16] 0.0, 128
        %2564 = vxpose.xlu0.b32.cont [8/16] 0.0, 128
        %2565 = vxpose.xlu0.b32.cont [9/16] 0.0, 128
        %2566 = vxpose.xlu0.b32.cont [10/16] 0.0, 128
        %2567 = vxpose.xlu0.b32.cont [11/16] 0.0, 128
        %2568 = vxpose.xlu0.b32.cont [12/16] 0.0, 128
        %2569 = vxpose.xlu0.b32.cont [13/16] 0.0, 128
        %2570 = vxpose.xlu0.b32.cont [14/16] 0.0, 128
        %2571 = vxpose.xlu0.b32.cont [15/16] 0.0, 128
        %2572 = vxpose.xlu0.b32.end [16/16] 0.0, 128
        %v2573 = vpop.trf.xlu0
        %v2574 = vpop.trf.xlu0
        %v2575 = vpop.trf.xlu0
        %v2576 = vpop.trf.xlu0
        %v2577 = vpop.trf.xlu0
        %v2578 = vpop.trf.xlu0
        %v2579 = vpop.trf.xlu0
        %v2580 = vpop.trf.xlu0
        %v2581 = vpop.trf.xlu0
        %v2582 = vpop.trf.xlu0
        %v2583 = vpop.trf.xlu0
        %v2584 = vpop.trf.xlu0
        %v2585 = vpop.trf.xlu0
        %v2586 = vpop.trf.xlu0
        %v2587 = vpop.trf.xlu0
        %v2588 = vpop.trf.xlu0
        %2589 = vxpose.xlu0.b32.start [1/16] %v1973, 128
        %2590 = vxpose.xlu0.b32.cont [2/16] 0.0, 128
        %2591 = vxpose.xlu0.b32.cont [3/16] 0.0, 128
        %2592 = vxpose.xlu0.b32.cont [4/16] 0.0, 128
        %2593 = vxpose.xlu0.b32.cont [5/16] 0.0, 128
        %2594 = vxpose.xlu0.b32.cont [6/16] 0.0, 128
        %2595 = vxpose.xlu0.b32.cont [7/16] 0.0, 128
        %2596 = vxpose.xlu0.b32.cont [8/16] 0.0, 128
        %2597 = vxpose.xlu0.b32.cont [9/16] 0.0, 128
        %2598 = vxpose.xlu0.b32.cont [10/16] 0.0, 128
        %2599 = vxpose.xlu0.b32.cont [11/16] 0.0, 128
        %2600 = vxpose.xlu0.b32.cont [12/16] 0.0, 128
        %2601 = vxpose.xlu0.b32.cont [13/16] 0.0, 128
        %2602 = vxpose.xlu0.b32.cont [14/16] 0.0, 128
        %2603 = vxpose.xlu0.b32.cont [15/16] 0.0, 128
        %2604 = vxpose.xlu0.b32.end [16/16] 0.0, 128
        %v2605 = vpop.trf.xlu0
        %v2606 = vpop.trf.xlu0
        %v2607 = vpop.trf.xlu0
        %v2608 = vpop.trf.xlu0
        %v2609 = vpop.trf.xlu0
        %v2610 = vpop.trf.xlu0
        %v2611 = vpop.trf.xlu0
        %v2612 = vpop.trf.xlu0
        %v2613 = vpop.trf.xlu0
        %v2614 = vpop.trf.xlu0
        %v2615 = vpop.trf.xlu0
        %v2616 = vpop.trf.xlu0
        %v2617 = vpop.trf.xlu0
        %v2618 = vpop.trf.xlu0
        %v2619 = vpop.trf.xlu0
        %v2620 = vpop.trf.xlu0
        %2621 = vxpose.xlu0.b32.start [1/16] %v1956, 128
        %2622 = vxpose.xlu0.b32.cont [2/16] 0.0, 128
        %2623 = vxpose.xlu0.b32.cont [3/16] 0.0, 128
        %2624 = vxpose.xlu0.b32.cont [4/16] 0.0, 128
        %2625 = vxpose.xlu0.b32.cont [5/16] 0.0, 128
        %2626 = vxpose.xlu0.b32.cont [6/16] 0.0, 128
        %2627 = vxpose.xlu0.b32.cont [7/16] 0.0, 128
        %2628 = vxpose.xlu0.b32.cont [8/16] 0.0, 128
        %2629 = vxpose.xlu0.b32.cont [9/16] 0.0, 128
        %2630 = vxpose.xlu0.b32.cont [10/16] 0.0, 128
        %2631 = vxpose.xlu0.b32.cont [11/16] 0.0, 128
        %2632 = vxpose.xlu0.b32.cont [12/16] 0.0, 128
        %2633 = vxpose.xlu0.b32.cont [13/16] 0.0, 128
        %2634 = vxpose.xlu0.b32.cont [14/16] 0.0, 128
        %2635 = vxpose.xlu0.b32.cont [15/16] 0.0, 128
        %2636 = vxpose.xlu0.b32.end [16/16] 0.0, 128
        %v2637 = vpop.trf.xlu0
        %v2638 = vpop.trf.xlu0
        %v2639 = vpop.trf.xlu0
        %v2640 = vpop.trf.xlu0
        %v2641 = vpop.trf.xlu0
        %v2642 = vpop.trf.xlu0
        %v2643 = vpop.trf.xlu0
        %v2644 = vpop.trf.xlu0
        %v2645 = vpop.trf.xlu0
        %v2646 = vpop.trf.xlu0
        %v2647 = vpop.trf.xlu0
        %v2648 = vpop.trf.xlu0
        %v2649 = vpop.trf.xlu0
        %v2650 = vpop.trf.xlu0
        %v2651 = vpop.trf.xlu0
        %v2652 = vpop.trf.xlu0
        %2653 = vxpose.xlu0.b32.start [1/16] %v1974, 128
        %2654 = vxpose.xlu0.b32.cont [2/16] 0.0, 128
        %2655 = vxpose.xlu0.b32.cont [3/16] 0.0, 128
        %2656 = vxpose.xlu0.b32.cont [4/16] 0.0, 128
        %2657 = vxpose.xlu0.b32.cont [5/16] 0.0, 128
        %2658 = vxpose.xlu0.b32.cont [6/16] 0.0, 128
        %2659 = vxpose.xlu0.b32.cont [7/16] 0.0, 128
        %2660 = vxpose.xlu0.b32.cont [8/16] 0.0, 128
        %2661 = vxpose.xlu0.b32.cont [9/16] 0.0, 128
        %2662 = vxpose.xlu0.b32.cont [10/16] 0.0, 128
        %2663 = vxpose.xlu0.b32.cont [11/16] 0.0, 128
        %2664 = vxpose.xlu0.b32.cont [12/16] 0.0, 128
        %2665 = vxpose.xlu0.b32.cont [13/16] 0.0, 128
        %2666 = vxpose.xlu0.b32.cont [14/16] 0.0, 128
        %2667 = vxpose.xlu0.b32.cont [15/16] 0.0, 128
        %2668 = vxpose.xlu0.b32.end [16/16] 0.0, 128
        %v2669 = vpop.trf.xlu0
        %v2670 = vpop.trf.xlu0
        %v2671 = vpop.trf.xlu0
        %v2672 = vpop.trf.xlu0
        %v2673 = vpop.trf.xlu0
        %v2674 = vpop.trf.xlu0
        %v2675 = vpop.trf.xlu0
        %v2676 = vpop.trf.xlu0
        %v2677 = vpop.trf.xlu0
        %v2678 = vpop.trf.xlu0
        %v2679 = vpop.trf.xlu0
        %v2680 = vpop.trf.xlu0
        %v2681 = vpop.trf.xlu0
        %v2682 = vpop.trf.xlu0
        %v2683 = vpop.trf.xlu0
        %v2684 = vpop.trf.xlu0
        %2685 = vxpose.xlu0.b32.start [1/16] %v1965, 128
        %2686 = vxpose.xlu0.b32.cont [2/16] 0.0, 128
        %2687 = vxpose.xlu0.b32.cont [3/16] 0.0, 128
        %2688 = vxpose.xlu0.b32.cont [4/16] 0.0, 128
        %2689 = vxpose.xlu0.b32.cont [5/16] 0.0, 128
        %2690 = vxpose.xlu0.b32.cont [6/16] 0.0, 128
        %2691 = vxpose.xlu0.b32.cont [7/16] 0.0, 128
        %2692 = vxpose.xlu0.b32.cont [8/16] 0.0, 128
        %2693 = vxpose.xlu0.b32.cont [9/16] 0.0, 128
        %2694 = vxpose.xlu0.b32.cont [10/16] 0.0, 128
        %2695 = vxpose.xlu0.b32.cont [11/16] 0.0, 128
        %2696 = vxpose.xlu0.b32.cont [12/16] 0.0, 128
        %2697 = vxpose.xlu0.b32.cont [13/16] 0.0, 128
        %2698 = vxpose.xlu0.b32.cont [14/16] 0.0, 128
        %2699 = vxpose.xlu0.b32.cont [15/16] 0.0, 128
        %2700 = vxpose.xlu0.b32.end [16/16] 0.0, 128
        %v2701 = vpop.trf.xlu0
        %v2702 = vpop.trf.xlu0
        %v2703 = vpop.trf.xlu0
        %v2704 = vpop.trf.xlu0
        %v2705 = vpop.trf.xlu0
        %v2706 = vpop.trf.xlu0
        %v2707 = vpop.trf.xlu0
        %v2708 = vpop.trf.xlu0
        %v2709 = vpop.trf.xlu0
        %v2710 = vpop.trf.xlu0
        %v2711 = vpop.trf.xlu0
        %v2712 = vpop.trf.xlu0
        %v2713 = vpop.trf.xlu0
        %v2714 = vpop.trf.xlu0
        %v2715 = vpop.trf.xlu0
        %v2716 = vpop.trf.xlu0
        %2717 = vxpose.xlu0.b32.start [1/16] %v1975, 128
        %2718 = vxpose.xlu0.b32.cont [2/16] 0.0, 128
        %2719 = vxpose.xlu0.b32.cont [3/16] 0.0, 128
        %2720 = vxpose.xlu0.b32.cont [4/16] 0.0, 128
        %2721 = vxpose.xlu0.b32.cont [5/16] 0.0, 128
        %2722 = vxpose.xlu0.b32.cont [6/16] 0.0, 128
        %2723 = vxpose.xlu0.b32.cont [7/16] 0.0, 128
        %2724 = vxpose.xlu0.b32.cont [8/16] 0.0, 128
        %2725 = vxpose.xlu0.b32.cont [9/16] 0.0, 128
        %2726 = vxpose.xlu0.b32.cont [10/16] 0.0, 128
        %2727 = vxpose.xlu0.b32.cont [11/16] 0.0, 128
        %2728 = vxpose.xlu0.b32.cont [12/16] 0.0, 128
        %2729 = vxpose.xlu0.b32.cont [13/16] 0.0, 128
        %2730 = vxpose.xlu0.b32.cont [14/16] 0.0, 128
        %2731 = vxpose.xlu0.b32.cont [15/16] 0.0, 128
        %2732 = vxpose.xlu0.b32.end [16/16] 0.0, 128
        %v2733 = vpop.trf.xlu0
        %v2734 = vpop.trf.xlu0
        %v2735 = vpop.trf.xlu0
        %v2736 = vpop.trf.xlu0
        %v2737 = vpop.trf.xlu0
        %v2738 = vpop.trf.xlu0
        %v2739 = vpop.trf.xlu0
        %v2740 = vpop.trf.xlu0
        %v2741 = vpop.trf.xlu0
        %v2742 = vpop.trf.xlu0
        %v2743 = vpop.trf.xlu0
        %v2744 = vpop.trf.xlu0
        %v2745 = vpop.trf.xlu0
        %v2746 = vpop.trf.xlu0
        %v2747 = vpop.trf.xlu0
        %v2748 = vpop.trf.xlu0
        %2749 = vxpose.xlu0.b32.start [1/16] %v1972, 128
        %2750 = vxpose.xlu0.b32.cont [2/16] 0.0, 128
        %2751 = vxpose.xlu0.b32.cont [3/16] 0.0, 128
        %2752 = vxpose.xlu0.b32.cont [4/16] 0.0, 128
        %2753 = vxpose.xlu0.b32.cont [5/16] 0.0, 128
        %2754 = vxpose.xlu0.b32.cont [6/16] 0.0, 128
        %2755 = vxpose.xlu0.b32.cont [7/16] 0.0, 128
        %2756 = vxpose.xlu0.b32.cont [8/16] 0.0, 128
        %2757 = vxpose.xlu0.b32.cont [9/16] 0.0, 128
        %2758 = vxpose.xlu0.b32.cont [10/16] 0.0, 128
        %2759 = vxpose.xlu0.b32.cont [11/16] 0.0, 128
        %2760 = vxpose.xlu0.b32.cont [12/16] 0.0, 128
        %2761 = vxpose.xlu0.b32.cont [13/16] 0.0, 128
        %2762 = vxpose.xlu0.b32.cont [14/16] 0.0, 128
        %2763 = vxpose.xlu0.b32.cont [15/16] 0.0, 128
        %2764 = vxpose.xlu0.b32.end [16/16] 0.0, 128
        %v2765 = vpop.trf.xlu0
        %v2766 = vpop.trf.xlu0
        %v2767 = vpop.trf.xlu0
        %v2768 = vpop.trf.xlu0
        %v2769 = vpop.trf.xlu0
        %v2770 = vpop.trf.xlu0
        %v2771 = vpop.trf.xlu0
        %v2772 = vpop.trf.xlu0
        %v2773 = vpop.trf.xlu0
        %v2774 = vpop.trf.xlu0
        %v2775 = vpop.trf.xlu0
        %v2776 = vpop.trf.xlu0
        %v2777 = vpop.trf.xlu0
        %v2778 = vpop.trf.xlu0
        %v2779 = vpop.trf.xlu0
        %v2780 = vpop.trf.xlu0
        %2781 = vxpose.xlu0.b32.start [1/16] %v1976, 128
        %2782 = vxpose.xlu0.b32.cont [2/16] 0.0, 128
        %2783 = vxpose.xlu0.b32.cont [3/16] 0.0, 128
        %2784 = vxpose.xlu0.b32.cont [4/16] 0.0, 128
        %2785 = vxpose.xlu0.b32.cont [5/16] 0.0, 128
        %2786 = vxpose.xlu0.b32.cont [6/16] 0.0, 128
        %2787 = vxpose.xlu0.b32.cont [7/16] 0.0, 128
        %2788 = vxpose.xlu0.b32.cont [8/16] 0.0, 128
        %2789 = vxpose.xlu0.b32.cont [9/16] 0.0, 128
        %2790 = vxpose.xlu0.b32.cont [10/16] 0.0, 128
        %2791 = vxpose.xlu0.b32.cont [11/16] 0.0, 128
        %2792 = vxpose.xlu0.b32.cont [12/16] 0.0, 128
        %2793 = vxpose.xlu0.b32.cont [13/16] 0.0, 128
        %2794 = vxpose.xlu0.b32.cont [14/16] 0.0, 128
        %2795 = vxpose.xlu0.b32.cont [15/16] 0.0, 128
        %2796 = vxpose.xlu0.b32.end [16/16] 0.0, 128
        %v2797 = vpop.trf.xlu0
        %v2798 = vpop.trf.xlu0
        %v2799 = vpop.trf.xlu0
        %v2800 = vpop.trf.xlu0
        %v2801 = vpop.trf.xlu0
        %v2802 = vpop.trf.xlu0
        %v2803 = vpop.trf.xlu0
        %v2804 = vpop.trf.xlu0
        %v2805 = vpop.trf.xlu0
        %v2806 = vpop.trf.xlu0
        %v2807 = vpop.trf.xlu0
        %v2808 = vpop.trf.xlu0
        %v2809 = vpop.trf.xlu0
        %v2810 = vpop.trf.xlu0
        %v2811 = vpop.trf.xlu0
        %v2812 = vpop.trf.xlu0
        %2813 = vxpose.xlu0.b32.start [1/16] %v2017, 128
        %2814 = vxpose.xlu0.b32.cont [2/16] 0.0, 128
        %2815 = vxpose.xlu0.b32.cont [3/16] 0.0, 128
        %2816 = vxpose.xlu0.b32.cont [4/16] 0.0, 128
        %2817 = vxpose.xlu0.b32.cont [5/16] 0.0, 128
        %2818 = vxpose.xlu0.b32.cont [6/16] 0.0, 128
        %2819 = vxpose.xlu0.b32.cont [7/16] 0.0, 128
        %2820 = vxpose.xlu0.b32.cont [8/16] 0.0, 128
        %2821 = vxpose.xlu0.b32.cont [9/16] 0.0, 128
        %2822 = vxpose.xlu0.b32.cont [10/16] 0.0, 128
        %2823 = vxpose.xlu0.b32.cont [11/16] 0.0, 128
        %2824 = vxpose.xlu0.b32.cont [12/16] 0.0, 128
        %2825 = vxpose.xlu0.b32.cont [13/16] 0.0, 128
        %2826 = vxpose.xlu0.b32.cont [14/16] 0.0, 128
        %2827 = vxpose.xlu0.b32.cont [15/16] 0.0, 128
        %2828 = vxpose.xlu0.b32.end [16/16] 0.0, 128
        %v2829 = vpop.trf.xlu0
        %v2830 = vpop.trf.xlu0
        %v2831 = vpop.trf.xlu0
        %v2832 = vpop.trf.xlu0
        %v2833 = vpop.trf.xlu0
        %v2834 = vpop.trf.xlu0
        %v2835 = vpop.trf.xlu0
        %v2836 = vpop.trf.xlu0
        %v2837 = vpop.trf.xlu0
        %v2838 = vpop.trf.xlu0
        %v2839 = vpop.trf.xlu0
        %v2840 = vpop.trf.xlu0
        %v2841 = vpop.trf.xlu0
        %v2842 = vpop.trf.xlu0
        %v2843 = vpop.trf.xlu0
        %v2844 = vpop.trf.xlu0
        %2845 = vxpose.xlu0.b32.start [1/16] %v2041, 128
        %2846 = vxpose.xlu0.b32.cont [2/16] 0.0, 128
        %2847 = vxpose.xlu0.b32.cont [3/16] 0.0, 128
        %2848 = vxpose.xlu0.b32.cont [4/16] 0.0, 128
        %2849 = vxpose.xlu0.b32.cont [5/16] 0.0, 128
        %2850 = vxpose.xlu0.b32.cont [6/16] 0.0, 128
        %2851 = vxpose.xlu0.b32.cont [7/16] 0.0, 128
        %2852 = vxpose.xlu0.b32.cont [8/16] 0.0, 128
        %2853 = vxpose.xlu0.b32.cont [9/16] 0.0, 128
        %2854 = vxpose.xlu0.b32.cont [10/16] 0.0, 128
        %2855 = vxpose.xlu0.b32.cont [11/16] 0.0, 128
        %2856 = vxpose.xlu0.b32.cont [12/16] 0.0, 128
        %2857 = vxpose.xlu0.b32.cont [13/16] 0.0, 128
        %2858 = vxpose.xlu0.b32.cont [14/16] 0.0, 128
        %2859 = vxpose.xlu0.b32.cont [15/16] 0.0, 128
        %2860 = vxpose.xlu0.b32.end [16/16] 0.0, 128
        %v2861 = vpop.trf.xlu0
        %v2862 = vpop.trf.xlu0
        %v2863 = vpop.trf.xlu0
        %v2864 = vpop.trf.xlu0
        %v2865 = vpop.trf.xlu0
        %v2866 = vpop.trf.xlu0
        %v2867 = vpop.trf.xlu0
        %v2868 = vpop.trf.xlu0
        %v2869 = vpop.trf.xlu0
        %v2870 = vpop.trf.xlu0
        %v2871 = vpop.trf.xlu0
        %v2872 = vpop.trf.xlu0
        %v2873 = vpop.trf.xlu0
        %v2874 = vpop.trf.xlu0
        %v2875 = vpop.trf.xlu0
        %v2876 = vpop.trf.xlu0
        %2877 = vxpose.xlu0.b32.start [1/16] %v2024, 128
        %2878 = vxpose.xlu0.b32.cont [2/16] 0.0, 128
        %2879 = vxpose.xlu0.b32.cont [3/16] 0.0, 128
        %2880 = vxpose.xlu0.b32.cont [4/16] 0.0, 128
        %2881 = vxpose.xlu0.b32.cont [5/16] 0.0, 128
        %2882 = vxpose.xlu0.b32.cont [6/16] 0.0, 128
        %2883 = vxpose.xlu0.b32.cont [7/16] 0.0, 128
        %2884 = vxpose.xlu0.b32.cont [8/16] 0.0, 128
        %2885 = vxpose.xlu0.b32.cont [9/16] 0.0, 128
        %2886 = vxpose.xlu0.b32.cont [10/16] 0.0, 128
        %2887 = vxpose.xlu0.b32.cont [11/16] 0.0, 128
        %2888 = vxpose.xlu0.b32.cont [12/16] 0.0, 128
        %2889 = vxpose.xlu0.b32.cont [13/16] 0.0, 128
        %2890 = vxpose.xlu0.b32.cont [14/16] 0.0, 128
        %2891 = vxpose.xlu0.b32.cont [15/16] 0.0, 128
        %2892 = vxpose.xlu0.b32.end [16/16] 0.0, 128
        %v2893 = vpop.trf.xlu0
        %v2894 = vpop.trf.xlu0
        %v2895 = vpop.trf.xlu0
        %v2896 = vpop.trf.xlu0
        %v2897 = vpop.trf.xlu0
        %v2898 = vpop.trf.xlu0
        %v2899 = vpop.trf.xlu0
        %v2900 = vpop.trf.xlu0
        %v2901 = vpop.trf.xlu0
        %v2902 = vpop.trf.xlu0
        %v2903 = vpop.trf.xlu0
        %v2904 = vpop.trf.xlu0
        %v2905 = vpop.trf.xlu0
        %v2906 = vpop.trf.xlu0
        %v2907 = vpop.trf.xlu0
        %v2908 = vpop.trf.xlu0
        %2909 = vxpose.xlu0.b32.start [1/16] %v2042, 128
        %2910 = vxpose.xlu0.b32.cont [2/16] 0.0, 128
        %2911 = vxpose.xlu0.b32.cont [3/16] 0.0, 128
        %2912 = vxpose.xlu0.b32.cont [4/16] 0.0, 128
        %2913 = vxpose.xlu0.b32.cont [5/16] 0.0, 128
        %2914 = vxpose.xlu0.b32.cont [6/16] 0.0, 128
        %2915 = vxpose.xlu0.b32.cont [7/16] 0.0, 128
        %2916 = vxpose.xlu0.b32.cont [8/16] 0.0, 128
        %2917 = vxpose.xlu0.b32.cont [9/16] 0.0, 128
        %2918 = vxpose.xlu0.b32.cont [10/16] 0.0, 128
        %2919 = vxpose.xlu0.b32.cont [11/16] 0.0, 128
        %2920 = vxpose.xlu0.b32.cont [12/16] 0.0, 128
        %2921 = vxpose.xlu0.b32.cont [13/16] 0.0, 128
        %2922 = vxpose.xlu0.b32.cont [14/16] 0.0, 128
        %2923 = vxpose.xlu0.b32.cont [15/16] 0.0, 128
        %2924 = vxpose.xlu0.b32.end [16/16] 0.0, 128
        %v2925 = vpop.trf.xlu0
        %v2926 = vpop.trf.xlu0
        %v2927 = vpop.trf.xlu0
        %v2928 = vpop.trf.xlu0
        %v2929 = vpop.trf.xlu0
        %v2930 = vpop.trf.xlu0
        %v2931 = vpop.trf.xlu0
        %v2932 = vpop.trf.xlu0
        %v2933 = vpop.trf.xlu0
        %v2934 = vpop.trf.xlu0
        %v2935 = vpop.trf.xlu0
        %v2936 = vpop.trf.xlu0
        %v2937 = vpop.trf.xlu0
        %v2938 = vpop.trf.xlu0
        %v2939 = vpop.trf.xlu0
        %v2940 = vpop.trf.xlu0
        %2941 = vxpose.xlu0.b32.start [1/16] %v2033, 128
        %2942 = vxpose.xlu0.b32.cont [2/16] 0.0, 128
        %2943 = vxpose.xlu0.b32.cont [3/16] 0.0, 128
        %2944 = vxpose.xlu0.b32.cont [4/16] 0.0, 128
        %2945 = vxpose.xlu0.b32.cont [5/16] 0.0, 128
        %2946 = vxpose.xlu0.b32.cont [6/16] 0.0, 128
        %2947 = vxpose.xlu0.b32.cont [7/16] 0.0, 128
        %2948 = vxpose.xlu0.b32.cont [8/16] 0.0, 128
        %2949 = vxpose.xlu0.b32.cont [9/16] 0.0, 128
        %2950 = vxpose.xlu0.b32.cont [10/16] 0.0, 128
        %2951 = vxpose.xlu0.b32.cont [11/16] 0.0, 128
        %2952 = vxpose.xlu0.b32.cont [12/16] 0.0, 128
        %2953 = vxpose.xlu0.b32.cont [13/16] 0.0, 128
        %2954 = vxpose.xlu0.b32.cont [14/16] 0.0, 128
        %2955 = vxpose.xlu0.b32.cont [15/16] 0.0, 128
        %2956 = vxpose.xlu0.b32.end [16/16] 0.0, 128
        %v2957 = vpop.trf.xlu0
        %v2958 = vpop.trf.xlu0
        %v2959 = vpop.trf.xlu0
        %v2960 = vpop.trf.xlu0
        %v2961 = vpop.trf.xlu0
        %v2962 = vpop.trf.xlu0
        %v2963 = vpop.trf.xlu0
        %v2964 = vpop.trf.xlu0
        %v2965 = vpop.trf.xlu0
        %v2966 = vpop.trf.xlu0
        %v2967 = vpop.trf.xlu0
        %v2968 = vpop.trf.xlu0
        %v2969 = vpop.trf.xlu0
        %v2970 = vpop.trf.xlu0
        %v2971 = vpop.trf.xlu0
        %v2972 = vpop.trf.xlu0
        %2973 = vxpose.xlu0.b32.start [1/16] %v2043, 128
        %2974 = vxpose.xlu0.b32.cont [2/16] 0.0, 128
        %2975 = vxpose.xlu0.b32.cont [3/16] 0.0, 128
        %2976 = vxpose.xlu0.b32.cont [4/16] 0.0, 128
        %2977 = vxpose.xlu0.b32.cont [5/16] 0.0, 128
        %2978 = vxpose.xlu0.b32.cont [6/16] 0.0, 128
        %2979 = vxpose.xlu0.b32.cont [7/16] 0.0, 128
        %2980 = vxpose.xlu0.b32.cont [8/16] 0.0, 128
        %2981 = vxpose.xlu0.b32.cont [9/16] 0.0, 128
        %2982 = vxpose.xlu0.b32.cont [10/16] 0.0, 128
        %2983 = vxpose.xlu0.b32.cont [11/16] 0.0, 128
        %2984 = vxpose.xlu0.b32.cont [12/16] 0.0, 128
        %2985 = vxpose.xlu0.b32.cont [13/16] 0.0, 128
        %2986 = vxpose.xlu0.b32.cont [14/16] 0.0, 128
        %2987 = vxpose.xlu0.b32.cont [15/16] 0.0, 128
        %2988 = vxpose.xlu0.b32.end [16/16] 0.0, 128
        %v2989 = vpop.trf.xlu0
        %v2990 = vpop.trf.xlu0
        %v2991 = vpop.trf.xlu0
        %v2992 = vpop.trf.xlu0
        %v2993 = vpop.trf.xlu0
        %v2994 = vpop.trf.xlu0
        %v2995 = vpop.trf.xlu0
        %v2996 = vpop.trf.xlu0
        %v2997 = vpop.trf.xlu0
        %v2998 = vpop.trf.xlu0
        %v2999 = vpop.trf.xlu0
        %v3000 = vpop.trf.xlu0
        %v3001 = vpop.trf.xlu0
        %v3002 = vpop.trf.xlu0
        %v3003 = vpop.trf.xlu0
        %v3004 = vpop.trf.xlu0
        %3005 = vxpose.xlu0.b32.start [1/16] %v2040, 128
        %3006 = vxpose.xlu0.b32.cont [2/16] 0.0, 128
        %3007 = vxpose.xlu0.b32.cont [3/16] 0.0, 128
        %3008 = vxpose.xlu0.b32.cont [4/16] 0.0, 128
        %3009 = vxpose.xlu0.b32.cont [5/16] 0.0, 128
        %3010 = vxpose.xlu0.b32.cont [6/16] 0.0, 128
        %3011 = vxpose.xlu0.b32.cont [7/16] 0.0, 128
        %3012 = vxpose.xlu0.b32.cont [8/16] 0.0, 128
        %3013 = vxpose.xlu0.b32.cont [9/16] 0.0, 128
        %3014 = vxpose.xlu0.b32.cont [10/16] 0.0, 128
        %3015 = vxpose.xlu0.b32.cont [11/16] 0.0, 128
        %3016 = vxpose.xlu0.b32.cont [12/16] 0.0, 128
        %3017 = vxpose.xlu0.b32.cont [13/16] 0.0, 128
        %3018 = vxpose.xlu0.b32.cont [14/16] 0.0, 128
        %3019 = vxpose.xlu0.b32.cont [15/16] 0.0, 128
        %3020 = vxpose.xlu0.b32.end [16/16] 0.0, 128
        %v3021 = vpop.trf.xlu0
        %v3022 = vpop.trf.xlu0
        %v3023 = vpop.trf.xlu0
        %v3024 = vpop.trf.xlu0
        %v3025 = vpop.trf.xlu0
        %v3026 = vpop.trf.xlu0
        %v3027 = vpop.trf.xlu0
        %v3028 = vpop.trf.xlu0
        %v3029 = vpop.trf.xlu0
        %v3030 = vpop.trf.xlu0
        %v3031 = vpop.trf.xlu0
        %v3032 = vpop.trf.xlu0
        %v3033 = vpop.trf.xlu0
        %v3034 = vpop.trf.xlu0
        %v3035 = vpop.trf.xlu0
        %v3036 = vpop.trf.xlu0
        %3037 = vxpose.xlu0.b32.start [1/16] %v2044, 128
        %3038 = vxpose.xlu0.b32.cont [2/16] 0.0, 128
        %3039 = vxpose.xlu0.b32.cont [3/16] 0.0, 128
        %3040 = vxpose.xlu0.b32.cont [4/16] 0.0, 128
        %3041 = vxpose.xlu0.b32.cont [5/16] 0.0, 128
        %3042 = vxpose.xlu0.b32.cont [6/16] 0.0, 128
        %3043 = vxpose.xlu0.b32.cont [7/16] 0.0, 128
        %3044 = vxpose.xlu0.b32.cont [8/16] 0.0, 128
        %3045 = vxpose.xlu0.b32.cont [9/16] 0.0, 128
        %3046 = vxpose.xlu0.b32.cont [10/16] 0.0, 128
        %3047 = vxpose.xlu0.b32.cont [11/16] 0.0, 128
        %3048 = vxpose.xlu0.b32.cont [12/16] 0.0, 128
        %3049 = vxpose.xlu0.b32.cont [13/16] 0.0, 128
        %3050 = vxpose.xlu0.b32.cont [14/16] 0.0, 128
        %3051 = vxpose.xlu0.b32.cont [15/16] 0.0, 128
        %3052 = vxpose.xlu0.b32.end [16/16] 0.0, 128
        %v3053 = vpop.trf.xlu0
        %v3054 = vpop.trf.xlu0
        %v3055 = vpop.trf.xlu0
        %v3056 = vpop.trf.xlu0
        %v3057 = vpop.trf.xlu0
        %v3058 = vpop.trf.xlu0
        %v3059 = vpop.trf.xlu0
        %v3060 = vpop.trf.xlu0
        %v3061 = vpop.trf.xlu0
        %v3062 = vpop.trf.xlu0
        %v3063 = vpop.trf.xlu0
        %v3064 = vpop.trf.xlu0
        %v3065 = vpop.trf.xlu0
        %v3066 = vpop.trf.xlu0
        %v3067 = vpop.trf.xlu0
        %v3068 = vpop.trf.xlu0
        %v3069 = vcombine.low %v2061, %v2125
        %v3070 = vcombine.high %v2061, %v2125
        %v3072 = vunpack.c.l.s4 1983009808
        %v3073 = vunpack.c.0.s8 %v3072
        %v3074 = vlaneseq
        %v3075 = vshrl.u32 %v3074, 7
        %v3076 = vsub.s32 %v3073, %v3075
        %v3077 = vrot.slane %v3069, %v3076
        %v3079 = vunpack.c.l.s4 1983009808
        %v3080 = vunpack.c.0.s8 %v3079
        %v3081 = vlaneseq
        %v3082 = vshrl.u32 %v3081, 7
        %v3083 = vsub.s32 %v3080, %v3082
        %v3084 = vrot.slane %v3070, %v3083
        %v3085 = vcombine.low %v2093, %v2157
        %v3086 = vcombine.high %v2093, %v2157
        %v3088 = vunpack.c.l.s4 1983009808
        %v3089 = vunpack.c.0.s8 %v3088
        %v3090 = vlaneseq
        %v3091 = vshrl.u32 %v3090, 7
        %v3092 = vsub.s32 %v3089, %v3091
        %v3093 = vrot.slane %v3085, %v3092
        %v3095 = vunpack.c.l.s4 1983009808
        %v3096 = vunpack.c.0.s8 %v3095
        %v3097 = vlaneseq
        %v3098 = vshrl.u32 %v3097, 7
        %v3099 = vsub.s32 %v3096, %v3098
        %v3100 = vrot.slane %v3086, %v3099
        %v3101 = vcombine.low %v2189, %v2253
        %v3102 = vcombine.high %v2189, %v2253
        %v3104 = vunpack.c.l.s4 1983009808
        %v3105 = vunpack.c.0.s8 %v3104
        %v3106 = vlaneseq
        %v3107 = vshrl.u32 %v3106, 7
        %v3108 = vsub.s32 %v3105, %v3107
        %v3109 = vrot.slane %v3101, %v3108
        %v3111 = vunpack.c.l.s4 1983009808
        %v3112 = vunpack.c.0.s8 %v3111
        %v3113 = vlaneseq
        %v3114 = vshrl.u32 %v3113, 7
        %v3115 = vsub.s32 %v3112, %v3114
        %v3116 = vrot.slane %v3102, %v3115
        %v3117 = vcombine.low %v2221, %v2285
        %v3118 = vcombine.high %v2221, %v2285
        %v3120 = vunpack.c.l.s4 1983009808
        %v3121 = vunpack.c.0.s8 %v3120
        %v3122 = vlaneseq
        %v3123 = vshrl.u32 %v3122, 7
        %v3124 = vsub.s32 %v3121, %v3123
        %v3125 = vrot.slane %v3117, %v3124
        %v3127 = vunpack.c.l.s4 1983009808
        %v3128 = vunpack.c.0.s8 %v3127
        %v3129 = vlaneseq
        %v3130 = vshrl.u32 %v3129, 7
        %v3131 = vsub.s32 %v3128, %v3130
        %v3132 = vrot.slane %v3118, %v3131
        %v3133 = vcombine.low %v3077, %v3093
        %v3134 = vcombine.high %v3077, %v3093
        %v3136 = vunpack.c.l.s4 1934713408
        %v3137 = vunpack.c.0.s8 %v3136
        %v3138 = vlaneseq
        %v3139 = vshrl.u32 %v3138, 7
        %v3140 = vsub.s32 %v3137, %v3139
        %v3141 = vrot.slane %v3133, %v3140
        %v3143 = vunpack.c.l.s4 1934713408
        %v3144 = vunpack.c.0.s8 %v3143
        %v3145 = vlaneseq
        %v3146 = vshrl.u32 %v3145, 7
        %v3147 = vsub.s32 %v3144, %v3146
        %v3148 = vrot.slane %v3134, %v3147
        %v3149 = vcombine.low %v3084, %v3100
        %v3150 = vcombine.high %v3084, %v3100
        %v3152 = vunpack.c.l.s4 1934713408
        %v3153 = vunpack.c.0.s8 %v3152
        %v3154 = vlaneseq
        %v3155 = vshrl.u32 %v3154, 7
        %v3156 = vsub.s32 %v3153, %v3155
        %v3157 = vrot.slane %v3149, %v3156
        %v3159 = vunpack.c.l.s4 1934713408
        %v3160 = vunpack.c.0.s8 %v3159
        %v3161 = vlaneseq
        %v3162 = vshrl.u32 %v3161, 7
        %v3163 = vsub.s32 %v3160, %v3162
        %v3164 = vrot.slane %v3150, %v3163
        %v3165 = vcombine.low %v3109, %v3125
        %v3166 = vcombine.high %v3109, %v3125
        %v3168 = vunpack.c.l.s4 1934713408
        %v3169 = vunpack.c.0.s8 %v3168
        %v3170 = vlaneseq
        %v3171 = vshrl.u32 %v3170, 7
        %v3172 = vsub.s32 %v3169, %v3171
        %v3173 = vrot.slane %v3165, %v3172
        %v3175 = vunpack.c.l.s4 1934713408
        %v3176 = vunpack.c.0.s8 %v3175
        %v3177 = vlaneseq
        %v3178 = vshrl.u32 %v3177, 7
        %v3179 = vsub.s32 %v3176, %v3178
        %v3180 = vrot.slane %v3166, %v3179
        %v3181 = vcombine.low %v3116, %v3132
        %v3182 = vcombine.high %v3116, %v3132
        %v3184 = vunpack.c.l.s4 1934713408
        %v3185 = vunpack.c.0.s8 %v3184
        %v3186 = vlaneseq
        %v3187 = vshrl.u32 %v3186, 7
        %v3188 = vsub.s32 %v3185, %v3187
        %v3189 = vrot.slane %v3181, %v3188
        %v3191 = vunpack.c.l.s4 1934713408
        %v3192 = vunpack.c.0.s8 %v3191
        %v3193 = vlaneseq
        %v3194 = vshrl.u32 %v3193, 7
        %v3195 = vsub.s32 %v3192, %v3194
        %v3196 = vrot.slane %v3182, %v3195
        %v3197 = vcombine.low %v3141, %v3173
        %v3198 = vcombine.high %v3141, %v3173
        %v3199 = vcombine.low %v3148, %v3180
        %v3200 = vcombine.high %v3148, %v3180
        %v3201 = vcombine.low %v3157, %v3189
        %v3202 = vcombine.high %v3157, %v3189
        %v3203 = vcombine.low %v3164, %v3196
        %v3204 = vcombine.high %v3164, %v3196
        %v3205 = vcombine.low %v2317, %v2381
        %v3206 = vcombine.high %v2317, %v2381
        %v3208 = vunpack.c.l.s4 1983009808
        %v3209 = vunpack.c.0.s8 %v3208
        %v3210 = vlaneseq
        %v3211 = vshrl.u32 %v3210, 7
        %v3212 = vsub.s32 %v3209, %v3211
        %v3213 = vrot.slane %v3205, %v3212
        %v3215 = vunpack.c.l.s4 1983009808
        %v3216 = vunpack.c.0.s8 %v3215
        %v3217 = vlaneseq
        %v3218 = vshrl.u32 %v3217, 7
        %v3219 = vsub.s32 %v3216, %v3218
        %v3220 = vrot.slane %v3206, %v3219
        %v3221 = vcombine.low %v2349, %v2413
        %v3222 = vcombine.high %v2349, %v2413
        %v3224 = vunpack.c.l.s4 1983009808
        %v3225 = vunpack.c.0.s8 %v3224
        %v3226 = vlaneseq
        %v3227 = vshrl.u32 %v3226, 7
        %v3228 = vsub.s32 %v3225, %v3227
        %v3229 = vrot.slane %v3221, %v3228
        %v3231 = vunpack.c.l.s4 1983009808
        %v3232 = vunpack.c.0.s8 %v3231
        %v3233 = vlaneseq
        %v3234 = vshrl.u32 %v3233, 7
        %v3235 = vsub.s32 %v3232, %v3234
        %v3236 = vrot.slane %v3222, %v3235
        %v3237 = vcombine.low %v2445, %v2509
        %v3238 = vcombine.high %v2445, %v2509
        %v3240 = vunpack.c.l.s4 1983009808
        %v3241 = vunpack.c.0.s8 %v3240
        %v3242 = vlaneseq
        %v3243 = vshrl.u32 %v3242, 7
        %v3244 = vsub.s32 %v3241, %v3243
        %v3245 = vrot.slane %v3237, %v3244
        %v3247 = vunpack.c.l.s4 1983009808
        %v3248 = vunpack.c.0.s8 %v3247
        %v3249 = vlaneseq
        %v3250 = vshrl.u32 %v3249, 7
        %v3251 = vsub.s32 %v3248, %v3250
        %v3252 = vrot.slane %v3238, %v3251
        %v3253 = vcombine.low %v2477, %v2541
        %v3254 = vcombine.high %v2477, %v2541
        %v3256 = vunpack.c.l.s4 1983009808
        %v3257 = vunpack.c.0.s8 %v3256
        %v3258 = vlaneseq
        %v3259 = vshrl.u32 %v3258, 7
        %v3260 = vsub.s32 %v3257, %v3259
        %v3261 = vrot.slane %v3253, %v3260
        %v3263 = vunpack.c.l.s4 1983009808
        %v3264 = vunpack.c.0.s8 %v3263
        %v3265 = vlaneseq
        %v3266 = vshrl.u32 %v3265, 7
        %v3267 = vsub.s32 %v3264, %v3266
        %v3268 = vrot.slane %v3254, %v3267
        %v3269 = vcombine.low %v3213, %v3229
        %v3270 = vcombine.high %v3213, %v3229
        %v3272 = vunpack.c.l.s4 1934713408
        %v3273 = vunpack.c.0.s8 %v3272
        %v3274 = vlaneseq
        %v3275 = vshrl.u32 %v3274, 7
        %v3276 = vsub.s32 %v3273, %v3275
        %v3277 = vrot.slane %v3269, %v3276
        %v3279 = vunpack.c.l.s4 1934713408
        %v3280 = vunpack.c.0.s8 %v3279
        %v3281 = vlaneseq
        %v3282 = vshrl.u32 %v3281, 7
        %v3283 = vsub.s32 %v3280, %v3282
        %v3284 = vrot.slane %v3270, %v3283
        %v3285 = vcombine.low %v3220, %v3236
        %v3286 = vcombine.high %v3220, %v3236
        %v3288 = vunpack.c.l.s4 1934713408
        %v3289 = vunpack.c.0.s8 %v3288
        %v3290 = vlaneseq
        %v3291 = vshrl.u32 %v3290, 7
        %v3292 = vsub.s32 %v3289, %v3291
        %v3293 = vrot.slane %v3285, %v3292
        %v3295 = vunpack.c.l.s4 1934713408
        %v3296 = vunpack.c.0.s8 %v3295
        %v3297 = vlaneseq
        %v3298 = vshrl.u32 %v3297, 7
        %v3299 = vsub.s32 %v3296, %v3298
        %v3300 = vrot.slane %v3286, %v3299
        %v3301 = vcombine.low %v3245, %v3261
        %v3302 = vcombine.high %v3245, %v3261
        %v3304 = vunpack.c.l.s4 1934713408
        %v3305 = vunpack.c.0.s8 %v3304
        %v3306 = vlaneseq
        %v3307 = vshrl.u32 %v3306, 7
        %v3308 = vsub.s32 %v3305, %v3307
        %v3309 = vrot.slane %v3301, %v3308
        %v3311 = vunpack.c.l.s4 1934713408
        %v3312 = vunpack.c.0.s8 %v3311
        %v3313 = vlaneseq
        %v3314 = vshrl.u32 %v3313, 7
        %v3315 = vsub.s32 %v3312, %v3314
        %v3316 = vrot.slane %v3302, %v3315
        %v3317 = vcombine.low %v3252, %v3268
        %v3318 = vcombine.high %v3252, %v3268
        %v3320 = vunpack.c.l.s4 1934713408
        %v3321 = vunpack.c.0.s8 %v3320
        %v3322 = vlaneseq
        %v3323 = vshrl.u32 %v3322, 7
        %v3324 = vsub.s32 %v3321, %v3323
        %v3325 = vrot.slane %v3317, %v3324
        %v3327 = vunpack.c.l.s4 1934713408
        %v3328 = vunpack.c.0.s8 %v3327
        %v3329 = vlaneseq
        %v3330 = vshrl.u32 %v3329, 7
        %v3331 = vsub.s32 %v3328, %v3330
        %v3332 = vrot.slane %v3318, %v3331
        %v3333 = vcombine.low %v3277, %v3309
        %v3334 = vcombine.high %v3277, %v3309
        %v3335 = vcombine.low %v3284, %v3316
        %v3336 = vcombine.high %v3284, %v3316
        %v3337 = vcombine.low %v3293, %v3325
        %v3338 = vcombine.high %v3293, %v3325
        %v3339 = vcombine.low %v3300, %v3332
        %v3340 = vcombine.high %v3300, %v3332
        %v3341 = vcombine.low %v2573, %v2637
        %v3342 = vcombine.high %v2573, %v2637
        %v3344 = vunpack.c.l.s4 1983009808
        %v3345 = vunpack.c.0.s8 %v3344
        %v3346 = vlaneseq
        %v3347 = vshrl.u32 %v3346, 7
        %v3348 = vsub.s32 %v3345, %v3347
        %v3349 = vrot.slane %v3341, %v3348
        %v3351 = vunpack.c.l.s4 1983009808
        %v3352 = vunpack.c.0.s8 %v3351
        %v3353 = vlaneseq
        %v3354 = vshrl.u32 %v3353, 7
        %v3355 = vsub.s32 %v3352, %v3354
        %v3356 = vrot.slane %v3342, %v3355
        %v3357 = vcombine.low %v2605, %v2669
        %v3358 = vcombine.high %v2605, %v2669
        %v3360 = vunpack.c.l.s4 1983009808
        %v3361 = vunpack.c.0.s8 %v3360
        %v3362 = vlaneseq
        %v3363 = vshrl.u32 %v3362, 7
        %v3364 = vsub.s32 %v3361, %v3363
        %v3365 = vrot.slane %v3357, %v3364
        %v3367 = vunpack.c.l.s4 1983009808
        %v3368 = vunpack.c.0.s8 %v3367
        %v3369 = vlaneseq
        %v3370 = vshrl.u32 %v3369, 7
        %v3371 = vsub.s32 %v3368, %v3370
        %v3372 = vrot.slane %v3358, %v3371
        %v3373 = vcombine.low %v2701, %v2765
        %v3374 = vcombine.high %v2701, %v2765
        %v3376 = vunpack.c.l.s4 1983009808
        %v3377 = vunpack.c.0.s8 %v3376
        %v3378 = vlaneseq
        %v3379 = vshrl.u32 %v3378, 7
        %v3380 = vsub.s32 %v3377, %v3379
        %v3381 = vrot.slane %v3373, %v3380
        %v3383 = vunpack.c.l.s4 1983009808
        %v3384 = vunpack.c.0.s8 %v3383
        %v3385 = vlaneseq
        %v3386 = vshrl.u32 %v3385, 7
        %v3387 = vsub.s32 %v3384, %v3386
        %v3388 = vrot.slane %v3374, %v3387
        %v3389 = vcombine.low %v2733, %v2797
        %v3390 = vcombine.high %v2733, %v2797
        %v3392 = vunpack.c.l.s4 1983009808
        %v3393 = vunpack.c.0.s8 %v3392
        %v3394 = vlaneseq
        %v3395 = vshrl.u32 %v3394, 7
        %v3396 = vsub.s32 %v3393, %v3395
        %v3397 = vrot.slane %v3389, %v3396
        %v3399 = vunpack.c.l.s4 1983009808
        %v3400 = vunpack.c.0.s8 %v3399
        %v3401 = vlaneseq
        %v3402 = vshrl.u32 %v3401, 7
        %v3403 = vsub.s32 %v3400, %v3402
        %v3404 = vrot.slane %v3390, %v3403
        %v3405 = vcombine.low %v3349, %v3365
        %v3406 = vcombine.high %v3349, %v3365
        %v3408 = vunpack.c.l.s4 1934713408
        %v3409 = vunpack.c.0.s8 %v3408
        %v3410 = vlaneseq
        %v3411 = vshrl.u32 %v3410, 7
        %v3412 = vsub.s32 %v3409, %v3411
        %v3413 = vrot.slane %v3405, %v3412
        %v3415 = vunpack.c.l.s4 1934713408
        %v3416 = vunpack.c.0.s8 %v3415
        %v3417 = vlaneseq
        %v3418 = vshrl.u32 %v3417, 7
        %v3419 = vsub.s32 %v3416, %v3418
        %v3420 = vrot.slane %v3406, %v3419
        %v3421 = vcombine.low %v3356, %v3372
        %v3422 = vcombine.high %v3356, %v3372
        %v3424 = vunpack.c.l.s4 1934713408
        %v3425 = vunpack.c.0.s8 %v3424
        %v3426 = vlaneseq
        %v3427 = vshrl.u32 %v3426, 7
        %v3428 = vsub.s32 %v3425, %v3427
        %v3429 = vrot.slane %v3421, %v3428
        %v3431 = vunpack.c.l.s4 1934713408
        %v3432 = vunpack.c.0.s8 %v3431
        %v3433 = vlaneseq
        %v3434 = vshrl.u32 %v3433, 7
        %v3435 = vsub.s32 %v3432, %v3434
        %v3436 = vrot.slane %v3422, %v3435
        %v3437 = vcombine.low %v3381, %v3397
        %v3438 = vcombine.high %v3381, %v3397
        %v3440 = vunpack.c.l.s4 1934713408
        %v3441 = vunpack.c.0.s8 %v3440
        %v3442 = vlaneseq
        %v3443 = vshrl.u32 %v3442, 7
        %v3444 = vsub.s32 %v3441, %v3443
        %v3445 = vrot.slane %v3437, %v3444
        %v3447 = vunpack.c.l.s4 1934713408
        %v3448 = vunpack.c.0.s8 %v3447
        %v3449 = vlaneseq
        %v3450 = vshrl.u32 %v3449, 7
        %v3451 = vsub.s32 %v3448, %v3450
        %v3452 = vrot.slane %v3438, %v3451
        %v3453 = vcombine.low %v3388, %v3404
        %v3454 = vcombine.high %v3388, %v3404
        %v3456 = vunpack.c.l.s4 1934713408
        %v3457 = vunpack.c.0.s8 %v3456
        %v3458 = vlaneseq
        %v3459 = vshrl.u32 %v3458, 7
        %v3460 = vsub.s32 %v3457, %v3459
        %v3461 = vrot.slane %v3453, %v3460
        %v3463 = vunpack.c.l.s4 1934713408
        %v3464 = vunpack.c.0.s8 %v3463
        %v3465 = vlaneseq
        %v3466 = vshrl.u32 %v3465, 7
        %v3467 = vsub.s32 %v3464, %v3466
        %v3468 = vrot.slane %v3454, %v3467
        %v3469 = vcombine.low %v3413, %v3445
        %v3470 = vcombine.high %v3413, %v3445
        %v3471 = vcombine.low %v3420, %v3452
        %v3472 = vcombine.high %v3420, %v3452
        %v3473 = vcombine.low %v3429, %v3461
        %v3474 = vcombine.high %v3429, %v3461
        %v3475 = vcombine.low %v3436, %v3468
        %v3476 = vcombine.high %v3436, %v3468
        %v3477 = vcombine.low %v2829, %v2893
        %v3478 = vcombine.high %v2829, %v2893
        %v3480 = vunpack.c.l.s4 1983009808
        %v3481 = vunpack.c.0.s8 %v3480
        %v3482 = vlaneseq
        %v3483 = vshrl.u32 %v3482, 7
        %v3484 = vsub.s32 %v3481, %v3483
        %v3485 = vrot.slane %v3477, %v3484
        %v3487 = vunpack.c.l.s4 1983009808
        %v3488 = vunpack.c.0.s8 %v3487
        %v3489 = vlaneseq
        %v3490 = vshrl.u32 %v3489, 7
        %v3491 = vsub.s32 %v3488, %v3490
        %v3492 = vrot.slane %v3478, %v3491
        %v3493 = vcombine.low %v2861, %v2925
        %v3494 = vcombine.high %v2861, %v2925
        %v3496 = vunpack.c.l.s4 1983009808
        %v3497 = vunpack.c.0.s8 %v3496
        %v3498 = vlaneseq
        %v3499 = vshrl.u32 %v3498, 7
        %v3500 = vsub.s32 %v3497, %v3499
        %v3501 = vrot.slane %v3493, %v3500
        %v3503 = vunpack.c.l.s4 1983009808
        %v3504 = vunpack.c.0.s8 %v3503
        %v3505 = vlaneseq
        %v3506 = vshrl.u32 %v3505, 7
        %v3507 = vsub.s32 %v3504, %v3506
        %v3508 = vrot.slane %v3494, %v3507
        %v3509 = vcombine.low %v2957, %v3021
        %v3510 = vcombine.high %v2957, %v3021
        %v3512 = vunpack.c.l.s4 1983009808
        %v3513 = vunpack.c.0.s8 %v3512
        %v3514 = vlaneseq
        %v3515 = vshrl.u32 %v3514, 7
        %v3516 = vsub.s32 %v3513, %v3515
        %v3517 = vrot.slane %v3509, %v3516
        %v3519 = vunpack.c.l.s4 1983009808
        %v3520 = vunpack.c.0.s8 %v3519
        %v3521 = vlaneseq
        %v3522 = vshrl.u32 %v3521, 7
        %v3523 = vsub.s32 %v3520, %v3522
        %v3524 = vrot.slane %v3510, %v3523
        %v3525 = vcombine.low %v2989, %v3053
        %v3526 = vcombine.high %v2989, %v3053
        %v3528 = vunpack.c.l.s4 1983009808
        %v3529 = vunpack.c.0.s8 %v3528
        %v3530 = vlaneseq
        %v3531 = vshrl.u32 %v3530, 7
        %v3532 = vsub.s32 %v3529, %v3531
        %v3533 = vrot.slane %v3525, %v3532
        %v3535 = vunpack.c.l.s4 1983009808
        %v3536 = vunpack.c.0.s8 %v3535
        %v3537 = vlaneseq
        %v3538 = vshrl.u32 %v3537, 7
        %v3539 = vsub.s32 %v3536, %v3538
        %v3540 = vrot.slane %v3526, %v3539
        %v3541 = vcombine.low %v3485, %v3501
        %v3542 = vcombine.high %v3485, %v3501
        %v3544 = vunpack.c.l.s4 1934713408
        %v3545 = vunpack.c.0.s8 %v3544
        %v3546 = vlaneseq
        %v3547 = vshrl.u32 %v3546, 7
        %v3548 = vsub.s32 %v3545, %v3547
        %v3549 = vrot.slane %v3541, %v3548
        %v3551 = vunpack.c.l.s4 1934713408
        %v3552 = vunpack.c.0.s8 %v3551
        %v3553 = vlaneseq
        %v3554 = vshrl.u32 %v3553, 7
        %v3555 = vsub.s32 %v3552, %v3554
        %v3556 = vrot.slane %v3542, %v3555
        %v3557 = vcombine.low %v3492, %v3508
        %v3558 = vcombine.high %v3492, %v3508
        %v3560 = vunpack.c.l.s4 1934713408
        %v3561 = vunpack.c.0.s8 %v3560
        %v3562 = vlaneseq
        %v3563 = vshrl.u32 %v3562, 7
        %v3564 = vsub.s32 %v3561, %v3563
        %v3565 = vrot.slane %v3557, %v3564
        %v3567 = vunpack.c.l.s4 1934713408
        %v3568 = vunpack.c.0.s8 %v3567
        %v3569 = vlaneseq
        %v3570 = vshrl.u32 %v3569, 7
        %v3571 = vsub.s32 %v3568, %v3570
        %v3572 = vrot.slane %v3558, %v3571
        %v3573 = vcombine.low %v3517, %v3533
        %v3574 = vcombine.high %v3517, %v3533
        %v3576 = vunpack.c.l.s4 1934713408
        %v3577 = vunpack.c.0.s8 %v3576
        %v3578 = vlaneseq
        %v3579 = vshrl.u32 %v3578, 7
        %v3580 = vsub.s32 %v3577, %v3579
        %v3581 = vrot.slane %v3573, %v3580
        %v3583 = vunpack.c.l.s4 1934713408
        %v3584 = vunpack.c.0.s8 %v3583
        %v3585 = vlaneseq
        %v3586 = vshrl.u32 %v3585, 7
        %v3587 = vsub.s32 %v3584, %v3586
        %v3588 = vrot.slane %v3574, %v3587
        %v3589 = vcombine.low %v3524, %v3540
        %v3590 = vcombine.high %v3524, %v3540
        %v3592 = vunpack.c.l.s4 1934713408
        %v3593 = vunpack.c.0.s8 %v3592
        %v3594 = vlaneseq
        %v3595 = vshrl.u32 %v3594, 7
        %v3596 = vsub.s32 %v3593, %v3595
        %v3597 = vrot.slane %v3589, %v3596
        %v3599 = vunpack.c.l.s4 1934713408
        %v3600 = vunpack.c.0.s8 %v3599
        %v3601 = vlaneseq
        %v3602 = vshrl.u32 %v3601, 7
        %v3603 = vsub.s32 %v3600, %v3602
        %v3604 = vrot.slane %v3590, %v3603
        %v3605 = vcombine.low %v3549, %v3581
        %v3606 = vcombine.high %v3549, %v3581
        %v3607 = vcombine.low %v3556, %v3588
        %v3608 = vcombine.high %v3556, %v3588
        %v3609 = vcombine.low %v3565, %v3597
        %v3610 = vcombine.high %v3565, %v3597
        %v3611 = vcombine.low %v3572, %v3604
        %v3612 = vcombine.high %v3572, %v3604
        %v3614 = vsel %vm664, %v645, 0
        %3616 = vmatprep.subr.mxu0 0.0
        %3617 = vmatpush1.msra.mxu0 0.0
        %3618 = vmatprep.subr.mxu0 0.0
        %3619 = vmatpush1.msra.mxu0 0.0
        %3620 = vmatprep.subr.mxu0 0.0
        %3621 = vmatpush1.msra.mxu0 0.0
        %3622 = vmatprep.subr.mxu0 0.0
        %3623 = vmatpush1.msra.mxu0 0.0
        %3624 = vmatprep.subr.mxu0 0.0
        %3625 = vmatpush1.msra.mxu0 0.0
        %3626 = vmatprep.subr.mxu0 0.0
        %3627 = vmatpush1.msra.mxu0 0.0
        %3628 = vmatprep.subr.mxu0 0.0
        %3629 = vmatpush1.msra.mxu0 0.0
        %3630 = vmatprep.subr.mxu0 0.0
        %3631 = vmatpush1.msra.mxu0 0.0
        %3632 = vmatprep.subr.mxu0 0.0
        %3633 = vmatpush1.msra.mxu0 0.0
        %3634 = vmatprep.subr.mxu0 0.0
        %3635 = vmatpush1.msra.mxu0 0.0
        %3636 = vmatprep.subr.mxu0 0.0
        %3637 = vmatpush1.msra.mxu0 0.0
        %3638 = vmatprep.subr.mxu0 0.0
        %3639 = vmatpush1.msra.mxu0 0.0
        %3640 = vmatprep.subr.mxu0 0.0
        %3641 = vmatpush1.msra.mxu0 %v3605
        %3642 = vmatprep.subr.mxu0 0.0
        %3643 = vmatpush1.msra.mxu0 %v3469
        %3644 = vmatprep.subr.mxu0 0.0
        %3645 = vmatpush1.msra.mxu0 %v3333
        %3646 = vmatprep.subr.mxu0 0.0
        %3647 = vmatpush1.msra.mxu0 %v3197
        %3648 = vmatprep.subr.mxu0 0.0
        %3649 = vmatpush2.msra.mxu0 0.0
        %3650 = vmatprep.subr.mxu0 0.0
        %3651 = vmatpush2.msra.mxu0 0.0
        %3652 = vmatprep.subr.mxu0 0.0
        %3653 = vmatpush2.msra.mxu0 0.0
        %3654 = vmatprep.subr.mxu0 0.0
        %3655 = vmatpush2.msra.mxu0 0.0
        %3656 = vmatprep.subr.mxu0 0.0
        %3657 = vmatpush2.msra.mxu0 0.0
        %3658 = vmatprep.subr.mxu0 0.0
        %3659 = vmatpush2.msra.mxu0 0.0
        %3660 = vmatprep.subr.mxu0 0.0
        %3661 = vmatpush2.msra.mxu0 0.0
        %3662 = vmatprep.subr.mxu0 0.0
        %3663 = vmatpush2.msra.mxu0 0.0
        %3664 = vmatprep.subr.mxu0 0.0
        %3665 = vmatpush2.msra.mxu0 0.0
        %3666 = vmatprep.subr.mxu0 0.0
        %3667 = vmatpush2.msra.mxu0 0.0
        %3668 = vmatprep.subr.mxu0 0.0
        %3669 = vmatpush2.msra.mxu0 0.0
        %3670 = vmatprep.subr.mxu0 0.0
        %3671 = vmatpush2.msra.mxu0 0.0
        %3672 = vmatprep.subr.mxu0 0.0
        %3673 = vmatpush2.msra.mxu0 0.0
        %3674 = vmatprep.subr.mxu0 0.0
        %3675 = vmatpush2.msra.mxu0 0.0
        %3676 = vmatprep.subr.mxu0 0.0
        %3677 = vmatpush2.msra.mxu0 0.0
        %3678 = vmatprep.subr.mxu0 0.0
        %3679 = vmatpush2.msra.mxu0 0.0
        %3680 = vmatprep.mubr.f32.mxu0 0.0
        %3681 = vmatmul.mubr.f32.gmra.mxu0 %v3614
        %v3682 = vpop.f32.mrf.mxu0
        %v3683 = vadd.f32 0.0, %v3682
        %v3684 = vpop.f32.mrf.mxu0
        %3685 = vdwg.mxu0
        %v3687 = vsel %vm664, %v646, 0
        %3689 = vmatprep.subr.mxu0 0.0
        %3690 = vmatpush1.msra.mxu0 0.0
        %3691 = vmatprep.subr.mxu0 0.0
        %3692 = vmatpush1.msra.mxu0 0.0
        %3693 = vmatprep.subr.mxu0 0.0
        %3694 = vmatpush1.msra.mxu0 0.0
        %3695 = vmatprep.subr.mxu0 0.0
        %3696 = vmatpush1.msra.mxu0 0.0
        %3697 = vmatprep.subr.mxu0 0.0
        %3698 = vmatpush1.msra.mxu0 0.0
        %3699 = vmatprep.subr.mxu0 0.0
        %3700 = vmatpush1.msra.mxu0 0.0
        %3701 = vmatprep.subr.mxu0 0.0
        %3702 = vmatpush1.msra.mxu0 0.0
        %3703 = vmatprep.subr.mxu0 0.0
        %3704 = vmatpush1.msra.mxu0 0.0
        %3705 = vmatprep.subr.mxu0 0.0
        %3706 = vmatpush1.msra.mxu0 0.0
        %3707 = vmatprep.subr.mxu0 0.0
        %3708 = vmatpush1.msra.mxu0 0.0
        %3709 = vmatprep.subr.mxu0 0.0
        %3710 = vmatpush1.msra.mxu0 0.0
        %3711 = vmatprep.subr.mxu0 0.0
        %3712 = vmatpush1.msra.mxu0 0.0
        %3713 = vmatprep.subr.mxu0 0.0
        %3714 = vmatpush1.msra.mxu0 %v3606
        %3715 = vmatprep.subr.mxu0 0.0
        %3716 = vmatpush1.msra.mxu0 %v3470
        %3717 = vmatprep.subr.mxu0 0.0
        %3718 = vmatpush1.msra.mxu0 %v3334
        %3719 = vmatprep.subr.mxu0 0.0
        %3720 = vmatpush1.msra.mxu0 %v3198
        %3721 = vmatprep.subr.mxu0 0.0
        %3722 = vmatpush2.msra.mxu0 0.0
        %3723 = vmatprep.subr.mxu0 0.0
        %3724 = vmatpush2.msra.mxu0 0.0
        %3725 = vmatprep.subr.mxu0 0.0
        %3726 = vmatpush2.msra.mxu0 0.0
        %3727 = vmatprep.subr.mxu0 0.0
        %3728 = vmatpush2.msra.mxu0 0.0
        %3729 = vmatprep.subr.mxu0 0.0
        %3730 = vmatpush2.msra.mxu0 0.0
        %3731 = vmatprep.subr.mxu0 0.0
        %3732 = vmatpush2.msra.mxu0 0.0
        %3733 = vmatprep.subr.mxu0 0.0
        %3734 = vmatpush2.msra.mxu0 0.0
        %3735 = vmatprep.subr.mxu0 0.0
        %3736 = vmatpush2.msra.mxu0 0.0
        %3737 = vmatprep.subr.mxu0 0.0
        %3738 = vmatpush2.msra.mxu0 0.0
        %3739 = vmatprep.subr.mxu0 0.0
        %3740 = vmatpush2.msra.mxu0 0.0
        %3741 = vmatprep.subr.mxu0 0.0
        %3742 = vmatpush2.msra.mxu0 0.0
        %3743 = vmatprep.subr.mxu0 0.0
        %3744 = vmatpush2.msra.mxu0 0.0
        %3745 = vmatprep.subr.mxu0 0.0
        %3746 = vmatpush2.msra.mxu0 0.0
        %3747 = vmatprep.subr.mxu0 0.0
        %3748 = vmatpush2.msra.mxu0 0.0
        %3749 = vmatprep.subr.mxu0 0.0
        %3750 = vmatpush2.msra.mxu0 0.0
        %3751 = vmatprep.subr.mxu0 0.0
        %3752 = vmatpush2.msra.mxu0 0.0
        %3753 = vmatprep.mubr.f32.mxu0 0.0
        %3754 = vmatmul.mubr.f32.gmra.mxu0 %v3687
        %v3755 = vpop.f32.mrf.mxu0
        %v3756 = vadd.f32 0.0, %v3755
        %v3757 = vpop.f32.mrf.mxu0
        %3758 = vdwg.mxu0
        %v3760 = vsel %vm664, %v647, 0
        %3762 = vmatprep.subr.mxu0 0.0
        %3763 = vmatpush1.msra.mxu0 0.0
        %3764 = vmatprep.subr.mxu0 0.0
        %3765 = vmatpush1.msra.mxu0 0.0
        %3766 = vmatprep.subr.mxu0 0.0
        %3767 = vmatpush1.msra.mxu0 0.0
        %3768 = vmatprep.subr.mxu0 0.0
        %3769 = vmatpush1.msra.mxu0 0.0
        %3770 = vmatprep.subr.mxu0 0.0
        %3771 = vmatpush1.msra.mxu0 0.0
        %3772 = vmatprep.subr.mxu0 0.0
        %3773 = vmatpush1.msra.mxu0 0.0
        %3774 = vmatprep.subr.mxu0 0.0
        %3775 = vmatpush1.msra.mxu0 0.0
        %3776 = vmatprep.subr.mxu0 0.0
        %3777 = vmatpush1.msra.mxu0 0.0
        %3778 = vmatprep.subr.mxu0 0.0
        %3779 = vmatpush1.msra.mxu0 0.0
        %3780 = vmatprep.subr.mxu0 0.0
        %3781 = vmatpush1.msra.mxu0 0.0
        %3782 = vmatprep.subr.mxu0 0.0
        %3783 = vmatpush1.msra.mxu0 0.0
        %3784 = vmatprep.subr.mxu0 0.0
        %3785 = vmatpush1.msra.mxu0 0.0
        %3786 = vmatprep.subr.mxu0 0.0
        %3787 = vmatpush1.msra.mxu0 %v3607
        %3788 = vmatprep.subr.mxu0 0.0
        %3789 = vmatpush1.msra.mxu0 %v3471
        %3790 = vmatprep.subr.mxu0 0.0
        %3791 = vmatpush1.msra.mxu0 %v3335
        %3792 = vmatprep.subr.mxu0 0.0
        %3793 = vmatpush1.msra.mxu0 %v3199
        %3794 = vmatprep.subr.mxu0 0.0
        %3795 = vmatpush2.msra.mxu0 0.0
        %3796 = vmatprep.subr.mxu0 0.0
        %3797 = vmatpush2.msra.mxu0 0.0
        %3798 = vmatprep.subr.mxu0 0.0
        %3799 = vmatpush2.msra.mxu0 0.0
        %3800 = vmatprep.subr.mxu0 0.0
        %3801 = vmatpush2.msra.mxu0 0.0
        %3802 = vmatprep.subr.mxu0 0.0
        %3803 = vmatpush2.msra.mxu0 0.0
        %3804 = vmatprep.subr.mxu0 0.0
        %3805 = vmatpush2.msra.mxu0 0.0
        %3806 = vmatprep.subr.mxu0 0.0
        %3807 = vmatpush2.msra.mxu0 0.0
        %3808 = vmatprep.subr.mxu0 0.0
        %3809 = vmatpush2.msra.mxu0 0.0
        %3810 = vmatprep.subr.mxu0 0.0
        %3811 = vmatpush2.msra.mxu0 0.0
        %3812 = vmatprep.subr.mxu0 0.0
        %3813 = vmatpush2.msra.mxu0 0.0
        %3814 = vmatprep.subr.mxu0 0.0
        %3815 = vmatpush2.msra.mxu0 0.0
        %3816 = vmatprep.subr.mxu0 0.0
        %3817 = vmatpush2.msra.mxu0 0.0
        %3818 = vmatprep.subr.mxu0 0.0
        %3819 = vmatpush2.msra.mxu0 0.0
        %3820 = vmatprep.subr.mxu0 0.0
        %3821 = vmatpush2.msra.mxu0 0.0
        %3822 = vmatprep.subr.mxu0 0.0
        %3823 = vmatpush2.msra.mxu0 0.0
        %3824 = vmatprep.subr.mxu0 0.0
        %3825 = vmatpush2.msra.mxu0 0.0
        %3826 = vmatprep.mubr.f32.mxu0 0.0
        %3827 = vmatmul.mubr.f32.gmra.mxu0 %v3760
        %v3828 = vpop.f32.mrf.mxu0
        %v3829 = vadd.f32 0.0, %v3828
        %v3830 = vpop.f32.mrf.mxu0
        %3831 = vdwg.mxu0
        %v3833 = vsel %vm664, %v648, 0
        %3835 = vmatprep.subr.mxu0 0.0
        %3836 = vmatpush1.msra.mxu0 0.0
        %3837 = vmatprep.subr.mxu0 0.0
        %3838 = vmatpush1.msra.mxu0 0.0
        %3839 = vmatprep.subr.mxu0 0.0
        %3840 = vmatpush1.msra.mxu0 0.0
        %3841 = vmatprep.subr.mxu0 0.0
        %3842 = vmatpush1.msra.mxu0 0.0
        %3843 = vmatprep.subr.mxu0 0.0
        %3844 = vmatpush1.msra.mxu0 0.0
        %3845 = vmatprep.subr.mxu0 0.0
        %3846 = vmatpush1.msra.mxu0 0.0
        %3847 = vmatprep.subr.mxu0 0.0
        %3848 = vmatpush1.msra.mxu0 0.0
        %3849 = vmatprep.subr.mxu0 0.0
        %3850 = vmatpush1.msra.mxu0 0.0
        %3851 = vmatprep.subr.mxu0 0.0
        %3852 = vmatpush1.msra.mxu0 0.0
        %3853 = vmatprep.subr.mxu0 0.0
        %3854 = vmatpush1.msra.mxu0 0.0
        %3855 = vmatprep.subr.mxu0 0.0
        %3856 = vmatpush1.msra.mxu0 0.0
        %3857 = vmatprep.subr.mxu0 0.0
        %3858 = vmatpush1.msra.mxu0 0.0
        %3859 = vmatprep.subr.mxu0 0.0
        %3860 = vmatpush1.msra.mxu0 %v3608
        %3861 = vmatprep.subr.mxu0 0.0
        %3862 = vmatpush1.msra.mxu0 %v3472
        %3863 = vmatprep.subr.mxu0 0.0
        %3864 = vmatpush1.msra.mxu0 %v3336
        %3865 = vmatprep.subr.mxu0 0.0
        %3866 = vmatpush1.msra.mxu0 %v3200
        %3867 = vmatprep.subr.mxu0 0.0
        %3868 = vmatpush2.msra.mxu0 0.0
        %3869 = vmatprep.subr.mxu0 0.0
        %3870 = vmatpush2.msra.mxu0 0.0
        %3871 = vmatprep.subr.mxu0 0.0
        %3872 = vmatpush2.msra.mxu0 0.0
        %3873 = vmatprep.subr.mxu0 0.0
        %3874 = vmatpush2.msra.mxu0 0.0
        %3875 = vmatprep.subr.mxu0 0.0
        %3876 = vmatpush2.msra.mxu0 0.0
        %3877 = vmatprep.subr.mxu0 0.0
        %3878 = vmatpush2.msra.mxu0 0.0
        %3879 = vmatprep.subr.mxu0 0.0
        %3880 = vmatpush2.msra.mxu0 0.0
        %3881 = vmatprep.subr.mxu0 0.0
        %3882 = vmatpush2.msra.mxu0 0.0
        %3883 = vmatprep.subr.mxu0 0.0
        %3884 = vmatpush2.msra.mxu0 0.0
        %3885 = vmatprep.subr.mxu0 0.0
        %3886 = vmatpush2.msra.mxu0 0.0
        %3887 = vmatprep.subr.mxu0 0.0
        %3888 = vmatpush2.msra.mxu0 0.0
        %3889 = vmatprep.subr.mxu0 0.0
        %3890 = vmatpush2.msra.mxu0 0.0
        %3891 = vmatprep.subr.mxu0 0.0
        %3892 = vmatpush2.msra.mxu0 0.0
        %3893 = vmatprep.subr.mxu0 0.0
        %3894 = vmatpush2.msra.mxu0 0.0
        %3895 = vmatprep.subr.mxu0 0.0
        %3896 = vmatpush2.msra.mxu0 0.0
        %3897 = vmatprep.subr.mxu0 0.0
        %3898 = vmatpush2.msra.mxu0 0.0
        %3899 = vmatprep.mubr.f32.mxu0 0.0
        %3900 = vmatmul.mubr.f32.gmra.mxu0 %v3833
        %v3901 = vpop.f32.mrf.mxu0
        %v3902 = vadd.f32 0.0, %v3901
        %v3903 = vpop.f32.mrf.mxu0
        %3904 = vdwg.mxu0
        %v3906 = vsel %vm664, %v649, 0
        %3908 = vmatprep.subr.mxu0 0.0
        %3909 = vmatpush1.msra.mxu0 0.0
        %3910 = vmatprep.subr.mxu0 0.0
        %3911 = vmatpush1.msra.mxu0 0.0
        %3912 = vmatprep.subr.mxu0 0.0
        %3913 = vmatpush1.msra.mxu0 0.0
        %3914 = vmatprep.subr.mxu0 0.0
        %3915 = vmatpush1.msra.mxu0 0.0
        %3916 = vmatprep.subr.mxu0 0.0
        %3917 = vmatpush1.msra.mxu0 0.0
        %3918 = vmatprep.subr.mxu0 0.0
        %3919 = vmatpush1.msra.mxu0 0.0
        %3920 = vmatprep.subr.mxu0 0.0
        %3921 = vmatpush1.msra.mxu0 0.0
        %3922 = vmatprep.subr.mxu0 0.0
        %3923 = vmatpush1.msra.mxu0 0.0
        %3924 = vmatprep.subr.mxu0 0.0
        %3925 = vmatpush1.msra.mxu0 0.0
        %3926 = vmatprep.subr.mxu0 0.0
        %3927 = vmatpush1.msra.mxu0 0.0
        %3928 = vmatprep.subr.mxu0 0.0
        %3929 = vmatpush1.msra.mxu0 0.0
        %3930 = vmatprep.subr.mxu0 0.0
        %3931 = vmatpush1.msra.mxu0 0.0
        %3932 = vmatprep.subr.mxu0 0.0
        %3933 = vmatpush1.msra.mxu0 %v3609
        %3934 = vmatprep.subr.mxu0 0.0
        %3935 = vmatpush1.msra.mxu0 %v3473
        %3936 = vmatprep.subr.mxu0 0.0
        %3937 = vmatpush1.msra.mxu0 %v3337
        %3938 = vmatprep.subr.mxu0 0.0
        %3939 = vmatpush1.msra.mxu0 %v3201
        %3940 = vmatprep.subr.mxu0 0.0
        %3941 = vmatpush2.msra.mxu0 0.0
        %3942 = vmatprep.subr.mxu0 0.0
        %3943 = vmatpush2.msra.mxu0 0.0
        %3944 = vmatprep.subr.mxu0 0.0
        %3945 = vmatpush2.msra.mxu0 0.0
        %3946 = vmatprep.subr.mxu0 0.0
        %3947 = vmatpush2.msra.mxu0 0.0
        %3948 = vmatprep.subr.mxu0 0.0
        %3949 = vmatpush2.msra.mxu0 0.0
        %3950 = vmatprep.subr.mxu0 0.0
        %3951 = vmatpush2.msra.mxu0 0.0
        %3952 = vmatprep.subr.mxu0 0.0
        %3953 = vmatpush2.msra.mxu0 0.0
        %3954 = vmatprep.subr.mxu0 0.0
        %3955 = vmatpush2.msra.mxu0 0.0
        %3956 = vmatprep.subr.mxu0 0.0
        %3957 = vmatpush2.msra.mxu0 0.0
        %3958 = vmatprep.subr.mxu0 0.0
        %3959 = vmatpush2.msra.mxu0 0.0
        %3960 = vmatprep.subr.mxu0 0.0
        %3961 = vmatpush2.msra.mxu0 0.0
        %3962 = vmatprep.subr.mxu0 0.0
        %3963 = vmatpush2.msra.mxu0 0.0
        %3964 = vmatprep.subr.mxu0 0.0
        %3965 = vmatpush2.msra.mxu0 0.0
        %3966 = vmatprep.subr.mxu0 0.0
        %3967 = vmatpush2.msra.mxu0 0.0
        %3968 = vmatprep.subr.mxu0 0.0
        %3969 = vmatpush2.msra.mxu0 0.0
        %3970 = vmatprep.subr.mxu0 0.0
        %3971 = vmatpush2.msra.mxu0 0.0
        %3972 = vmatprep.mubr.f32.mxu0 0.0
        %3973 = vmatmul.mubr.f32.gmra.mxu0 %v3906
        %v3974 = vpop.f32.mrf.mxu0
        %v3975 = vadd.f32 0.0, %v3974
        %v3976 = vpop.f32.mrf.mxu0
        %3977 = vdwg.mxu0
        %v3979 = vsel %vm664, %v650, 0
        %3981 = vmatprep.subr.mxu0 0.0
        %3982 = vmatpush1.msra.mxu0 0.0
        %3983 = vmatprep.subr.mxu0 0.0
        %3984 = vmatpush1.msra.mxu0 0.0
        %3985 = vmatprep.subr.mxu0 0.0
        %3986 = vmatpush1.msra.mxu0 0.0
        %3987 = vmatprep.subr.mxu0 0.0
        %3988 = vmatpush1.msra.mxu0 0.0
        %3989 = vmatprep.subr.mxu0 0.0
        %3990 = vmatpush1.msra.mxu0 0.0
        %3991 = vmatprep.subr.mxu0 0.0
        %3992 = vmatpush1.msra.mxu0 0.0
        %3993 = vmatprep.subr.mxu0 0.0
        %3994 = vmatpush1.msra.mxu0 0.0
        %3995 = vmatprep.subr.mxu0 0.0
        %3996 = vmatpush1.msra.mxu0 0.0
        %3997 = vmatprep.subr.mxu0 0.0
        %3998 = vmatpush1.msra.mxu0 0.0
        %3999 = vmatprep.subr.mxu0 0.0
        %4000 = vmatpush1.msra.mxu0 0.0
        %4001 = vmatprep.subr.mxu0 0.0
        %4002 = vmatpush1.msra.mxu0 0.0
        %4003 = vmatprep.subr.mxu0 0.0
        %4004 = vmatpush1.msra.mxu0 0.0
        %4005 = vmatprep.subr.mxu0 0.0
        %4006 = vmatpush1.msra.mxu0 %v3610
        %4007 = vmatprep.subr.mxu0 0.0
        %4008 = vmatpush1.msra.mxu0 %v3474
        %4009 = vmatprep.subr.mxu0 0.0
        %4010 = vmatpush1.msra.mxu0 %v3338
        %4011 = vmatprep.subr.mxu0 0.0
        %4012 = vmatpush1.msra.mxu0 %v3202
        %4013 = vmatprep.subr.mxu0 0.0
        %4014 = vmatpush2.msra.mxu0 0.0
        %4015 = vmatprep.subr.mxu0 0.0
        %4016 = vmatpush2.msra.mxu0 0.0
        %4017 = vmatprep.subr.mxu0 0.0
        %4018 = vmatpush2.msra.mxu0 0.0
        %4019 = vmatprep.subr.mxu0 0.0
        %4020 = vmatpush2.msra.mxu0 0.0
        %4021 = vmatprep.subr.mxu0 0.0
        %4022 = vmatpush2.msra.mxu0 0.0
        %4023 = vmatprep.subr.mxu0 0.0
        %4024 = vmatpush2.msra.mxu0 0.0
        %4025 = vmatprep.subr.mxu0 0.0
        %4026 = vmatpush2.msra.mxu0 0.0
        %4027 = vmatprep.subr.mxu0 0.0
        %4028 = vmatpush2.msra.mxu0 0.0
        %4029 = vmatprep.subr.mxu0 0.0
        %4030 = vmatpush2.msra.mxu0 0.0
        %4031 = vmatprep.subr.mxu0 0.0
        %4032 = vmatpush2.msra.mxu0 0.0
        %4033 = vmatprep.subr.mxu0 0.0
        %4034 = vmatpush2.msra.mxu0 0.0
        %4035 = vmatprep.subr.mxu0 0.0
        %4036 = vmatpush2.msra.mxu0 0.0
        %4037 = vmatprep.subr.mxu0 0.0
        %4038 = vmatpush2.msra.mxu0 0.0
        %4039 = vmatprep.subr.mxu0 0.0
        %4040 = vmatpush2.msra.mxu0 0.0
        %4041 = vmatprep.subr.mxu0 0.0
        %4042 = vmatpush2.msra.mxu0 0.0
        %4043 = vmatprep.subr.mxu0 0.0
        %4044 = vmatpush2.msra.mxu0 0.0
        %4045 = vmatprep.mubr.f32.mxu0 0.0
        %4046 = vmatmul.mubr.f32.gmra.mxu0 %v3979
        %v4047 = vpop.f32.mrf.mxu0
        %v4048 = vadd.f32 0.0, %v4047
        %v4049 = vpop.f32.mrf.mxu0
        %4050 = vdwg.mxu0
        %v4052 = vsel %vm664, %v651, 0
        %4054 = vmatprep.subr.mxu0 0.0
        %4055 = vmatpush1.msra.mxu0 0.0
        %4056 = vmatprep.subr.mxu0 0.0
        %4057 = vmatpush1.msra.mxu0 0.0
        %4058 = vmatprep.subr.mxu0 0.0
        %4059 = vmatpush1.msra.mxu0 0.0
        %4060 = vmatprep.subr.mxu0 0.0
        %4061 = vmatpush1.msra.mxu0 0.0
        %4062 = vmatprep.subr.mxu0 0.0
        %4063 = vmatpush1.msra.mxu0 0.0
        %4064 = vmatprep.subr.mxu0 0.0
        %4065 = vmatpush1.msra.mxu0 0.0
        %4066 = vmatprep.subr.mxu0 0.0
        %4067 = vmatpush1.msra.mxu0 0.0
        %4068 = vmatprep.subr.mxu0 0.0
        %4069 = vmatpush1.msra.mxu0 0.0
        %4070 = vmatprep.subr.mxu0 0.0
        %4071 = vmatpush1.msra.mxu0 0.0
        %4072 = vmatprep.subr.mxu0 0.0
        %4073 = vmatpush1.msra.mxu0 0.0
        %4074 = vmatprep.subr.mxu0 0.0
        %4075 = vmatpush1.msra.mxu0 0.0
        %4076 = vmatprep.subr.mxu0 0.0
        %4077 = vmatpush1.msra.mxu0 0.0
        %4078 = vmatprep.subr.mxu0 0.0
        %4079 = vmatpush1.msra.mxu0 %v3611
        %4080 = vmatprep.subr.mxu0 0.0
        %4081 = vmatpush1.msra.mxu0 %v3475
        %4082 = vmatprep.subr.mxu0 0.0
        %4083 = vmatpush1.msra.mxu0 %v3339
        %4084 = vmatprep.subr.mxu0 0.0
        %4085 = vmatpush1.msra.mxu0 %v3203
        %4086 = vmatprep.subr.mxu0 0.0
        %4087 = vmatpush2.msra.mxu0 0.0
        %4088 = vmatprep.subr.mxu0 0.0
        %4089 = vmatpush2.msra.mxu0 0.0
        %4090 = vmatprep.subr.mxu0 0.0
        %4091 = vmatpush2.msra.mxu0 0.0
        %4092 = vmatprep.subr.mxu0 0.0
        %4093 = vmatpush2.msra.mxu0 0.0
        %4094 = vmatprep.subr.mxu0 0.0
        %4095 = vmatpush2.msra.mxu0 0.0
        %4096 = vmatprep.subr.mxu0 0.0
        %4097 = vmatpush2.msra.mxu0 0.0
        %4098 = vmatprep.subr.mxu0 0.0
        %4099 = vmatpush2.msra.mxu0 0.0
        %4100 = vmatprep.subr.mxu0 0.0
        %4101 = vmatpush2.msra.mxu0 0.0
        %4102 = vmatprep.subr.mxu0 0.0
        %4103 = vmatpush2.msra.mxu0 0.0
        %4104 = vmatprep.subr.mxu0 0.0
        %4105 = vmatpush2.msra.mxu0 0.0
        %4106 = vmatprep.subr.mxu0 0.0
        %4107 = vmatpush2.msra.mxu0 0.0
        %4108 = vmatprep.subr.mxu0 0.0
        %4109 = vmatpush2.msra.mxu0 0.0
        %4110 = vmatprep.subr.mxu0 0.0
        %4111 = vmatpush2.msra.mxu0 0.0
        %4112 = vmatprep.subr.mxu0 0.0
        %4113 = vmatpush2.msra.mxu0 0.0
        %4114 = vmatprep.subr.mxu0 0.0
        %4115 = vmatpush2.msra.mxu0 0.0
        %4116 = vmatprep.subr.mxu0 0.0
        %4117 = vmatpush2.msra.mxu0 0.0
        %4118 = vmatprep.mubr.f32.mxu0 0.0
        %4119 = vmatmul.mubr.f32.gmra.mxu0 %v4052
        %v4120 = vpop.f32.mrf.mxu0
        %v4121 = vadd.f32 0.0, %v4120
        %v4122 = vpop.f32.mrf.mxu0
        %4123 = vdwg.mxu0
        %v4125 = vsel %vm664, %v652, 0
        %4127 = vmatprep.subr.mxu0 0.0
        %4128 = vmatpush1.msra.mxu0 0.0
        %4129 = vmatprep.subr.mxu0 0.0
        %4130 = vmatpush1.msra.mxu0 0.0
        %4131 = vmatprep.subr.mxu0 0.0
        %4132 = vmatpush1.msra.mxu0 0.0
        %4133 = vmatprep.subr.mxu0 0.0
        %4134 = vmatpush1.msra.mxu0 0.0
        %4135 = vmatprep.subr.mxu0 0.0
        %4136 = vmatpush1.msra.mxu0 0.0
        %4137 = vmatprep.subr.mxu0 0.0
        %4138 = vmatpush1.msra.mxu0 0.0
        %4139 = vmatprep.subr.mxu0 0.0
        %4140 = vmatpush1.msra.mxu0 0.0
        %4141 = vmatprep.subr.mxu0 0.0
        %4142 = vmatpush1.msra.mxu0 0.0
        %4143 = vmatprep.subr.mxu0 0.0
        %4144 = vmatpush1.msra.mxu0 0.0
        %4145 = vmatprep.subr.mxu0 0.0
        %4146 = vmatpush1.msra.mxu0 0.0
        %4147 = vmatprep.subr.mxu0 0.0
        %4148 = vmatpush1.msra.mxu0 0.0
        %4149 = vmatprep.subr.mxu0 0.0
        %4150 = vmatpush1.msra.mxu0 0.0
        %4151 = vmatprep.subr.mxu0 0.0
        %4152 = vmatpush1.msra.mxu0 %v3612
        %4153 = vmatprep.subr.mxu0 0.0
        %4154 = vmatpush1.msra.mxu0 %v3476
        %4155 = vmatprep.subr.mxu0 0.0
        %4156 = vmatpush1.msra.mxu0 %v3340
        %4157 = vmatprep.subr.mxu0 0.0
        %4158 = vmatpush1.msra.mxu0 %v3204
        %4159 = vmatprep.subr.mxu0 0.0
        %4160 = vmatpush2.msra.mxu0 0.0
        %4161 = vmatprep.subr.mxu0 0.0
        %4162 = vmatpush2.msra.mxu0 0.0
        %4163 = vmatprep.subr.mxu0 0.0
        %4164 = vmatpush2.msra.mxu0 0.0
        %4165 = vmatprep.subr.mxu0 0.0
        %4166 = vmatpush2.msra.mxu0 0.0
        %4167 = vmatprep.subr.mxu0 0.0
        %4168 = vmatpush2.msra.mxu0 0.0
        %4169 = vmatprep.subr.mxu0 0.0
        %4170 = vmatpush2.msra.mxu0 0.0
        %4171 = vmatprep.subr.mxu0 0.0
        %4172 = vmatpush2.msra.mxu0 0.0
        %4173 = vmatprep.subr.mxu0 0.0
        %4174 = vmatpush2.msra.mxu0 0.0
        %4175 = vmatprep.subr.mxu0 0.0
        %4176 = vmatpush2.msra.mxu0 0.0
        %4177 = vmatprep.subr.mxu0 0.0
        %4178 = vmatpush2.msra.mxu0 0.0
        %4179 = vmatprep.subr.mxu0 0.0
        %4180 = vmatpush2.msra.mxu0 0.0
        %4181 = vmatprep.subr.mxu0 0.0
        %4182 = vmatpush2.msra.mxu0 0.0
        %4183 = vmatprep.subr.mxu0 0.0
        %4184 = vmatpush2.msra.mxu0 0.0
        %4185 = vmatprep.subr.mxu0 0.0
        %4186 = vmatpush2.msra.mxu0 0.0
        %4187 = vmatprep.subr.mxu0 0.0
        %4188 = vmatpush2.msra.mxu0 0.0
        %4189 = vmatprep.subr.mxu0 0.0
        %4190 = vmatpush2.msra.mxu0 0.0
        %4191 = vmatprep.mubr.f32.mxu0 0.0
        %4192 = vmatmul.mubr.f32.gmra.mxu0 %v4125
        %v4193 = vpop.f32.mrf.mxu0
        %v4194 = vadd.f32 0.0, %v4193
        %v4195 = vpop.f32.mrf.mxu0
        %4196 = vdwg.mxu0
        %4197 = vxpose.xlu0.b32.start [1/16] %v3683, 128
        %4198 = vxpose.xlu0.b32.cont [2/16] 0.0, 128
        %4199 = vxpose.xlu0.b32.cont [3/16] 0.0, 128
        %4200 = vxpose.xlu0.b32.cont [4/16] 0.0, 128
        %4201 = vxpose.xlu0.b32.cont [5/16] 0.0, 128
        %4202 = vxpose.xlu0.b32.cont [6/16] 0.0, 128
        %4203 = vxpose.xlu0.b32.cont [7/16] 0.0, 128
        %4204 = vxpose.xlu0.b32.cont [8/16] 0.0, 128
        %4205 = vxpose.xlu0.b32.cont [9/16] 0.0, 128
        %4206 = vxpose.xlu0.b32.cont [10/16] 0.0, 128
        %4207 = vxpose.xlu0.b32.cont [11/16] 0.0, 128
        %4208 = vxpose.xlu0.b32.cont [12/16] 0.0, 128
        %4209 = vxpose.xlu0.b32.cont [13/16] 0.0, 128
        %4210 = vxpose.xlu0.b32.cont [14/16] 0.0, 128
        %4211 = vxpose.xlu0.b32.cont [15/16] 0.0, 128
        %4212 = vxpose.xlu0.b32.end [16/16] 0.0, 128
        %v4213 = vpop.trf.xlu0
        %v4214 = vpop.trf.xlu0
        %v4215 = vpop.trf.xlu0
        %v4216 = vpop.trf.xlu0
        %v4217 = vpop.trf.xlu0
        %v4218 = vpop.trf.xlu0
        %v4219 = vpop.trf.xlu0
        %v4220 = vpop.trf.xlu0
        %v4221 = vpop.trf.xlu0
        %v4222 = vpop.trf.xlu0
        %v4223 = vpop.trf.xlu0
        %v4224 = vpop.trf.xlu0
        %v4225 = vpop.trf.xlu0
        %v4226 = vpop.trf.xlu0
        %v4227 = vpop.trf.xlu0
        %v4228 = vpop.trf.xlu0
        %4229 = vxpose.xlu0.b32.start [1/16] %v3756, 128
        %4230 = vxpose.xlu0.b32.cont [2/16] 0.0, 128
        %4231 = vxpose.xlu0.b32.cont [3/16] 0.0, 128
        %4232 = vxpose.xlu0.b32.cont [4/16] 0.0, 128
        %4233 = vxpose.xlu0.b32.cont [5/16] 0.0, 128
        %4234 = vxpose.xlu0.b32.cont [6/16] 0.0, 128
        %4235 = vxpose.xlu0.b32.cont [7/16] 0.0, 128
        %4236 = vxpose.xlu0.b32.cont [8/16] 0.0, 128
        %4237 = vxpose.xlu0.b32.cont [9/16] 0.0, 128
        %4238 = vxpose.xlu0.b32.cont [10/16] 0.0, 128
        %4239 = vxpose.xlu0.b32.cont [11/16] 0.0, 128
        %4240 = vxpose.xlu0.b32.cont [12/16] 0.0, 128
        %4241 = vxpose.xlu0.b32.cont [13/16] 0.0, 128
        %4242 = vxpose.xlu0.b32.cont [14/16] 0.0, 128
        %4243 = vxpose.xlu0.b32.cont [15/16] 0.0, 128
        %4244 = vxpose.xlu0.b32.end [16/16] 0.0, 128
        %v4245 = vpop.trf.xlu0
        %v4246 = vpop.trf.xlu0
        %v4247 = vpop.trf.xlu0
        %v4248 = vpop.trf.xlu0
        %v4249 = vpop.trf.xlu0
        %v4250 = vpop.trf.xlu0
        %v4251 = vpop.trf.xlu0
        %v4252 = vpop.trf.xlu0
        %v4253 = vpop.trf.xlu0
        %v4254 = vpop.trf.xlu0
        %v4255 = vpop.trf.xlu0
        %v4256 = vpop.trf.xlu0
        %v4257 = vpop.trf.xlu0
        %v4258 = vpop.trf.xlu0
        %v4259 = vpop.trf.xlu0
        %v4260 = vpop.trf.xlu0
        %4261 = vxpose.xlu0.b32.start [1/16] %v3829, 128
        %4262 = vxpose.xlu0.b32.cont [2/16] 0.0, 128
        %4263 = vxpose.xlu0.b32.cont [3/16] 0.0, 128
        %4264 = vxpose.xlu0.b32.cont [4/16] 0.0, 128
        %4265 = vxpose.xlu0.b32.cont [5/16] 0.0, 128
        %4266 = vxpose.xlu0.b32.cont [6/16] 0.0, 128
        %4267 = vxpose.xlu0.b32.cont [7/16] 0.0, 128
        %4268 = vxpose.xlu0.b32.cont [8/16] 0.0, 128
        %4269 = vxpose.xlu0.b32.cont [9/16] 0.0, 128
        %4270 = vxpose.xlu0.b32.cont [10/16] 0.0, 128
        %4271 = vxpose.xlu0.b32.cont [11/16] 0.0, 128
        %4272 = vxpose.xlu0.b32.cont [12/16] 0.0, 128
        %4273 = vxpose.xlu0.b32.cont [13/16] 0.0, 128
        %4274 = vxpose.xlu0.b32.cont [14/16] 0.0, 128
        %4275 = vxpose.xlu0.b32.cont [15/16] 0.0, 128
        %4276 = vxpose.xlu0.b32.end [16/16] 0.0, 128
        %v4277 = vpop.trf.xlu0
        %v4278 = vpop.trf.xlu0
        %v4279 = vpop.trf.xlu0
        %v4280 = vpop.trf.xlu0
        %v4281 = vpop.trf.xlu0
        %v4282 = vpop.trf.xlu0
        %v4283 = vpop.trf.xlu0
        %v4284 = vpop.trf.xlu0
        %v4285 = vpop.trf.xlu0
        %v4286 = vpop.trf.xlu0
        %v4287 = vpop.trf.xlu0
        %v4288 = vpop.trf.xlu0
        %v4289 = vpop.trf.xlu0
        %v4290 = vpop.trf.xlu0
        %v4291 = vpop.trf.xlu0
        %v4292 = vpop.trf.xlu0
        %4293 = vxpose.xlu0.b32.start [1/16] %v3902, 128
        %4294 = vxpose.xlu0.b32.cont [2/16] 0.0, 128
        %4295 = vxpose.xlu0.b32.cont [3/16] 0.0, 128
        %4296 = vxpose.xlu0.b32.cont [4/16] 0.0, 128
        %4297 = vxpose.xlu0.b32.cont [5/16] 0.0, 128
        %4298 = vxpose.xlu0.b32.cont [6/16] 0.0, 128
        %4299 = vxpose.xlu0.b32.cont [7/16] 0.0, 128
        %4300 = vxpose.xlu0.b32.cont [8/16] 0.0, 128
        %4301 = vxpose.xlu0.b32.cont [9/16] 0.0, 128
        %4302 = vxpose.xlu0.b32.cont [10/16] 0.0, 128
        %4303 = vxpose.xlu0.b32.cont [11/16] 0.0, 128
        %4304 = vxpose.xlu0.b32.cont [12/16] 0.0, 128
        %4305 = vxpose.xlu0.b32.cont [13/16] 0.0, 128
        %4306 = vxpose.xlu0.b32.cont [14/16] 0.0, 128
        %4307 = vxpose.xlu0.b32.cont [15/16] 0.0, 128
        %4308 = vxpose.xlu0.b32.end [16/16] 0.0, 128
        %v4309 = vpop.trf.xlu0
        %v4310 = vpop.trf.xlu0
        %v4311 = vpop.trf.xlu0
        %v4312 = vpop.trf.xlu0
        %v4313 = vpop.trf.xlu0
        %v4314 = vpop.trf.xlu0
        %v4315 = vpop.trf.xlu0
        %v4316 = vpop.trf.xlu0
        %v4317 = vpop.trf.xlu0
        %v4318 = vpop.trf.xlu0
        %v4319 = vpop.trf.xlu0
        %v4320 = vpop.trf.xlu0
        %v4321 = vpop.trf.xlu0
        %v4322 = vpop.trf.xlu0
        %v4323 = vpop.trf.xlu0
        %v4324 = vpop.trf.xlu0
        %4325 = vxpose.xlu0.b32.start [1/16] %v3975, 128
        %4326 = vxpose.xlu0.b32.cont [2/16] 0.0, 128
        %4327 = vxpose.xlu0.b32.cont [3/16] 0.0, 128
        %4328 = vxpose.xlu0.b32.cont [4/16] 0.0, 128
        %4329 = vxpose.xlu0.b32.cont [5/16] 0.0, 128
        %4330 = vxpose.xlu0.b32.cont [6/16] 0.0, 128
        %4331 = vxpose.xlu0.b32.cont [7/16] 0.0, 128
        %4332 = vxpose.xlu0.b32.cont [8/16] 0.0, 128
        %4333 = vxpose.xlu0.b32.cont [9/16] 0.0, 128
        %4334 = vxpose.xlu0.b32.cont [10/16] 0.0, 128
        %4335 = vxpose.xlu0.b32.cont [11/16] 0.0, 128
        %4336 = vxpose.xlu0.b32.cont [12/16] 0.0, 128
        %4337 = vxpose.xlu0.b32.cont [13/16] 0.0, 128
        %4338 = vxpose.xlu0.b32.cont [14/16] 0.0, 128
        %4339 = vxpose.xlu0.b32.cont [15/16] 0.0, 128
        %4340 = vxpose.xlu0.b32.end [16/16] 0.0, 128
        %v4341 = vpop.trf.xlu0
        %v4342 = vpop.trf.xlu0
        %v4343 = vpop.trf.xlu0
        %v4344 = vpop.trf.xlu0
        %v4345 = vpop.trf.xlu0
        %v4346 = vpop.trf.xlu0
        %v4347 = vpop.trf.xlu0
        %v4348 = vpop.trf.xlu0
        %v4349 = vpop.trf.xlu0
        %v4350 = vpop.trf.xlu0
        %v4351 = vpop.trf.xlu0
        %v4352 = vpop.trf.xlu0
        %v4353 = vpop.trf.xlu0
        %v4354 = vpop.trf.xlu0
        %v4355 = vpop.trf.xlu0
        %v4356 = vpop.trf.xlu0
        %4357 = vxpose.xlu0.b32.start [1/16] %v4048, 128
        %4358 = vxpose.xlu0.b32.cont [2/16] 0.0, 128
        %4359 = vxpose.xlu0.b32.cont [3/16] 0.0, 128
        %4360 = vxpose.xlu0.b32.cont [4/16] 0.0, 128
        %4361 = vxpose.xlu0.b32.cont [5/16] 0.0, 128
        %4362 = vxpose.xlu0.b32.cont [6/16] 0.0, 128
        %4363 = vxpose.xlu0.b32.cont [7/16] 0.0, 128
        %4364 = vxpose.xlu0.b32.cont [8/16] 0.0, 128
        %4365 = vxpose.xlu0.b32.cont [9/16] 0.0, 128
        %4366 = vxpose.xlu0.b32.cont [10/16] 0.0, 128
        %4367 = vxpose.xlu0.b32.cont [11/16] 0.0, 128
        %4368 = vxpose.xlu0.b32.cont [12/16] 0.0, 128
        %4369 = vxpose.xlu0.b32.cont [13/16] 0.0, 128
        %4370 = vxpose.xlu0.b32.cont [14/16] 0.0, 128
        %4371 = vxpose.xlu0.b32.cont [15/16] 0.0, 128
        %4372 = vxpose.xlu0.b32.end [16/16] 0.0, 128
        %v4373 = vpop.trf.xlu0
        %v4374 = vpop.trf.xlu0
        %v4375 = vpop.trf.xlu0
        %v4376 = vpop.trf.xlu0
        %v4377 = vpop.trf.xlu0
        %v4378 = vpop.trf.xlu0
        %v4379 = vpop.trf.xlu0
        %v4380 = vpop.trf.xlu0
        %v4381 = vpop.trf.xlu0
        %v4382 = vpop.trf.xlu0
        %v4383 = vpop.trf.xlu0
        %v4384 = vpop.trf.xlu0
        %v4385 = vpop.trf.xlu0
        %v4386 = vpop.trf.xlu0
        %v4387 = vpop.trf.xlu0
        %v4388 = vpop.trf.xlu0
        %4389 = vxpose.xlu0.b32.start [1/16] %v4121, 128
        %4390 = vxpose.xlu0.b32.cont [2/16] 0.0, 128
        %4391 = vxpose.xlu0.b32.cont [3/16] 0.0, 128
        %4392 = vxpose.xlu0.b32.cont [4/16] 0.0, 128
        %4393 = vxpose.xlu0.b32.cont [5/16] 0.0, 128
        %4394 = vxpose.xlu0.b32.cont [6/16] 0.0, 128
        %4395 = vxpose.xlu0.b32.cont [7/16] 0.0, 128
        %4396 = vxpose.xlu0.b32.cont [8/16] 0.0, 128
        %4397 = vxpose.xlu0.b32.cont [9/16] 0.0, 128
        %4398 = vxpose.xlu0.b32.cont [10/16] 0.0, 128
        %4399 = vxpose.xlu0.b32.cont [11/16] 0.0, 128
        %4400 = vxpose.xlu0.b32.cont [12/16] 0.0, 128
        %4401 = vxpose.xlu0.b32.cont [13/16] 0.0, 128
        %4402 = vxpose.xlu0.b32.cont [14/16] 0.0, 128
        %4403 = vxpose.xlu0.b32.cont [15/16] 0.0, 128
        %4404 = vxpose.xlu0.b32.end [16/16] 0.0, 128
        %v4405 = vpop.trf.xlu0
        %v4406 = vpop.trf.xlu0
        %v4407 = vpop.trf.xlu0
        %v4408 = vpop.trf.xlu0
        %v4409 = vpop.trf.xlu0
        %v4410 = vpop.trf.xlu0
        %v4411 = vpop.trf.xlu0
        %v4412 = vpop.trf.xlu0
        %v4413 = vpop.trf.xlu0
        %v4414 = vpop.trf.xlu0
        %v4415 = vpop.trf.xlu0
        %v4416 = vpop.trf.xlu0
        %v4417 = vpop.trf.xlu0
        %v4418 = vpop.trf.xlu0
        %v4419 = vpop.trf.xlu0
        %v4420 = vpop.trf.xlu0
        %4421 = vxpose.xlu0.b32.start [1/16] %v4194, 128
        %4422 = vxpose.xlu0.b32.cont [2/16] 0.0, 128
        %4423 = vxpose.xlu0.b32.cont [3/16] 0.0, 128
        %4424 = vxpose.xlu0.b32.cont [4/16] 0.0, 128
        %4425 = vxpose.xlu0.b32.cont [5/16] 0.0, 128
        %4426 = vxpose.xlu0.b32.cont [6/16] 0.0, 128
        %4427 = vxpose.xlu0.b32.cont [7/16] 0.0, 128
        %4428 = vxpose.xlu0.b32.cont [8/16] 0.0, 128
        %4429 = vxpose.xlu0.b32.cont [9/16] 0.0, 128
        %4430 = vxpose.xlu0.b32.cont [10/16] 0.0, 128
        %4431 = vxpose.xlu0.b32.cont [11/16] 0.0, 128
        %4432 = vxpose.xlu0.b32.cont [12/16] 0.0, 128
        %4433 = vxpose.xlu0.b32.cont [13/16] 0.0, 128
        %4434 = vxpose.xlu0.b32.cont [14/16] 0.0, 128
        %4435 = vxpose.xlu0.b32.cont [15/16] 0.0, 128
        %4436 = vxpose.xlu0.b32.end [16/16] 0.0, 128
        %v4437 = vpop.trf.xlu0
        %v4438 = vpop.trf.xlu0
        %v4439 = vpop.trf.xlu0
        %v4440 = vpop.trf.xlu0
        %v4441 = vpop.trf.xlu0
        %v4442 = vpop.trf.xlu0
        %v4443 = vpop.trf.xlu0
        %v4444 = vpop.trf.xlu0
        %v4445 = vpop.trf.xlu0
        %v4446 = vpop.trf.xlu0
        %v4447 = vpop.trf.xlu0
        %v4448 = vpop.trf.xlu0
        %v4449 = vpop.trf.xlu0
        %v4450 = vpop.trf.xlu0
        %v4451 = vpop.trf.xlu0
        %v4452 = vpop.trf.xlu0
        %v4453 = vcombine.low %v4213, %v4277
        %v4455 = vunpack.c.l.s4 1983009808
        %v4456 = vunpack.c.0.s8 %v4455
        %v4457 = vlaneseq
        %v4458 = vshrl.u32 %v4457, 7
        %v4459 = vsub.s32 %v4456, %v4458
        %v4460 = vrot.slane %v4453, %v4459
        %v4461 = vcombine.low %v4245, %v4309
        %v4463 = vunpack.c.l.s4 1983009808
        %v4464 = vunpack.c.0.s8 %v4463
        %v4465 = vlaneseq
        %v4466 = vshrl.u32 %v4465, 7
        %v4467 = vsub.s32 %v4464, %v4466
        %v4468 = vrot.slane %v4461, %v4467
        %v4469 = vcombine.low %v4341, %v4405
        %v4471 = vunpack.c.l.s4 1983009808
        %v4472 = vunpack.c.0.s8 %v4471
        %v4473 = vlaneseq
        %v4474 = vshrl.u32 %v4473, 7
        %v4475 = vsub.s32 %v4472, %v4474
        %v4476 = vrot.slane %v4469, %v4475
        %v4477 = vcombine.low %v4373, %v4437
        %v4479 = vunpack.c.l.s4 1983009808
        %v4480 = vunpack.c.0.s8 %v4479
        %v4481 = vlaneseq
        %v4482 = vshrl.u32 %v4481, 7
        %v4483 = vsub.s32 %v4480, %v4482
        %v4484 = vrot.slane %v4477, %v4483
        %v4485 = vcombine.low %v4460, %v4468
        %v4486 = vcombine.high %v4460, %v4468
        %v4488 = vunpack.c.l.s4 1934713408
        %v4489 = vunpack.c.0.s8 %v4488
        %v4490 = vlaneseq
        %v4491 = vshrl.u32 %v4490, 7
        %v4492 = vsub.s32 %v4489, %v4491
        %v4493 = vrot.slane %v4485, %v4492
        %v4495 = vunpack.c.l.s4 1934713408
        %v4496 = vunpack.c.0.s8 %v4495
        %v4497 = vlaneseq
        %v4498 = vshrl.u32 %v4497, 7
        %v4499 = vsub.s32 %v4496, %v4498
        %v4500 = vrot.slane %v4486, %v4499
        %v4501 = vcombine.low %v4476, %v4484
        %v4502 = vcombine.high %v4476, %v4484
        %v4504 = vunpack.c.l.s4 1934713408
        %v4505 = vunpack.c.0.s8 %v4504
        %v4506 = vlaneseq
        %v4507 = vshrl.u32 %v4506, 7
        %v4508 = vsub.s32 %v4505, %v4507
        %v4509 = vrot.slane %v4501, %v4508
        %v4511 = vunpack.c.l.s4 1934713408
        %v4512 = vunpack.c.0.s8 %v4511
        %v4513 = vlaneseq
        %v4514 = vshrl.u32 %v4513, 7
        %v4515 = vsub.s32 %v4512, %v4514
        %v4516 = vrot.slane %v4502, %v4515
        %v4517 = vcombine.low %v4493, %v4509
        %v4518 = vcombine.high %v4493, %v4509
        %v4519 = vcombine.low %v4500, %v4516
        %v4520 = vcombine.high %v4500, %v4516
        %v4521 = vld [vmem:[%s7] sm:$0x1]
        %v4522 = vld [vmem:[%s7 + $0x1] sm:$0x1]
        %v4523 = vld [vmem:[%s7 + $0x2] sm:$0x1]
        %v4524 = vld [vmem:[%s7 + $0x3] sm:$0x1]
        %v4526 = vlaneseq
        %v4527 = vshrl.u32 %v4526, 7
        %v4528 = vsub.s32 0, %v4527
        %v4529 = vrot.slane %v4521, %v4528
        %v4531 = vmul.f32 %v1052, %v4529
        %v4532 = vsel %vm1352, %v4531, 0.0
        %4533 = vadd.xlane.f32.xlu0 %v4532
        %v4534 = vpop.xlane.xlu0 %4533
        %v4536 = vlaneseq
        %v4537 = vshrl.u32 %v4536, 7
        %v4538 = vsub.s32 0, %v4537
        %v4539 = vrot.slane %v4522, %v4538
        %v4541 = vmul.f32 %v1053, %v4539
        %v4542 = vsel %vm1352, %v4541, 0.0
        %4543 = vadd.xlane.f32.xlu0 %v4542
        %v4544 = vpop.xlane.xlu0 %4543
        %v4546 = vlaneseq
        %v4547 = vshrl.u32 %v4546, 7
        %v4548 = vsub.s32 0, %v4547
        %v4549 = vrot.slane %v4523, %v4548
        %v4551 = vmul.f32 %v1054, %v4549
        %v4552 = vsel %vm1352, %v4551, 0.0
        %4553 = vadd.xlane.f32.xlu0 %v4552
        %v4554 = vpop.xlane.xlu0 %4553
        %v4556 = vlaneseq
        %v4557 = vshrl.u32 %v4556, 7
        %v4558 = vsub.s32 0, %v4557
        %v4559 = vrot.slane %v4524, %v4558
        %v4561 = vmul.f32 %v1055, %v4559
        %v4562 = vsel %vm1352, %v4561, 0.0
        %4563 = vadd.xlane.f32.xlu0 %v4562
        %v4564 = vpop.xlane.xlu0 %4563
        %v4566 = vsel %vm1352, %v1198, 0
        %4568 = vmatprep.subr.mxu0 0.0
        %4569 = vmatpush1.xpose.msra.mxu0 0.0
        %4570 = vmatprep.subr.mxu0 0.0
        %4571 = vmatpush1.xpose.msra.mxu0 0.0
        %4572 = vmatprep.subr.mxu0 0.0
        %4573 = vmatpush1.xpose.msra.mxu0 0.0
        %4574 = vmatprep.subr.mxu0 0.0
        %4575 = vmatpush1.xpose.msra.mxu0 0.0
        %4576 = vmatprep.subr.mxu0 0.0
        %4577 = vmatpush1.xpose.msra.mxu0 0.0
        %4578 = vmatprep.subr.mxu0 0.0
        %4579 = vmatpush1.xpose.msra.mxu0 0.0
        %4580 = vmatprep.subr.mxu0 0.0
        %4581 = vmatpush1.xpose.msra.mxu0 0.0
        %4582 = vmatprep.subr.mxu0 0.0
        %4583 = vmatpush1.xpose.msra.mxu0 0.0
        %4584 = vmatprep.subr.mxu0 0.0
        %4585 = vmatpush1.xpose.msra.mxu0 0.0
        %4586 = vmatprep.subr.mxu0 0.0
        %4587 = vmatpush1.xpose.msra.mxu0 0.0
        %4588 = vmatprep.subr.mxu0 0.0
        %4589 = vmatpush1.xpose.msra.mxu0 0.0
        %4590 = vmatprep.subr.mxu0 0.0
        %4591 = vmatpush1.xpose.msra.mxu0 0.0
        %4592 = vmatprep.subr.mxu0 0.0
        %4593 = vmatpush1.xpose.msra.mxu0 0.0
        %4594 = vmatprep.subr.mxu0 0.0
        %4595 = vmatpush1.xpose.msra.mxu0 0.0
        %4596 = vmatprep.subr.mxu0 0.0
        %4597 = vmatpush1.xpose.msra.mxu0 0.0
        %4598 = vmatprep.subr.mxu0 0.0
        %4599 = vmatpush1.xpose.msra.mxu0 %v4566
        %4600 = vmatprep.subr.mxu0 0.0
        %4601 = vmatpush2.xpose.msra.mxu0 0.0
        %4602 = vmatprep.subr.mxu0 0.0
        %4603 = vmatpush2.xpose.msra.mxu0 0.0
        %4604 = vmatprep.subr.mxu0 0.0
        %4605 = vmatpush2.xpose.msra.mxu0 0.0
        %4606 = vmatprep.subr.mxu0 0.0
        %4607 = vmatpush2.xpose.msra.mxu0 0.0
        %4608 = vmatprep.subr.mxu0 0.0
        %4609 = vmatpush2.xpose.msra.mxu0 0.0
        %4610 = vmatprep.subr.mxu0 0.0
        %4611 = vmatpush2.xpose.msra.mxu0 0.0
        %4612 = vmatprep.subr.mxu0 0.0
        %4613 = vmatpush2.xpose.msra.mxu0 0.0
        %4614 = vmatprep.subr.mxu0 0.0
        %4615 = vmatpush2.xpose.msra.mxu0 0.0
        %4616 = vmatprep.subr.mxu0 0.0
        %4617 = vmatpush2.xpose.msra.mxu0 0.0
        %4618 = vmatprep.subr.mxu0 0.0
        %4619 = vmatpush2.xpose.msra.mxu0 0.0
        %4620 = vmatprep.subr.mxu0 0.0
        %4621 = vmatpush2.xpose.msra.mxu0 0.0
        %4622 = vmatprep.subr.mxu0 0.0
        %4623 = vmatpush2.xpose.msra.mxu0 0.0
        %4624 = vmatprep.subr.mxu0 0.0
        %4625 = vmatpush2.xpose.msra.mxu0 0.0
        %4626 = vmatprep.subr.mxu0 0.0
        %4627 = vmatpush2.xpose.msra.mxu0 0.0
        %4628 = vmatprep.subr.mxu0 0.0
        %4629 = vmatpush2.xpose.msra.mxu0 0.0
        %4630 = vmatprep.subr.mxu0 0.0
        %4631 = vmatpush2.xpose.msra.mxu0 0.0
        %4632 = vmatprep.mubr.f32.mxu0 0.0
        %4633 = vmatmul.mubr.f32.gmra.mxu0 %v1354
        %v4634 = vpop.f32.mrf.mxu0
        %v4635 = vadd.f32 %v4517, %v4634
        %v4636 = vpop.f32.mrf.mxu0
        %4637 = vdwg.mxu0
        %v4639 = vsel %vm1352, %v1199, 0
        %4641 = vmatprep.subr.mxu0 0.0
        %4642 = vmatpush1.xpose.msra.mxu0 0.0
        %4643 = vmatprep.subr.mxu0 0.0
        %4644 = vmatpush1.xpose.msra.mxu0 0.0
        %4645 = vmatprep.subr.mxu0 0.0
        %4646 = vmatpush1.xpose.msra.mxu0 0.0
        %4647 = vmatprep.subr.mxu0 0.0
        %4648 = vmatpush1.xpose.msra.mxu0 0.0
        %4649 = vmatprep.subr.mxu0 0.0
        %4650 = vmatpush1.xpose.msra.mxu0 0.0
        %4651 = vmatprep.subr.mxu0 0.0
        %4652 = vmatpush1.xpose.msra.mxu0 0.0
        %4653 = vmatprep.subr.mxu0 0.0
        %4654 = vmatpush1.xpose.msra.mxu0 0.0
        %4655 = vmatprep.subr.mxu0 0.0
        %4656 = vmatpush1.xpose.msra.mxu0 0.0
        %4657 = vmatprep.subr.mxu0 0.0
        %4658 = vmatpush1.xpose.msra.mxu0 0.0
        %4659 = vmatprep.subr.mxu0 0.0
        %4660 = vmatpush1.xpose.msra.mxu0 0.0
        %4661 = vmatprep.subr.mxu0 0.0
        %4662 = vmatpush1.xpose.msra.mxu0 0.0
        %4663 = vmatprep.subr.mxu0 0.0
        %4664 = vmatpush1.xpose.msra.mxu0 0.0
        %4665 = vmatprep.subr.mxu0 0.0
        %4666 = vmatpush1.xpose.msra.mxu0 0.0
        %4667 = vmatprep.subr.mxu0 0.0
        %4668 = vmatpush1.xpose.msra.mxu0 0.0
        %4669 = vmatprep.subr.mxu0 0.0
        %4670 = vmatpush1.xpose.msra.mxu0 0.0
        %4671 = vmatprep.subr.mxu0 0.0
        %4672 = vmatpush1.xpose.msra.mxu0 %v4639
        %4673 = vmatprep.subr.mxu0 0.0
        %4674 = vmatpush2.xpose.msra.mxu0 0.0
        %4675 = vmatprep.subr.mxu0 0.0
        %4676 = vmatpush2.xpose.msra.mxu0 0.0
        %4677 = vmatprep.subr.mxu0 0.0
        %4678 = vmatpush2.xpose.msra.mxu0 0.0
        %4679 = vmatprep.subr.mxu0 0.0
        %4680 = vmatpush2.xpose.msra.mxu0 0.0
        %4681 = vmatprep.subr.mxu0 0.0
        %4682 = vmatpush2.xpose.msra.mxu0 0.0
        %4683 = vmatprep.subr.mxu0 0.0
        %4684 = vmatpush2.xpose.msra.mxu0 0.0
        %4685 = vmatprep.subr.mxu0 0.0
        %4686 = vmatpush2.xpose.msra.mxu0 0.0
        %4687 = vmatprep.subr.mxu0 0.0
        %4688 = vmatpush2.xpose.msra.mxu0 0.0
        %4689 = vmatprep.subr.mxu0 0.0
        %4690 = vmatpush2.xpose.msra.mxu0 0.0
        %4691 = vmatprep.subr.mxu0 0.0
        %4692 = vmatpush2.xpose.msra.mxu0 0.0
        %4693 = vmatprep.subr.mxu0 0.0
        %4694 = vmatpush2.xpose.msra.mxu0 0.0
        %4695 = vmatprep.subr.mxu0 0.0
        %4696 = vmatpush2.xpose.msra.mxu0 0.0
        %4697 = vmatprep.subr.mxu0 0.0
        %4698 = vmatpush2.xpose.msra.mxu0 0.0
        %4699 = vmatprep.subr.mxu0 0.0
        %4700 = vmatpush2.xpose.msra.mxu0 0.0
        %4701 = vmatprep.subr.mxu0 0.0
        %4702 = vmatpush2.xpose.msra.mxu0 0.0
        %4703 = vmatprep.subr.mxu0 0.0
        %4704 = vmatpush2.xpose.msra.mxu0 0.0
        %4705 = vmatprep.mubr.f32.mxu0 0.0
        %4706 = vmatmul.mubr.f32.gmra.mxu0 %v1427
        %v4707 = vpop.f32.mrf.mxu0
        %v4708 = vadd.f32 %v4518, %v4707
        %v4709 = vpop.f32.mrf.mxu0
        %4710 = vdwg.mxu0
        %v4712 = vsel %vm1352, %v1200, 0
        %4714 = vmatprep.subr.mxu0 0.0
        %4715 = vmatpush1.xpose.msra.mxu0 0.0
        %4716 = vmatprep.subr.mxu0 0.0
        %4717 = vmatpush1.xpose.msra.mxu0 0.0
        %4718 = vmatprep.subr.mxu0 0.0
        %4719 = vmatpush1.xpose.msra.mxu0 0.0
        %4720 = vmatprep.subr.mxu0 0.0
        %4721 = vmatpush1.xpose.msra.mxu0 0.0
        %4722 = vmatprep.subr.mxu0 0.0
        %4723 = vmatpush1.xpose.msra.mxu0 0.0
        %4724 = vmatprep.subr.mxu0 0.0
        %4725 = vmatpush1.xpose.msra.mxu0 0.0
        %4726 = vmatprep.subr.mxu0 0.0
        %4727 = vmatpush1.xpose.msra.mxu0 0.0
        %4728 = vmatprep.subr.mxu0 0.0
        %4729 = vmatpush1.xpose.msra.mxu0 0.0
        %4730 = vmatprep.subr.mxu0 0.0
        %4731 = vmatpush1.xpose.msra.mxu0 0.0
        %4732 = vmatprep.subr.mxu0 0.0
        %4733 = vmatpush1.xpose.msra.mxu0 0.0
        %4734 = vmatprep.subr.mxu0 0.0
        %4735 = vmatpush1.xpose.msra.mxu0 0.0
        %4736 = vmatprep.subr.mxu0 0.0
        %4737 = vmatpush1.xpose.msra.mxu0 0.0
        %4738 = vmatprep.subr.mxu0 0.0
        %4739 = vmatpush1.xpose.msra.mxu0 0.0
        %4740 = vmatprep.subr.mxu0 0.0
        %4741 = vmatpush1.xpose.msra.mxu0 0.0
        %4742 = vmatprep.subr.mxu0 0.0
        %4743 = vmatpush1.xpose.msra.mxu0 0.0
        %4744 = vmatprep.subr.mxu0 0.0
        %4745 = vmatpush1.xpose.msra.mxu0 %v4712
        %4746 = vmatprep.subr.mxu0 0.0
        %4747 = vmatpush2.xpose.msra.mxu0 0.0
        %4748 = vmatprep.subr.mxu0 0.0
        %4749 = vmatpush2.xpose.msra.mxu0 0.0
        %4750 = vmatprep.subr.mxu0 0.0
        %4751 = vmatpush2.xpose.msra.mxu0 0.0
        %4752 = vmatprep.subr.mxu0 0.0
        %4753 = vmatpush2.xpose.msra.mxu0 0.0
        %4754 = vmatprep.subr.mxu0 0.0
        %4755 = vmatpush2.xpose.msra.mxu0 0.0
        %4756 = vmatprep.subr.mxu0 0.0
        %4757 = vmatpush2.xpose.msra.mxu0 0.0
        %4758 = vmatprep.subr.mxu0 0.0
        %4759 = vmatpush2.xpose.msra.mxu0 0.0
        %4760 = vmatprep.subr.mxu0 0.0
        %4761 = vmatpush2.xpose.msra.mxu0 0.0
        %4762 = vmatprep.subr.mxu0 0.0
        %4763 = vmatpush2.xpose.msra.mxu0 0.0
        %4764 = vmatprep.subr.mxu0 0.0
        %4765 = vmatpush2.xpose.msra.mxu0 0.0
        %4766 = vmatprep.subr.mxu0 0.0
        %4767 = vmatpush2.xpose.msra.mxu0 0.0
        %4768 = vmatprep.subr.mxu0 0.0
        %4769 = vmatpush2.xpose.msra.mxu0 0.0
        %4770 = vmatprep.subr.mxu0 0.0
        %4771 = vmatpush2.xpose.msra.mxu0 0.0
        %4772 = vmatprep.subr.mxu0 0.0
        %4773 = vmatpush2.xpose.msra.mxu0 0.0
        %4774 = vmatprep.subr.mxu0 0.0
        %4775 = vmatpush2.xpose.msra.mxu0 0.0
        %4776 = vmatprep.subr.mxu0 0.0
        %4777 = vmatpush2.xpose.msra.mxu0 0.0
        %4778 = vmatprep.mubr.f32.mxu0 0.0
        %4779 = vmatmul.mubr.f32.gmra.mxu0 %v1500
        %v4780 = vpop.f32.mrf.mxu0
        %v4781 = vadd.f32 %v4519, %v4780
        %v4782 = vpop.f32.mrf.mxu0
        %4783 = vdwg.mxu0
        %v4785 = vsel %vm1352, %v1201, 0
        %4787 = vmatprep.subr.mxu0 0.0
        %4788 = vmatpush1.xpose.msra.mxu0 0.0
        %4789 = vmatprep.subr.mxu0 0.0
        %4790 = vmatpush1.xpose.msra.mxu0 0.0
        %4791 = vmatprep.subr.mxu0 0.0
        %4792 = vmatpush1.xpose.msra.mxu0 0.0
        %4793 = vmatprep.subr.mxu0 0.0
        %4794 = vmatpush1.xpose.msra.mxu0 0.0
        %4795 = vmatprep.subr.mxu0 0.0
        %4796 = vmatpush1.xpose.msra.mxu0 0.0
        %4797 = vmatprep.subr.mxu0 0.0
        %4798 = vmatpush1.xpose.msra.mxu0 0.0
        %4799 = vmatprep.subr.mxu0 0.0
        %4800 = vmatpush1.xpose.msra.mxu0 0.0
        %4801 = vmatprep.subr.mxu0 0.0
        %4802 = vmatpush1.xpose.msra.mxu0 0.0
        %4803 = vmatprep.subr.mxu0 0.0
        %4804 = vmatpush1.xpose.msra.mxu0 0.0
        %4805 = vmatprep.subr.mxu0 0.0
        %4806 = vmatpush1.xpose.msra.mxu0 0.0
        %4807 = vmatprep.subr.mxu0 0.0
        %4808 = vmatpush1.xpose.msra.mxu0 0.0
        %4809 = vmatprep.subr.mxu0 0.0
        %4810 = vmatpush1.xpose.msra.mxu0 0.0
        %4811 = vmatprep.subr.mxu0 0.0
        %4812 = vmatpush1.xpose.msra.mxu0 0.0
        %4813 = vmatprep.subr.mxu0 0.0
        %4814 = vmatpush1.xpose.msra.mxu0 0.0
        %4815 = vmatprep.subr.mxu0 0.0
        %4816 = vmatpush1.xpose.msra.mxu0 0.0
        %4817 = vmatprep.subr.mxu0 0.0
        %4818 = vmatpush1.xpose.msra.mxu0 %v4785
        %4819 = vmatprep.subr.mxu0 0.0
        %4820 = vmatpush2.xpose.msra.mxu0 0.0
        %4821 = vmatprep.subr.mxu0 0.0
        %4822 = vmatpush2.xpose.msra.mxu0 0.0
        %4823 = vmatprep.subr.mxu0 0.0
        %4824 = vmatpush2.xpose.msra.mxu0 0.0
        %4825 = vmatprep.subr.mxu0 0.0
        %4826 = vmatpush2.xpose.msra.mxu0 0.0
        %4827 = vmatprep.subr.mxu0 0.0
        %4828 = vmatpush2.xpose.msra.mxu0 0.0
        %4829 = vmatprep.subr.mxu0 0.0
        %4830 = vmatpush2.xpose.msra.mxu0 0.0
        %4831 = vmatprep.subr.mxu0 0.0
        %4832 = vmatpush2.xpose.msra.mxu0 0.0
        %4833 = vmatprep.subr.mxu0 0.0
        %4834 = vmatpush2.xpose.msra.mxu0 0.0
        %4835 = vmatprep.subr.mxu0 0.0
        %4836 = vmatpush2.xpose.msra.mxu0 0.0
        %4837 = vmatprep.subr.mxu0 0.0
        %4838 = vmatpush2.xpose.msra.mxu0 0.0
        %4839 = vmatprep.subr.mxu0 0.0
        %4840 = vmatpush2.xpose.msra.mxu0 0.0
        %4841 = vmatprep.subr.mxu0 0.0
        %4842 = vmatpush2.xpose.msra.mxu0 0.0
        %4843 = vmatprep.subr.mxu0 0.0
        %4844 = vmatpush2.xpose.msra.mxu0 0.0
        %4845 = vmatprep.subr.mxu0 0.0
        %4846 = vmatpush2.xpose.msra.mxu0 0.0
        %4847 = vmatprep.subr.mxu0 0.0
        %4848 = vmatpush2.xpose.msra.mxu0 0.0
        %4849 = vmatprep.subr.mxu0 0.0
        %4850 = vmatpush2.xpose.msra.mxu0 0.0
        %4851 = vmatprep.mubr.f32.mxu0 0.0
        %4852 = vmatmul.mubr.f32.gmra.mxu0 %v1573
        %v4853 = vpop.f32.mrf.mxu0
        %v4854 = vadd.f32 %v4520, %v4853
        %v4855 = vpop.f32.mrf.mxu0
        %4856 = vdwg.mxu0
        %4858 = vset.pattern.permute.xlu0 0
        %4859 = vperm.xlu0 %4858, %v4534
        %v4860 = vpop.permute.xlu0 %4859
        %4863 = vset.pattern.permute.xlu0 0
        %4864 = vperm.xlu0 %4863, %v4544
        %v4865 = vpop.permute.xlu0 %4864
        %4868 = vset.pattern.permute.xlu0 0
        %4869 = vperm.xlu0 %4868, %v4554
        %v4870 = vpop.permute.xlu0 %4869
        %4873 = vset.pattern.permute.xlu0 0
        %4874 = vperm.xlu0 %4873, %v4564
        %v4875 = vpop.permute.xlu0 %4874
        %v4877 = vadd.f32 %v4635, %v4860
        %v4878 = vadd.f32 %v4708, %v4865
        %v4879 = vadd.f32 %v4781, %v4870
        %v4880 = vadd.f32 %v4854, %v4875
        %v4881 = vmul.f32 %v4877, 0.35355338
        %v4882 = vmul.f32 %v4878, 0.35355338
        %v4883 = vmul.f32 %v4879, 0.35355338
        %v4884 = vmul.f32 %v4880, 0.35355338
        %v4885 = vsel %vm1352, %v4881, -inf
        %4886 = vmax.xlane.f32.xlu0 %v4885
        %v4887 = vpop.xlane.xlu0 %4886
        %v4888 = vsel %vm1352, %v4882, -inf
        %4889 = vmax.xlane.f32.xlu0 %v4888
        %v4890 = vpop.xlane.xlu0 %4889
        %v4891 = vsel %vm1352, %v4883, -inf
        %4892 = vmax.xlane.f32.xlu0 %v4891
        %v4893 = vpop.xlane.xlu0 %4892
        %v4894 = vsel %vm1352, %v4884, -inf
        %4895 = vmax.xlane.f32.xlu0 %v4894
        %v4896 = vpop.xlane.xlu0 %4895
        %v4897 = vsub.f32 %v4881, %v4887
        %v4898 = vsub.f32 %v4882, %v4890
        %v4899 = vsub.f32 %v4883, %v4893
        %v4900 = vsub.f32 %v4884, %v4896
        %v4901 = vmul.f32 %v4897, 1.442695
        %v4902 = vpow.pop %v4901
        %v4903 = vmul.f32 %v4898, 1.442695
        %v4904 = vpow.pop %v4903
        %v4905 = vmul.f32 %v4899, 1.442695
        %v4906 = vpow.pop %v4905
        %v4907 = vmul.f32 %v4900, 1.442695
        %v4908 = vpow.pop %v4907
        %v4909 = vsel %vm1352, %v4902, 0.0
        %4910 = vadd.xlane.f32.xlu0 %v4909
        %v4911 = vpop.xlane.xlu0 %4910
        %v4912 = vsel %vm1352, %v4904, 0.0
        %4913 = vadd.xlane.f32.xlu0 %v4912
        %v4914 = vpop.xlane.xlu0 %4913
        %v4915 = vsel %vm1352, %v4906, 0.0
        %4916 = vadd.xlane.f32.xlu0 %v4915
        %v4917 = vpop.xlane.xlu0 %4916
        %v4918 = vsel %vm1352, %v4908, 0.0
        %4919 = vadd.xlane.f32.xlu0 %v4918
        %v4920 = vpop.xlane.xlu0 %4919
        %v4921 = vrcp.pop %v4911
        %v4922 = vrcp.pop %v4914
        %v4923 = vrcp.pop %v4917
        %v4924 = vrcp.pop %v4920
        %v4925 = vmul.f32 %v4902, %v4921
        %v4926 = vmul.f32 %v4904, %v4922
        %v4927 = vmul.f32 %v4906, %v4923
        %v4928 = vmul.f32 %v4908, %v4924
        %s4929 = smul.u32 %s46, 8
        %v4930 = vlaneseq
        %v4931 = vshrl.u32 %v4930, 7
        %v4932 = vstv %s4929
        %v4933 = vadd.s32 %v4931, %v4932
        %v4934 = vlaneseq
        %v4935 = vand.u32 %v4934, 127
        %vm4936 = vcmp.eq.s32.totalorder %v4933, %v4935
        %v4937 = vsel %vm4936, 1, 0
        %vm4938 = vcmp.eq.s32.totalorder %v4937, 1
        %v4939 = vsel %vm4938, 0.0, %v4902
        %v4940 = vsel %vm4938, 0.0, %v4904
        %v4941 = vsel %vm4938, 0.0, %v4906
        %v4942 = vsel %vm4938, 0.0, %v4908
        %v4943 = vsel %vm1352, %v4939, 0.0
        %4944 = vadd.xlane.f32.xlu0 %v4943
        %v4945 = vpop.xlane.xlu0 %4944
        %v4946 = vsel %vm1352, %v4940, 0.0
        %4947 = vadd.xlane.f32.xlu0 %v4946
        %v4948 = vpop.xlane.xlu0 %4947
        %v4949 = vsel %vm1352, %v4941, 0.0
        %4950 = vadd.xlane.f32.xlu0 %v4949
        %v4951 = vpop.xlane.xlu0 %4950
        %v4952 = vsel %vm1352, %v4942, 0.0
        %4953 = vadd.xlane.f32.xlu0 %v4952
        %v4954 = vpop.xlane.xlu0 %4953
        %v4955 = vrcp.pop %v4945
        %v4956 = vrcp.pop %v4948
        %v4957 = vrcp.pop %v4951
        %v4958 = vrcp.pop %v4954
        %v4959 = vmul.f32 %v4939, %v4955
        %v4960 = vmul.f32 %v4940, %v4956
        %v4961 = vmul.f32 %v4941, %v4957
        %v4962 = vmul.f32 %v4942, %v4958
        %v4964 = vsel %vm1352, %v4925, 0
        %4966 = vmatprep.subr.mxu0 0.0
        %4967 = vmatpush1.msra.mxu0 0.0
        %4968 = vmatprep.subr.mxu0 0.0
        %4969 = vmatpush1.msra.mxu0 0.0
        %4970 = vmatprep.subr.mxu0 0.0
        %4971 = vmatpush1.msra.mxu0 0.0
        %4972 = vmatprep.subr.mxu0 0.0
        %4973 = vmatpush1.msra.mxu0 0.0
        %4974 = vmatprep.subr.mxu0 0.0
        %4975 = vmatpush1.msra.mxu0 0.0
        %4976 = vmatprep.subr.mxu0 0.0
        %4977 = vmatpush1.msra.mxu0 0.0
        %4978 = vmatprep.subr.mxu0 0.0
        %4979 = vmatpush1.msra.mxu0 0.0
        %4980 = vmatprep.subr.mxu0 0.0
        %4981 = vmatpush1.msra.mxu0 0.0
        %4982 = vmatprep.subr.mxu0 0.0
        %4983 = vmatpush1.msra.mxu0 0.0
        %4984 = vmatprep.subr.mxu0 0.0
        %4985 = vmatpush1.msra.mxu0 0.0
        %4986 = vmatprep.subr.mxu0 0.0
        %4987 = vmatpush1.msra.mxu0 0.0
        %4988 = vmatprep.subr.mxu0 0.0
        %4989 = vmatpush1.msra.mxu0 0.0
        %4990 = vmatprep.subr.mxu0 0.0
        %4991 = vmatpush1.msra.mxu0 0.0
        %4992 = vmatprep.subr.mxu0 0.0
        %4993 = vmatpush1.msra.mxu0 0.0
        %4994 = vmatprep.subr.mxu0 0.0
        %4995 = vmatpush1.msra.mxu0 0.0
        %4996 = vmatprep.subr.mxu0 0.0
        %4997 = vmatpush1.msra.mxu0 %v1344
        %4998 = vmatprep.subr.mxu0 0.0
        %4999 = vmatpush2.msra.mxu0 0.0
        %5000 = vmatprep.subr.mxu0 0.0
        %5001 = vmatpush2.msra.mxu0 0.0
        %5002 = vmatprep.subr.mxu0 0.0
        %5003 = vmatpush2.msra.mxu0 0.0
        %5004 = vmatprep.subr.mxu0 0.0
        %5005 = vmatpush2.msra.mxu0 0.0
        %5006 = vmatprep.subr.mxu0 0.0
        %5007 = vmatpush2.msra.mxu0 0.0
        %5008 = vmatprep.subr.mxu0 0.0
        %5009 = vmatpush2.msra.mxu0 0.0
        %5010 = vmatprep.subr.mxu0 0.0
        %5011 = vmatpush2.msra.mxu0 0.0
        %5012 = vmatprep.subr.mxu0 0.0
        %5013 = vmatpush2.msra.mxu0 0.0
        %5014 = vmatprep.subr.mxu0 0.0
        %5015 = vmatpush2.msra.mxu0 0.0
        %5016 = vmatprep.subr.mxu0 0.0
        %5017 = vmatpush2.msra.mxu0 0.0
        %5018 = vmatprep.subr.mxu0 0.0
        %5019 = vmatpush2.msra.mxu0 0.0
        %5020 = vmatprep.subr.mxu0 0.0
        %5021 = vmatpush2.msra.mxu0 0.0
        %5022 = vmatprep.subr.mxu0 0.0
        %5023 = vmatpush2.msra.mxu0 0.0
        %5024 = vmatprep.subr.mxu0 0.0
        %5025 = vmatpush2.msra.mxu0 0.0
        %5026 = vmatprep.subr.mxu0 0.0
        %5027 = vmatpush2.msra.mxu0 0.0
        %5028 = vmatprep.subr.mxu0 0.0
        %5029 = vmatpush2.msra.mxu0 0.0
        %5030 = vmatprep.mubr.f32.mxu0 0.0
        %5031 = vmatmul.mubr.f32.gmra.mxu0 %v4964
        %v5032 = vpop.f32.mrf.mxu0
        %v5033 = vadd.f32 0.0, %v5032
        %v5034 = vpop.f32.mrf.mxu0
        %5035 = vdwg.mxu0
        %v5037 = vsel %vm1352, %v4926, 0
        %5039 = vmatprep.subr.mxu0 0.0
        %5040 = vmatpush1.msra.mxu0 0.0
        %5041 = vmatprep.subr.mxu0 0.0
        %5042 = vmatpush1.msra.mxu0 0.0
        %5043 = vmatprep.subr.mxu0 0.0
        %5044 = vmatpush1.msra.mxu0 0.0
        %5045 = vmatprep.subr.mxu0 0.0
        %5046 = vmatpush1.msra.mxu0 0.0
        %5047 = vmatprep.subr.mxu0 0.0
        %5048 = vmatpush1.msra.mxu0 0.0
        %5049 = vmatprep.subr.mxu0 0.0
        %5050 = vmatpush1.msra.mxu0 0.0
        %5051 = vmatprep.subr.mxu0 0.0
        %5052 = vmatpush1.msra.mxu0 0.0
        %5053 = vmatprep.subr.mxu0 0.0
        %5054 = vmatpush1.msra.mxu0 0.0
        %5055 = vmatprep.subr.mxu0 0.0
        %5056 = vmatpush1.msra.mxu0 0.0
        %5057 = vmatprep.subr.mxu0 0.0
        %5058 = vmatpush1.msra.mxu0 0.0
        %5059 = vmatprep.subr.mxu0 0.0
        %5060 = vmatpush1.msra.mxu0 0.0
        %5061 = vmatprep.subr.mxu0 0.0
        %5062 = vmatpush1.msra.mxu0 0.0
        %5063 = vmatprep.subr.mxu0 0.0
        %5064 = vmatpush1.msra.mxu0 0.0
        %5065 = vmatprep.subr.mxu0 0.0
        %5066 = vmatpush1.msra.mxu0 0.0
        %5067 = vmatprep.subr.mxu0 0.0
        %5068 = vmatpush1.msra.mxu0 0.0
        %5069 = vmatprep.subr.mxu0 0.0
        %5070 = vmatpush1.msra.mxu0 %v1345
        %5071 = vmatprep.subr.mxu0 0.0
        %5072 = vmatpush2.msra.mxu0 0.0
        %5073 = vmatprep.subr.mxu0 0.0
        %5074 = vmatpush2.msra.mxu0 0.0
        %5075 = vmatprep.subr.mxu0 0.0
        %5076 = vmatpush2.msra.mxu0 0.0
        %5077 = vmatprep.subr.mxu0 0.0
        %5078 = vmatpush2.msra.mxu0 0.0
        %5079 = vmatprep.subr.mxu0 0.0
        %5080 = vmatpush2.msra.mxu0 0.0
        %5081 = vmatprep.subr.mxu0 0.0
        %5082 = vmatpush2.msra.mxu0 0.0
        %5083 = vmatprep.subr.mxu0 0.0
        %5084 = vmatpush2.msra.mxu0 0.0
        %5085 = vmatprep.subr.mxu0 0.0
        %5086 = vmatpush2.msra.mxu0 0.0
        %5087 = vmatprep.subr.mxu0 0.0
        %5088 = vmatpush2.msra.mxu0 0.0
        %5089 = vmatprep.subr.mxu0 0.0
        %5090 = vmatpush2.msra.mxu0 0.0
        %5091 = vmatprep.subr.mxu0 0.0
        %5092 = vmatpush2.msra.mxu0 0.0
        %5093 = vmatprep.subr.mxu0 0.0
        %5094 = vmatpush2.msra.mxu0 0.0
        %5095 = vmatprep.subr.mxu0 0.0
        %5096 = vmatpush2.msra.mxu0 0.0
        %5097 = vmatprep.subr.mxu0 0.0
        %5098 = vmatpush2.msra.mxu0 0.0
        %5099 = vmatprep.subr.mxu0 0.0
        %5100 = vmatpush2.msra.mxu0 0.0
        %5101 = vmatprep.subr.mxu0 0.0
        %5102 = vmatpush2.msra.mxu0 0.0
        %5103 = vmatprep.mubr.f32.mxu0 0.0
        %5104 = vmatmul.mubr.f32.gmra.mxu0 %v5037
        %v5105 = vpop.f32.mrf.mxu0
        %v5106 = vadd.f32 0.0, %v5105
        %v5107 = vpop.f32.mrf.mxu0
        %5108 = vdwg.mxu0
        %v5110 = vsel %vm1352, %v4927, 0
        %5112 = vmatprep.subr.mxu0 0.0
        %5113 = vmatpush1.msra.mxu0 0.0
        %5114 = vmatprep.subr.mxu0 0.0
        %5115 = vmatpush1.msra.mxu0 0.0
        %5116 = vmatprep.subr.mxu0 0.0
        %5117 = vmatpush1.msra.mxu0 0.0
        %5118 = vmatprep.subr.mxu0 0.0
        %5119 = vmatpush1.msra.mxu0 0.0
        %5120 = vmatprep.subr.mxu0 0.0
        %5121 = vmatpush1.msra.mxu0 0.0
        %5122 = vmatprep.subr.mxu0 0.0
        %5123 = vmatpush1.msra.mxu0 0.0
        %5124 = vmatprep.subr.mxu0 0.0
        %5125 = vmatpush1.msra.mxu0 0.0
        %5126 = vmatprep.subr.mxu0 0.0
        %5127 = vmatpush1.msra.mxu0 0.0
        %5128 = vmatprep.subr.mxu0 0.0
        %5129 = vmatpush1.msra.mxu0 0.0
        %5130 = vmatprep.subr.mxu0 0.0
        %5131 = vmatpush1.msra.mxu0 0.0
        %5132 = vmatprep.subr.mxu0 0.0
        %5133 = vmatpush1.msra.mxu0 0.0
        %5134 = vmatprep.subr.mxu0 0.0
        %5135 = vmatpush1.msra.mxu0 0.0
        %5136 = vmatprep.subr.mxu0 0.0
        %5137 = vmatpush1.msra.mxu0 0.0
        %5138 = vmatprep.subr.mxu0 0.0
        %5139 = vmatpush1.msra.mxu0 0.0
        %5140 = vmatprep.subr.mxu0 0.0
        %5141 = vmatpush1.msra.mxu0 0.0
        %5142 = vmatprep.subr.mxu0 0.0
        %5143 = vmatpush1.msra.mxu0 %v1346
        %5144 = vmatprep.subr.mxu0 0.0
        %5145 = vmatpush2.msra.mxu0 0.0
        %5146 = vmatprep.subr.mxu0 0.0
        %5147 = vmatpush2.msra.mxu0 0.0
        %5148 = vmatprep.subr.mxu0 0.0
        %5149 = vmatpush2.msra.mxu0 0.0
        %5150 = vmatprep.subr.mxu0 0.0
        %5151 = vmatpush2.msra.mxu0 0.0
        %5152 = vmatprep.subr.mxu0 0.0
        %5153 = vmatpush2.msra.mxu0 0.0
        %5154 = vmatprep.subr.mxu0 0.0
        %5155 = vmatpush2.msra.mxu0 0.0
        %5156 = vmatprep.subr.mxu0 0.0
        %5157 = vmatpush2.msra.mxu0 0.0
        %5158 = vmatprep.subr.mxu0 0.0
        %5159 = vmatpush2.msra.mxu0 0.0
        %5160 = vmatprep.subr.mxu0 0.0
        %5161 = vmatpush2.msra.mxu0 0.0
        %5162 = vmatprep.subr.mxu0 0.0
        %5163 = vmatpush2.msra.mxu0 0.0
        %5164 = vmatprep.subr.mxu0 0.0
        %5165 = vmatpush2.msra.mxu0 0.0
        %5166 = vmatprep.subr.mxu0 0.0
        %5167 = vmatpush2.msra.mxu0 0.0
        %5168 = vmatprep.subr.mxu0 0.0
        %5169 = vmatpush2.msra.mxu0 0.0
        %5170 = vmatprep.subr.mxu0 0.0
        %5171 = vmatpush2.msra.mxu0 0.0
        %5172 = vmatprep.subr.mxu0 0.0
        %5173 = vmatpush2.msra.mxu0 0.0
        %5174 = vmatprep.subr.mxu0 0.0
        %5175 = vmatpush2.msra.mxu0 0.0
        %5176 = vmatprep.mubr.f32.mxu0 0.0
        %5177 = vmatmul.mubr.f32.gmra.mxu0 %v5110
        %v5178 = vpop.f32.mrf.mxu0
        %v5179 = vadd.f32 0.0, %v5178
        %v5180 = vpop.f32.mrf.mxu0
        %5181 = vdwg.mxu0
        %v5183 = vsel %vm1352, %v4928, 0
        %5185 = vmatprep.subr.mxu0 0.0
        %5186 = vmatpush1.msra.mxu0 0.0
        %5187 = vmatprep.subr.mxu0 0.0
        %5188 = vmatpush1.msra.mxu0 0.0
        %5189 = vmatprep.subr.mxu0 0.0
        %5190 = vmatpush1.msra.mxu0 0.0
        %5191 = vmatprep.subr.mxu0 0.0
        %5192 = vmatpush1.msra.mxu0 0.0
        %5193 = vmatprep.subr.mxu0 0.0
        %5194 = vmatpush1.msra.mxu0 0.0
        %5195 = vmatprep.subr.mxu0 0.0
        %5196 = vmatpush1.msra.mxu0 0.0
        %5197 = vmatprep.subr.mxu0 0.0
        %5198 = vmatpush1.msra.mxu0 0.0
        %5199 = vmatprep.subr.mxu0 0.0
        %5200 = vmatpush1.msra.mxu0 0.0
        %5201 = vmatprep.subr.mxu0 0.0
        %5202 = vmatpush1.msra.mxu0 0.0
        %5203 = vmatprep.subr.mxu0 0.0
        %5204 = vmatpush1.msra.mxu0 0.0
        %5205 = vmatprep.subr.mxu0 0.0
        %5206 = vmatpush1.msra.mxu0 0.0
        %5207 = vmatprep.subr.mxu0 0.0
        %5208 = vmatpush1.msra.mxu0 0.0
        %5209 = vmatprep.subr.mxu0 0.0
        %5210 = vmatpush1.msra.mxu0 0.0
        %5211 = vmatprep.subr.mxu0 0.0
        %5212 = vmatpush1.msra.mxu0 0.0
        %5213 = vmatprep.subr.mxu0 0.0
        %5214 = vmatpush1.msra.mxu0 0.0
        %5215 = vmatprep.subr.mxu0 0.0
        %5216 = vmatpush1.msra.mxu0 %v1347
        %5217 = vmatprep.subr.mxu0 0.0
        %5218 = vmatpush2.msra.mxu0 0.0
        %5219 = vmatprep.subr.mxu0 0.0
        %5220 = vmatpush2.msra.mxu0 0.0
        %5221 = vmatprep.subr.mxu0 0.0
        %5222 = vmatpush2.msra.mxu0 0.0
        %5223 = vmatprep.subr.mxu0 0.0
        %5224 = vmatpush2.msra.mxu0 0.0
        %5225 = vmatprep.subr.mxu0 0.0
        %5226 = vmatpush2.msra.mxu0 0.0
        %5227 = vmatprep.subr.mxu0 0.0
        %5228 = vmatpush2.msra.mxu0 0.0
        %5229 = vmatprep.subr.mxu0 0.0
        %5230 = vmatpush2.msra.mxu0 0.0
        %5231 = vmatprep.subr.mxu0 0.0
        %5232 = vmatpush2.msra.mxu0 0.0
        %5233 = vmatprep.subr.mxu0 0.0
        %5234 = vmatpush2.msra.mxu0 0.0
        %5235 = vmatprep.subr.mxu0 0.0
        %5236 = vmatpush2.msra.mxu0 0.0
        %5237 = vmatprep.subr.mxu0 0.0
        %5238 = vmatpush2.msra.mxu0 0.0
        %5239 = vmatprep.subr.mxu0 0.0
        %5240 = vmatpush2.msra.mxu0 0.0
        %5241 = vmatprep.subr.mxu0 0.0
        %5242 = vmatpush2.msra.mxu0 0.0
        %5243 = vmatprep.subr.mxu0 0.0
        %5244 = vmatpush2.msra.mxu0 0.0
        %5245 = vmatprep.subr.mxu0 0.0
        %5246 = vmatpush2.msra.mxu0 0.0
        %5247 = vmatprep.subr.mxu0 0.0
        %5248 = vmatpush2.msra.mxu0 0.0
        %5249 = vmatprep.mubr.f32.mxu0 0.0
        %5250 = vmatmul.mubr.f32.gmra.mxu0 %v5183
        %v5251 = vpop.f32.mrf.mxu0
        %v5252 = vadd.f32 0.0, %v5251
        %v5253 = vpop.f32.mrf.mxu0
        %5254 = vdwg.mxu0
        %5255 = vxpose.xlu0.b32.start [1/16] %v4959, 128
        %5256 = vxpose.xlu0.b32.cont [2/16] 0.0, 128
        %5257 = vxpose.xlu0.b32.cont [3/16] 0.0, 128
        %5258 = vxpose.xlu0.b32.cont [4/16] 0.0, 128
        %5259 = vxpose.xlu0.b32.cont [5/16] 0.0, 128
        %5260 = vxpose.xlu0.b32.cont [6/16] 0.0, 128
        %5261 = vxpose.xlu0.b32.cont [7/16] 0.0, 128
        %5262 = vxpose.xlu0.b32.cont [8/16] 0.0, 128
        %5263 = vxpose.xlu0.b32.cont [9/16] 0.0, 128
        %5264 = vxpose.xlu0.b32.cont [10/16] 0.0, 128
        %5265 = vxpose.xlu0.b32.cont [11/16] 0.0, 128
        %5266 = vxpose.xlu0.b32.cont [12/16] 0.0, 128
        %5267 = vxpose.xlu0.b32.cont [13/16] 0.0, 128
        %5268 = vxpose.xlu0.b32.cont [14/16] 0.0, 128
        %5269 = vxpose.xlu0.b32.cont [15/16] 0.0, 128
        %5270 = vxpose.xlu0.b32.end [16/16] 0.0, 128
        %v5271 = vpop.trf.xlu0
        %v5272 = vpop.trf.xlu0
        %v5273 = vpop.trf.xlu0
        %v5274 = vpop.trf.xlu0
        %v5275 = vpop.trf.xlu0
        %v5276 = vpop.trf.xlu0
        %v5277 = vpop.trf.xlu0
        %v5278 = vpop.trf.xlu0
        %v5279 = vpop.trf.xlu0
        %v5280 = vpop.trf.xlu0
        %v5281 = vpop.trf.xlu0
        %v5282 = vpop.trf.xlu0
        %v5283 = vpop.trf.xlu0
        %v5284 = vpop.trf.xlu0
        %v5285 = vpop.trf.xlu0
        %v5286 = vpop.trf.xlu0
        %5287 = vxpose.xlu0.b32.start [1/16] %v4960, 128
        %5288 = vxpose.xlu0.b32.cont [2/16] 0.0, 128
        %5289 = vxpose.xlu0.b32.cont [3/16] 0.0, 128
        %5290 = vxpose.xlu0.b32.cont [4/16] 0.0, 128
        %5291 = vxpose.xlu0.b32.cont [5/16] 0.0, 128
        %5292 = vxpose.xlu0.b32.cont [6/16] 0.0, 128
        %5293 = vxpose.xlu0.b32.cont [7/16] 0.0, 128
        %5294 = vxpose.xlu0.b32.cont [8/16] 0.0, 128
        %5295 = vxpose.xlu0.b32.cont [9/16] 0.0, 128
        %5296 = vxpose.xlu0.b32.cont [10/16] 0.0, 128
        %5297 = vxpose.xlu0.b32.cont [11/16] 0.0, 128
        %5298 = vxpose.xlu0.b32.cont [12/16] 0.0, 128
        %5299 = vxpose.xlu0.b32.cont [13/16] 0.0, 128
        %5300 = vxpose.xlu0.b32.cont [14/16] 0.0, 128
        %5301 = vxpose.xlu0.b32.cont [15/16] 0.0, 128
        %5302 = vxpose.xlu0.b32.end [16/16] 0.0, 128
        %v5303 = vpop.trf.xlu0
        %v5304 = vpop.trf.xlu0
        %v5305 = vpop.trf.xlu0
        %v5306 = vpop.trf.xlu0
        %v5307 = vpop.trf.xlu0
        %v5308 = vpop.trf.xlu0
        %v5309 = vpop.trf.xlu0
        %v5310 = vpop.trf.xlu0
        %v5311 = vpop.trf.xlu0
        %v5312 = vpop.trf.xlu0
        %v5313 = vpop.trf.xlu0
        %v5314 = vpop.trf.xlu0
        %v5315 = vpop.trf.xlu0
        %v5316 = vpop.trf.xlu0
        %v5317 = vpop.trf.xlu0
        %v5318 = vpop.trf.xlu0
        %5319 = vxpose.xlu0.b32.start [1/16] %v4961, 128
        %5320 = vxpose.xlu0.b32.cont [2/16] 0.0, 128
        %5321 = vxpose.xlu0.b32.cont [3/16] 0.0, 128
        %5322 = vxpose.xlu0.b32.cont [4/16] 0.0, 128
        %5323 = vxpose.xlu0.b32.cont [5/16] 0.0, 128
        %5324 = vxpose.xlu0.b32.cont [6/16] 0.0, 128
        %5325 = vxpose.xlu0.b32.cont [7/16] 0.0, 128
        %5326 = vxpose.xlu0.b32.cont [8/16] 0.0, 128
        %5327 = vxpose.xlu0.b32.cont [9/16] 0.0, 128
        %5328 = vxpose.xlu0.b32.cont [10/16] 0.0, 128
        %5329 = vxpose.xlu0.b32.cont [11/16] 0.0, 128
        %5330 = vxpose.xlu0.b32.cont [12/16] 0.0, 128
        %5331 = vxpose.xlu0.b32.cont [13/16] 0.0, 128
        %5332 = vxpose.xlu0.b32.cont [14/16] 0.0, 128
        %5333 = vxpose.xlu0.b32.cont [15/16] 0.0, 128
        %5334 = vxpose.xlu0.b32.end [16/16] 0.0, 128
        %v5335 = vpop.trf.xlu0
        %v5336 = vpop.trf.xlu0
        %v5337 = vpop.trf.xlu0
        %v5338 = vpop.trf.xlu0
        %v5339 = vpop.trf.xlu0
        %v5340 = vpop.trf.xlu0
        %v5341 = vpop.trf.xlu0
        %v5342 = vpop.trf.xlu0
        %v5343 = vpop.trf.xlu0
        %v5344 = vpop.trf.xlu0
        %v5345 = vpop.trf.xlu0
        %v5346 = vpop.trf.xlu0
        %v5347 = vpop.trf.xlu0
        %v5348 = vpop.trf.xlu0
        %v5349 = vpop.trf.xlu0
        %v5350 = vpop.trf.xlu0
        %5351 = vxpose.xlu0.b32.start [1/16] %v4962, 128
        %5352 = vxpose.xlu0.b32.cont [2/16] 0.0, 128
        %5353 = vxpose.xlu0.b32.cont [3/16] 0.0, 128
        %5354 = vxpose.xlu0.b32.cont [4/16] 0.0, 128
        %5355 = vxpose.xlu0.b32.cont [5/16] 0.0, 128
        %5356 = vxpose.xlu0.b32.cont [6/16] 0.0, 128
        %5357 = vxpose.xlu0.b32.cont [7/16] 0.0, 128
        %5358 = vxpose.xlu0.b32.cont [8/16] 0.0, 128
        %5359 = vxpose.xlu0.b32.cont [9/16] 0.0, 128
        %5360 = vxpose.xlu0.b32.cont [10/16] 0.0, 128
        %5361 = vxpose.xlu0.b32.cont [11/16] 0.0, 128
        %5362 = vxpose.xlu0.b32.cont [12/16] 0.0, 128
        %5363 = vxpose.xlu0.b32.cont [13/16] 0.0, 128
        %5364 = vxpose.xlu0.b32.cont [14/16] 0.0, 128
        %5365 = vxpose.xlu0.b32.cont [15/16] 0.0, 128
        %5366 = vxpose.xlu0.b32.end [16/16] 0.0, 128
        %v5367 = vpop.trf.xlu0
        %v5368 = vpop.trf.xlu0
        %v5369 = vpop.trf.xlu0
        %v5370 = vpop.trf.xlu0
        %v5371 = vpop.trf.xlu0
        %v5372 = vpop.trf.xlu0
        %v5373 = vpop.trf.xlu0
        %v5374 = vpop.trf.xlu0
        %v5375 = vpop.trf.xlu0
        %v5376 = vpop.trf.xlu0
        %v5377 = vpop.trf.xlu0
        %v5378 = vpop.trf.xlu0
        %v5379 = vpop.trf.xlu0
        %v5380 = vpop.trf.xlu0
        %v5381 = vpop.trf.xlu0
        %v5382 = vpop.trf.xlu0
        %v5383 = vcombine.low %v5271, %v5335
        %v5384 = vcombine.high %v5271, %v5335
        %v5386 = vunpack.c.l.s4 1983009808
        %v5387 = vunpack.c.0.s8 %v5386
        %v5388 = vlaneseq
        %v5389 = vshrl.u32 %v5388, 7
        %v5390 = vsub.s32 %v5387, %v5389
        %v5391 = vrot.slane %v5383, %v5390
        %v5393 = vunpack.c.l.s4 1983009808
        %v5394 = vunpack.c.0.s8 %v5393
        %v5395 = vlaneseq
        %v5396 = vshrl.u32 %v5395, 7
        %v5397 = vsub.s32 %v5394, %v5396
        %v5398 = vrot.slane %v5384, %v5397
        %v5399 = vcombine.low %v5303, %v5367
        %v5400 = vcombine.high %v5303, %v5367
        %v5402 = vunpack.c.l.s4 1983009808
        %v5403 = vunpack.c.0.s8 %v5402
        %v5404 = vlaneseq
        %v5405 = vshrl.u32 %v5404, 7
        %v5406 = vsub.s32 %v5403, %v5405
        %v5407 = vrot.slane %v5399, %v5406
        %v5409 = vunpack.c.l.s4 1983009808
        %v5410 = vunpack.c.0.s8 %v5409
        %v5411 = vlaneseq
        %v5412 = vshrl.u32 %v5411, 7
        %v5413 = vsub.s32 %v5410, %v5412
        %v5414 = vrot.slane %v5400, %v5413
        %v5415 = vcombine.low %v5391, %v5407
        %v5416 = vcombine.high %v5391, %v5407
        %v5418 = vunpack.c.l.s4 1934713408
        %v5419 = vunpack.c.0.s8 %v5418
        %v5420 = vlaneseq
        %v5421 = vshrl.u32 %v5420, 7
        %v5422 = vsub.s32 %v5419, %v5421
        %v5423 = vrot.slane %v5415, %v5422
        %v5425 = vunpack.c.l.s4 1934713408
        %v5426 = vunpack.c.0.s8 %v5425
        %v5427 = vlaneseq
        %v5428 = vshrl.u32 %v5427, 7
        %v5429 = vsub.s32 %v5426, %v5428
        %v5430 = vrot.slane %v5416, %v5429
        %v5431 = vcombine.low %v5398, %v5414
        %v5432 = vcombine.high %v5398, %v5414
        %v5434 = vunpack.c.l.s4 1934713408
        %v5435 = vunpack.c.0.s8 %v5434
        %v5436 = vlaneseq
        %v5437 = vshrl.u32 %v5436, 7
        %v5438 = vsub.s32 %v5435, %v5437
        %v5439 = vrot.slane %v5431, %v5438
        %v5441 = vunpack.c.l.s4 1934713408
        %v5442 = vunpack.c.0.s8 %v5441
        %v5443 = vlaneseq
        %v5444 = vshrl.u32 %v5443, 7
        %v5445 = vsub.s32 %v5442, %v5444
        %v5446 = vrot.slane %v5432, %v5445
        %v5447 = vcombine.high %v5423, 0.0
        %v5448 = vcombine.high %v5430, 0.0
        %v5449 = vcombine.high %v5439, 0.0
        %v5450 = vcombine.high %v5446, 0.0
        %5451 = vxpose.xlu0.b32.start [1/16] %v5423, 128
        %5452 = vxpose.xlu0.b32.cont [2/16] 0.0, 128
        %5453 = vxpose.xlu0.b32.cont [3/16] 0.0, 128
        %5454 = vxpose.xlu0.b32.cont [4/16] 0.0, 128
        %5455 = vxpose.xlu0.b32.cont [5/16] 0.0, 128
        %5456 = vxpose.xlu0.b32.cont [6/16] 0.0, 128
        %5457 = vxpose.xlu0.b32.cont [7/16] 0.0, 128
        %5458 = vxpose.xlu0.b32.cont [8/16] 0.0, 128
        %5459 = vxpose.xlu0.b32.cont [9/16] 0.0, 128
        %5460 = vxpose.xlu0.b32.cont [10/16] 0.0, 128
        %5461 = vxpose.xlu0.b32.cont [11/16] 0.0, 128
        %5462 = vxpose.xlu0.b32.cont [12/16] 0.0, 128
        %5463 = vxpose.xlu0.b32.cont [13/16] 0.0, 128
        %5464 = vxpose.xlu0.b32.cont [14/16] 0.0, 128
        %5465 = vxpose.xlu0.b32.cont [15/16] 0.0, 128
        %5466 = vxpose.xlu0.b32.end [16/16] 0.0, 128
        %v5467 = vpop.trf.xlu0
        %v5468 = vpop.trf.xlu0
        %v5469 = vpop.trf.xlu0
        %v5470 = vpop.trf.xlu0
        %v5471 = vpop.trf.xlu0
        %v5472 = vpop.trf.xlu0
        %v5473 = vpop.trf.xlu0
        %v5474 = vpop.trf.xlu0
        %v5475 = vpop.trf.xlu0
        %v5476 = vpop.trf.xlu0
        %v5477 = vpop.trf.xlu0
        %v5478 = vpop.trf.xlu0
        %v5479 = vpop.trf.xlu0
        %v5480 = vpop.trf.xlu0
        %v5481 = vpop.trf.xlu0
        %v5482 = vpop.trf.xlu0
        %5483 = vxpose.xlu0.b32.start [1/16] %v5447, 128
        %5484 = vxpose.xlu0.b32.cont [2/16] 0.0, 128
        %5485 = vxpose.xlu0.b32.cont [3/16] 0.0, 128
        %5486 = vxpose.xlu0.b32.cont [4/16] 0.0, 128
        %5487 = vxpose.xlu0.b32.cont [5/16] 0.0, 128
        %5488 = vxpose.xlu0.b32.cont [6/16] 0.0, 128
        %5489 = vxpose.xlu0.b32.cont [7/16] 0.0, 128
        %5490 = vxpose.xlu0.b32.cont [8/16] 0.0, 128
        %5491 = vxpose.xlu0.b32.cont [9/16] 0.0, 128
        %5492 = vxpose.xlu0.b32.cont [10/16] 0.0, 128
        %5493 = vxpose.xlu0.b32.cont [11/16] 0.0, 128
        %5494 = vxpose.xlu0.b32.cont [12/16] 0.0, 128
        %5495 = vxpose.xlu0.b32.cont [13/16] 0.0, 128
        %5496 = vxpose.xlu0.b32.cont [14/16] 0.0, 128
        %5497 = vxpose.xlu0.b32.cont [15/16] 0.0, 128
        %5498 = vxpose.xlu0.b32.end [16/16] 0.0, 128
        %v5499 = vpop.trf.xlu0
        %v5500 = vpop.trf.xlu0
        %v5501 = vpop.trf.xlu0
        %v5502 = vpop.trf.xlu0
        %v5503 = vpop.trf.xlu0
        %v5504 = vpop.trf.xlu0
        %v5505 = vpop.trf.xlu0
        %v5506 = vpop.trf.xlu0
        %v5507 = vpop.trf.xlu0
        %v5508 = vpop.trf.xlu0
        %v5509 = vpop.trf.xlu0
        %v5510 = vpop.trf.xlu0
        %v5511 = vpop.trf.xlu0
        %v5512 = vpop.trf.xlu0
        %v5513 = vpop.trf.xlu0
        %v5514 = vpop.trf.xlu0
        %5515 = vxpose.xlu0.b32.start [1/16] %v5430, 128
        %5516 = vxpose.xlu0.b32.cont [2/16] 0.0, 128
        %5517 = vxpose.xlu0.b32.cont [3/16] 0.0, 128
        %5518 = vxpose.xlu0.b32.cont [4/16] 0.0, 128
        %5519 = vxpose.xlu0.b32.cont [5/16] 0.0, 128
        %5520 = vxpose.xlu0.b32.cont [6/16] 0.0, 128
        %5521 = vxpose.xlu0.b32.cont [7/16] 0.0, 128
        %5522 = vxpose.xlu0.b32.cont [8/16] 0.0, 128
        %5523 = vxpose.xlu0.b32.cont [9/16] 0.0, 128
        %5524 = vxpose.xlu0.b32.cont [10/16] 0.0, 128
        %5525 = vxpose.xlu0.b32.cont [11/16] 0.0, 128
        %5526 = vxpose.xlu0.b32.cont [12/16] 0.0, 128
        %5527 = vxpose.xlu0.b32.cont [13/16] 0.0, 128
        %5528 = vxpose.xlu0.b32.cont [14/16] 0.0, 128
        %5529 = vxpose.xlu0.b32.cont [15/16] 0.0, 128
        %5530 = vxpose.xlu0.b32.end [16/16] 0.0, 128
        %v5531 = vpop.trf.xlu0
        %v5532 = vpop.trf.xlu0
        %v5533 = vpop.trf.xlu0
        %v5534 = vpop.trf.xlu0
        %v5535 = vpop.trf.xlu0
        %v5536 = vpop.trf.xlu0
        %v5537 = vpop.trf.xlu0
        %v5538 = vpop.trf.xlu0
        %v5539 = vpop.trf.xlu0
        %v5540 = vpop.trf.xlu0
        %v5541 = vpop.trf.xlu0
        %v5542 = vpop.trf.xlu0
        %v5543 = vpop.trf.xlu0
        %v5544 = vpop.trf.xlu0
        %v5545 = vpop.trf.xlu0
        %v5546 = vpop.trf.xlu0
        %5547 = vxpose.xlu0.b32.start [1/16] %v5448, 128
        %5548 = vxpose.xlu0.b32.cont [2/16] 0.0, 128
        %5549 = vxpose.xlu0.b32.cont [3/16] 0.0, 128
        %5550 = vxpose.xlu0.b32.cont [4/16] 0.0, 128
        %5551 = vxpose.xlu0.b32.cont [5/16] 0.0, 128
        %5552 = vxpose.xlu0.b32.cont [6/16] 0.0, 128
        %5553 = vxpose.xlu0.b32.cont [7/16] 0.0, 128
        %5554 = vxpose.xlu0.b32.cont [8/16] 0.0, 128
        %5555 = vxpose.xlu0.b32.cont [9/16] 0.0, 128
        %5556 = vxpose.xlu0.b32.cont [10/16] 0.0, 128
        %5557 = vxpose.xlu0.b32.cont [11/16] 0.0, 128
        %5558 = vxpose.xlu0.b32.cont [12/16] 0.0, 128
        %5559 = vxpose.xlu0.b32.cont [13/16] 0.0, 128
        %5560 = vxpose.xlu0.b32.cont [14/16] 0.0, 128
        %5561 = vxpose.xlu0.b32.cont [15/16] 0.0, 128
        %5562 = vxpose.xlu0.b32.end [16/16] 0.0, 128
        %v5563 = vpop.trf.xlu0
        %v5564 = vpop.trf.xlu0
        %v5565 = vpop.trf.xlu0
        %v5566 = vpop.trf.xlu0
        %v5567 = vpop.trf.xlu0
        %v5568 = vpop.trf.xlu0
        %v5569 = vpop.trf.xlu0
        %v5570 = vpop.trf.xlu0
        %v5571 = vpop.trf.xlu0
        %v5572 = vpop.trf.xlu0
        %v5573 = vpop.trf.xlu0
        %v5574 = vpop.trf.xlu0
        %v5575 = vpop.trf.xlu0
        %v5576 = vpop.trf.xlu0
        %v5577 = vpop.trf.xlu0
        %v5578 = vpop.trf.xlu0
        %5579 = vxpose.xlu0.b32.start [1/16] %v5439, 128
        %5580 = vxpose.xlu0.b32.cont [2/16] 0.0, 128
        %5581 = vxpose.xlu0.b32.cont [3/16] 0.0, 128
        %5582 = vxpose.xlu0.b32.cont [4/16] 0.0, 128
        %5583 = vxpose.xlu0.b32.cont [5/16] 0.0, 128
        %5584 = vxpose.xlu0.b32.cont [6/16] 0.0, 128
        %5585 = vxpose.xlu0.b32.cont [7/16] 0.0, 128
        %5586 = vxpose.xlu0.b32.cont [8/16] 0.0, 128
        %5587 = vxpose.xlu0.b32.cont [9/16] 0.0, 128
        %5588 = vxpose.xlu0.b32.cont [10/16] 0.0, 128
        %5589 = vxpose.xlu0.b32.cont [11/16] 0.0, 128
        %5590 = vxpose.xlu0.b32.cont [12/16] 0.0, 128
        %5591 = vxpose.xlu0.b32.cont [13/16] 0.0, 128
        %5592 = vxpose.xlu0.b32.cont [14/16] 0.0, 128
        %5593 = vxpose.xlu0.b32.cont [15/16] 0.0, 128
        %5594 = vxpose.xlu0.b32.end [16/16] 0.0, 128
        %v5595 = vpop.trf.xlu0
        %v5596 = vpop.trf.xlu0
        %v5597 = vpop.trf.xlu0
        %v5598 = vpop.trf.xlu0
        %v5599 = vpop.trf.xlu0
        %v5600 = vpop.trf.xlu0
        %v5601 = vpop.trf.xlu0
        %v5602 = vpop.trf.xlu0
        %v5603 = vpop.trf.xlu0
        %v5604 = vpop.trf.xlu0
        %v5605 = vpop.trf.xlu0
        %v5606 = vpop.trf.xlu0
        %v5607 = vpop.trf.xlu0
        %v5608 = vpop.trf.xlu0
        %v5609 = vpop.trf.xlu0
        %v5610 = vpop.trf.xlu0
        %5611 = vxpose.xlu0.b32.start [1/16] %v5449, 128
        %5612 = vxpose.xlu0.b32.cont [2/16] 0.0, 128
        %5613 = vxpose.xlu0.b32.cont [3/16] 0.0, 128
        %5614 = vxpose.xlu0.b32.cont [4/16] 0.0, 128
        %5615 = vxpose.xlu0.b32.cont [5/16] 0.0, 128
        %5616 = vxpose.xlu0.b32.cont [6/16] 0.0, 128
        %5617 = vxpose.xlu0.b32.cont [7/16] 0.0, 128
        %5618 = vxpose.xlu0.b32.cont [8/16] 0.0, 128
        %5619 = vxpose.xlu0.b32.cont [9/16] 0.0, 128
        %5620 = vxpose.xlu0.b32.cont [10/16] 0.0, 128
        %5621 = vxpose.xlu0.b32.cont [11/16] 0.0, 128
        %5622 = vxpose.xlu0.b32.cont [12/16] 0.0, 128
        %5623 = vxpose.xlu0.b32.cont [13/16] 0.0, 128
        %5624 = vxpose.xlu0.b32.cont [14/16] 0.0, 128
        %5625 = vxpose.xlu0.b32.cont [15/16] 0.0, 128
        %5626 = vxpose.xlu0.b32.end [16/16] 0.0, 128
        %v5627 = vpop.trf.xlu0
        %v5628 = vpop.trf.xlu0
        %v5629 = vpop.trf.xlu0
        %v5630 = vpop.trf.xlu0
        %v5631 = vpop.trf.xlu0
        %v5632 = vpop.trf.xlu0
        %v5633 = vpop.trf.xlu0
        %v5634 = vpop.trf.xlu0
        %v5635 = vpop.trf.xlu0
        %v5636 = vpop.trf.xlu0
        %v5637 = vpop.trf.xlu0
        %v5638 = vpop.trf.xlu0
        %v5639 = vpop.trf.xlu0
        %v5640 = vpop.trf.xlu0
        %v5641 = vpop.trf.xlu0
        %v5642 = vpop.trf.xlu0
        %5643 = vxpose.xlu0.b32.start [1/16] %v5446, 128
        %5644 = vxpose.xlu0.b32.cont [2/16] 0.0, 128
        %5645 = vxpose.xlu0.b32.cont [3/16] 0.0, 128
        %5646 = vxpose.xlu0.b32.cont [4/16] 0.0, 128
        %5647 = vxpose.xlu0.b32.cont [5/16] 0.0, 128
        %5648 = vxpose.xlu0.b32.cont [6/16] 0.0, 128
        %5649 = vxpose.xlu0.b32.cont [7/16] 0.0, 128
        %5650 = vxpose.xlu0.b32.cont [8/16] 0.0, 128
        %5651 = vxpose.xlu0.b32.cont [9/16] 0.0, 128
        %5652 = vxpose.xlu0.b32.cont [10/16] 0.0, 128
        %5653 = vxpose.xlu0.b32.cont [11/16] 0.0, 128
        %5654 = vxpose.xlu0.b32.cont [12/16] 0.0, 128
        %5655 = vxpose.xlu0.b32.cont [13/16] 0.0, 128
        %5656 = vxpose.xlu0.b32.cont [14/16] 0.0, 128
        %5657 = vxpose.xlu0.b32.cont [15/16] 0.0, 128
        %5658 = vxpose.xlu0.b32.end [16/16] 0.0, 128
        %v5659 = vpop.trf.xlu0
        %v5660 = vpop.trf.xlu0
        %v5661 = vpop.trf.xlu0
        %v5662 = vpop.trf.xlu0
        %v5663 = vpop.trf.xlu0
        %v5664 = vpop.trf.xlu0
        %v5665 = vpop.trf.xlu0
        %v5666 = vpop.trf.xlu0
        %v5667 = vpop.trf.xlu0
        %v5668 = vpop.trf.xlu0
        %v5669 = vpop.trf.xlu0
        %v5670 = vpop.trf.xlu0
        %v5671 = vpop.trf.xlu0
        %v5672 = vpop.trf.xlu0
        %v5673 = vpop.trf.xlu0
        %v5674 = vpop.trf.xlu0
        %5675 = vxpose.xlu0.b32.start [1/16] %v5450, 128
        %5676 = vxpose.xlu0.b32.cont [2/16] 0.0, 128
        %5677 = vxpose.xlu0.b32.cont [3/16] 0.0, 128
        %5678 = vxpose.xlu0.b32.cont [4/16] 0.0, 128
        %5679 = vxpose.xlu0.b32.cont [5/16] 0.0, 128
        %5680 = vxpose.xlu0.b32.cont [6/16] 0.0, 128
        %5681 = vxpose.xlu0.b32.cont [7/16] 0.0, 128
        %5682 = vxpose.xlu0.b32.cont [8/16] 0.0, 128
        %5683 = vxpose.xlu0.b32.cont [9/16] 0.0, 128
        %5684 = vxpose.xlu0.b32.cont [10/16] 0.0, 128
        %5685 = vxpose.xlu0.b32.cont [11/16] 0.0, 128
        %5686 = vxpose.xlu0.b32.cont [12/16] 0.0, 128
        %5687 = vxpose.xlu0.b32.cont [13/16] 0.0, 128
        %5688 = vxpose.xlu0.b32.cont [14/16] 0.0, 128
        %5689 = vxpose.xlu0.b32.cont [15/16] 0.0, 128
        %5690 = vxpose.xlu0.b32.end [16/16] 0.0, 128
        %v5691 = vpop.trf.xlu0
        %v5692 = vpop.trf.xlu0
        %v5693 = vpop.trf.xlu0
        %v5694 = vpop.trf.xlu0
        %v5695 = vpop.trf.xlu0
        %v5696 = vpop.trf.xlu0
        %v5697 = vpop.trf.xlu0
        %v5698 = vpop.trf.xlu0
        %v5699 = vpop.trf.xlu0
        %v5700 = vpop.trf.xlu0
        %v5701 = vpop.trf.xlu0
        %v5702 = vpop.trf.xlu0
        %v5703 = vpop.trf.xlu0
        %v5704 = vpop.trf.xlu0
        %v5705 = vpop.trf.xlu0
        %v5706 = vpop.trf.xlu0
        %v5707 = vcombine.low %v5467, %v5531
        %v5708 = vcombine.high %v5467, %v5531
        %v5710 = vunpack.c.l.s4 1983009808
        %v5711 = vunpack.c.0.s8 %v5710
        %v5712 = vlaneseq
        %v5713 = vshrl.u32 %v5712, 7
        %v5714 = vsub.s32 %v5711, %v5713
        %v5715 = vrot.slane %v5707, %v5714
        %v5717 = vunpack.c.l.s4 1983009808
        %v5718 = vunpack.c.0.s8 %v5717
        %v5719 = vlaneseq
        %v5720 = vshrl.u32 %v5719, 7
        %v5721 = vsub.s32 %v5718, %v5720
        %v5722 = vrot.slane %v5708, %v5721
        %v5723 = vcombine.low %v5499, %v5563
        %v5724 = vcombine.high %v5499, %v5563
        %v5726 = vunpack.c.l.s4 1983009808
        %v5727 = vunpack.c.0.s8 %v5726
        %v5728 = vlaneseq
        %v5729 = vshrl.u32 %v5728, 7
        %v5730 = vsub.s32 %v5727, %v5729
        %v5731 = vrot.slane %v5723, %v5730
        %v5733 = vunpack.c.l.s4 1983009808
        %v5734 = vunpack.c.0.s8 %v5733
        %v5735 = vlaneseq
        %v5736 = vshrl.u32 %v5735, 7
        %v5737 = vsub.s32 %v5734, %v5736
        %v5738 = vrot.slane %v5724, %v5737
        %v5739 = vcombine.low %v5595, %v5659
        %v5740 = vcombine.high %v5595, %v5659
        %v5742 = vunpack.c.l.s4 1983009808
        %v5743 = vunpack.c.0.s8 %v5742
        %v5744 = vlaneseq
        %v5745 = vshrl.u32 %v5744, 7
        %v5746 = vsub.s32 %v5743, %v5745
        %v5747 = vrot.slane %v5739, %v5746
        %v5749 = vunpack.c.l.s4 1983009808
        %v5750 = vunpack.c.0.s8 %v5749
        %v5751 = vlaneseq
        %v5752 = vshrl.u32 %v5751, 7
        %v5753 = vsub.s32 %v5750, %v5752
        %v5754 = vrot.slane %v5740, %v5753
        %v5755 = vcombine.low %v5627, %v5691
        %v5756 = vcombine.high %v5627, %v5691
        %v5758 = vunpack.c.l.s4 1983009808
        %v5759 = vunpack.c.0.s8 %v5758
        %v5760 = vlaneseq
        %v5761 = vshrl.u32 %v5760, 7
        %v5762 = vsub.s32 %v5759, %v5761
        %v5763 = vrot.slane %v5755, %v5762
        %v5765 = vunpack.c.l.s4 1983009808
        %v5766 = vunpack.c.0.s8 %v5765
        %v5767 = vlaneseq
        %v5768 = vshrl.u32 %v5767, 7
        %v5769 = vsub.s32 %v5766, %v5768
        %v5770 = vrot.slane %v5756, %v5769
        %v5771 = vcombine.low %v5715, %v5731
        %v5772 = vcombine.high %v5715, %v5731
        %v5774 = vunpack.c.l.s4 1934713408
        %v5775 = vunpack.c.0.s8 %v5774
        %v5776 = vlaneseq
        %v5777 = vshrl.u32 %v5776, 7
        %v5778 = vsub.s32 %v5775, %v5777
        %v5779 = vrot.slane %v5771, %v5778
        %v5781 = vunpack.c.l.s4 1934713408
        %v5782 = vunpack.c.0.s8 %v5781
        %v5783 = vlaneseq
        %v5784 = vshrl.u32 %v5783, 7
        %v5785 = vsub.s32 %v5782, %v5784
        %v5786 = vrot.slane %v5772, %v5785
        %v5787 = vcombine.low %v5722, %v5738
        %v5788 = vcombine.high %v5722, %v5738
        %v5790 = vunpack.c.l.s4 1934713408
        %v5791 = vunpack.c.0.s8 %v5790
        %v5792 = vlaneseq
        %v5793 = vshrl.u32 %v5792, 7
        %v5794 = vsub.s32 %v5791, %v5793
        %v5795 = vrot.slane %v5787, %v5794
        %v5797 = vunpack.c.l.s4 1934713408
        %v5798 = vunpack.c.0.s8 %v5797
        %v5799 = vlaneseq
        %v5800 = vshrl.u32 %v5799, 7
        %v5801 = vsub.s32 %v5798, %v5800
        %v5802 = vrot.slane %v5788, %v5801
        %v5803 = vcombine.low %v5747, %v5763
        %v5804 = vcombine.high %v5747, %v5763
        %v5806 = vunpack.c.l.s4 1934713408
        %v5807 = vunpack.c.0.s8 %v5806
        %v5808 = vlaneseq
        %v5809 = vshrl.u32 %v5808, 7
        %v5810 = vsub.s32 %v5807, %v5809
        %v5811 = vrot.slane %v5803, %v5810
        %v5813 = vunpack.c.l.s4 1934713408
        %v5814 = vunpack.c.0.s8 %v5813
        %v5815 = vlaneseq
        %v5816 = vshrl.u32 %v5815, 7
        %v5817 = vsub.s32 %v5814, %v5816
        %v5818 = vrot.slane %v5804, %v5817
        %v5819 = vcombine.low %v5754, %v5770
        %v5820 = vcombine.high %v5754, %v5770
        %v5822 = vunpack.c.l.s4 1934713408
        %v5823 = vunpack.c.0.s8 %v5822
        %v5824 = vlaneseq
        %v5825 = vshrl.u32 %v5824, 7
        %v5826 = vsub.s32 %v5823, %v5825
        %v5827 = vrot.slane %v5819, %v5826
        %v5829 = vunpack.c.l.s4 1934713408
        %v5830 = vunpack.c.0.s8 %v5829
        %v5831 = vlaneseq
        %v5832 = vshrl.u32 %v5831, 7
        %v5833 = vsub.s32 %v5830, %v5832
        %v5834 = vrot.slane %v5820, %v5833
        %v5835 = vcombine.low %v5779, %v5811
        %v5836 = vcombine.high %v5779, %v5811
        %v5837 = vcombine.low %v5786, %v5818
        %v5838 = vcombine.high %v5786, %v5818
        %v5839 = vcombine.low %v5795, %v5827
        %v5840 = vcombine.high %v5795, %v5827
        %v5841 = vcombine.low %v5802, %v5834
        %v5842 = vcombine.high %v5802, %v5834
        %5843 = vxpose.xlu0.b32.start [1/16] %v645, 128
        %5844 = vxpose.xlu0.b32.cont [2/16] 0.0, 128
        %5845 = vxpose.xlu0.b32.cont [3/16] 0.0, 128
        %5846 = vxpose.xlu0.b32.cont [4/16] 0.0, 128
        %5847 = vxpose.xlu0.b32.cont [5/16] 0.0, 128
        %5848 = vxpose.xlu0.b32.cont [6/16] 0.0, 128
        %5849 = vxpose.xlu0.b32.cont [7/16] 0.0, 128
        %5850 = vxpose.xlu0.b32.cont [8/16] 0.0, 128
        %5851 = vxpose.xlu0.b32.cont [9/16] 0.0, 128
        %5852 = vxpose.xlu0.b32.cont [10/16] 0.0, 128
        %5853 = vxpose.xlu0.b32.cont [11/16] 0.0, 128
        %5854 = vxpose.xlu0.b32.cont [12/16] 0.0, 128
        %5855 = vxpose.xlu0.b32.cont [13/16] 0.0, 128
        %5856 = vxpose.xlu0.b32.cont [14/16] 0.0, 128
        %5857 = vxpose.xlu0.b32.cont [15/16] 0.0, 128
        %5858 = vxpose.xlu0.b32.end [16/16] 0.0, 128
        %v5859 = vpop.trf.xlu0
        %v5860 = vpop.trf.xlu0
        %v5861 = vpop.trf.xlu0
        %v5862 = vpop.trf.xlu0
        %v5863 = vpop.trf.xlu0
        %v5864 = vpop.trf.xlu0
        %v5865 = vpop.trf.xlu0
        %v5866 = vpop.trf.xlu0
        %v5867 = vpop.trf.xlu0
        %v5868 = vpop.trf.xlu0
        %v5869 = vpop.trf.xlu0
        %v5870 = vpop.trf.xlu0
        %v5871 = vpop.trf.xlu0
        %v5872 = vpop.trf.xlu0
        %v5873 = vpop.trf.xlu0
        %v5874 = vpop.trf.xlu0
        %v5876 = vsel %vm1352, %v5859, 0
        %v5879 = vsel %vm1352, %v5860, 0
        %v5882 = vsel %vm1352, %v5861, 0
        %v5885 = vsel %vm1352, %v5862, 0
        %5887 = vmatprep.subr.mxu0 0.0
        %5888 = vmatpush1.msra.mxu0 0.0
        %5889 = vmatprep.subr.mxu0 0.0
        %5890 = vmatpush1.msra.mxu0 0.0
        %5891 = vmatprep.subr.mxu0 0.0
        %5892 = vmatpush1.msra.mxu0 0.0
        %5893 = vmatprep.subr.mxu0 0.0
        %5894 = vmatpush1.msra.mxu0 0.0
        %5895 = vmatprep.subr.mxu0 0.0
        %5896 = vmatpush1.msra.mxu0 0.0
        %5897 = vmatprep.subr.mxu0 0.0
        %5898 = vmatpush1.msra.mxu0 0.0
        %5899 = vmatprep.subr.mxu0 0.0
        %5900 = vmatpush1.msra.mxu0 0.0
        %5901 = vmatprep.subr.mxu0 0.0
        %5902 = vmatpush1.msra.mxu0 0.0
        %5903 = vmatprep.subr.mxu0 0.0
        %5904 = vmatpush1.msra.mxu0 0.0
        %5905 = vmatprep.subr.mxu0 0.0
        %5906 = vmatpush1.msra.mxu0 0.0
        %5907 = vmatprep.subr.mxu0 0.0
        %5908 = vmatpush1.msra.mxu0 0.0
        %5909 = vmatprep.subr.mxu0 0.0
        %5910 = vmatpush1.msra.mxu0 0.0
        %5911 = vmatprep.subr.mxu0 0.0
        %5912 = vmatpush1.msra.mxu0 0.0
        %5913 = vmatprep.subr.mxu0 0.0
        %5914 = vmatpush1.msra.mxu0 0.0
        %5915 = vmatprep.subr.mxu0 0.0
        %5916 = vmatpush1.msra.mxu0 0.0
        %5917 = vmatprep.subr.mxu0 0.0
        %5918 = vmatpush1.msra.mxu0 %v5835
        %5919 = vmatprep.subr.mxu0 0.0
        %5920 = vmatpush2.msra.mxu0 0.0
        %5921 = vmatprep.subr.mxu0 0.0
        %5922 = vmatpush2.msra.mxu0 0.0
        %5923 = vmatprep.subr.mxu0 0.0
        %5924 = vmatpush2.msra.mxu0 0.0
        %5925 = vmatprep.subr.mxu0 0.0
        %5926 = vmatpush2.msra.mxu0 0.0
        %5927 = vmatprep.subr.mxu0 0.0
        %5928 = vmatpush2.msra.mxu0 0.0
        %5929 = vmatprep.subr.mxu0 0.0
        %5930 = vmatpush2.msra.mxu0 0.0
        %5931 = vmatprep.subr.mxu0 0.0
        %5932 = vmatpush2.msra.mxu0 0.0
        %5933 = vmatprep.subr.mxu0 0.0
        %5934 = vmatpush2.msra.mxu0 0.0
        %5935 = vmatprep.subr.mxu0 0.0
        %5936 = vmatpush2.msra.mxu0 0.0
        %5937 = vmatprep.subr.mxu0 0.0
        %5938 = vmatpush2.msra.mxu0 0.0
        %5939 = vmatprep.subr.mxu0 0.0
        %5940 = vmatpush2.msra.mxu0 0.0
        %5941 = vmatprep.subr.mxu0 0.0
        %5942 = vmatpush2.msra.mxu0 0.0
        %5943 = vmatprep.subr.mxu0 0.0
        %5944 = vmatpush2.msra.mxu0 0.0
        %5945 = vmatprep.subr.mxu0 0.0
        %5946 = vmatpush2.msra.mxu0 0.0
        %5947 = vmatprep.subr.mxu0 0.0
        %5948 = vmatpush2.msra.mxu0 0.0
        %5949 = vmatprep.subr.mxu0 0.0
        %5950 = vmatpush2.msra.mxu0 0.0
        %5951 = vmatprep.mubr.f32.mxu0 0.0
        %5952 = vmatmul.mubr.f32.gmra.mxu0 %v5876
        %v5953 = vpop.f32.mrf.mxu0
        %v5954 = vadd.f32 0.0, %v5953
        %v5955 = vpop.f32.mrf.mxu0
        %5956 = vmatprep.mubr.f32.mxu0 0.0
        %5957 = vmatmul.mubr.f32.gmra.mxu0 %v5879
        %v5958 = vpop.f32.mrf.mxu0
        %v5959 = vadd.f32 0.0, %v5958
        %v5960 = vpop.f32.mrf.mxu0
        %5961 = vmatprep.mubr.f32.mxu0 0.0
        %5962 = vmatmul.mubr.f32.gmra.mxu0 %v5882
        %v5963 = vpop.f32.mrf.mxu0
        %v5964 = vadd.f32 0.0, %v5963
        %v5965 = vpop.f32.mrf.mxu0
        %5966 = vmatprep.mubr.f32.mxu0 0.0
        %5967 = vmatmul.mubr.f32.gmra.mxu0 %v5885
        %v5968 = vpop.f32.mrf.mxu0
        %v5969 = vadd.f32 0.0, %v5968
        %v5970 = vpop.f32.mrf.mxu0
        %5971 = vdwg.mxu0
        %5972 = vxpose.xlu0.b32.start [1/16] %v646, 128
        %5973 = vxpose.xlu0.b32.cont [2/16] 0.0, 128
        %5974 = vxpose.xlu0.b32.cont [3/16] 0.0, 128
        %5975 = vxpose.xlu0.b32.cont [4/16] 0.0, 128
        %5976 = vxpose.xlu0.b32.cont [5/16] 0.0, 128
        %5977 = vxpose.xlu0.b32.cont [6/16] 0.0, 128
        %5978 = vxpose.xlu0.b32.cont [7/16] 0.0, 128
        %5979 = vxpose.xlu0.b32.cont [8/16] 0.0, 128
        %5980 = vxpose.xlu0.b32.cont [9/16] 0.0, 128
        %5981 = vxpose.xlu0.b32.cont [10/16] 0.0, 128
        %5982 = vxpose.xlu0.b32.cont [11/16] 0.0, 128
        %5983 = vxpose.xlu0.b32.cont [12/16] 0.0, 128
        %5984 = vxpose.xlu0.b32.cont [13/16] 0.0, 128
        %5985 = vxpose.xlu0.b32.cont [14/16] 0.0, 128
        %5986 = vxpose.xlu0.b32.cont [15/16] 0.0, 128
        %5987 = vxpose.xlu0.b32.end [16/16] 0.0, 128
        %v5988 = vpop.trf.xlu0
        %v5989 = vpop.trf.xlu0
        %v5990 = vpop.trf.xlu0
        %v5991 = vpop.trf.xlu0
        %v5992 = vpop.trf.xlu0
        %v5993 = vpop.trf.xlu0
        %v5994 = vpop.trf.xlu0
        %v5995 = vpop.trf.xlu0
        %v5996 = vpop.trf.xlu0
        %v5997 = vpop.trf.xlu0
        %v5998 = vpop.trf.xlu0
        %v5999 = vpop.trf.xlu0
        %v6000 = vpop.trf.xlu0
        %v6001 = vpop.trf.xlu0
        %v6002 = vpop.trf.xlu0
        %v6003 = vpop.trf.xlu0
        %v6005 = vsel %vm1352, %v5988, 0
        %v6008 = vsel %vm1352, %v5989, 0
        %v6011 = vsel %vm1352, %v5990, 0
        %v6014 = vsel %vm1352, %v5991, 0
        %6016 = vmatprep.subr.mxu0 0.0
        %6017 = vmatpush1.msra.mxu0 0.0
        %6018 = vmatprep.subr.mxu0 0.0
        %6019 = vmatpush1.msra.mxu0 0.0
        %6020 = vmatprep.subr.mxu0 0.0
        %6021 = vmatpush1.msra.mxu0 0.0
        %6022 = vmatprep.subr.mxu0 0.0
        %6023 = vmatpush1.msra.mxu0 0.0
        %6024 = vmatprep.subr.mxu0 0.0
        %6025 = vmatpush1.msra.mxu0 0.0
        %6026 = vmatprep.subr.mxu0 0.0
        %6027 = vmatpush1.msra.mxu0 0.0
        %6028 = vmatprep.subr.mxu0 0.0
        %6029 = vmatpush1.msra.mxu0 0.0
        %6030 = vmatprep.subr.mxu0 0.0
        %6031 = vmatpush1.msra.mxu0 0.0
        %6032 = vmatprep.subr.mxu0 0.0
        %6033 = vmatpush1.msra.mxu0 0.0
        %6034 = vmatprep.subr.mxu0 0.0
        %6035 = vmatpush1.msra.mxu0 0.0
        %6036 = vmatprep.subr.mxu0 0.0
        %6037 = vmatpush1.msra.mxu0 0.0
        %6038 = vmatprep.subr.mxu0 0.0
        %6039 = vmatpush1.msra.mxu0 0.0
        %6040 = vmatprep.subr.mxu0 0.0
        %6041 = vmatpush1.msra.mxu0 0.0
        %6042 = vmatprep.subr.mxu0 0.0
        %6043 = vmatpush1.msra.mxu0 0.0
        %6044 = vmatprep.subr.mxu0 0.0
        %6045 = vmatpush1.msra.mxu0 0.0
        %6046 = vmatprep.subr.mxu0 0.0
        %6047 = vmatpush1.msra.mxu0 %v5836
        %6048 = vmatprep.subr.mxu0 0.0
        %6049 = vmatpush2.msra.mxu0 0.0
        %6050 = vmatprep.subr.mxu0 0.0
        %6051 = vmatpush2.msra.mxu0 0.0
        %6052 = vmatprep.subr.mxu0 0.0
        %6053 = vmatpush2.msra.mxu0 0.0
        %6054 = vmatprep.subr.mxu0 0.0
        %6055 = vmatpush2.msra.mxu0 0.0
        %6056 = vmatprep.subr.mxu0 0.0
        %6057 = vmatpush2.msra.mxu0 0.0
        %6058 = vmatprep.subr.mxu0 0.0
        %6059 = vmatpush2.msra.mxu0 0.0
        %6060 = vmatprep.subr.mxu0 0.0
        %6061 = vmatpush2.msra.mxu0 0.0
        %6062 = vmatprep.subr.mxu0 0.0
        %6063 = vmatpush2.msra.mxu0 0.0
        %6064 = vmatprep.subr.mxu0 0.0
        %6065 = vmatpush2.msra.mxu0 0.0
        %6066 = vmatprep.subr.mxu0 0.0
        %6067 = vmatpush2.msra.mxu0 0.0
        %6068 = vmatprep.subr.mxu0 0.0
        %6069 = vmatpush2.msra.mxu0 0.0
        %6070 = vmatprep.subr.mxu0 0.0
        %6071 = vmatpush2.msra.mxu0 0.0
        %6072 = vmatprep.subr.mxu0 0.0
        %6073 = vmatpush2.msra.mxu0 0.0
        %6074 = vmatprep.subr.mxu0 0.0
        %6075 = vmatpush2.msra.mxu0 0.0
        %6076 = vmatprep.subr.mxu0 0.0
        %6077 = vmatpush2.msra.mxu0 0.0
        %6078 = vmatprep.subr.mxu0 0.0
        %6079 = vmatpush2.msra.mxu0 0.0
        %6080 = vmatprep.mubr.f32.mxu0 0.0
        %6081 = vmatmul.mubr.f32.gmra.mxu0 %v6005
        %v6082 = vpop.f32.mrf.mxu0
        %v6083 = vadd.f32 0.0, %v6082
        %v6084 = vpop.f32.mrf.mxu0
        %6085 = vmatprep.mubr.f32.mxu0 0.0
        %6086 = vmatmul.mubr.f32.gmra.mxu0 %v6008
        %v6087 = vpop.f32.mrf.mxu0
        %v6088 = vadd.f32 0.0, %v6087
        %v6089 = vpop.f32.mrf.mxu0
        %6090 = vmatprep.mubr.f32.mxu0 0.0
        %6091 = vmatmul.mubr.f32.gmra.mxu0 %v6011
        %v6092 = vpop.f32.mrf.mxu0
        %v6093 = vadd.f32 0.0, %v6092
        %v6094 = vpop.f32.mrf.mxu0
        %6095 = vmatprep.mubr.f32.mxu0 0.0
        %6096 = vmatmul.mubr.f32.gmra.mxu0 %v6014
        %v6097 = vpop.f32.mrf.mxu0
        %v6098 = vadd.f32 0.0, %v6097
        %v6099 = vpop.f32.mrf.mxu0
        %6100 = vdwg.mxu0
        %6101 = vxpose.xlu0.b32.start [1/16] %v647, 128
        %6102 = vxpose.xlu0.b32.cont [2/16] 0.0, 128
        %6103 = vxpose.xlu0.b32.cont [3/16] 0.0, 128
        %6104 = vxpose.xlu0.b32.cont [4/16] 0.0, 128
        %6105 = vxpose.xlu0.b32.cont [5/16] 0.0, 128
        %6106 = vxpose.xlu0.b32.cont [6/16] 0.0, 128
        %6107 = vxpose.xlu0.b32.cont [7/16] 0.0, 128
        %6108 = vxpose.xlu0.b32.cont [8/16] 0.0, 128
        %6109 = vxpose.xlu0.b32.cont [9/16] 0.0, 128
        %6110 = vxpose.xlu0.b32.cont [10/16] 0.0, 128
        %6111 = vxpose.xlu0.b32.cont [11/16] 0.0, 128
        %6112 = vxpose.xlu0.b32.cont [12/16] 0.0, 128
        %6113 = vxpose.xlu0.b32.cont [13/16] 0.0, 128
        %6114 = vxpose.xlu0.b32.cont [14/16] 0.0, 128
        %6115 = vxpose.xlu0.b32.cont [15/16] 0.0, 128
        %6116 = vxpose.xlu0.b32.end [16/16] 0.0, 128
        %v6117 = vpop.trf.xlu0
        %v6118 = vpop.trf.xlu0
        %v6119 = vpop.trf.xlu0
        %v6120 = vpop.trf.xlu0
        %v6121 = vpop.trf.xlu0
        %v6122 = vpop.trf.xlu0
        %v6123 = vpop.trf.xlu0
        %v6124 = vpop.trf.xlu0
        %v6125 = vpop.trf.xlu0
        %v6126 = vpop.trf.xlu0
        %v6127 = vpop.trf.xlu0
        %v6128 = vpop.trf.xlu0
        %v6129 = vpop.trf.xlu0
        %v6130 = vpop.trf.xlu0
        %v6131 = vpop.trf.xlu0
        %v6132 = vpop.trf.xlu0
        %v6134 = vsel %vm1352, %v6117, 0
        %v6137 = vsel %vm1352, %v6118, 0
        %v6140 = vsel %vm1352, %v6119, 0
        %v6143 = vsel %vm1352, %v6120, 0
        %6145 = vmatprep.subr.mxu0 0.0
        %6146 = vmatpush1.msra.mxu0 0.0
        %6147 = vmatprep.subr.mxu0 0.0
        %6148 = vmatpush1.msra.mxu0 0.0
        %6149 = vmatprep.subr.mxu0 0.0
        %6150 = vmatpush1.msra.mxu0 0.0
        %6151 = vmatprep.subr.mxu0 0.0
        %6152 = vmatpush1.msra.mxu0 0.0
        %6153 = vmatprep.subr.mxu0 0.0
        %6154 = vmatpush1.msra.mxu0 0.0
        %6155 = vmatprep.subr.mxu0 0.0
        %6156 = vmatpush1.msra.mxu0 0.0
        %6157 = vmatprep.subr.mxu0 0.0
        %6158 = vmatpush1.msra.mxu0 0.0
        %6159 = vmatprep.subr.mxu0 0.0
        %6160 = vmatpush1.msra.mxu0 0.0
        %6161 = vmatprep.subr.mxu0 0.0
        %6162 = vmatpush1.msra.mxu0 0.0
        %6163 = vmatprep.subr.mxu0 0.0
        %6164 = vmatpush1.msra.mxu0 0.0
        %6165 = vmatprep.subr.mxu0 0.0
        %6166 = vmatpush1.msra.mxu0 0.0
        %6167 = vmatprep.subr.mxu0 0.0
        %6168 = vmatpush1.msra.mxu0 0.0
        %6169 = vmatprep.subr.mxu0 0.0
        %6170 = vmatpush1.msra.mxu0 0.0
        %6171 = vmatprep.subr.mxu0 0.0
        %6172 = vmatpush1.msra.mxu0 0.0
        %6173 = vmatprep.subr.mxu0 0.0
        %6174 = vmatpush1.msra.mxu0 0.0
        %6175 = vmatprep.subr.mxu0 0.0
        %6176 = vmatpush1.msra.mxu0 %v5837
        %6177 = vmatprep.subr.mxu0 0.0
        %6178 = vmatpush2.msra.mxu0 0.0
        %6179 = vmatprep.subr.mxu0 0.0
        %6180 = vmatpush2.msra.mxu0 0.0
        %6181 = vmatprep.subr.mxu0 0.0
        %6182 = vmatpush2.msra.mxu0 0.0
        %6183 = vmatprep.subr.mxu0 0.0
        %6184 = vmatpush2.msra.mxu0 0.0
        %6185 = vmatprep.subr.mxu0 0.0
        %6186 = vmatpush2.msra.mxu0 0.0
        %6187 = vmatprep.subr.mxu0 0.0
        %6188 = vmatpush2.msra.mxu0 0.0
        %6189 = vmatprep.subr.mxu0 0.0
        %6190 = vmatpush2.msra.mxu0 0.0
        %6191 = vmatprep.subr.mxu0 0.0
        %6192 = vmatpush2.msra.mxu0 0.0
        %6193 = vmatprep.subr.mxu0 0.0
        %6194 = vmatpush2.msra.mxu0 0.0
        %6195 = vmatprep.subr.mxu0 0.0
        %6196 = vmatpush2.msra.mxu0 0.0
        %6197 = vmatprep.subr.mxu0 0.0
        %6198 = vmatpush2.msra.mxu0 0.0
        %6199 = vmatprep.subr.mxu0 0.0
        %6200 = vmatpush2.msra.mxu0 0.0
        %6201 = vmatprep.subr.mxu0 0.0
        %6202 = vmatpush2.msra.mxu0 0.0
        %6203 = vmatprep.subr.mxu0 0.0
        %6204 = vmatpush2.msra.mxu0 0.0
        %6205 = vmatprep.subr.mxu0 0.0
        %6206 = vmatpush2.msra.mxu0 0.0
        %6207 = vmatprep.subr.mxu0 0.0
        %6208 = vmatpush2.msra.mxu0 0.0
        %6209 = vmatprep.mubr.f32.mxu0 0.0
        %6210 = vmatmul.mubr.f32.gmra.mxu0 %v6134
        %v6211 = vpop.f32.mrf.mxu0
        %v6212 = vadd.f32 0.0, %v6211
        %v6213 = vpop.f32.mrf.mxu0
        %6214 = vmatprep.mubr.f32.mxu0 0.0
        %6215 = vmatmul.mubr.f32.gmra.mxu0 %v6137
        %v6216 = vpop.f32.mrf.mxu0
        %v6217 = vadd.f32 0.0, %v6216
        %v6218 = vpop.f32.mrf.mxu0
        %6219 = vmatprep.mubr.f32.mxu0 0.0
        %6220 = vmatmul.mubr.f32.gmra.mxu0 %v6140
        %v6221 = vpop.f32.mrf.mxu0
        %v6222 = vadd.f32 0.0, %v6221
        %v6223 = vpop.f32.mrf.mxu0
        %6224 = vmatprep.mubr.f32.mxu0 0.0
        %6225 = vmatmul.mubr.f32.gmra.mxu0 %v6143
        %v6226 = vpop.f32.mrf.mxu0
        %v6227 = vadd.f32 0.0, %v6226
        %v6228 = vpop.f32.mrf.mxu0
        %6229 = vdwg.mxu0
        %6230 = vxpose.xlu0.b32.start [1/16] %v648, 128
        %6231 = vxpose.xlu0.b32.cont [2/16] 0.0, 128
        %6232 = vxpose.xlu0.b32.cont [3/16] 0.0, 128
        %6233 = vxpose.xlu0.b32.cont [4/16] 0.0, 128
        %6234 = vxpose.xlu0.b32.cont [5/16] 0.0, 128
        %6235 = vxpose.xlu0.b32.cont [6/16] 0.0, 128
        %6236 = vxpose.xlu0.b32.cont [7/16] 0.0, 128
        %6237 = vxpose.xlu0.b32.cont [8/16] 0.0, 128
        %6238 = vxpose.xlu0.b32.cont [9/16] 0.0, 128
        %6239 = vxpose.xlu0.b32.cont [10/16] 0.0, 128
        %6240 = vxpose.xlu0.b32.cont [11/16] 0.0, 128
        %6241 = vxpose.xlu0.b32.cont [12/16] 0.0, 128
        %6242 = vxpose.xlu0.b32.cont [13/16] 0.0, 128
        %6243 = vxpose.xlu0.b32.cont [14/16] 0.0, 128
        %6244 = vxpose.xlu0.b32.cont [15/16] 0.0, 128
        %6245 = vxpose.xlu0.b32.end [16/16] 0.0, 128
        %v6246 = vpop.trf.xlu0
        %v6247 = vpop.trf.xlu0
        %v6248 = vpop.trf.xlu0
        %v6249 = vpop.trf.xlu0
        %v6250 = vpop.trf.xlu0
        %v6251 = vpop.trf.xlu0
        %v6252 = vpop.trf.xlu0
        %v6253 = vpop.trf.xlu0
        %v6254 = vpop.trf.xlu0
        %v6255 = vpop.trf.xlu0
        %v6256 = vpop.trf.xlu0
        %v6257 = vpop.trf.xlu0
        %v6258 = vpop.trf.xlu0
        %v6259 = vpop.trf.xlu0
        %v6260 = vpop.trf.xlu0
        %v6261 = vpop.trf.xlu0
        %v6263 = vsel %vm1352, %v6246, 0
        %v6266 = vsel %vm1352, %v6247, 0
        %v6269 = vsel %vm1352, %v6248, 0
        %v6272 = vsel %vm1352, %v6249, 0
        %6274 = vmatprep.subr.mxu0 0.0
        %6275 = vmatpush1.msra.mxu0 0.0
        %6276 = vmatprep.subr.mxu0 0.0
        %6277 = vmatpush1.msra.mxu0 0.0
        %6278 = vmatprep.subr.mxu0 0.0
        %6279 = vmatpush1.msra.mxu0 0.0
        %6280 = vmatprep.subr.mxu0 0.0
        %6281 = vmatpush1.msra.mxu0 0.0
        %6282 = vmatprep.subr.mxu0 0.0
        %6283 = vmatpush1.msra.mxu0 0.0
        %6284 = vmatprep.subr.mxu0 0.0
        %6285 = vmatpush1.msra.mxu0 0.0
        %6286 = vmatprep.subr.mxu0 0.0
        %6287 = vmatpush1.msra.mxu0 0.0
        %6288 = vmatprep.subr.mxu0 0.0
        %6289 = vmatpush1.msra.mxu0 0.0
        %6290 = vmatprep.subr.mxu0 0.0
        %6291 = vmatpush1.msra.mxu0 0.0
        %6292 = vmatprep.subr.mxu0 0.0
        %6293 = vmatpush1.msra.mxu0 0.0
        %6294 = vmatprep.subr.mxu0 0.0
        %6295 = vmatpush1.msra.mxu0 0.0
        %6296 = vmatprep.subr.mxu0 0.0
        %6297 = vmatpush1.msra.mxu0 0.0
        %6298 = vmatprep.subr.mxu0 0.0
        %6299 = vmatpush1.msra.mxu0 0.0
        %6300 = vmatprep.subr.mxu0 0.0
        %6301 = vmatpush1.msra.mxu0 0.0
        %6302 = vmatprep.subr.mxu0 0.0
        %6303 = vmatpush1.msra.mxu0 0.0
        %6304 = vmatprep.subr.mxu0 0.0
        %6305 = vmatpush1.msra.mxu0 %v5838
        %6306 = vmatprep.subr.mxu0 0.0
        %6307 = vmatpush2.msra.mxu0 0.0
        %6308 = vmatprep.subr.mxu0 0.0
        %6309 = vmatpush2.msra.mxu0 0.0
        %6310 = vmatprep.subr.mxu0 0.0
        %6311 = vmatpush2.msra.mxu0 0.0
        %6312 = vmatprep.subr.mxu0 0.0
        %6313 = vmatpush2.msra.mxu0 0.0
        %6314 = vmatprep.subr.mxu0 0.0
        %6315 = vmatpush2.msra.mxu0 0.0
        %6316 = vmatprep.subr.mxu0 0.0
        %6317 = vmatpush2.msra.mxu0 0.0
        %6318 = vmatprep.subr.mxu0 0.0
        %6319 = vmatpush2.msra.mxu0 0.0
        %6320 = vmatprep.subr.mxu0 0.0
        %6321 = vmatpush2.msra.mxu0 0.0
        %6322 = vmatprep.subr.mxu0 0.0
        %6323 = vmatpush2.msra.mxu0 0.0
        %6324 = vmatprep.subr.mxu0 0.0
        %6325 = vmatpush2.msra.mxu0 0.0
        %6326 = vmatprep.subr.mxu0 0.0
        %6327 = vmatpush2.msra.mxu0 0.0
        %6328 = vmatprep.subr.mxu0 0.0
        %6329 = vmatpush2.msra.mxu0 0.0
        %6330 = vmatprep.subr.mxu0 0.0
        %6331 = vmatpush2.msra.mxu0 0.0
        %6332 = vmatprep.subr.mxu0 0.0
        %6333 = vmatpush2.msra.mxu0 0.0
        %6334 = vmatprep.subr.mxu0 0.0
        %6335 = vmatpush2.msra.mxu0 0.0
        %6336 = vmatprep.subr.mxu0 0.0
        %6337 = vmatpush2.msra.mxu0 0.0
        %6338 = vmatprep.mubr.f32.mxu0 0.0
        %6339 = vmatmul.mubr.f32.gmra.mxu0 %v6263
        %v6340 = vpop.f32.mrf.mxu0
        %v6341 = vadd.f32 0.0, %v6340
        %v6342 = vpop.f32.mrf.mxu0
        %6343 = vmatprep.mubr.f32.mxu0 0.0
        %6344 = vmatmul.mubr.f32.gmra.mxu0 %v6266
        %v6345 = vpop.f32.mrf.mxu0
        %v6346 = vadd.f32 0.0, %v6345
        %v6347 = vpop.f32.mrf.mxu0
        %6348 = vmatprep.mubr.f32.mxu0 0.0
        %6349 = vmatmul.mubr.f32.gmra.mxu0 %v6269
        %v6350 = vpop.f32.mrf.mxu0
        %v6351 = vadd.f32 0.0, %v6350
        %v6352 = vpop.f32.mrf.mxu0
        %6353 = vmatprep.mubr.f32.mxu0 0.0
        %6354 = vmatmul.mubr.f32.gmra.mxu0 %v6272
        %v6355 = vpop.f32.mrf.mxu0
        %v6356 = vadd.f32 0.0, %v6355
        %v6357 = vpop.f32.mrf.mxu0
        %6358 = vdwg.mxu0
        %6359 = vxpose.xlu0.b32.start [1/16] %v649, 128
        %6360 = vxpose.xlu0.b32.cont [2/16] 0.0, 128
        %6361 = vxpose.xlu0.b32.cont [3/16] 0.0, 128
        %6362 = vxpose.xlu0.b32.cont [4/16] 0.0, 128
        %6363 = vxpose.xlu0.b32.cont [5/16] 0.0, 128
        %6364 = vxpose.xlu0.b32.cont [6/16] 0.0, 128
        %6365 = vxpose.xlu0.b32.cont [7/16] 0.0, 128
        %6366 = vxpose.xlu0.b32.cont [8/16] 0.0, 128
        %6367 = vxpose.xlu0.b32.cont [9/16] 0.0, 128
        %6368 = vxpose.xlu0.b32.cont [10/16] 0.0, 128
        %6369 = vxpose.xlu0.b32.cont [11/16] 0.0, 128
        %6370 = vxpose.xlu0.b32.cont [12/16] 0.0, 128
        %6371 = vxpose.xlu0.b32.cont [13/16] 0.0, 128
        %6372 = vxpose.xlu0.b32.cont [14/16] 0.0, 128
        %6373 = vxpose.xlu0.b32.cont [15/16] 0.0, 128
        %6374 = vxpose.xlu0.b32.end [16/16] 0.0, 128
        %v6375 = vpop.trf.xlu0
        %v6376 = vpop.trf.xlu0
        %v6377 = vpop.trf.xlu0
        %v6378 = vpop.trf.xlu0
        %v6379 = vpop.trf.xlu0
        %v6380 = vpop.trf.xlu0
        %v6381 = vpop.trf.xlu0
        %v6382 = vpop.trf.xlu0
        %v6383 = vpop.trf.xlu0
        %v6384 = vpop.trf.xlu0
        %v6385 = vpop.trf.xlu0
        %v6386 = vpop.trf.xlu0
        %v6387 = vpop.trf.xlu0
        %v6388 = vpop.trf.xlu0
        %v6389 = vpop.trf.xlu0
        %v6390 = vpop.trf.xlu0
        %v6392 = vsel %vm1352, %v6375, 0
        %v6395 = vsel %vm1352, %v6376, 0
        %v6398 = vsel %vm1352, %v6377, 0
        %v6401 = vsel %vm1352, %v6378, 0
        %6403 = vmatprep.subr.mxu0 0.0
        %6404 = vmatpush1.msra.mxu0 0.0
        %6405 = vmatprep.subr.mxu0 0.0
        %6406 = vmatpush1.msra.mxu0 0.0
        %6407 = vmatprep.subr.mxu0 0.0
        %6408 = vmatpush1.msra.mxu0 0.0
        %6409 = vmatprep.subr.mxu0 0.0
        %6410 = vmatpush1.msra.mxu0 0.0
        %6411 = vmatprep.subr.mxu0 0.0
        %6412 = vmatpush1.msra.mxu0 0.0
        %6413 = vmatprep.subr.mxu0 0.0
        %6414 = vmatpush1.msra.mxu0 0.0
        %6415 = vmatprep.subr.mxu0 0.0
        %6416 = vmatpush1.msra.mxu0 0.0
        %6417 = vmatprep.subr.mxu0 0.0
        %6418 = vmatpush1.msra.mxu0 0.0
        %6419 = vmatprep.subr.mxu0 0.0
        %6420 = vmatpush1.msra.mxu0 0.0
        %6421 = vmatprep.subr.mxu0 0.0
        %6422 = vmatpush1.msra.mxu0 0.0
        %6423 = vmatprep.subr.mxu0 0.0
        %6424 = vmatpush1.msra.mxu0 0.0
        %6425 = vmatprep.subr.mxu0 0.0
        %6426 = vmatpush1.msra.mxu0 0.0
        %6427 = vmatprep.subr.mxu0 0.0
        %6428 = vmatpush1.msra.mxu0 0.0
        %6429 = vmatprep.subr.mxu0 0.0
        %6430 = vmatpush1.msra.mxu0 0.0
        %6431 = vmatprep.subr.mxu0 0.0
        %6432 = vmatpush1.msra.mxu0 0.0
        %6433 = vmatprep.subr.mxu0 0.0
        %6434 = vmatpush1.msra.mxu0 %v5839
        %6435 = vmatprep.subr.mxu0 0.0
        %6436 = vmatpush2.msra.mxu0 0.0
        %6437 = vmatprep.subr.mxu0 0.0
        %6438 = vmatpush2.msra.mxu0 0.0
        %6439 = vmatprep.subr.mxu0 0.0
        %6440 = vmatpush2.msra.mxu0 0.0
        %6441 = vmatprep.subr.mxu0 0.0
        %6442 = vmatpush2.msra.mxu0 0.0
        %6443 = vmatprep.subr.mxu0 0.0
        %6444 = vmatpush2.msra.mxu0 0.0
        %6445 = vmatprep.subr.mxu0 0.0
        %6446 = vmatpush2.msra.mxu0 0.0
        %6447 = vmatprep.subr.mxu0 0.0
        %6448 = vmatpush2.msra.mxu0 0.0
        %6449 = vmatprep.subr.mxu0 0.0
        %6450 = vmatpush2.msra.mxu0 0.0
        %6451 = vmatprep.subr.mxu0 0.0
        %6452 = vmatpush2.msra.mxu0 0.0
        %6453 = vmatprep.subr.mxu0 0.0
        %6454 = vmatpush2.msra.mxu0 0.0
        %6455 = vmatprep.subr.mxu0 0.0
        %6456 = vmatpush2.msra.mxu0 0.0
        %6457 = vmatprep.subr.mxu0 0.0
        %6458 = vmatpush2.msra.mxu0 0.0
        %6459 = vmatprep.subr.mxu0 0.0
        %6460 = vmatpush2.msra.mxu0 0.0
        %6461 = vmatprep.subr.mxu0 0.0
        %6462 = vmatpush2.msra.mxu0 0.0
        %6463 = vmatprep.subr.mxu0 0.0
        %6464 = vmatpush2.msra.mxu0 0.0
        %6465 = vmatprep.subr.mxu0 0.0
        %6466 = vmatpush2.msra.mxu0 0.0
        %6467 = vmatprep.mubr.f32.mxu0 0.0
        %6468 = vmatmul.mubr.f32.gmra.mxu0 %v6392
        %v6469 = vpop.f32.mrf.mxu0
        %v6470 = vadd.f32 0.0, %v6469
        %v6471 = vpop.f32.mrf.mxu0
        %6472 = vmatprep.mubr.f32.mxu0 0.0
        %6473 = vmatmul.mubr.f32.gmra.mxu0 %v6395
        %v6474 = vpop.f32.mrf.mxu0
        %v6475 = vadd.f32 0.0, %v6474
        %v6476 = vpop.f32.mrf.mxu0
        %6477 = vmatprep.mubr.f32.mxu0 0.0
        %6478 = vmatmul.mubr.f32.gmra.mxu0 %v6398
        %v6479 = vpop.f32.mrf.mxu0
        %v6480 = vadd.f32 0.0, %v6479
        %v6481 = vpop.f32.mrf.mxu0
        %6482 = vmatprep.mubr.f32.mxu0 0.0
        %6483 = vmatmul.mubr.f32.gmra.mxu0 %v6401
        %v6484 = vpop.f32.mrf.mxu0
        %v6485 = vadd.f32 0.0, %v6484
        %v6486 = vpop.f32.mrf.mxu0
        %6487 = vdwg.mxu0
        %6488 = vxpose.xlu0.b32.start [1/16] %v650, 128
        %6489 = vxpose.xlu0.b32.cont [2/16] 0.0, 128
        %6490 = vxpose.xlu0.b32.cont [3/16] 0.0, 128
        %6491 = vxpose.xlu0.b32.cont [4/16] 0.0, 128
        %6492 = vxpose.xlu0.b32.cont [5/16] 0.0, 128
        %6493 = vxpose.xlu0.b32.cont [6/16] 0.0, 128
        %6494 = vxpose.xlu0.b32.cont [7/16] 0.0, 128
        %6495 = vxpose.xlu0.b32.cont [8/16] 0.0, 128
        %6496 = vxpose.xlu0.b32.cont [9/16] 0.0, 128
        %6497 = vxpose.xlu0.b32.cont [10/16] 0.0, 128
        %6498 = vxpose.xlu0.b32.cont [11/16] 0.0, 128
        %6499 = vxpose.xlu0.b32.cont [12/16] 0.0, 128
        %6500 = vxpose.xlu0.b32.cont [13/16] 0.0, 128
        %6501 = vxpose.xlu0.b32.cont [14/16] 0.0, 128
        %6502 = vxpose.xlu0.b32.cont [15/16] 0.0, 128
        %6503 = vxpose.xlu0.b32.end [16/16] 0.0, 128
        %v6504 = vpop.trf.xlu0
        %v6505 = vpop.trf.xlu0
        %v6506 = vpop.trf.xlu0
        %v6507 = vpop.trf.xlu0
        %v6508 = vpop.trf.xlu0
        %v6509 = vpop.trf.xlu0
        %v6510 = vpop.trf.xlu0
        %v6511 = vpop.trf.xlu0
        %v6512 = vpop.trf.xlu0
        %v6513 = vpop.trf.xlu0
        %v6514 = vpop.trf.xlu0
        %v6515 = vpop.trf.xlu0
        %v6516 = vpop.trf.xlu0
        %v6517 = vpop.trf.xlu0
        %v6518 = vpop.trf.xlu0
        %v6519 = vpop.trf.xlu0
        %v6521 = vsel %vm1352, %v6504, 0
        %v6524 = vsel %vm1352, %v6505, 0
        %v6527 = vsel %vm1352, %v6506, 0
        %v6530 = vsel %vm1352, %v6507, 0
        %6532 = vmatprep.subr.mxu0 0.0
        %6533 = vmatpush1.msra.mxu0 0.0
        %6534 = vmatprep.subr.mxu0 0.0
        %6535 = vmatpush1.msra.mxu0 0.0
        %6536 = vmatprep.subr.mxu0 0.0
        %6537 = vmatpush1.msra.mxu0 0.0
        %6538 = vmatprep.subr.mxu0 0.0
        %6539 = vmatpush1.msra.mxu0 0.0
        %6540 = vmatprep.subr.mxu0 0.0
        %6541 = vmatpush1.msra.mxu0 0.0
        %6542 = vmatprep.subr.mxu0 0.0
        %6543 = vmatpush1.msra.mxu0 0.0
        %6544 = vmatprep.subr.mxu0 0.0
        %6545 = vmatpush1.msra.mxu0 0.0
        %6546 = vmatprep.subr.mxu0 0.0
        %6547 = vmatpush1.msra.mxu0 0.0
        %6548 = vmatprep.subr.mxu0 0.0
        %6549 = vmatpush1.msra.mxu0 0.0
        %6550 = vmatprep.subr.mxu0 0.0
        %6551 = vmatpush1.msra.mxu0 0.0
        %6552 = vmatprep.subr.mxu0 0.0
        %6553 = vmatpush1.msra.mxu0 0.0
        %6554 = vmatprep.subr.mxu0 0.0
        %6555 = vmatpush1.msra.mxu0 0.0
        %6556 = vmatprep.subr.mxu0 0.0
        %6557 = vmatpush1.msra.mxu0 0.0
        %6558 = vmatprep.subr.mxu0 0.0
        %6559 = vmatpush1.msra.mxu0 0.0
        %6560 = vmatprep.subr.mxu0 0.0
        %6561 = vmatpush1.msra.mxu0 0.0
        %6562 = vmatprep.subr.mxu0 0.0
        %6563 = vmatpush1.msra.mxu0 %v5840
        %6564 = vmatprep.subr.mxu0 0.0
        %6565 = vmatpush2.msra.mxu0 0.0
        %6566 = vmatprep.subr.mxu0 0.0
        %6567 = vmatpush2.msra.mxu0 0.0
        %6568 = vmatprep.subr.mxu0 0.0
        %6569 = vmatpush2.msra.mxu0 0.0
        %6570 = vmatprep.subr.mxu0 0.0
        %6571 = vmatpush2.msra.mxu0 0.0
        %6572 = vmatprep.subr.mxu0 0.0
        %6573 = vmatpush2.msra.mxu0 0.0
        %6574 = vmatprep.subr.mxu0 0.0
        %6575 = vmatpush2.msra.mxu0 0.0
        %6576 = vmatprep.subr.mxu0 0.0
        %6577 = vmatpush2.msra.mxu0 0.0
        %6578 = vmatprep.subr.mxu0 0.0
        %6579 = vmatpush2.msra.mxu0 0.0
        %6580 = vmatprep.subr.mxu0 0.0
        %6581 = vmatpush2.msra.mxu0 0.0
        %6582 = vmatprep.subr.mxu0 0.0
        %6583 = vmatpush2.msra.mxu0 0.0
        %6584 = vmatprep.subr.mxu0 0.0
        %6585 = vmatpush2.msra.mxu0 0.0
        %6586 = vmatprep.subr.mxu0 0.0
        %6587 = vmatpush2.msra.mxu0 0.0
        %6588 = vmatprep.subr.mxu0 0.0
        %6589 = vmatpush2.msra.mxu0 0.0
        %6590 = vmatprep.subr.mxu0 0.0
        %6591 = vmatpush2.msra.mxu0 0.0
        %6592 = vmatprep.subr.mxu0 0.0
        %6593 = vmatpush2.msra.mxu0 0.0
        %6594 = vmatprep.subr.mxu0 0.0
        %6595 = vmatpush2.msra.mxu0 0.0
        %6596 = vmatprep.mubr.f32.mxu0 0.0
        %6597 = vmatmul.mubr.f32.gmra.mxu0 %v6521
        %v6598 = vpop.f32.mrf.mxu0
        %v6599 = vadd.f32 0.0, %v6598
        %v6600 = vpop.f32.mrf.mxu0
        %6601 = vmatprep.mubr.f32.mxu0 0.0
        %6602 = vmatmul.mubr.f32.gmra.mxu0 %v6524
        %v6603 = vpop.f32.mrf.mxu0
        %v6604 = vadd.f32 0.0, %v6603
        %v6605 = vpop.f32.mrf.mxu0
        %6606 = vmatprep.mubr.f32.mxu0 0.0
        %6607 = vmatmul.mubr.f32.gmra.mxu0 %v6527
        %v6608 = vpop.f32.mrf.mxu0
        %v6609 = vadd.f32 0.0, %v6608
        %v6610 = vpop.f32.mrf.mxu0
        %6611 = vmatprep.mubr.f32.mxu0 0.0
        %6612 = vmatmul.mubr.f32.gmra.mxu0 %v6530
        %v6613 = vpop.f32.mrf.mxu0
        %v6614 = vadd.f32 0.0, %v6613
        %v6615 = vpop.f32.mrf.mxu0
        %6616 = vdwg.mxu0
        %6617 = vxpose.xlu0.b32.start [1/16] %v651, 128
        %6618 = vxpose.xlu0.b32.cont [2/16] 0.0, 128
        %6619 = vxpose.xlu0.b32.cont [3/16] 0.0, 128
        %6620 = vxpose.xlu0.b32.cont [4/16] 0.0, 128
        %6621 = vxpose.xlu0.b32.cont [5/16] 0.0, 128
        %6622 = vxpose.xlu0.b32.cont [6/16] 0.0, 128
        %6623 = vxpose.xlu0.b32.cont [7/16] 0.0, 128
        %6624 = vxpose.xlu0.b32.cont [8/16] 0.0, 128
        %6625 = vxpose.xlu0.b32.cont [9/16] 0.0, 128
        %6626 = vxpose.xlu0.b32.cont [10/16] 0.0, 128
        %6627 = vxpose.xlu0.b32.cont [11/16] 0.0, 128
        %6628 = vxpose.xlu0.b32.cont [12/16] 0.0, 128
        %6629 = vxpose.xlu0.b32.cont [13/16] 0.0, 128
        %6630 = vxpose.xlu0.b32.cont [14/16] 0.0, 128
        %6631 = vxpose.xlu0.b32.cont [15/16] 0.0, 128
        %6632 = vxpose.xlu0.b32.end [16/16] 0.0, 128
        %v6633 = vpop.trf.xlu0
        %v6634 = vpop.trf.xlu0
        %v6635 = vpop.trf.xlu0
        %v6636 = vpop.trf.xlu0
        %v6637 = vpop.trf.xlu0
        %v6638 = vpop.trf.xlu0
        %v6639 = vpop.trf.xlu0
        %v6640 = vpop.trf.xlu0
        %v6641 = vpop.trf.xlu0
        %v6642 = vpop.trf.xlu0
        %v6643 = vpop.trf.xlu0
        %v6644 = vpop.trf.xlu0
        %v6645 = vpop.trf.xlu0
        %v6646 = vpop.trf.xlu0
        %v6647 = vpop.trf.xlu0
        %v6648 = vpop.trf.xlu0
        %v6650 = vsel %vm1352, %v6633, 0
        %v6653 = vsel %vm1352, %v6634, 0
        %v6656 = vsel %vm1352, %v6635, 0
        %v6659 = vsel %vm1352, %v6636, 0
        %6661 = vmatprep.subr.mxu0 0.0
        %6662 = vmatpush1.msra.mxu0 0.0
        %6663 = vmatprep.subr.mxu0 0.0
        %6664 = vmatpush1.msra.mxu0 0.0
        %6665 = vmatprep.subr.mxu0 0.0
        %6666 = vmatpush1.msra.mxu0 0.0
        %6667 = vmatprep.subr.mxu0 0.0
        %6668 = vmatpush1.msra.mxu0 0.0
        %6669 = vmatprep.subr.mxu0 0.0
        %6670 = vmatpush1.msra.mxu0 0.0
        %6671 = vmatprep.subr.mxu0 0.0
        %6672 = vmatpush1.msra.mxu0 0.0
        %6673 = vmatprep.subr.mxu0 0.0
        %6674 = vmatpush1.msra.mxu0 0.0
        %6675 = vmatprep.subr.mxu0 0.0
        %6676 = vmatpush1.msra.mxu0 0.0
        %6677 = vmatprep.subr.mxu0 0.0
        %6678 = vmatpush1.msra.mxu0 0.0
        %6679 = vmatprep.subr.mxu0 0.0
        %6680 = vmatpush1.msra.mxu0 0.0
        %6681 = vmatprep.subr.mxu0 0.0
        %6682 = vmatpush1.msra.mxu0 0.0
        %6683 = vmatprep.subr.mxu0 0.0
        %6684 = vmatpush1.msra.mxu0 0.0
        %6685 = vmatprep.subr.mxu0 0.0
        %6686 = vmatpush1.msra.mxu0 0.0
        %6687 = vmatprep.subr.mxu0 0.0
        %6688 = vmatpush1.msra.mxu0 0.0
        %6689 = vmatprep.subr.mxu0 0.0
        %6690 = vmatpush1.msra.mxu0 0.0
        %6691 = vmatprep.subr.mxu0 0.0
        %6692 = vmatpush1.msra.mxu0 %v5841
        %6693 = vmatprep.subr.mxu0 0.0
        %6694 = vmatpush2.msra.mxu0 0.0
        %6695 = vmatprep.subr.mxu0 0.0
        %6696 = vmatpush2.msra.mxu0 0.0
        %6697 = vmatprep.subr.mxu0 0.0
        %6698 = vmatpush2.msra.mxu0 0.0
        %6699 = vmatprep.subr.mxu0 0.0
        %6700 = vmatpush2.msra.mxu0 0.0
        %6701 = vmatprep.subr.mxu0 0.0
        %6702 = vmatpush2.msra.mxu0 0.0
        %6703 = vmatprep.subr.mxu0 0.0
        %6704 = vmatpush2.msra.mxu0 0.0
        %6705 = vmatprep.subr.mxu0 0.0
        %6706 = vmatpush2.msra.mxu0 0.0
        %6707 = vmatprep.subr.mxu0 0.0
        %6708 = vmatpush2.msra.mxu0 0.0
        %6709 = vmatprep.subr.mxu0 0.0
        %6710 = vmatpush2.msra.mxu0 0.0
        %6711 = vmatprep.subr.mxu0 0.0
        %6712 = vmatpush2.msra.mxu0 0.0
        %6713 = vmatprep.subr.mxu0 0.0
        %6714 = vmatpush2.msra.mxu0 0.0
        %6715 = vmatprep.subr.mxu0 0.0
        %6716 = vmatpush2.msra.mxu0 0.0
        %6717 = vmatprep.subr.mxu0 0.0
        %6718 = vmatpush2.msra.mxu0 0.0
        %6719 = vmatprep.subr.mxu0 0.0
        %6720 = vmatpush2.msra.mxu0 0.0
        %6721 = vmatprep.subr.mxu0 0.0
        %6722 = vmatpush2.msra.mxu0 0.0
        %6723 = vmatprep.subr.mxu0 0.0
        %6724 = vmatpush2.msra.mxu0 0.0
        %6725 = vmatprep.mubr.f32.mxu0 0.0
        %6726 = vmatmul.mubr.f32.gmra.mxu0 %v6650
        %v6727 = vpop.f32.mrf.mxu0
        %v6728 = vadd.f32 0.0, %v6727
        %v6729 = vpop.f32.mrf.mxu0
        %6730 = vmatprep.mubr.f32.mxu0 0.0
        %6731 = vmatmul.mubr.f32.gmra.mxu0 %v6653
        %v6732 = vpop.f32.mrf.mxu0
        %v6733 = vadd.f32 0.0, %v6732
        %v6734 = vpop.f32.mrf.mxu0
        %6735 = vmatprep.mubr.f32.mxu0 0.0
        %6736 = vmatmul.mubr.f32.gmra.mxu0 %v6656
        %v6737 = vpop.f32.mrf.mxu0
        %v6738 = vadd.f32 0.0, %v6737
        %v6739 = vpop.f32.mrf.mxu0
        %6740 = vmatprep.mubr.f32.mxu0 0.0
        %6741 = vmatmul.mubr.f32.gmra.mxu0 %v6659
        %v6742 = vpop.f32.mrf.mxu0
        %v6743 = vadd.f32 0.0, %v6742
        %v6744 = vpop.f32.mrf.mxu0
        %6745 = vdwg.mxu0
        %6746 = vxpose.xlu0.b32.start [1/16] %v652, 128
        %6747 = vxpose.xlu0.b32.cont [2/16] 0.0, 128
        %6748 = vxpose.xlu0.b32.cont [3/16] 0.0, 128
        %6749 = vxpose.xlu0.b32.cont [4/16] 0.0, 128
        %6750 = vxpose.xlu0.b32.cont [5/16] 0.0, 128
        %6751 = vxpose.xlu0.b32.cont [6/16] 0.0, 128
        %6752 = vxpose.xlu0.b32.cont [7/16] 0.0, 128
        %6753 = vxpose.xlu0.b32.cont [8/16] 0.0, 128
        %6754 = vxpose.xlu0.b32.cont [9/16] 0.0, 128
        %6755 = vxpose.xlu0.b32.cont [10/16] 0.0, 128
        %6756 = vxpose.xlu0.b32.cont [11/16] 0.0, 128
        %6757 = vxpose.xlu0.b32.cont [12/16] 0.0, 128
        %6758 = vxpose.xlu0.b32.cont [13/16] 0.0, 128
        %6759 = vxpose.xlu0.b32.cont [14/16] 0.0, 128
        %6760 = vxpose.xlu0.b32.cont [15/16] 0.0, 128
        %6761 = vxpose.xlu0.b32.end [16/16] 0.0, 128
        %v6762 = vpop.trf.xlu0
        %v6763 = vpop.trf.xlu0
        %v6764 = vpop.trf.xlu0
        %v6765 = vpop.trf.xlu0
        %v6766 = vpop.trf.xlu0
        %v6767 = vpop.trf.xlu0
        %v6768 = vpop.trf.xlu0
        %v6769 = vpop.trf.xlu0
        %v6770 = vpop.trf.xlu0
        %v6771 = vpop.trf.xlu0
        %v6772 = vpop.trf.xlu0
        %v6773 = vpop.trf.xlu0
        %v6774 = vpop.trf.xlu0
        %v6775 = vpop.trf.xlu0
        %v6776 = vpop.trf.xlu0
        %v6777 = vpop.trf.xlu0
        %v6779 = vsel %vm1352, %v6762, 0
        %v6782 = vsel %vm1352, %v6763, 0
        %v6785 = vsel %vm1352, %v6764, 0
        %v6788 = vsel %vm1352, %v6765, 0
        %6790 = vmatprep.subr.mxu0 0.0
        %6791 = vmatpush1.msra.mxu0 0.0
        %6792 = vmatprep.subr.mxu0 0.0
        %6793 = vmatpush1.msra.mxu0 0.0
        %6794 = vmatprep.subr.mxu0 0.0
        %6795 = vmatpush1.msra.mxu0 0.0
        %6796 = vmatprep.subr.mxu0 0.0
        %6797 = vmatpush1.msra.mxu0 0.0
        %6798 = vmatprep.subr.mxu0 0.0
        %6799 = vmatpush1.msra.mxu0 0.0
        %6800 = vmatprep.subr.mxu0 0.0
        %6801 = vmatpush1.msra.mxu0 0.0
        %6802 = vmatprep.subr.mxu0 0.0
        %6803 = vmatpush1.msra.mxu0 0.0
        %6804 = vmatprep.subr.mxu0 0.0
        %6805 = vmatpush1.msra.mxu0 0.0
        %6806 = vmatprep.subr.mxu0 0.0
        %6807 = vmatpush1.msra.mxu0 0.0
        %6808 = vmatprep.subr.mxu0 0.0
        %6809 = vmatpush1.msra.mxu0 0.0
        %6810 = vmatprep.subr.mxu0 0.0
        %6811 = vmatpush1.msra.mxu0 0.0
        %6812 = vmatprep.subr.mxu0 0.0
        %6813 = vmatpush1.msra.mxu0 0.0
        %6814 = vmatprep.subr.mxu0 0.0
        %6815 = vmatpush1.msra.mxu0 0.0
        %6816 = vmatprep.subr.mxu0 0.0
        %6817 = vmatpush1.msra.mxu0 0.0
        %6818 = vmatprep.subr.mxu0 0.0
        %6819 = vmatpush1.msra.mxu0 0.0
        %6820 = vmatprep.subr.mxu0 0.0
        %6821 = vmatpush1.msra.mxu0 %v5842
        %6822 = vmatprep.subr.mxu0 0.0
        %6823 = vmatpush2.msra.mxu0 0.0
        %6824 = vmatprep.subr.mxu0 0.0
        %6825 = vmatpush2.msra.mxu0 0.0
        %6826 = vmatprep.subr.mxu0 0.0
        %6827 = vmatpush2.msra.mxu0 0.0
        %6828 = vmatprep.subr.mxu0 0.0
        %6829 = vmatpush2.msra.mxu0 0.0
        %6830 = vmatprep.subr.mxu0 0.0
        %6831 = vmatpush2.msra.mxu0 0.0
        %6832 = vmatprep.subr.mxu0 0.0
        %6833 = vmatpush2.msra.mxu0 0.0
        %6834 = vmatprep.subr.mxu0 0.0
        %6835 = vmatpush2.msra.mxu0 0.0
        %6836 = vmatprep.subr.mxu0 0.0
        %6837 = vmatpush2.msra.mxu0 0.0
        %6838 = vmatprep.subr.mxu0 0.0
        %6839 = vmatpush2.msra.mxu0 0.0
        %6840 = vmatprep.subr.mxu0 0.0
        %6841 = vmatpush2.msra.mxu0 0.0
        %6842 = vmatprep.subr.mxu0 0.0
        %6843 = vmatpush2.msra.mxu0 0.0
        %6844 = vmatprep.subr.mxu0 0.0
        %6845 = vmatpush2.msra.mxu0 0.0
        %6846 = vmatprep.subr.mxu0 0.0
        %6847 = vmatpush2.msra.mxu0 0.0
        %6848 = vmatprep.subr.mxu0 0.0
        %6849 = vmatpush2.msra.mxu0 0.0
        %6850 = vmatprep.subr.mxu0 0.0
        %6851 = vmatpush2.msra.mxu0 0.0
        %6852 = vmatprep.subr.mxu0 0.0
        %6853 = vmatpush2.msra.mxu0 0.0
        %6854 = vmatprep.mubr.f32.mxu0 0.0
        %6855 = vmatmul.mubr.f32.gmra.mxu0 %v6779
        %v6856 = vpop.f32.mrf.mxu0
        %v6857 = vadd.f32 0.0, %v6856
        %v6858 = vpop.f32.mrf.mxu0
        %6859 = vmatprep.mubr.f32.mxu0 0.0
        %6860 = vmatmul.mubr.f32.gmra.mxu0 %v6782
        %v6861 = vpop.f32.mrf.mxu0
        %v6862 = vadd.f32 0.0, %v6861
        %v6863 = vpop.f32.mrf.mxu0
        %6864 = vmatprep.mubr.f32.mxu0 0.0
        %6865 = vmatmul.mubr.f32.gmra.mxu0 %v6785
        %v6866 = vpop.f32.mrf.mxu0
        %v6867 = vadd.f32 0.0, %v6866
        %v6868 = vpop.f32.mrf.mxu0
        %6869 = vmatprep.mubr.f32.mxu0 0.0
        %6870 = vmatmul.mubr.f32.gmra.mxu0 %v6788
        %v6871 = vpop.f32.mrf.mxu0
        %v6872 = vadd.f32 0.0, %v6871
        %v6873 = vpop.f32.mrf.mxu0
        %6874 = vdwg.mxu0
        %6875 = vxpose.xlu0.b32.start [1/16] %v5954, 128
        %6876 = vxpose.xlu0.b32.cont [2/16] %v5959, 128
        %6877 = vxpose.xlu0.b32.cont [3/16] %v5964, 128
        %6878 = vxpose.xlu0.b32.cont [4/16] %v5969, 128
        %6879 = vxpose.xlu0.b32.cont [5/16] 0.0, 128
        %6880 = vxpose.xlu0.b32.cont [6/16] 0.0, 128
        %6881 = vxpose.xlu0.b32.cont [7/16] 0.0, 128
        %6882 = vxpose.xlu0.b32.cont [8/16] 0.0, 128
        %6883 = vxpose.xlu0.b32.cont [9/16] 0.0, 128
        %6884 = vxpose.xlu0.b32.cont [10/16] 0.0, 128
        %6885 = vxpose.xlu0.b32.cont [11/16] 0.0, 128
        %6886 = vxpose.xlu0.b32.cont [12/16] 0.0, 128
        %6887 = vxpose.xlu0.b32.cont [13/16] 0.0, 128
        %6888 = vxpose.xlu0.b32.cont [14/16] 0.0, 128
        %6889 = vxpose.xlu0.b32.cont [15/16] 0.0, 128
        %6890 = vxpose.xlu0.b32.end [16/16] 0.0, 128
        %v6891 = vpop.trf.xlu0
        %v6892 = vpop.trf.xlu0
        %v6893 = vpop.trf.xlu0
        %v6894 = vpop.trf.xlu0
        %v6895 = vpop.trf.xlu0
        %v6896 = vpop.trf.xlu0
        %v6897 = vpop.trf.xlu0
        %v6898 = vpop.trf.xlu0
        %v6899 = vpop.trf.xlu0
        %v6900 = vpop.trf.xlu0
        %v6901 = vpop.trf.xlu0
        %v6902 = vpop.trf.xlu0
        %v6903 = vpop.trf.xlu0
        %v6904 = vpop.trf.xlu0
        %v6905 = vpop.trf.xlu0
        %v6906 = vpop.trf.xlu0
        %6907 = vxpose.xlu0.b32.start [1/16] %v6083, 128
        %6908 = vxpose.xlu0.b32.cont [2/16] %v6088, 128
        %6909 = vxpose.xlu0.b32.cont [3/16] %v6093, 128
        %6910 = vxpose.xlu0.b32.cont [4/16] %v6098, 128
        %6911 = vxpose.xlu0.b32.cont [5/16] 0.0, 128
        %6912 = vxpose.xlu0.b32.cont [6/16] 0.0, 128
        %6913 = vxpose.xlu0.b32.cont [7/16] 0.0, 128
        %6914 = vxpose.xlu0.b32.cont [8/16] 0.0, 128
        %6915 = vxpose.xlu0.b32.cont [9/16] 0.0, 128
        %6916 = vxpose.xlu0.b32.cont [10/16] 0.0, 128
        %6917 = vxpose.xlu0.b32.cont [11/16] 0.0, 128
        %6918 = vxpose.xlu0.b32.cont [12/16] 0.0, 128
        %6919 = vxpose.xlu0.b32.cont [13/16] 0.0, 128
        %6920 = vxpose.xlu0.b32.cont [14/16] 0.0, 128
        %6921 = vxpose.xlu0.b32.cont [15/16] 0.0, 128
        %6922 = vxpose.xlu0.b32.end [16/16] 0.0, 128
        %v6923 = vpop.trf.xlu0
        %v6924 = vpop.trf.xlu0
        %v6925 = vpop.trf.xlu0
        %v6926 = vpop.trf.xlu0
        %v6927 = vpop.trf.xlu0
        %v6928 = vpop.trf.xlu0
        %v6929 = vpop.trf.xlu0
        %v6930 = vpop.trf.xlu0
        %v6931 = vpop.trf.xlu0
        %v6932 = vpop.trf.xlu0
        %v6933 = vpop.trf.xlu0
        %v6934 = vpop.trf.xlu0
        %v6935 = vpop.trf.xlu0
        %v6936 = vpop.trf.xlu0
        %v6937 = vpop.trf.xlu0
        %v6938 = vpop.trf.xlu0
        %6939 = vxpose.xlu0.b32.start [1/16] %v6212, 128
        %6940 = vxpose.xlu0.b32.cont [2/16] %v6217, 128
        %6941 = vxpose.xlu0.b32.cont [3/16] %v6222, 128
        %6942 = vxpose.xlu0.b32.cont [4/16] %v6227, 128
        %6943 = vxpose.xlu0.b32.cont [5/16] 0.0, 128
        %6944 = vxpose.xlu0.b32.cont [6/16] 0.0, 128
        %6945 = vxpose.xlu0.b32.cont [7/16] 0.0, 128
        %6946 = vxpose.xlu0.b32.cont [8/16] 0.0, 128
        %6947 = vxpose.xlu0.b32.cont [9/16] 0.0, 128
        %6948 = vxpose.xlu0.b32.cont [10/16] 0.0, 128
        %6949 = vxpose.xlu0.b32.cont [11/16] 0.0, 128
        %6950 = vxpose.xlu0.b32.cont [12/16] 0.0, 128
        %6951 = vxpose.xlu0.b32.cont [13/16] 0.0, 128
        %6952 = vxpose.xlu0.b32.cont [14/16] 0.0, 128
        %6953 = vxpose.xlu0.b32.cont [15/16] 0.0, 128
        %6954 = vxpose.xlu0.b32.end [16/16] 0.0, 128
        %v6955 = vpop.trf.xlu0
        %v6956 = vpop.trf.xlu0
        %v6957 = vpop.trf.xlu0
        %v6958 = vpop.trf.xlu0
        %v6959 = vpop.trf.xlu0
        %v6960 = vpop.trf.xlu0
        %v6961 = vpop.trf.xlu0
        %v6962 = vpop.trf.xlu0
        %v6963 = vpop.trf.xlu0
        %v6964 = vpop.trf.xlu0
        %v6965 = vpop.trf.xlu0
        %v6966 = vpop.trf.xlu0
        %v6967 = vpop.trf.xlu0
        %v6968 = vpop.trf.xlu0
        %v6969 = vpop.trf.xlu0
        %v6970 = vpop.trf.xlu0
        %6971 = vxpose.xlu0.b32.start [1/16] %v6341, 128
        %6972 = vxpose.xlu0.b32.cont [2/16] %v6346, 128
        %6973 = vxpose.xlu0.b32.cont [3/16] %v6351, 128
        %6974 = vxpose.xlu0.b32.cont [4/16] %v6356, 128
        %6975 = vxpose.xlu0.b32.cont [5/16] 0.0, 128
        %6976 = vxpose.xlu0.b32.cont [6/16] 0.0, 128
        %6977 = vxpose.xlu0.b32.cont [7/16] 0.0, 128
        %6978 = vxpose.xlu0.b32.cont [8/16] 0.0, 128
        %6979 = vxpose.xlu0.b32.cont [9/16] 0.0, 128
        %6980 = vxpose.xlu0.b32.cont [10/16] 0.0, 128
        %6981 = vxpose.xlu0.b32.cont [11/16] 0.0, 128
        %6982 = vxpose.xlu0.b32.cont [12/16] 0.0, 128
        %6983 = vxpose.xlu0.b32.cont [13/16] 0.0, 128
        %6984 = vxpose.xlu0.b32.cont [14/16] 0.0, 128
        %6985 = vxpose.xlu0.b32.cont [15/16] 0.0, 128
        %6986 = vxpose.xlu0.b32.end [16/16] 0.0, 128
        %v6987 = vpop.trf.xlu0
        %v6988 = vpop.trf.xlu0
        %v6989 = vpop.trf.xlu0
        %v6990 = vpop.trf.xlu0
        %v6991 = vpop.trf.xlu0
        %v6992 = vpop.trf.xlu0
        %v6993 = vpop.trf.xlu0
        %v6994 = vpop.trf.xlu0
        %v6995 = vpop.trf.xlu0
        %v6996 = vpop.trf.xlu0
        %v6997 = vpop.trf.xlu0
        %v6998 = vpop.trf.xlu0
        %v6999 = vpop.trf.xlu0
        %v7000 = vpop.trf.xlu0
        %v7001 = vpop.trf.xlu0
        %v7002 = vpop.trf.xlu0
        %7003 = vxpose.xlu0.b32.start [1/16] %v6470, 128
        %7004 = vxpose.xlu0.b32.cont [2/16] %v6475, 128
        %7005 = vxpose.xlu0.b32.cont [3/16] %v6480, 128
        %7006 = vxpose.xlu0.b32.cont [4/16] %v6485, 128
        %7007 = vxpose.xlu0.b32.cont [5/16] 0.0, 128
        %7008 = vxpose.xlu0.b32.cont [6/16] 0.0, 128
        %7009 = vxpose.xlu0.b32.cont [7/16] 0.0, 128
        %7010 = vxpose.xlu0.b32.cont [8/16] 0.0, 128
        %7011 = vxpose.xlu0.b32.cont [9/16] 0.0, 128
        %7012 = vxpose.xlu0.b32.cont [10/16] 0.0, 128
        %7013 = vxpose.xlu0.b32.cont [11/16] 0.0, 128
        %7014 = vxpose.xlu0.b32.cont [12/16] 0.0, 128
        %7015 = vxpose.xlu0.b32.cont [13/16] 0.0, 128
        %7016 = vxpose.xlu0.b32.cont [14/16] 0.0, 128
        %7017 = vxpose.xlu0.b32.cont [15/16] 0.0, 128
        %7018 = vxpose.xlu0.b32.end [16/16] 0.0, 128
        %v7019 = vpop.trf.xlu0
        %v7020 = vpop.trf.xlu0
        %v7021 = vpop.trf.xlu0
        %v7022 = vpop.trf.xlu0
        %v7023 = vpop.trf.xlu0
        %v7024 = vpop.trf.xlu0
        %v7025 = vpop.trf.xlu0
        %v7026 = vpop.trf.xlu0
        %v7027 = vpop.trf.xlu0
        %v7028 = vpop.trf.xlu0
        %v7029 = vpop.trf.xlu0
        %v7030 = vpop.trf.xlu0
        %v7031 = vpop.trf.xlu0
        %v7032 = vpop.trf.xlu0
        %v7033 = vpop.trf.xlu0
        %v7034 = vpop.trf.xlu0
        %7035 = vxpose.xlu0.b32.start [1/16] %v6599, 128
        %7036 = vxpose.xlu0.b32.cont [2/16] %v6604, 128
        %7037 = vxpose.xlu0.b32.cont [3/16] %v6609, 128
        %7038 = vxpose.xlu0.b32.cont [4/16] %v6614, 128
        %7039 = vxpose.xlu0.b32.cont [5/16] 0.0, 128
        %7040 = vxpose.xlu0.b32.cont [6/16] 0.0, 128
        %7041 = vxpose.xlu0.b32.cont [7/16] 0.0, 128
        %7042 = vxpose.xlu0.b32.cont [8/16] 0.0, 128
        %7043 = vxpose.xlu0.b32.cont [9/16] 0.0, 128
        %7044 = vxpose.xlu0.b32.cont [10/16] 0.0, 128
        %7045 = vxpose.xlu0.b32.cont [11/16] 0.0, 128
        %7046 = vxpose.xlu0.b32.cont [12/16] 0.0, 128
        %7047 = vxpose.xlu0.b32.cont [13/16] 0.0, 128
        %7048 = vxpose.xlu0.b32.cont [14/16] 0.0, 128
        %7049 = vxpose.xlu0.b32.cont [15/16] 0.0, 128
        %7050 = vxpose.xlu0.b32.end [16/16] 0.0, 128
        %v7051 = vpop.trf.xlu0
        %v7052 = vpop.trf.xlu0
        %v7053 = vpop.trf.xlu0
        %v7054 = vpop.trf.xlu0
        %v7055 = vpop.trf.xlu0
        %v7056 = vpop.trf.xlu0
        %v7057 = vpop.trf.xlu0
        %v7058 = vpop.trf.xlu0
        %v7059 = vpop.trf.xlu0
        %v7060 = vpop.trf.xlu0
        %v7061 = vpop.trf.xlu0
        %v7062 = vpop.trf.xlu0
        %v7063 = vpop.trf.xlu0
        %v7064 = vpop.trf.xlu0
        %v7065 = vpop.trf.xlu0
        %v7066 = vpop.trf.xlu0
        %7067 = vxpose.xlu0.b32.start [1/16] %v6728, 128
        %7068 = vxpose.xlu0.b32.cont [2/16] %v6733, 128
        %7069 = vxpose.xlu0.b32.cont [3/16] %v6738, 128
        %7070 = vxpose.xlu0.b32.cont [4/16] %v6743, 128
        %7071 = vxpose.xlu0.b32.cont [5/16] 0.0, 128
        %7072 = vxpose.xlu0.b32.cont [6/16] 0.0, 128
        %7073 = vxpose.xlu0.b32.cont [7/16] 0.0, 128
        %7074 = vxpose.xlu0.b32.cont [8/16] 0.0, 128
        %7075 = vxpose.xlu0.b32.cont [9/16] 0.0, 128
        %7076 = vxpose.xlu0.b32.cont [10/16] 0.0, 128
        %7077 = vxpose.xlu0.b32.cont [11/16] 0.0, 128
        %7078 = vxpose.xlu0.b32.cont [12/16] 0.0, 128
        %7079 = vxpose.xlu0.b32.cont [13/16] 0.0, 128
        %7080 = vxpose.xlu0.b32.cont [14/16] 0.0, 128
        %7081 = vxpose.xlu0.b32.cont [15/16] 0.0, 128
        %7082 = vxpose.xlu0.b32.end [16/16] 0.0, 128
        %v7083 = vpop.trf.xlu0
        %v7084 = vpop.trf.xlu0
        %v7085 = vpop.trf.xlu0
        %v7086 = vpop.trf.xlu0
        %v7087 = vpop.trf.xlu0
        %v7088 = vpop.trf.xlu0
        %v7089 = vpop.trf.xlu0
        %v7090 = vpop.trf.xlu0
        %v7091 = vpop.trf.xlu0
        %v7092 = vpop.trf.xlu0
        %v7093 = vpop.trf.xlu0
        %v7094 = vpop.trf.xlu0
        %v7095 = vpop.trf.xlu0
        %v7096 = vpop.trf.xlu0
        %v7097 = vpop.trf.xlu0
        %v7098 = vpop.trf.xlu0
        %7099 = vxpose.xlu0.b32.start [1/16] %v6857, 128
        %7100 = vxpose.xlu0.b32.cont [2/16] %v6862, 128
        %7101 = vxpose.xlu0.b32.cont [3/16] %v6867, 128
        %7102 = vxpose.xlu0.b32.cont [4/16] %v6872, 128
        %7103 = vxpose.xlu0.b32.cont [5/16] 0.0, 128
        %7104 = vxpose.xlu0.b32.cont [6/16] 0.0, 128
        %7105 = vxpose.xlu0.b32.cont [7/16] 0.0, 128
        %7106 = vxpose.xlu0.b32.cont [8/16] 0.0, 128
        %7107 = vxpose.xlu0.b32.cont [9/16] 0.0, 128
        %7108 = vxpose.xlu0.b32.cont [10/16] 0.0, 128
        %7109 = vxpose.xlu0.b32.cont [11/16] 0.0, 128
        %7110 = vxpose.xlu0.b32.cont [12/16] 0.0, 128
        %7111 = vxpose.xlu0.b32.cont [13/16] 0.0, 128
        %7112 = vxpose.xlu0.b32.cont [14/16] 0.0, 128
        %7113 = vxpose.xlu0.b32.cont [15/16] 0.0, 128
        %7114 = vxpose.xlu0.b32.end [16/16] 0.0, 128
        %v7115 = vpop.trf.xlu0
        %v7116 = vpop.trf.xlu0
        %v7117 = vpop.trf.xlu0
        %v7118 = vpop.trf.xlu0
        %v7119 = vpop.trf.xlu0
        %v7120 = vpop.trf.xlu0
        %v7121 = vpop.trf.xlu0
        %v7122 = vpop.trf.xlu0
        %v7123 = vpop.trf.xlu0
        %v7124 = vpop.trf.xlu0
        %v7125 = vpop.trf.xlu0
        %v7126 = vpop.trf.xlu0
        %v7127 = vpop.trf.xlu0
        %v7128 = vpop.trf.xlu0
        %v7129 = vpop.trf.xlu0
        %v7130 = vpop.trf.xlu0
        %v7131 = vcombine.low %v6891, %v6955
        %v7133 = vunpack.c.l.s4 1983009808
        %v7134 = vunpack.c.0.s8 %v7133
        %v7135 = vlaneseq
        %v7136 = vshrl.u32 %v7135, 7
        %v7137 = vsub.s32 %v7134, %v7136
        %v7138 = vrot.slane %v7131, %v7137
        %v7139 = vcombine.low %v6923, %v6987
        %v7141 = vunpack.c.l.s4 1983009808
        %v7142 = vunpack.c.0.s8 %v7141
        %v7143 = vlaneseq
        %v7144 = vshrl.u32 %v7143, 7
        %v7145 = vsub.s32 %v7142, %v7144
        %v7146 = vrot.slane %v7139, %v7145
        %v7147 = vcombine.low %v7019, %v7083
        %v7149 = vunpack.c.l.s4 1983009808
        %v7150 = vunpack.c.0.s8 %v7149
        %v7151 = vlaneseq
        %v7152 = vshrl.u32 %v7151, 7
        %v7153 = vsub.s32 %v7150, %v7152
        %v7154 = vrot.slane %v7147, %v7153
        %v7155 = vcombine.low %v7051, %v7115
        %v7157 = vunpack.c.l.s4 1983009808
        %v7158 = vunpack.c.0.s8 %v7157
        %v7159 = vlaneseq
        %v7160 = vshrl.u32 %v7159, 7
        %v7161 = vsub.s32 %v7158, %v7160
        %v7162 = vrot.slane %v7155, %v7161
        %v7163 = vcombine.low %v7138, %v7146
        %v7164 = vcombine.high %v7138, %v7146
        %v7166 = vunpack.c.l.s4 1934713408
        %v7167 = vunpack.c.0.s8 %v7166
        %v7168 = vlaneseq
        %v7169 = vshrl.u32 %v7168, 7
        %v7170 = vsub.s32 %v7167, %v7169
        %v7171 = vrot.slane %v7163, %v7170
        %v7173 = vunpack.c.l.s4 1934713408
        %v7174 = vunpack.c.0.s8 %v7173
        %v7175 = vlaneseq
        %v7176 = vshrl.u32 %v7175, 7
        %v7177 = vsub.s32 %v7174, %v7176
        %v7178 = vrot.slane %v7164, %v7177
        %v7179 = vcombine.low %v7154, %v7162
        %v7180 = vcombine.high %v7154, %v7162
        %v7182 = vunpack.c.l.s4 1934713408
        %v7183 = vunpack.c.0.s8 %v7182
        %v7184 = vlaneseq
        %v7185 = vshrl.u32 %v7184, 7
        %v7186 = vsub.s32 %v7183, %v7185
        %v7187 = vrot.slane %v7179, %v7186
        %v7189 = vunpack.c.l.s4 1934713408
        %v7190 = vunpack.c.0.s8 %v7189
        %v7191 = vlaneseq
        %v7192 = vshrl.u32 %v7191, 7
        %v7193 = vsub.s32 %v7190, %v7192
        %v7194 = vrot.slane %v7180, %v7193
        %v7195 = vcombine.low %v7171, %v7187
        %v7196 = vcombine.high %v7171, %v7187
        %v7197 = vcombine.low %v7178, %v7194
        %v7198 = vcombine.high %v7178, %v7194
        %v7199 = vld [vmem:[#allocation14] sm:$0xff]
        %v7200 = vld [vmem:[#allocation14 + $0x8] sm:$0xff]
        %v7201 = vld [vmem:[#allocation14 + $0x10] sm:$0xff]
        %v7202 = vld [vmem:[#allocation14 + $0x18] sm:$0xff]
        %v7203 = vld [vmem:[%s9] sm:$0x1]
        %v7204 = vld [vmem:[%s9 + $0x1] sm:$0x1]
        %v7205 = vld [vmem:[%s9 + $0x2] sm:$0x1]
        %v7206 = vld [vmem:[%s9 + $0x3] sm:$0x1]
        %v7211 = vlaneseq
        %v7212 = vshrl.u32 %v7211, 7
        %v7213 = vsub.s32 0, %v7212
        %v7214 = vrot.slane %v7203, %v7213
        %v7215 = vlaneseq
        %v7216 = vshrl.u32 %v7215, 7
        %v7217 = vsub.s32 0, %v7216
        %v7218 = vrot.slane %v7204, %v7217
        %v7219 = vlaneseq
        %v7220 = vshrl.u32 %v7219, 7
        %v7221 = vsub.s32 0, %v7220
        %v7222 = vrot.slane %v7205, %v7221
        %v7223 = vlaneseq
        %v7224 = vshrl.u32 %v7223, 7
        %v7225 = vsub.s32 0, %v7224
        %v7226 = vrot.slane %v7206, %v7225
        %v7232 = vsel %vm664, %v7195, 0
        %v7235 = vsel %vm664, %v7199, 0
        %7237 = vmatprep.subr.mxu0 0.0
        %7238 = vmatpush1.xpose.msra.mxu0 0.0
        %7239 = vmatprep.subr.mxu0 0.0
        %7240 = vmatpush1.xpose.msra.mxu0 0.0
        %7241 = vmatprep.subr.mxu0 0.0
        %7242 = vmatpush1.xpose.msra.mxu0 0.0
        %7243 = vmatprep.subr.mxu0 0.0
        %7244 = vmatpush1.xpose.msra.mxu0 0.0
        %7245 = vmatprep.subr.mxu0 0.0
        %7246 = vmatpush1.xpose.msra.mxu0 0.0
        %7247 = vmatprep.subr.mxu0 0.0
        %7248 = vmatpush1.xpose.msra.mxu0 0.0
        %7249 = vmatprep.subr.mxu0 0.0
        %7250 = vmatpush1.xpose.msra.mxu0 0.0
        %7251 = vmatprep.subr.mxu0 0.0
        %7252 = vmatpush1.xpose.msra.mxu0 0.0
        %7253 = vmatprep.subr.mxu0 0.0
        %7254 = vmatpush1.xpose.msra.mxu0 0.0
        %7255 = vmatprep.subr.mxu0 0.0
        %7256 = vmatpush1.xpose.msra.mxu0 0.0
        %7257 = vmatprep.subr.mxu0 0.0
        %7258 = vmatpush1.xpose.msra.mxu0 0.0
        %7259 = vmatprep.subr.mxu0 0.0
        %7260 = vmatpush1.xpose.msra.mxu0 0.0
        %7261 = vmatprep.subr.mxu0 0.0
        %7262 = vmatpush1.xpose.msra.mxu0 0.0
        %7263 = vmatprep.subr.mxu0 0.0
        %7264 = vmatpush1.xpose.msra.mxu0 0.0
        %7265 = vmatprep.subr.mxu0 0.0
        %7266 = vmatpush1.xpose.msra.mxu0 0.0
        %7267 = vmatprep.subr.mxu0 0.0
        %7268 = vmatpush1.xpose.msra.mxu0 %v7235
        %7269 = vmatprep.subr.mxu0 0.0
        %7270 = vmatpush2.xpose.msra.mxu0 0.0
        %7271 = vmatprep.subr.mxu0 0.0
        %7272 = vmatpush2.xpose.msra.mxu0 0.0
        %7273 = vmatprep.subr.mxu0 0.0
        %7274 = vmatpush2.xpose.msra.mxu0 0.0
        %7275 = vmatprep.subr.mxu0 0.0
        %7276 = vmatpush2.xpose.msra.mxu0 0.0
        %7277 = vmatprep.subr.mxu0 0.0
        %7278 = vmatpush2.xpose.msra.mxu0 0.0
        %7279 = vmatprep.subr.mxu0 0.0
        %7280 = vmatpush2.xpose.msra.mxu0 0.0
        %7281 = vmatprep.subr.mxu0 0.0
        %7282 = vmatpush2.xpose.msra.mxu0 0.0
        %7283 = vmatprep.subr.mxu0 0.0
        %7284 = vmatpush2.xpose.msra.mxu0 0.0
        %7285 = vmatprep.subr.mxu0 0.0
        %7286 = vmatpush2.xpose.msra.mxu0 0.0
        %7287 = vmatprep.subr.mxu0 0.0
        %7288 = vmatpush2.xpose.msra.mxu0 0.0
        %7289 = vmatprep.subr.mxu0 0.0
        %7290 = vmatpush2.xpose.msra.mxu0 0.0
        %7291 = vmatprep.subr.mxu0 0.0
        %7292 = vmatpush2.xpose.msra.mxu0 0.0
        %7293 = vmatprep.subr.mxu0 0.0
        %7294 = vmatpush2.xpose.msra.mxu0 0.0
        %7295 = vmatprep.subr.mxu0 0.0
        %7296 = vmatpush2.xpose.msra.mxu0 0.0
        %7297 = vmatprep.subr.mxu0 0.0
        %7298 = vmatpush2.xpose.msra.mxu0 0.0
        %7299 = vmatprep.subr.mxu0 0.0
        %7300 = vmatpush2.xpose.msra.mxu0 0.0
        %7301 = vmatprep.mubr.f32.mxu0 0.0
        %7302 = vmatmul.mubr.f32.gmra.mxu0 %v7232
        %v7303 = vpop.f32.mrf.mxu0
        %v7304 = vadd.f32 %v7214, %v7303
        %v7305 = vpop.f32.mrf.mxu0
        %7306 = vdwg.mxu0
        %v7308 = vsel %vm664, %v7196, 0
        %v7311 = vsel %vm664, %v7200, 0
        %7313 = vmatprep.subr.mxu0 0.0
        %7314 = vmatpush1.xpose.msra.mxu0 0.0
        %7315 = vmatprep.subr.mxu0 0.0
        %7316 = vmatpush1.xpose.msra.mxu0 0.0
        %7317 = vmatprep.subr.mxu0 0.0
        %7318 = vmatpush1.xpose.msra.mxu0 0.0
        %7319 = vmatprep.subr.mxu0 0.0
        %7320 = vmatpush1.xpose.msra.mxu0 0.0
        %7321 = vmatprep.subr.mxu0 0.0
        %7322 = vmatpush1.xpose.msra.mxu0 0.0
        %7323 = vmatprep.subr.mxu0 0.0
        %7324 = vmatpush1.xpose.msra.mxu0 0.0
        %7325 = vmatprep.subr.mxu0 0.0
        %7326 = vmatpush1.xpose.msra.mxu0 0.0
        %7327 = vmatprep.subr.mxu0 0.0
        %7328 = vmatpush1.xpose.msra.mxu0 0.0
        %7329 = vmatprep.subr.mxu0 0.0
        %7330 = vmatpush1.xpose.msra.mxu0 0.0
        %7331 = vmatprep.subr.mxu0 0.0
        %7332 = vmatpush1.xpose.msra.mxu0 0.0
        %7333 = vmatprep.subr.mxu0 0.0
        %7334 = vmatpush1.xpose.msra.mxu0 0.0
        %7335 = vmatprep.subr.mxu0 0.0
        %7336 = vmatpush1.xpose.msra.mxu0 0.0
        %7337 = vmatprep.subr.mxu0 0.0
        %7338 = vmatpush1.xpose.msra.mxu0 0.0
        %7339 = vmatprep.subr.mxu0 0.0
        %7340 = vmatpush1.xpose.msra.mxu0 0.0
        %7341 = vmatprep.subr.mxu0 0.0
        %7342 = vmatpush1.xpose.msra.mxu0 0.0
        %7343 = vmatprep.subr.mxu0 0.0
        %7344 = vmatpush1.xpose.msra.mxu0 %v7311
        %7345 = vmatprep.subr.mxu0 0.0
        %7346 = vmatpush2.xpose.msra.mxu0 0.0
        %7347 = vmatprep.subr.mxu0 0.0
        %7348 = vmatpush2.xpose.msra.mxu0 0.0
        %7349 = vmatprep.subr.mxu0 0.0
        %7350 = vmatpush2.xpose.msra.mxu0 0.0
        %7351 = vmatprep.subr.mxu0 0.0
        %7352 = vmatpush2.xpose.msra.mxu0 0.0
        %7353 = vmatprep.subr.mxu0 0.0
        %7354 = vmatpush2.xpose.msra.mxu0 0.0
        %7355 = vmatprep.subr.mxu0 0.0
        %7356 = vmatpush2.xpose.msra.mxu0 0.0
        %7357 = vmatprep.subr.mxu0 0.0
        %7358 = vmatpush2.xpose.msra.mxu0 0.0
        %7359 = vmatprep.subr.mxu0 0.0
        %7360 = vmatpush2.xpose.msra.mxu0 0.0
        %7361 = vmatprep.subr.mxu0 0.0
        %7362 = vmatpush2.xpose.msra.mxu0 0.0
        %7363 = vmatprep.subr.mxu0 0.0
        %7364 = vmatpush2.xpose.msra.mxu0 0.0
        %7365 = vmatprep.subr.mxu0 0.0
        %7366 = vmatpush2.xpose.msra.mxu0 0.0
        %7367 = vmatprep.subr.mxu0 0.0
        %7368 = vmatpush2.xpose.msra.mxu0 0.0
        %7369 = vmatprep.subr.mxu0 0.0
        %7370 = vmatpush2.xpose.msra.mxu0 0.0
        %7371 = vmatprep.subr.mxu0 0.0
        %7372 = vmatpush2.xpose.msra.mxu0 0.0
        %7373 = vmatprep.subr.mxu0 0.0
        %7374 = vmatpush2.xpose.msra.mxu0 0.0
        %7375 = vmatprep.subr.mxu0 0.0
        %7376 = vmatpush2.xpose.msra.mxu0 0.0
        %7377 = vmatprep.mubr.f32.mxu0 0.0
        %7378 = vmatmul.mubr.f32.gmra.mxu0 %v7308
        %v7379 = vpop.f32.mrf.mxu0
        %v7380 = vadd.f32 %v7218, %v7379
        %v7381 = vpop.f32.mrf.mxu0
        %7382 = vdwg.mxu0
        %v7384 = vsel %vm664, %v7197, 0
        %v7387 = vsel %vm664, %v7201, 0
        %7389 = vmatprep.subr.mxu0 0.0
        %7390 = vmatpush1.xpose.msra.mxu0 0.0
        %7391 = vmatprep.subr.mxu0 0.0
        %7392 = vmatpush1.xpose.msra.mxu0 0.0
        %7393 = vmatprep.subr.mxu0 0.0
        %7394 = vmatpush1.xpose.msra.mxu0 0.0
        %7395 = vmatprep.subr.mxu0 0.0
        %7396 = vmatpush1.xpose.msra.mxu0 0.0
        %7397 = vmatprep.subr.mxu0 0.0
        %7398 = vmatpush1.xpose.msra.mxu0 0.0
        %7399 = vmatprep.subr.mxu0 0.0
        %7400 = vmatpush1.xpose.msra.mxu0 0.0
        %7401 = vmatprep.subr.mxu0 0.0
        %7402 = vmatpush1.xpose.msra.mxu0 0.0
        %7403 = vmatprep.subr.mxu0 0.0
        %7404 = vmatpush1.xpose.msra.mxu0 0.0
        %7405 = vmatprep.subr.mxu0 0.0
        %7406 = vmatpush1.xpose.msra.mxu0 0.0
        %7407 = vmatprep.subr.mxu0 0.0
        %7408 = vmatpush1.xpose.msra.mxu0 0.0
        %7409 = vmatprep.subr.mxu0 0.0
        %7410 = vmatpush1.xpose.msra.mxu0 0.0
        %7411 = vmatprep.subr.mxu0 0.0
        %7412 = vmatpush1.xpose.msra.mxu0 0.0
        %7413 = vmatprep.subr.mxu0 0.0
        %7414 = vmatpush1.xpose.msra.mxu0 0.0
        %7415 = vmatprep.subr.mxu0 0.0
        %7416 = vmatpush1.xpose.msra.mxu0 0.0
        %7417 = vmatprep.subr.mxu0 0.0
        %7418 = vmatpush1.xpose.msra.mxu0 0.0
        %7419 = vmatprep.subr.mxu0 0.0
        %7420 = vmatpush1.xpose.msra.mxu0 %v7387
        %7421 = vmatprep.subr.mxu0 0.0
        %7422 = vmatpush2.xpose.msra.mxu0 0.0
        %7423 = vmatprep.subr.mxu0 0.0
        %7424 = vmatpush2.xpose.msra.mxu0 0.0
        %7425 = vmatprep.subr.mxu0 0.0
        %7426 = vmatpush2.xpose.msra.mxu0 0.0
        %7427 = vmatprep.subr.mxu0 0.0
        %7428 = vmatpush2.xpose.msra.mxu0 0.0
        %7429 = vmatprep.subr.mxu0 0.0
        %7430 = vmatpush2.xpose.msra.mxu0 0.0
        %7431 = vmatprep.subr.mxu0 0.0
        %7432 = vmatpush2.xpose.msra.mxu0 0.0
        %7433 = vmatprep.subr.mxu0 0.0
        %7434 = vmatpush2.xpose.msra.mxu0 0.0
        %7435 = vmatprep.subr.mxu0 0.0
        %7436 = vmatpush2.xpose.msra.mxu0 0.0
        %7437 = vmatprep.subr.mxu0 0.0
        %7438 = vmatpush2.xpose.msra.mxu0 0.0
        %7439 = vmatprep.subr.mxu0 0.0
        %7440 = vmatpush2.xpose.msra.mxu0 0.0
        %7441 = vmatprep.subr.mxu0 0.0
        %7442 = vmatpush2.xpose.msra.mxu0 0.0
        %7443 = vmatprep.subr.mxu0 0.0
        %7444 = vmatpush2.xpose.msra.mxu0 0.0
        %7445 = vmatprep.subr.mxu0 0.0
        %7446 = vmatpush2.xpose.msra.mxu0 0.0
        %7447 = vmatprep.subr.mxu0 0.0
        %7448 = vmatpush2.xpose.msra.mxu0 0.0
        %7449 = vmatprep.subr.mxu0 0.0
        %7450 = vmatpush2.xpose.msra.mxu0 0.0
        %7451 = vmatprep.subr.mxu0 0.0
        %7452 = vmatpush2.xpose.msra.mxu0 0.0
        %7453 = vmatprep.mubr.f32.mxu0 0.0
        %7454 = vmatmul.mubr.f32.gmra.mxu0 %v7384
        %v7455 = vpop.f32.mrf.mxu0
        %v7456 = vadd.f32 %v7222, %v7455
        %v7457 = vpop.f32.mrf.mxu0
        %7458 = vdwg.mxu0
        %v7460 = vsel %vm664, %v7198, 0
        %v7463 = vsel %vm664, %v7202, 0
        %7465 = vmatprep.subr.mxu0 0.0
        %7466 = vmatpush1.xpose.msra.mxu0 0.0
        %7467 = vmatprep.subr.mxu0 0.0
        %7468 = vmatpush1.xpose.msra.mxu0 0.0
        %7469 = vmatprep.subr.mxu0 0.0
        %7470 = vmatpush1.xpose.msra.mxu0 0.0
        %7471 = vmatprep.subr.mxu0 0.0
        %7472 = vmatpush1.xpose.msra.mxu0 0.0
        %7473 = vmatprep.subr.mxu0 0.0
        %7474 = vmatpush1.xpose.msra.mxu0 0.0
        %7475 = vmatprep.subr.mxu0 0.0
        %7476 = vmatpush1.xpose.msra.mxu0 0.0
        %7477 = vmatprep.subr.mxu0 0.0
        %7478 = vmatpush1.xpose.msra.mxu0 0.0
        %7479 = vmatprep.subr.mxu0 0.0
        %7480 = vmatpush1.xpose.msra.mxu0 0.0
        %7481 = vmatprep.subr.mxu0 0.0
        %7482 = vmatpush1.xpose.msra.mxu0 0.0
        %7483 = vmatprep.subr.mxu0 0.0
        %7484 = vmatpush1.xpose.msra.mxu0 0.0
        %7485 = vmatprep.subr.mxu0 0.0
        %7486 = vmatpush1.xpose.msra.mxu0 0.0
        %7487 = vmatprep.subr.mxu0 0.0
        %7488 = vmatpush1.xpose.msra.mxu0 0.0
        %7489 = vmatprep.subr.mxu0 0.0
        %7490 = vmatpush1.xpose.msra.mxu0 0.0
        %7491 = vmatprep.subr.mxu0 0.0
        %7492 = vmatpush1.xpose.msra.mxu0 0.0
        %7493 = vmatprep.subr.mxu0 0.0
        %7494 = vmatpush1.xpose.msra.mxu0 0.0
        %7495 = vmatprep.subr.mxu0 0.0
        %7496 = vmatpush1.xpose.msra.mxu0 %v7463
        %7497 = vmatprep.subr.mxu0 0.0
        %7498 = vmatpush2.xpose.msra.mxu0 0.0
        %7499 = vmatprep.subr.mxu0 0.0
        %7500 = vmatpush2.xpose.msra.mxu0 0.0
        %7501 = vmatprep.subr.mxu0 0.0
        %7502 = vmatpush2.xpose.msra.mxu0 0.0
        %7503 = vmatprep.subr.mxu0 0.0
        %7504 = vmatpush2.xpose.msra.mxu0 0.0
        %7505 = vmatprep.subr.mxu0 0.0
        %7506 = vmatpush2.xpose.msra.mxu0 0.0
        %7507 = vmatprep.subr.mxu0 0.0
        %7508 = vmatpush2.xpose.msra.mxu0 0.0
        %7509 = vmatprep.subr.mxu0 0.0
        %7510 = vmatpush2.xpose.msra.mxu0 0.0
        %7511 = vmatprep.subr.mxu0 0.0
        %7512 = vmatpush2.xpose.msra.mxu0 0.0
        %7513 = vmatprep.subr.mxu0 0.0
        %7514 = vmatpush2.xpose.msra.mxu0 0.0
        %7515 = vmatprep.subr.mxu0 0.0
        %7516 = vmatpush2.xpose.msra.mxu0 0.0
        %7517 = vmatprep.subr.mxu0 0.0
        %7518 = vmatpush2.xpose.msra.mxu0 0.0
        %7519 = vmatprep.subr.mxu0 0.0
        %7520 = vmatpush2.xpose.msra.mxu0 0.0
        %7521 = vmatprep.subr.mxu0 0.0
        %7522 = vmatpush2.xpose.msra.mxu0 0.0
        %7523 = vmatprep.subr.mxu0 0.0
        %7524 = vmatpush2.xpose.msra.mxu0 0.0
        %7525 = vmatprep.subr.mxu0 0.0
        %7526 = vmatpush2.xpose.msra.mxu0 0.0
        %7527 = vmatprep.subr.mxu0 0.0
        %7528 = vmatpush2.xpose.msra.mxu0 0.0
        %7529 = vmatprep.mubr.f32.mxu0 0.0
        %7530 = vmatmul.mubr.f32.gmra.mxu0 %v7460
        %v7531 = vpop.f32.mrf.mxu0
        %v7532 = vadd.f32 %v7226, %v7531
        %v7533 = vpop.f32.mrf.mxu0
        %7534 = vdwg.mxu0
        %7535 = vst.msk [vmem:[%s633] sm:$0xff] %vm1352, %v4925
        %7536 = vst.msk [vmem:[%s633 + $0x8] sm:$0xff] %vm1352, %v4926
        %7537 = vst.msk [vmem:[%s633 + $0x10] sm:$0xff] %vm1352, %v4927
        %7538 = vst.msk [vmem:[%s633 + $0x18] sm:$0xff] %vm1352, %v4928
        %v7539 = vcombine.low %v5033, %v5179
        %v7540 = vcombine.high %v5033, %v5179
        %v7542 = vunpack.c.l.s4 1983009808
        %v7543 = vunpack.c.0.s8 %v7542
        %v7544 = vlaneseq
        %v7545 = vshrl.u32 %v7544, 7
        %v7546 = vsub.s32 %v7543, %v7545
        %v7547 = vrot.slane %v7539, %v7546
        %v7549 = vunpack.c.l.s4 1983009808
        %v7550 = vunpack.c.0.s8 %v7549
        %v7551 = vlaneseq
        %v7552 = vshrl.u32 %v7551, 7
        %v7553 = vsub.s32 %v7550, %v7552
        %v7554 = vrot.slane %v7540, %v7553
        %v7555 = vcombine.low %v5106, %v5252
        %v7556 = vcombine.high %v5106, %v5252
        %v7558 = vunpack.c.l.s4 1983009808
        %v7559 = vunpack.c.0.s8 %v7558
        %v7560 = vlaneseq
        %v7561 = vshrl.u32 %v7560, 7
        %v7562 = vsub.s32 %v7559, %v7561
        %v7563 = vrot.slane %v7555, %v7562
        %v7565 = vunpack.c.l.s4 1983009808
        %v7566 = vunpack.c.0.s8 %v7565
        %v7567 = vlaneseq
        %v7568 = vshrl.u32 %v7567, 7
        %v7569 = vsub.s32 %v7566, %v7568
        %v7570 = vrot.slane %v7556, %v7569
        %v7571 = vcombine.low %v7547, %v7563
        %v7572 = vcombine.high %v7547, %v7563
        %v7574 = vunpack.c.l.s4 1934713408
        %v7575 = vunpack.c.0.s8 %v7574
        %v7576 = vlaneseq
        %v7577 = vshrl.u32 %v7576, 7
        %v7578 = vsub.s32 %v7575, %v7577
        %v7579 = vrot.slane %v7571, %v7578
        %v7581 = vunpack.c.l.s4 1934713408
        %v7582 = vunpack.c.0.s8 %v7581
        %v7583 = vlaneseq
        %v7584 = vshrl.u32 %v7583, 7
        %v7585 = vsub.s32 %v7582, %v7584
        %v7586 = vrot.slane %v7572, %v7585
        %v7587 = vcombine.low %v7554, %v7570
        %v7588 = vcombine.high %v7554, %v7570
        %v7590 = vunpack.c.l.s4 1934713408
        %v7591 = vunpack.c.0.s8 %v7590
        %v7592 = vlaneseq
        %v7593 = vshrl.u32 %v7592, 7
        %v7594 = vsub.s32 %v7591, %v7593
        %v7595 = vrot.slane %v7587, %v7594
        %v7597 = vunpack.c.l.s4 1934713408
        %v7598 = vunpack.c.0.s8 %v7597
        %v7599 = vlaneseq
        %v7600 = vshrl.u32 %v7599, 7
        %v7601 = vsub.s32 %v7598, %v7600
        %v7602 = vrot.slane %v7588, %v7601
        %v7603 = vcombine.high %v7579, 0.0
        %v7604 = vcombine.high %v7586, 0.0
        %v7605 = vcombine.high %v7595, 0.0
        %v7606 = vcombine.high %v7602, 0.0
        %v7607 = vcombine.low %v7579, %v7586
        %v7609 = vunpack.c.l.s4 1983009808
        %v7610 = vunpack.c.0.s8 %v7609
        %v7611 = vlaneseq
        %v7612 = vshrl.u32 %v7611, 7
        %v7613 = vsub.s32 %v7610, %v7612
        %v7614 = vrot.slane %v7607, %v7613
        %v7615 = vcombine.low %v7603, %v7604
        %v7617 = vunpack.c.l.s4 1983009808
        %v7618 = vunpack.c.0.s8 %v7617
        %v7619 = vlaneseq
        %v7620 = vshrl.u32 %v7619, 7
        %v7621 = vsub.s32 %v7618, %v7620
        %v7622 = vrot.slane %v7615, %v7621
        %v7623 = vcombine.low %v7595, %v7602
        %v7625 = vunpack.c.l.s4 1983009808
        %v7626 = vunpack.c.0.s8 %v7625
        %v7627 = vlaneseq
        %v7628 = vshrl.u32 %v7627, 7
        %v7629 = vsub.s32 %v7626, %v7628
        %v7630 = vrot.slane %v7623, %v7629
        %v7631 = vcombine.low %v7605, %v7606
        %v7633 = vunpack.c.l.s4 1983009808
        %v7634 = vunpack.c.0.s8 %v7633
        %v7635 = vlaneseq
        %v7636 = vshrl.u32 %v7635, 7
        %v7637 = vsub.s32 %v7634, %v7636
        %v7638 = vrot.slane %v7631, %v7637
        %v7639 = vcombine.low %v7614, %v7622
        %v7640 = vcombine.high %v7614, %v7622
        %v7642 = vunpack.c.l.s4 1934713408
        %v7643 = vunpack.c.0.s8 %v7642
        %v7644 = vlaneseq
        %v7645 = vshrl.u32 %v7644, 7
        %v7646 = vsub.s32 %v7643, %v7645
        %v7647 = vrot.slane %v7639, %v7646
        %v7649 = vunpack.c.l.s4 1934713408
        %v7650 = vunpack.c.0.s8 %v7649
        %v7651 = vlaneseq
        %v7652 = vshrl.u32 %v7651, 7
        %v7653 = vsub.s32 %v7650, %v7652
        %v7654 = vrot.slane %v7640, %v7653
        %v7655 = vcombine.low %v7630, %v7638
        %v7656 = vcombine.high %v7630, %v7638
        %v7658 = vunpack.c.l.s4 1934713408
        %v7659 = vunpack.c.0.s8 %v7658
        %v7660 = vlaneseq
        %v7661 = vshrl.u32 %v7660, 7
        %v7662 = vsub.s32 %v7659, %v7661
        %v7663 = vrot.slane %v7655, %v7662
        %v7665 = vunpack.c.l.s4 1934713408
        %v7666 = vunpack.c.0.s8 %v7665
        %v7667 = vlaneseq
        %v7668 = vshrl.u32 %v7667, 7
        %v7669 = vsub.s32 %v7666, %v7668
        %v7670 = vrot.slane %v7656, %v7669
        %v7671 = vcombine.low %v7647, %v7663
        %v7672 = vcombine.high %v7647, %v7663
        %v7673 = vcombine.low %v7654, %v7670
        %v7674 = vcombine.high %v7654, %v7670
        %7676 = vrot.lane.b32.xlu0 %v7672, 8
        %v7677 = vpop.permute.xlu0 %7676
        %7680 = vrot.lane.b32.xlu0 %v7673, 16
        %v7681 = vpop.permute.xlu0 %7680
        %7684 = vrot.lane.b32.xlu0 %v7674, 24
        %v7685 = vpop.permute.xlu0 %7684
        %v7687 = vsel %vm1352, %v7671, %v7677
        %vm7688 = vcmask 130048
        %v7689 = vsel %vm7688, %v7687, %v7681
        %vm7690 = vcmask 195584
        %v7691 = vsel %vm7690, %v7689, %v7685
        %7692 = vst.msk [vmem:[%s626] sm:$0xff] %vm664, %v7691
        %v7693 = vcombine.low %v7304, %v7456
        %v7694 = vcombine.high %v7304, %v7456
        %v7696 = vunpack.c.l.s4 1983009808
        %v7697 = vunpack.c.0.s8 %v7696
        %v7698 = vlaneseq
        %v7699 = vshrl.u32 %v7698, 7
        %v7700 = vsub.s32 %v7697, %v7699
        %v7701 = vrot.slane %v7693, %v7700
        %v7703 = vunpack.c.l.s4 1983009808
        %v7704 = vunpack.c.0.s8 %v7703
        %v7705 = vlaneseq
        %v7706 = vshrl.u32 %v7705, 7
        %v7707 = vsub.s32 %v7704, %v7706
        %v7708 = vrot.slane %v7694, %v7707
        %v7709 = vcombine.low %v7380, %v7532
        %v7710 = vcombine.high %v7380, %v7532
        %v7712 = vunpack.c.l.s4 1983009808
        %v7713 = vunpack.c.0.s8 %v7712
        %v7714 = vlaneseq
        %v7715 = vshrl.u32 %v7714, 7
        %v7716 = vsub.s32 %v7713, %v7715
        %v7717 = vrot.slane %v7709, %v7716
        %v7719 = vunpack.c.l.s4 1983009808
        %v7720 = vunpack.c.0.s8 %v7719
        %v7721 = vlaneseq
        %v7722 = vshrl.u32 %v7721, 7
        %v7723 = vsub.s32 %v7720, %v7722
        %v7724 = vrot.slane %v7710, %v7723
        %v7725 = vcombine.low %v7701, %v7717
        %v7726 = vcombine.high %v7701, %v7717
        %v7728 = vunpack.c.l.s4 1934713408
        %v7729 = vunpack.c.0.s8 %v7728
        %v7730 = vlaneseq
        %v7731 = vshrl.u32 %v7730, 7
        %v7732 = vsub.s32 %v7729, %v7731
        %v7733 = vrot.slane %v7725, %v7732
        %v7735 = vunpack.c.l.s4 1934713408
        %v7736 = vunpack.c.0.s8 %v7735
        %v7737 = vlaneseq
        %v7738 = vshrl.u32 %v7737, 7
        %v7739 = vsub.s32 %v7736, %v7738
        %v7740 = vrot.slane %v7726, %v7739
        %v7741 = vcombine.low %v7708, %v7724
        %v7742 = vcombine.high %v7708, %v7724
        %v7744 = vunpack.c.l.s4 1934713408
        %v7745 = vunpack.c.0.s8 %v7744
        %v7746 = vlaneseq
        %v7747 = vshrl.u32 %v7746, 7
        %v7748 = vsub.s32 %v7745, %v7747
        %v7749 = vrot.slane %v7741, %v7748
        %v7751 = vunpack.c.l.s4 1934713408
        %v7752 = vunpack.c.0.s8 %v7751
        %v7753 = vlaneseq
        %v7754 = vshrl.u32 %v7753, 7
        %v7755 = vsub.s32 %v7752, %v7754
        %v7756 = vrot.slane %v7742, %v7755
        %v7757 = vcombine.high %v7733, 0.0
        %v7758 = vcombine.high %v7740, 0.0
        %v7759 = vcombine.high %v7749, 0.0
        %v7760 = vcombine.high %v7756, 0.0
        %v7761 = vcombine.low %v7733, %v7740
        %v7763 = vunpack.c.l.s4 1983009808
        %v7764 = vunpack.c.0.s8 %v7763
        %v7765 = vlaneseq
        %v7766 = vshrl.u32 %v7765, 7
        %v7767 = vsub.s32 %v7764, %v7766
        %v7768 = vrot.slane %v7761, %v7767
        %v7769 = vcombine.low %v7757, %v7758
        %v7771 = vunpack.c.l.s4 1983009808
        %v7772 = vunpack.c.0.s8 %v7771
        %v7773 = vlaneseq
        %v7774 = vshrl.u32 %v7773, 7
        %v7775 = vsub.s32 %v7772, %v7774
        %v7776 = vrot.slane %v7769, %v7775
        %v7777 = vcombine.low %v7749, %v7756
        %v7779 = vunpack.c.l.s4 1983009808
        %v7780 = vunpack.c.0.s8 %v7779
        %v7781 = vlaneseq
        %v7782 = vshrl.u32 %v7781, 7
        %v7783 = vsub.s32 %v7780, %v7782
        %v7784 = vrot.slane %v7777, %v7783
        %v7785 = vcombine.low %v7759, %v7760
        %v7787 = vunpack.c.l.s4 1983009808
        %v7788 = vunpack.c.0.s8 %v7787
        %v7789 = vlaneseq
        %v7790 = vshrl.u32 %v7789, 7
        %v7791 = vsub.s32 %v7788, %v7790
        %v7792 = vrot.slane %v7785, %v7791
        %v7793 = vcombine.low %v7768, %v7776
        %v7794 = vcombine.high %v7768, %v7776
        %v7796 = vunpack.c.l.s4 1934713408
        %v7797 = vunpack.c.0.s8 %v7796
        %v7798 = vlaneseq
        %v7799 = vshrl.u32 %v7798, 7
        %v7800 = vsub.s32 %v7797, %v7799
        %v7801 = vrot.slane %v7793, %v7800
        %v7803 = vunpack.c.l.s4 1934713408
        %v7804 = vunpack.c.0.s8 %v7803
        %v7805 = vlaneseq
        %v7806 = vshrl.u32 %v7805, 7
        %v7807 = vsub.s32 %v7804, %v7806
        %v7808 = vrot.slane %v7794, %v7807
        %v7809 = vcombine.low %v7784, %v7792
        %v7810 = vcombine.high %v7784, %v7792
        %v7812 = vunpack.c.l.s4 1934713408
        %v7813 = vunpack.c.0.s8 %v7812
        %v7814 = vlaneseq
        %v7815 = vshrl.u32 %v7814, 7
        %v7816 = vsub.s32 %v7813, %v7815
        %v7817 = vrot.slane %v7809, %v7816
        %v7819 = vunpack.c.l.s4 1934713408
        %v7820 = vunpack.c.0.s8 %v7819
        %v7821 = vlaneseq
        %v7822 = vshrl.u32 %v7821, 7
        %v7823 = vsub.s32 %v7820, %v7822
        %v7824 = vrot.slane %v7810, %v7823
        %v7825 = vcombine.low %v7801, %v7817
        %v7826 = vcombine.high %v7801, %v7817
        %v7827 = vcombine.low %v7808, %v7824
        %v7828 = vcombine.high %v7808, %v7824
        %7830 = vrot.lane.b32.xlu0 %v7826, 8
        %v7831 = vpop.permute.xlu0 %7830
        %7834 = vrot.lane.b32.xlu0 %v7827, 16
        %v7835 = vpop.permute.xlu0 %7834
        %7838 = vrot.lane.b32.xlu0 %v7828, 24
        %v7839 = vpop.permute.xlu0 %7838
        %v7841 = vsel %vm1352, %v7825, %v7831
        %v7842 = vsel %vm7688, %v7841, %v7835
        %v7843 = vsel %vm7690, %v7842, %v7839
        %7844 = vst.msk [vmem:[%s640] sm:$0xff] %vm664, %v7843
        %s7845 = sand.u32 %s297, 1
        %s7846 = scalar_lea.sflag [#allocation4], %s7845
        %s7847 = sand.u32 %s297, 1
        %s7848 = smul.addr %s7847, 8
        %s7849 = scalar_lea.vmem [#allocation16], %s7848
        %s7850 = sand.u32 %s41, 1
        %s7851 = scalar_lea.sflag [#allocation18], %s7850
        %s7852 = sand.u32 %s325, 1
        %s7853 = smul.addr %s7852, 32
        %s7854 = scalar_lea.vmem [#allocation17], %s7853
        %s7855 = sand.u32 %s41, 1
        %s7856 = scalar_lea.sflag [#allocation18], %s7855
        %s7857 = sand.u32 %s353, 1
        %s7858 = smul.addr %s7857, 8
        %s7859 = scalar_lea.vmem [#allocation19], %s7858
        // Predicated region
        $region93: #{tpu_custom_call.1} parent=59 // pred_check
          %p7860 = pneg %p307
        $region94: #{tpu_custom_call.1} parent=59 // pred_check_branch
          %7862 = sbr.rel (%p7860) target = $region96
        $region95: #{tpu_custom_call.1} parent=59 // pred_region
          %s7864 = ssub.s32 128, 128
          %7865 = vsyncadd %s7846, %s7864
          %s7866 = sadd.s32 %s46, %s45
          %s7867 = smul.addr %s7866, 128
          %s7868 = scalar_lea.hbm %s10, %s7867
          %s7870 = sshll.u32 %s7849, 4
          %s7871 = int_to_ptr.vmem [resolvable:$true] %s7870
          %7873 = dma.vmem_to_hbm [thread:$0]  %s7871, 128, %s7868, %s7846
        $region96: #{tpu_custom_call.1} parent=59 // pred_fallthru
          _
        // Predicated region
        $region97: #{tpu_custom_call.1} parent=59 // pred_check
          %p7874 = pneg %p335
        $region98: #{tpu_custom_call.1} parent=59 // pred_check_branch
          %7876 = sbr.rel (%p7874) target = $region100
        $region99: #{tpu_custom_call.1} parent=59 // pred_region
          %s7878 = ssub.s32 512, 512
          %7879 = vsyncadd %s7851, %s7878
          %s7880 = smul.addr %s45, 4
          %s7881 = sadd.s32 %s46, %s7880
          %s7882 = smul.addr %s7881, 128
          %s7883 = scalar_lea.hbm %s11, %s7882
          %s7884 = sshll.u32 %s7854, 4
          %s7885 = int_to_ptr.vmem [resolvable:$true] %s7884
          %7890 = dma.vmem_to_hbm [thread:$0]  %s7885, 512, %s7883, %s7851, 128, 128, 8
        $region100: #{tpu_custom_call.1} parent=59 // pred_fallthru
          _
        // Predicated region
        $region101: #{tpu_custom_call.1} parent=59 // pred_check
          %p7891 = pneg %p363
        $region102: #{tpu_custom_call.1} parent=59 // pred_check_branch
          %7893 = sbr.rel (%p7891) target = $region104
        $region103: #{tpu_custom_call.1} parent=59 // pred_region
          %s7895 = ssub.s32 128, 128
          %7896 = vsyncadd %s7856, %s7895
          %s7897 = sadd.s32 %s46, %s45
          %s7898 = smul.addr %s7897, 128
          %s7899 = scalar_lea.hbm %s12, %s7898
          %s7901 = sshll.u32 %s7859, 4
          %s7902 = int_to_ptr.vmem [resolvable:$true] %s7901
          %7904 = dma.vmem_to_hbm [thread:$0]  %s7902, 128, %s7899, %s7856
        $region104: #{tpu_custom_call.1} parent=59 // pred_fallthru
          _
      $region60: #{tpu_custom_call.1} parent=5 // pred_fallthru
        _
      %p7905 = scmp.le.s32.totalorder 2, %s36
      // Predicated region
      $region105: #{tpu_custom_call.1} parent=5 // pred_check
        %p7906 = pneg %p7905
      $region106: #{tpu_custom_call.1} parent=5 // pred_check_branch
        %7908 = sbr.rel (%p7906) target = $region108
      $region107: #{tpu_custom_call.1} parent=5 // pred_region
        %s7909 = ssub.s32 %s36, 2
        // Predicated region
        $region109: #{tpu_custom_call.1} parent=107 // pred_check
          %p7910 = pneg %p313
        $region110: #{tpu_custom_call.1} parent=107 // pred_check_branch
          %7912 = sbr.rel (%p7910) target = $region112
        $region111: #{tpu_custom_call.1} parent=107 // pred_region
          %s7913 = sand.u32 %s298, 1
          %s7914 = scalar_lea.sflag [#allocation4], %s7913
          %s7915 = sand.u32 %s298, 1
          %s7916 = smul.addr %s7915, 8
          %s7917 = scalar_lea.vmem [#allocation16], %s7916
          %7918 = dma.done %s7914, 128
        $region112: #{tpu_custom_call.1} parent=107 // pred_fallthru
          _
        // Predicated region
        $region113: #{tpu_custom_call.1} parent=107 // pred_check
          %p7919 = pneg %p341
        $region114: #{tpu_custom_call.1} parent=107 // pred_check_branch
          %7921 = sbr.rel (%p7919) target = $region116
        $region115: #{tpu_custom_call.1} parent=107 // pred_region
          %s7922 = sand.u32 %s42, 1
          %s7923 = scalar_lea.sflag [#allocation18], %s7922
          %s7924 = sand.u32 %s326, 1
          %s7925 = smul.addr %s7924, 32
          %s7926 = scalar_lea.vmem [#allocation17], %s7925
          %7927 = dma.done %s7923, 512
        $region116: #{tpu_custom_call.1} parent=107 // pred_fallthru
          _
        // Predicated region
        $region117: #{tpu_custom_call.1} parent=107 // pred_check
          %p7928 = pneg %p369
        $region118: #{tpu_custom_call.1} parent=107 // pred_check_branch
          %7930 = sbr.rel (%p7928) target = $region120
        $region119: #{tpu_custom_call.1} parent=107 // pred_region
          %s7931 = sand.u32 %s42, 1
          %s7932 = scalar_lea.sflag [#allocation18], %s7931
          %s7933 = sand.u32 %s354, 1
          %s7934 = smul.addr %s7933, 8
          %s7935 = scalar_lea.vmem [#allocation19], %s7934
          %7936 = dma.done %s7932, 128
        $region120: #{tpu_custom_call.1} parent=107 // pred_fallthru
          _
      $region108: #{tpu_custom_call.1} parent=5 // pred_fallthru
        _
    $region6: #{tpu_custom_call.1} parent=1 // loop_footer
      %s40 = sadd.s32 1, %s36
    $region7: #{tpu_custom_call.1} parent=1 // loop_footer_branch
      %35 = sbr.rel target = $region3
    $region8: #{tpu_custom_call.1} parent=1 // loop_exit
      _
    %7937 = vsyncpa [#allocation3], 1
    %s7938 = scalar_lea.sflag [#allocation3], 1
    %7939 = vsyncpa %s7938, 1
    %7940 = vsyncpa [#allocation6], 1
    %s7941 = scalar_lea.sflag [#allocation6], 1
    %7942 = vsyncpa %s7941, 1
    %7943 = vsyncpa [#allocation9], 1
    %s7944 = scalar_lea.sflag [#allocation9], 1
    %7945 = vsyncpa %s7944, 1
    %7946 = vsyncpa [#allocation12], 1
    %7947 = vsyncpa [#allocation15], 1
    %7948 = vsyncpa [#allocation4], 1
    %s7949 = scalar_lea.sflag [#allocation4], 1
    %7950 = vsyncpa %s7949, 1
    %7951 = vsyncpa [#allocation18], 1
    %s7952 = scalar_lea.sflag [#allocation18], 1
    %7953 = vsyncpa %s7952, 1

</llo_original>
